<compile_context>
chip_gen: v6e
topology: v6e:2x2x1
jax: 0.10.0
libtpu: 0.0.40
codegen_flags: <defaults>
</compile_context>

<pallas_src>
import functools

import jax
import jax.numpy as jnp
from jax.experimental import pallas as pl
from jax.experimental.pallas import tpu as pltpu


# ---------------------------------------------------------------------------
# Fused kernel: 3x3 same-conv (9 taps, MXU) + folded BN bias + optional
# residual add + optional ReLU.
# ---------------------------------------------------------------------------
def _conv3x3_bn_act_kernel(x_ref, w_ref, b_ref, *rest, H, W,
                           apply_relu, has_residual):
    if has_residual:
        res_ref, o_ref = rest
    else:
        (o_ref,) = rest

    x = x_ref[0]                       # (H+2, W+2, Cin)  -- one padded image
    cin = x.shape[-1]
    cout = o_ref.shape[-1]

    acc = jnp.zeros((H * W, cout), jnp.float32)
    for t in range(9):                 # 9 taps, accumulated on the MXU
        dy, dx = t // 3, t % 3
        patch = x[dy:dy + H, dx:dx + W, :].reshape(H * W, cin)
        acc = acc + jnp.dot(patch, w_ref[t],
                            preferred_element_type=jnp.float32)

    r = acc + b_ref[...]               # folded BatchNorm shift (conv has no bias)
    if has_residual:
        r = r + res_ref[0].reshape(H * W, cout)
    if apply_relu:
        r = jnp.maximum(r, 0.0)
    o_ref[0] = r.reshape(H, W, cout).astype(o_ref.dtype)


def conv3x3_bn_act(x, w, scale, shift, residual=None, apply_relu=True):
    """x: (B,H,W,Cin) NHWC f32.  w: (Cout,Cin,3,3) PyTorch OIHW (bias-free conv).
    Computes act(conv3x3_same(x, w) * scale + shift [+ residual])."""
    B, H, W, Cin = x.shape
    Cout = w.shape[0]

    # Fold eval-mode BatchNorm into the conv.
    w_f = (w * scale[:, None, None, None]).astype(jnp.float32)
    w_taps = jnp.transpose(w_f, (2, 3, 1, 0)).reshape(9, Cin, Cout)  # (tap,Cin,Cout)
    bias = shift.reshape(1, Cout).astype(jnp.float32)

    # Spatial halo pad only (cheap); channel / K dims are never zero-padded.
    xp = jnp.pad(x, ((0, 0), (1, 1), (1, 1), (0, 0)))
    Hp, Wp = H + 2, W + 2

    # Cout tiling: full extent when small, else 128-lane multiples.
    tco = Cout if Cout <= 256 else 128
    assert Cout % tco == 0
    n_co = Cout // tco

    in_specs = [
        pl.BlockSpec((1, Hp, Wp, Cin), lambda b, j: (b, 0, 0, 0)),
        pl.BlockSpec((9, Cin, tco), lambda b, j: (0, 0, j)),
        pl.BlockSpec((1, tco), lambda b, j: (0, j)),
    ]
    args = [xp, w_taps, bias]
    if residual is not None:
        in_specs.append(pl.BlockSpec((1, H, W, tco), lambda b, j: (b, 0, 0, j)))
        args.append(residual)

    return pl.pallas_call(
        functools.partial(_conv3x3_bn_act_kernel, H=H, W=W,
                          apply_relu=apply_relu,
                          has_residual=residual is not None),
        out_shape=jax.ShapeDtypeStruct((B, H, W, Cout), jnp.float32),
        grid=(B, n_co),
        in_specs=in_specs,
        out_specs=pl.BlockSpec((1, H, W, tco), lambda b, j: (b, 0, 0, j)),
        compiler_params=pltpu.CompilerParams(
            dimension_semantics=("parallel", "parallel")),
    )(*args)


# ---------------------------------------------------------------------------
# BasicBlock forward (NCHW in / NCHW out, like the PyTorch module)
# ---------------------------------------------------------------------------
def basic_block_forward(params, x_nchw, eps=1e-5):
    x = jnp.transpose(x_nchw, (0, 2, 3, 1))          # -> NHWC

    bn1, bn2 = params["bn1"], params["bn2"]
    s1 = bn1["w"] / jnp.sqrt(bn1["v"] + eps)
    t1 = bn1["b"] - bn1["m"] * s1
    s2 = bn2["w"] / jnp.sqrt(bn2["v"] + eps)
    t2 = bn2["b"] - bn2["m"] * s2

    out = conv3x3_bn_act(x, params["conv1_w"], s1, t1,
                         residual=None, apply_relu=True)     # relu(bn1(conv1(x)))
    out = conv3x3_bn_act(out, params["conv2_w"], s2, t2,
                         residual=x, apply_relu=True)        # relu(bn2(conv2)+x)
    return jnp.transpose(out, (0, 3, 1, 2))          # -> NCHW


# ---------------------------------------------------------------------------
# Plain-JAX reference (for in-script correctness check)
# ---------------------------------------------------------------------------
def _reference_forward(params, x_nchw, eps=1e-5):
    x = jnp.transpose(x_nchw, (0, 2, 3, 1))

    def conv(v, w):
        return jax.lax.conv_general_dilated(
            v, jnp.transpose(w, (2, 3, 1, 0)), (1, 1), "SAME",
            dimension_numbers=("NHWC", "HWIO", "NHWC"),
            precision=jax.lax.Precision.HIGHEST)

    bn1, bn2 = params["bn1"], params["bn2"]
    s1 = bn1["w"] / jnp.sqrt(bn1["v"] + eps)
    t1 = bn1["b"] - bn1["m"] * s1
    s2 = bn2["w"] / jnp.sqrt(bn2["v"] + eps)
    t2 = bn2["b"] - bn2["m"] * s2

    out = jnp.maximum(conv(x, params["conv1_w"]) * s1 + t1, 0.0)
    out = jnp.maximum(conv(out, params["conv2_w"]) * s2 + t2 + x, 0.0)
    return jnp.transpose(out, (0, 3, 1, 2))


# ---------------------------------------------------------------------------
# Deterministic synthetic parameters + smoke test
# ---------------------------------------------------------------------------
def init_params(key, planes):
    k1, k2, k3, k4, k5, k6 = jax.random.split(key, 6)
    fan_in = planes * 9

    def bn(km, kv):
        return dict(
            w=jnp.ones((planes,), jnp.float32),
            b=jnp.zeros((planes,), jnp.float32),
            m=0.1 * jax.random.normal(km, (planes,), jnp.float32),
            v=1.0 + 0.1 * jax.random.uniform(kv, (planes,), jnp.float32),
        )

    return {
        "conv1_w": jax.random.normal(k1, (planes, planes, 3, 3), jnp.float32)
        / jnp.sqrt(fan_in),
        "conv2_w": jax.random.normal(k2, (planes, planes, 3, 3), jnp.float32)
        / jnp.sqrt(fan_in),
        "bn1": bn(k3, k4),
        "bn2": bn(k5, k6),
    }


if __name__ == "__main__":
    key = jax.random.PRNGKey(0)
    pkey, xkey = jax.random.split(key)

    planes = 64                       # BasicBlock default width (inplanes == planes)
    B, H, W = 2, 16, 16
    params = init_params(pkey, planes)
    x = jax.random.normal(xkey, (B, planes, H, W), jnp.float32)

    y = jax.jit(basic_block_forward)(params, x)
    jax.block_until_ready(y)

    assert y.shape == (B, planes, H, W), y.shape
    assert bool(jnp.all(jnp.isfinite(y)))

    y_ref = _reference_forward(params, x)
    assert bool(jnp.allclose(y, y_ref, atol=2e-2, rtol=2e-2)), (
        float(jnp.max(jnp.abs(y - y_ref))))

    print("KERNEL_OK")
</pallas_src>

<mosaic_0001>
module attributes {stable_mosaic.version = 11 : i64} {
  func.func @_conv3x3_bn_act_kernel(%arg0: i32, %arg1: i32, %arg2: memref<1x18x18x64xf32, #tpu.memory_space<vmem>>, %arg3: memref<9x64x64xf32, #tpu.memory_space<vmem>>, %arg4: memref<1x64xf32, #tpu.memory_space<vmem>>, %arg5: memref<1x16x16x64xf32, #tpu.memory_space<vmem>>) attributes {dimension_semantics = [#tpu.dimension_semantics<parallel>, #tpu.dimension_semantics<parallel>], iteration_bounds = array<i64: 2, 1>, scalar_prefetch = 0 : i64, scratch_operands = 0 : i64, tpu.core_type = #tpu.core_type<tc>, window_params = [{transform_indices = @transform_0, window_bounds = array<i64: 1, 18, 18, 64>}, {transform_indices = @transform_1, window_bounds = array<i64: 9, 64, 64>}, {transform_indices = @transform_2, window_bounds = array<i64: 1, 64>}, {transform_indices = @transform_3, window_bounds = array<i64: 1, 16, 16, 64>}]} {
    %c0 = arith.constant 0 : index
    %c0_0 = arith.constant 0 : index
    %c0_1 = arith.constant 0 : index
    %c0_2 = arith.constant 0 : index
    %0 = vector.load %arg2[%c0, %c0_0, %c0_1, %c0_2] : memref<1x18x18x64xf32, #tpu.memory_space<vmem>>, vector<1x18x18x64xf32>
    %1 = vector.shape_cast %0 : vector<1x18x18x64xf32> to vector<18x18x64xf32>
    %cst = arith.constant 0.000000e+00 : f32
    %2 = vector.broadcast %cst : f32 to vector<256x64xf32>
    %3 = vector.extract_strided_slice %1 {offsets = [0, 0, 0], sizes = [16, 16, 64], strides = [1, 1, 1]} : vector<18x18x64xf32> to vector<16x16x64xf32>
    %4 = vector.shape_cast %3 : vector<16x16x64xf32> to vector<256x64xf32>
    %c0_3 = arith.constant 0 : index
    %c0_4 = arith.constant 0 : index
    %c0_5 = arith.constant 0 : index
    %5 = vector.load %arg3[%c0_3, %c0_4, %c0_5] : memref<9x64x64xf32, #tpu.memory_space<vmem>>, vector<1x64x64xf32>
    %6 = vector.shape_cast %5 : vector<1x64x64xf32> to vector<64x64xf32>
    %cst_6 = arith.constant dense<0.000000e+00> : vector<256x64xf32>
    %7 = tpu.matmul %4, %6, %cst_6 {dimension_numbers = #tpu.dot_dimension_numbers<[1], [0], [0], [1], [0, 0, 1, 1], [], []>} : vector<256x64xf32>, vector<64x64xf32>, vector<256x64xf32> -> vector<256x64xf32>
    %8 = arith.addf %2, %7 : vector<256x64xf32>
    %9 = vector.extract_strided_slice %1 {offsets = [0, 1, 0], sizes = [16, 16, 64], strides = [1, 1, 1]} : vector<18x18x64xf32> to vector<16x16x64xf32>
    %10 = vector.shape_cast %9 : vector<16x16x64xf32> to vector<256x64xf32>
    %c1 = arith.constant 1 : index
    %c0_7 = arith.constant 0 : index
    %c0_8 = arith.constant 0 : index
    %11 = vector.load %arg3[%c1, %c0_7, %c0_8] : memref<9x64x64xf32, #tpu.memory_space<vmem>>, vector<1x64x64xf32>
    %12 = vector.shape_cast %11 : vector<1x64x64xf32> to vector<64x64xf32>
    %cst_9 = arith.constant dense<0.000000e+00> : vector<256x64xf32>
    %13 = tpu.matmul %10, %12, %cst_9 {dimension_numbers = #tpu.dot_dimension_numbers<[1], [0], [0], [1], [0, 0, 1, 1], [], []>} : vector<256x64xf32>, vector<64x64xf32>, vector<256x64xf32> -> vector<256x64xf32>
    %14 = arith.addf %8, %13 : vector<256x64xf32>
    %15 = vector.extract_strided_slice %1 {offsets = [0, 2, 0], sizes = [16, 16, 64], strides = [1, 1, 1]} : vector<18x18x64xf32> to vector<16x16x64xf32>
    %16 = vector.shape_cast %15 : vector<16x16x64xf32> to vector<256x64xf32>
    %c2 = arith.constant 2 : index
    %c0_10 = arith.constant 0 : index
    %c0_11 = arith.constant 0 : index
    %17 = vector.load %arg3[%c2, %c0_10, %c0_11] : memref<9x64x64xf32, #tpu.memory_space<vmem>>, vector<1x64x64xf32>
    %18 = vector.shape_cast %17 : vector<1x64x64xf32> to vector<64x64xf32>
    %cst_12 = arith.constant dense<0.000000e+00> : vector<256x64xf32>
    %19 = tpu.matmul %16, %18, %cst_12 {dimension_numbers = #tpu.dot_dimension_numbers<[1], [0], [0], [1], [0, 0, 1, 1], [], []>} : vector<256x64xf32>, vector<64x64xf32>, vector<256x64xf32> -> vector<256x64xf32>
    %20 = arith.addf %14, %19 : vector<256x64xf32>
    %21 = vector.extract_strided_slice %1 {offsets = [1, 0, 0], sizes = [16, 16, 64], strides = [1, 1, 1]} : vector<18x18x64xf32> to vector<16x16x64xf32>
    %22 = vector.shape_cast %21 : vector<16x16x64xf32> to vector<256x64xf32>
    %c3 = arith.constant 3 : index
    %c0_13 = arith.constant 0 : index
    %c0_14 = arith.constant 0 : index
    %23 = vector.load %arg3[%c3, %c0_13, %c0_14] : memref<9x64x64xf32, #tpu.memory_space<vmem>>, vector<1x64x64xf32>
    %24 = vector.shape_cast %23 : vector<1x64x64xf32> to vector<64x64xf32>
    %cst_15 = arith.constant dense<0.000000e+00> : vector<256x64xf32>
    %25 = tpu.matmul %22, %24, %cst_15 {dimension_numbers = #tpu.dot_dimension_numbers<[1], [0], [0], [1], [0, 0, 1, 1], [], []>} : vector<256x64xf32>, vector<64x64xf32>, vector<256x64xf32> -> vector<256x64xf32>
    %26 = arith.addf %20, %25 : vector<256x64xf32>
    %27 = vector.extract_strided_slice %1 {offsets = [1, 1, 0], sizes = [16, 16, 64], strides = [1, 1, 1]} : vector<18x18x64xf32> to vector<16x16x64xf32>
    %28 = vector.shape_cast %27 : vector<16x16x64xf32> to vector<256x64xf32>
    %c4 = arith.constant 4 : index
    %c0_16 = arith.constant 0 : index
    %c0_17 = arith.constant 0 : index
    %29 = vector.load %arg3[%c4, %c0_16, %c0_17] : memref<9x64x64xf32, #tpu.memory_space<vmem>>, vector<1x64x64xf32>
    %30 = vector.shape_cast %29 : vector<1x64x64xf32> to vector<64x64xf32>
    %cst_18 = arith.constant dense<0.000000e+00> : vector<256x64xf32>
    %31 = tpu.matmul %28, %30, %cst_18 {dimension_numbers = #tpu.dot_dimension_numbers<[1], [0], [0], [1], [0, 0, 1, 1], [], []>} : vector<256x64xf32>, vector<64x64xf32>, vector<256x64xf32> -> vector<256x64xf32>
    %32 = arith.addf %26, %31 : vector<256x64xf32>
    %33 = vector.extract_strided_slice %1 {offsets = [1, 2, 0], sizes = [16, 16, 64], strides = [1, 1, 1]} : vector<18x18x64xf32> to vector<16x16x64xf32>
    %34 = vector.shape_cast %33 : vector<16x16x64xf32> to vector<256x64xf32>
    %c5 = arith.constant 5 : index
    %c0_19 = arith.constant 0 : index
    %c0_20 = arith.constant 0 : index
    %35 = vector.load %arg3[%c5, %c0_19, %c0_20] : memref<9x64x64xf32, #tpu.memory_space<vmem>>, vector<1x64x64xf32>
    %36 = vector.shape_cast %35 : vector<1x64x64xf32> to vector<64x64xf32>
    %cst_21 = arith.constant dense<0.000000e+00> : vector<256x64xf32>
    %37 = tpu.matmul %34, %36, %cst_21 {dimension_numbers = #tpu.dot_dimension_numbers<[1], [0], [0], [1], [0, 0, 1, 1], [], []>} : vector<256x64xf32>, vector<64x64xf32>, vector<256x64xf32> -> vector<256x64xf32>
    %38 = arith.addf %32, %37 : vector<256x64xf32>
    %39 = vector.extract_strided_slice %1 {offsets = [2, 0, 0], sizes = [16, 16, 64], strides = [1, 1, 1]} : vector<18x18x64xf32> to vector<16x16x64xf32>
    %40 = vector.shape_cast %39 : vector<16x16x64xf32> to vector<256x64xf32>
    %c6 = arith.constant 6 : index
    %c0_22 = arith.constant 0 : index
    %c0_23 = arith.constant 0 : index
    %41 = vector.load %arg3[%c6, %c0_22, %c0_23] : memref<9x64x64xf32, #tpu.memory_space<vmem>>, vector<1x64x64xf32>
    %42 = vector.shape_cast %41 : vector<1x64x64xf32> to vector<64x64xf32>
    %cst_24 = arith.constant dense<0.000000e+00> : vector<256x64xf32>
    %43 = tpu.matmul %40, %42, %cst_24 {dimension_numbers = #tpu.dot_dimension_numbers<[1], [0], [0], [1], [0, 0, 1, 1], [], []>} : vector<256x64xf32>, vector<64x64xf32>, vector<256x64xf32> -> vector<256x64xf32>
    %44 = arith.addf %38, %43 : vector<256x64xf32>
    %45 = vector.extract_strided_slice %1 {offsets = [2, 1, 0], sizes = [16, 16, 64], strides = [1, 1, 1]} : vector<18x18x64xf32> to vector<16x16x64xf32>
    %46 = vector.shape_cast %45 : vector<16x16x64xf32> to vector<256x64xf32>
    %c7 = arith.constant 7 : index
    %c0_25 = arith.constant 0 : index
    %c0_26 = arith.constant 0 : index
    %47 = vector.load %arg3[%c7, %c0_25, %c0_26] : memref<9x64x64xf32, #tpu.memory_space<vmem>>, vector<1x64x64xf32>
    %48 = vector.shape_cast %47 : vector<1x64x64xf32> to vector<64x64xf32>
    %cst_27 = arith.constant dense<0.000000e+00> : vector<256x64xf32>
    %49 = tpu.matmul %46, %48, %cst_27 {dimension_numbers = #tpu.dot_dimension_numbers<[1], [0], [0], [1], [0, 0, 1, 1], [], []>} : vector<256x64xf32>, vector<64x64xf32>, vector<256x64xf32> -> vector<256x64xf32>
    %50 = arith.addf %44, %49 : vector<256x64xf32>
    %51 = vector.extract_strided_slice %1 {offsets = [2, 2, 0], sizes = [16, 16, 64], strides = [1, 1, 1]} : vector<18x18x64xf32> to vector<16x16x64xf32>
    %52 = vector.shape_cast %51 : vector<16x16x64xf32> to vector<256x64xf32>
    %c8 = arith.constant 8 : index
    %c0_28 = arith.constant 0 : index
    %c0_29 = arith.constant 0 : index
    %53 = vector.load %arg3[%c8, %c0_28, %c0_29] : memref<9x64x64xf32, #tpu.memory_space<vmem>>, vector<1x64x64xf32>
    %54 = vector.shape_cast %53 : vector<1x64x64xf32> to vector<64x64xf32>
    %cst_30 = arith.constant dense<0.000000e+00> : vector<256x64xf32>
    %55 = tpu.matmul %52, %54, %cst_30 {dimension_numbers = #tpu.dot_dimension_numbers<[1], [0], [0], [1], [0, 0, 1, 1], [], []>} : vector<256x64xf32>, vector<64x64xf32>, vector<256x64xf32> -> vector<256x64xf32>
    %56 = arith.addf %50, %55 : vector<256x64xf32>
    %c0_31 = arith.constant 0 : index
    %c0_32 = arith.constant 0 : index
    %57 = vector.load %arg4[%c0_31, %c0_32] : memref<1x64xf32, #tpu.memory_space<vmem>>, vector<1x64xf32>
    %58 = vector.broadcast %57 : vector<1x64xf32> to vector<256x64xf32>
    %59 = arith.addf %56, %58 : vector<256x64xf32>
    %cst_33 = arith.constant 0.000000e+00 : f32
    %60 = vector.broadcast %cst_33 : f32 to vector<256x64xf32>
    %61 = arith.maximumf %59, %60 : vector<256x64xf32>
    %62 = vector.shape_cast %61 : vector<256x64xf32> to vector<16x16x64xf32>
    %c0_34 = arith.constant 0 : index
    %c0_35 = arith.constant 0 : index
    %c0_36 = arith.constant 0 : index
    %c0_37 = arith.constant 0 : index
    %63 = vector.load %arg5[%c0_34, %c0_35, %c0_36, %c0_37] : memref<1x16x16x64xf32, #tpu.memory_space<vmem>>, vector<1x16x16x64xf32>
    %64 = vector.shape_cast %63 : vector<1x16x16x64xf32> to vector<16x16x64xf32>
    %65 = vector.shape_cast %62 : vector<16x16x64xf32> to vector<1x16x16x64xf32>
    tpu.vector_store %arg5[%c0_34, %c0_35, %c0_36, %c0_37], %65 {strides = array<i32>} : memref<1x16x16x64xf32, #tpu.memory_space<vmem>>, vector<1x16x16x64xf32>,
    return
  }
  func.func @transform_0(%arg0: i32, %arg1: i32) -> (i32, i32, i32, i32) {
    %c0_i32 = arith.constant 0 : i32
    %c0_i32_0 = arith.constant 0 : i32
    %c0_i32_1 = arith.constant 0 : i32
    %c0_i32_2 = arith.constant 0 : i32
    return %arg0, %c0_i32, %c0_i32_0, %c0_i32_1 : i32, i32, i32, i32
  }
  func.func @transform_1(%arg0: i32, %arg1: i32) -> (i32, i32, i32) {
    %c0_i32 = arith.constant 0 : i32
    %c0_i32_0 = arith.constant 0 : i32
    %c0_i32_1 = arith.constant 0 : i32
    return %c0_i32, %c0_i32_0, %arg1 : i32, i32, i32
  }
  func.func @transform_2(%arg0: i32, %arg1: i32) -> (i32, i32) {
    %c0_i32 = arith.constant 0 : i32
    %c0_i32_0 = arith.constant 0 : i32
    return %c0_i32, %arg1 : i32, i32
  }
  func.func @transform_3(%arg0: i32, %arg1: i32) -> (i32, i32, i32, i32) {
    %c0_i32 = arith.constant 0 : i32
    %c0_i32_0 = arith.constant 0 : i32
    %c0_i32_1 = arith.constant 0 : i32
    return %arg0, %c0_i32, %c0_i32_0, %arg1 : i32, i32, i32, i32
  }
}

module attributes {stable_mosaic.version = 11 : i64} {
  func.func @_conv3x3_bn_act_kernel(%arg0: i32, %arg1: i32, %arg2: memref<1x18x18x64xf32, #tpu.memory_space<vmem>>, %arg3: memref<9x64x64xf32, #tpu.memory_space<vmem>>, %arg4: memref<1x64xf32, #tpu.memory_space<vmem>>, %arg5: memref<1x16x16x64xf32, #tpu.memory_space<vmem>>, %arg6: memref<1x16x16x64xf32, #tpu.memory_space<vmem>>) attributes {dimension_semantics = [#tpu.dimension_semantics<parallel>, #tpu.dimension_semantics<parallel>], iteration_bounds = array<i64: 2, 1>, scalar_prefetch = 0 : i64, scratch_operands = 0 : i64, tpu.core_type = #tpu.core_type<tc>, window_params = [{transform_indices = @transform_0, window_bounds = array<i64: 1, 18, 18, 64>}, {transform_indices = @transform_1, window_bounds = array<i64: 9, 64, 64>}, {transform_indices = @transform_2, window_bounds = array<i64: 1, 64>}, {transform_indices = @transform_3, window_bounds = array<i64: 1, 16, 16, 64>}, {transform_indices = @transform_4, window_bounds = array<i64: 1, 16, 16, 64>}]} {
    %c0 = arith.constant 0 : index
    %c0_0 = arith.constant 0 : index
    %c0_1 = arith.constant 0 : index
    %c0_2 = arith.constant 0 : index
    %0 = vector.load %arg2[%c0, %c0_0, %c0_1, %c0_2] : memref<1x18x18x64xf32, #tpu.memory_space<vmem>>, vector<1x18x18x64xf32>
    %1 = vector.shape_cast %0 : vector<1x18x18x64xf32> to vector<18x18x64xf32>
    %cst = arith.constant 0.000000e+00 : f32
    %2 = vector.broadcast %cst : f32 to vector<256x64xf32>
    %3 = vector.extract_strided_slice %1 {offsets = [0, 0, 0], sizes = [16, 16, 64], strides = [1, 1, 1]} : vector<18x18x64xf32> to vector<16x16x64xf32>
    %4 = vector.shape_cast %3 : vector<16x16x64xf32> to vector<256x64xf32>
    %c0_3 = arith.constant 0 : index
    %c0_4 = arith.constant 0 : index
    %c0_5 = arith.constant 0 : index
    %5 = vector.load %arg3[%c0_3, %c0_4, %c0_5] : memref<9x64x64xf32, #tpu.memory_space<vmem>>, vector<1x64x64xf32>
    %6 = vector.shape_cast %5 : vector<1x64x64xf32> to vector<64x64xf32>
    %cst_6 = arith.constant dense<0.000000e+00> : vector<256x64xf32>
    %7 = tpu.matmul %4, %6, %cst_6 {dimension_numbers = #tpu.dot_dimension_numbers<[1], [0], [0], [1], [0, 0, 1, 1], [], []>} : vector<256x64xf32>, vector<64x64xf32>, vector<256x64xf32> -> vector<256x64xf32>
    %8 = arith.addf %2, %7 : vector<256x64xf32>
    %9 = vector.extract_strided_slice %1 {offsets = [0, 1, 0], sizes = [16, 16, 64], strides = [1, 1, 1]} : vector<18x18x64xf32> to vector<16x16x64xf32>
    %10 = vector.shape_cast %9 : vector<16x16x64xf32> to vector<256x64xf32>
    %c1 = arith.constant 1 : index
    %c0_7 = arith.constant 0 : index
    %c0_8 = arith.constant 0 : index
    %11 = vector.load %arg3[%c1, %c0_7, %c0_8] : memref<9x64x64xf32, #tpu.memory_space<vmem>>, vector<1x64x64xf32>
    %12 = vector.shape_cast %11 : vector<1x64x64xf32> to vector<64x64xf32>
    %cst_9 = arith.constant dense<0.000000e+00> : vector<256x64xf32>
    %13 = tpu.matmul %10, %12, %cst_9 {dimension_numbers = #tpu.dot_dimension_numbers<[1], [0], [0], [1], [0, 0, 1, 1], [], []>} : vector<256x64xf32>, vector<64x64xf32>, vector<256x64xf32> -> vector<256x64xf32>
    %14 = arith.addf %8, %13 : vector<256x64xf32>
    %15 = vector.extract_strided_slice %1 {offsets = [0, 2, 0], sizes = [16, 16, 64], strides = [1, 1, 1]} : vector<18x18x64xf32> to vector<16x16x64xf32>
    %16 = vector.shape_cast %15 : vector<16x16x64xf32> to vector<256x64xf32>
    %c2 = arith.constant 2 : index
    %c0_10 = arith.constant 0 : index
    %c0_11 = arith.constant 0 : index
    %17 = vector.load %arg3[%c2, %c0_10, %c0_11] : memref<9x64x64xf32, #tpu.memory_space<vmem>>, vector<1x64x64xf32>
    %18 = vector.shape_cast %17 : vector<1x64x64xf32> to vector<64x64xf32>
    %cst_12 = arith.constant dense<0.000000e+00> : vector<256x64xf32>
    %19 = tpu.matmul %16, %18, %cst_12 {dimension_numbers = #tpu.dot_dimension_numbers<[1], [0], [0], [1], [0, 0, 1, 1], [], []>} : vector<256x64xf32>, vector<64x64xf32>, vector<256x64xf32> -> vector<256x64xf32>
    %20 = arith.addf %14, %19 : vector<256x64xf32>
    %21 = vector.extract_strided_slice %1 {offsets = [1, 0, 0], sizes = [16, 16, 64], strides = [1, 1, 1]} : vector<18x18x64xf32> to vector<16x16x64xf32>
    %22 = vector.shape_cast %21 : vector<16x16x64xf32> to vector<256x64xf32>
    %c3 = arith.constant 3 : index
    %c0_13 = arith.constant 0 : index
    %c0_14 = arith.constant 0 : index
    %23 = vector.load %arg3[%c3, %c0_13, %c0_14] : memref<9x64x64xf32, #tpu.memory_space<vmem>>, vector<1x64x64xf32>
    %24 = vector.shape_cast %23 : vector<1x64x64xf32> to vector<64x64xf32>
    %cst_15 = arith.constant dense<0.000000e+00> : vector<256x64xf32>
    %25 = tpu.matmul %22, %24, %cst_15 {dimension_numbers = #tpu.dot_dimension_numbers<[1], [0], [0], [1], [0, 0, 1, 1], [], []>} : vector<256x64xf32>, vector<64x64xf32>, vector<256x64xf32> -> vector<256x64xf32>
    %26 = arith.addf %20, %25 : vector<256x64xf32>
    %27 = vector.extract_strided_slice %1 {offsets = [1, 1, 0], sizes = [16, 16, 64], strides = [1, 1, 1]} : vector<18x18x64xf32> to vector<16x16x64xf32>
    %28 = vector.shape_cast %27 : vector<16x16x64xf32> to vector<256x64xf32>
    %c4 = arith.constant 4 : index
    %c0_16 = arith.constant 0 : index
    %c0_17 = arith.constant 0 : index
    %29 = vector.load %arg3[%c4, %c0_16, %c0_17] : memref<9x64x64xf32, #tpu.memory_space<vmem>>, vector<1x64x64xf32>
    %30 = vector.shape_cast %29 : vector<1x64x64xf32> to vector<64x64xf32>
    %cst_18 = arith.constant dense<0.000000e+00> : vector<256x64xf32>
    %31 = tpu.matmul %28, %30, %cst_18 {dimension_numbers = #tpu.dot_dimension_numbers<[1], [0], [0], [1], [0, 0, 1, 1], [], []>} : vector<256x64xf32>, vector<64x64xf32>, vector<256x64xf32> -> vector<256x64xf32>
    %32 = arith.addf %26, %31 : vector<256x64xf32>
    %33 = vector.extract_strided_slice %1 {offsets = [1, 2, 0], sizes = [16, 16, 64], strides = [1, 1, 1]} : vector<18x18x64xf32> to vector<16x16x64xf32>
    %34 = vector.shape_cast %33 : vector<16x16x64xf32> to vector<256x64xf32>
    %c5 = arith.constant 5 : index
    %c0_19 = arith.constant 0 : index
    %c0_20 = arith.constant 0 : index
    %35 = vector.load %arg3[%c5, %c0_19, %c0_20] : memref<9x64x64xf32, #tpu.memory_space<vmem>>, vector<1x64x64xf32>
    %36 = vector.shape_cast %35 : vector<1x64x64xf32> to vector<64x64xf32>
    %cst_21 = arith.constant dense<0.000000e+00> : vector<256x64xf32>
    %37 = tpu.matmul %34, %36, %cst_21 {dimension_numbers = #tpu.dot_dimension_numbers<[1], [0], [0], [1], [0, 0, 1, 1], [], []>} : vector<256x64xf32>, vector<64x64xf32>, vector<256x64xf32> -> vector<256x64xf32>
    %38 = arith.addf %32, %37 : vector<256x64xf32>
    %39 = vector.extract_strided_slice %1 {offsets = [2, 0, 0], sizes = [16, 16, 64], strides = [1, 1, 1]} : vector<18x18x64xf32> to vector<16x16x64xf32>
    %40 = vector.shape_cast %39 : vector<16x16x64xf32> to vector<256x64xf32>
    %c6 = arith.constant 6 : index
    %c0_22 = arith.constant 0 : index
    %c0_23 = arith.constant 0 : index
    %41 = vector.load %arg3[%c6, %c0_22, %c0_23] : memref<9x64x64xf32, #tpu.memory_space<vmem>>, vector<1x64x64xf32>
    %42 = vector.shape_cast %41 : vector<1x64x64xf32> to vector<64x64xf32>
    %cst_24 = arith.constant dense<0.000000e+00> : vector<256x64xf32>
    %43 = tpu.matmul %40, %42, %cst_24 {dimension_numbers = #tpu.dot_dimension_numbers<[1], [0], [0], [1], [0, 0, 1, 1], [], []>} : vector<256x64xf32>, vector<64x64xf32>, vector<256x64xf32> -> vector<256x64xf32>
    %44 = arith.addf %38, %43 : vector<256x64xf32>
    %45 = vector.extract_strided_slice %1 {offsets = [2, 1, 0], sizes = [16, 16, 64], strides = [1, 1, 1]} : vector<18x18x64xf32> to vector<16x16x64xf32>
    %46 = vector.shape_cast %45 : vector<16x16x64xf32> to vector<256x64xf32>
    %c7 = arith.constant 7 : index
    %c0_25 = arith.constant 0 : index
    %c0_26 = arith.constant 0 : index
    %47 = vector.load %arg3[%c7, %c0_25, %c0_26] : memref<9x64x64xf32, #tpu.memory_space<vmem>>, vector<1x64x64xf32>
    %48 = vector.shape_cast %47 : vector<1x64x64xf32> to vector<64x64xf32>
    %cst_27 = arith.constant dense<0.000000e+00> : vector<256x64xf32>
    %49 = tpu.matmul %46, %48, %cst_27 {dimension_numbers = #tpu.dot_dimension_numbers<[1], [0], [0], [1], [0, 0, 1, 1], [], []>} : vector<256x64xf32>, vector<64x64xf32>, vector<256x64xf32> -> vector<256x64xf32>
    %50 = arith.addf %44, %49 : vector<256x64xf32>
    %51 = vector.extract_strided_slice %1 {offsets = [2, 2, 0], sizes = [16, 16, 64], strides = [1, 1, 1]} : vector<18x18x64xf32> to vector<16x16x64xf32>
    %52 = vector.shape_cast %51 : vector<16x16x64xf32> to vector<256x64xf32>
    %c8 = arith.constant 8 : index
    %c0_28 = arith.constant 0 : index
    %c0_29 = arith.constant 0 : index
    %53 = vector.load %arg3[%c8, %c0_28, %c0_29] : memref<9x64x64xf32, #tpu.memory_space<vmem>>, vector<1x64x64xf32>
    %54 = vector.shape_cast %53 : vector<1x64x64xf32> to vector<64x64xf32>
    %cst_30 = arith.constant dense<0.000000e+00> : vector<256x64xf32>
    %55 = tpu.matmul %52, %54, %cst_30 {dimension_numbers = #tpu.dot_dimension_numbers<[1], [0], [0], [1], [0, 0, 1, 1], [], []>} : vector<256x64xf32>, vector<64x64xf32>, vector<256x64xf32> -> vector<256x64xf32>
    %56 = arith.addf %50, %55 : vector<256x64xf32>
    %c0_31 = arith.constant 0 : index
    %c0_32 = arith.constant 0 : index
    %57 = vector.load %arg4[%c0_31, %c0_32] : memref<1x64xf32, #tpu.memory_space<vmem>>, vector<1x64xf32>
    %58 = vector.broadcast %57 : vector<1x64xf32> to vector<256x64xf32>
    %59 = arith.addf %56, %58 : vector<256x64xf32>
    %c0_33 = arith.constant 0 : index
    %c0_34 = arith.constant 0 : index
    %c0_35 = arith.constant 0 : index
    %c0_36 = arith.constant 0 : index
    %60 = vector.load %arg5[%c0_33, %c0_34, %c0_35, %c0_36] : memref<1x16x16x64xf32, #tpu.memory_space<vmem>>, vector<1x16x16x64xf32>
    %61 = vector.shape_cast %60 : vector<1x16x16x64xf32> to vector<16x16x64xf32>
    %62 = vector.shape_cast %61 : vector<16x16x64xf32> to vector<256x64xf32>
    %63 = arith.addf %59, %62 : vector<256x64xf32>
    %cst_37 = arith.constant 0.000000e+00 : f32
    %64 = vector.broadcast %cst_37 : f32 to vector<256x64xf32>
    %65 = arith.maximumf %63, %64 : vector<256x64xf32>
    %66 = vector.shape_cast %65 : vector<256x64xf32> to vector<16x16x64xf32>
    %c0_38 = arith.constant 0 : index
    %c0_39 = arith.constant 0 : index
    %c0_40 = arith.constant 0 : index
    %c0_41 = arith.constant 0 : index
    %67 = vector.load %arg6[%c0_38, %c0_39, %c0_40, %c0_41] : memref<1x16x16x64xf32, #tpu.memory_space<vmem>>, vector<1x16x16x64xf32>
    %68 = vector.shape_cast %67 : vector<1x16x16x64xf32> to vector<16x16x64xf32>
    %69 = vector.shape_cast %66 : vector<16x16x64xf32> to vector<1x16x16x64xf32>
    tpu.vector_store %arg6[%c0_38, %c0_39, %c0_40, %c0_41], %69 {strides = array<i32>} : memref<1x16x16x64xf32, #tpu.memory_space<vmem>>, vector<1x16x16x64xf32>,
    return
  }
  func.func @transform_0(%arg0: i32, %arg1: i32) -> (i32, i32, i32, i32) {
    %c0_i32 = arith.constant 0 : i32
    %c0_i32_0 = arith.constant 0 : i32
    %c0_i32_1 = arith.constant 0 : i32
    %c0_i32_2 = arith.constant 0 : i32
    return %arg0, %c0_i32, %c0_i32_0, %c0_i32_1 : i32, i32, i32, i32
  }
  func.func @transform_1(%arg0: i32, %arg1: i32) -> (i32, i32, i32) {
    %c0_i32 = arith.constant 0 : i32
    %c0_i32_0 = arith.constant 0 : i32
    %c0_i32_1 = arith.constant 0 : i32
    return %c0_i32, %c0_i32_0, %arg1 : i32, i32, i32
  }
  func.func @transform_2(%arg0: i32, %arg1: i32) -> (i32, i32) {
    %c0_i32 = arith.constant 0 : i32
    %c0_i32_0 = arith.constant 0 : i32
    return %c0_i32, %arg1 : i32, i32
  }
  func.func @transform_3(%arg0: i32, %arg1: i32) -> (i32, i32, i32, i32) {
    %c0_i32 = arith.constant 0 : i32
    %c0_i32_0 = arith.constant 0 : i32
    %c0_i32_1 = arith.constant 0 : i32
    return %arg0, %c0_i32, %c0_i32_0, %arg1 : i32, i32, i32, i32
  }
  func.func @transform_4(%arg0: i32, %arg1: i32) -> (i32, i32, i32, i32) {
    %c0_i32 = arith.constant 0 : i32
    %c0_i32_0 = arith.constant 0 : i32
    %c0_i32_1 = arith.constant 0 : i32
    return %arg0, %c0_i32, %c0_i32_0, %arg1 : i32, i32, i32, i32
  }
}

</mosaic_0001>

<llo_original>
// kernel: basic_block_forward.2
$region0: #{basic_block_forward.2}
  #allocation0 [shape = 'u32[]', space=smem, size = 0x4, offset = 0x4, fixed_abs, tag = 'smem constant byte address 0x4 - core index']
  #allocation1 [shape = 'u32[144,128]{1,0:T(1,128)}', space=vmem, size = 0x12000, scoped, tag = 'internal scratch']
  %s0 = inlined_call_operand.vmem [shape: f32[2,18,18,64], index: 0, kind: input, shape index: {}]
  %s1 = inlined_call_operand.vmem [shape: f32[9,64,64], index: 1, kind: input, shape index: {}]
  %s2 = inlined_call_operand.vmem [shape: f32[1,64], index: 2, kind: input, shape index: {}]
  %s3 = inlined_call_operand.vmem [shape: f32[2,16,16,64], index: 3, kind: output, shape index: {}]
  %s4 = sld [smem:[#allocation0]]
  $region45: #{basic_block_forward.2} parent=0
    _
  %s6 = ssub.s32 1, %s4
  %s7 = scalar_select 0, %s6, %s4
  loop: start=0, step=1, limit=4
  $region2: #{basic_block_forward.2} parent=0 // loop_pre_header
    _
  $region3: #{basic_block_forward.2} parent=0 // loop_header
    %s9 = sphi 0, %s13
    %p10 = scmp.ge.s32.totalorder %s9, 4
    %s16 = sphi 0, %s28
    %s17 = sphi 0, %s24
    %s18 = sphi 0, %s16
    %s19 = sphi 0, %s17
    %s20 = sphi 0, %s18
    %s21 = sphi 0, %s19
    %s31 = sphi 0, %s33
    %s34 = sphi 0, %s31
    %s35 = sphi 0, %s34
    %s51 = sphi 0, %s35
    %s57 = sphi 0, %s59
    %s60 = sphi 0, %s57
    %s61 = sphi 0, %s60
    %s77 = sphi 0, %s61
    %s83 = sphi 0, %s85
    %s86 = sphi 0, %s83
    %s87 = sphi 0, %s86
    %s103 = sphi 0, %s87
    %s111 = sphi 0, %s113
    %s114 = sphi 0, %s111
    %s115 = sphi 0, %s114
    %s131 = sphi 0, %s115
  $region4: #{basic_block_forward.2} parent=0 // loop_header_branch
    %12 = sbr.rel (%p10) target = $region8
  $region5: #{basic_block_forward.2} parent=0 // loop_body
    %s14 = ssub.s32 %s9, 1
    %s15 = ssub.s32 %s9, 2
    %s22 = sadd.s32 1, %s17
    %p23 = scmp.ge.s32.totalorder %s22, 1
    %s24 = scalar_select %p23, 0, %s22
    %s25 = sadd.s32 1, %s16
    %s26 = scalar_select %p23, %s25, %s16
    %p27 = scmp.ge.s32.totalorder %s26, 2
    %s28 = scalar_select %p27, 0, %s26
    %s29 = ssub.s32 %s16, %s28
    %p30 = scmp.eq.s32.totalorder %s29, 0
    %s32 = sadd.s32 %s31, 1
    %s33 = scalar_select %p30, %s31, %s32
    %p36 = pneg %p30
    %p37 = scmp.eq.s32.totalorder %s9, 1
    %p38 = por %p36, %p37
    %p39 = scmp.ne.s32.totalorder %s31, %s34
    %p40 = scmp.eq.s32.totalorder %s9, 0
    %p41 = por %p39, %p40
    %p42 = scmp.ne.s32.totalorder %s31, %s34
    %p43 = scmp.eq.s32.totalorder %s14, 1
    %p44 = por %p42, %p43
    %p45 = scmp.ne.s32.totalorder %s34, %s35
    %p46 = scmp.eq.s32.totalorder %s14, 0
    %p47 = por %p45, %p46
    %p48 = scmp.ne.s32.totalorder %s34, %s35
    %p49 = scmp.eq.s32.totalorder %s15, 1
    %p50 = por %p48, %p49
    %p52 = scmp.ne.s32.totalorder %s35, %s51
    %p53 = scmp.eq.s32.totalorder %s15, 0
    %p54 = por %p52, %p53
    %s55 = ssub.s32 %s17, %s24
    %p56 = scmp.eq.s32.totalorder %s55, 0
    %s58 = sadd.s32 %s57, 1
    %s59 = scalar_select %p56, %s57, %s58
    %p62 = pneg %p56
    %p63 = scmp.eq.s32.totalorder %s9, 1
    %p64 = por %p62, %p63
    %p65 = scmp.ne.s32.totalorder %s57, %s60
    %p66 = scmp.eq.s32.totalorder %s9, 0
    %p67 = por %p65, %p66
    %p68 = scmp.ne.s32.totalorder %s57, %s60
    %p69 = scmp.eq.s32.totalorder %s14, 1
    %p70 = por %p68, %p69
    %p71 = scmp.ne.s32.totalorder %s60, %s61
    %p72 = scmp.eq.s32.totalorder %s14, 0
    %p73 = por %p71, %p72
    %p74 = scmp.ne.s32.totalorder %s60, %s61
    %p75 = scmp.eq.s32.totalorder %s15, 1
    %p76 = por %p74, %p75
    %p78 = scmp.ne.s32.totalorder %s61, %s77
    %p79 = scmp.eq.s32.totalorder %s15, 0
    %p80 = por %p78, %p79
    %s81 = ssub.s32 %s17, %s24
    %p82 = scmp.eq.s32.totalorder %s81, 0
    %s84 = sadd.s32 %s83, 1
    %s85 = scalar_select %p82, %s83, %s84
    %p88 = pneg %p82
    %p89 = scmp.eq.s32.totalorder %s9, 1
    %p90 = por %p88, %p89
    %p91 = scmp.ne.s32.totalorder %s83, %s86
    %p92 = scmp.eq.s32.totalorder %s9, 0
    %p93 = por %p91, %p92
    %p94 = scmp.ne.s32.totalorder %s83, %s86
    %p95 = scmp.eq.s32.totalorder %s14, 1
    %p96 = por %p94, %p95
    %p97 = scmp.ne.s32.totalorder %s86, %s87
    %p98 = scmp.eq.s32.totalorder %s14, 0
    %p99 = por %p97, %p98
    %p100 = scmp.ne.s32.totalorder %s86, %s87
    %p101 = scmp.eq.s32.totalorder %s15, 1
    %p102 = por %p100, %p101
    %p104 = scmp.ne.s32.totalorder %s87, %s103
    %p105 = scmp.eq.s32.totalorder %s15, 0
    %p106 = por %p104, %p105
    %s107 = ssub.s32 %s16, %s28
    %s108 = ssub.s32 %s17, %s24
    %s109 = sor.u32 %s107, %s108
    %p110 = scmp.eq.s32.totalorder %s109, 0
    %s112 = sadd.s32 %s111, 1
    %s113 = scalar_select %p110, %s111, %s112
    %p116 = pneg %p110
    %p117 = scmp.eq.s32.totalorder %s9, 1
    %p118 = por %p116, %p117
    %p119 = scmp.ne.s32.totalorder %s111, %s114
    %p120 = scmp.eq.s32.totalorder %s9, 0
    %p121 = por %p119, %p120
    %p122 = scmp.ne.s32.totalorder %s111, %s114
    %p123 = scmp.eq.s32.totalorder %s14, 1
    %p124 = por %p122, %p123
    %p125 = scmp.ne.s32.totalorder %s114, %s115
    %p126 = scmp.eq.s32.totalorder %s14, 0
    %p127 = por %p125, %p126
    %p128 = scmp.ne.s32.totalorder %s114, %s115
    %p129 = scmp.eq.s32.totalorder %s15, 1
    %p130 = por %p128, %p129
    %p132 = scmp.ne.s32.totalorder %s115, %s131
    %p133 = scmp.eq.s32.totalorder %s15, 0
    %p134 = por %p132, %p133
    %p135 = scmp.le.s32.totalorder 1, %s9
    %p136 = scmp.lt.s32.totalorder %s9, 3
    %p137 = pnand %p135, %p136
    %p138 = pneg %p137
    // Predicated region
    $region9: #{basic_block_forward.2} parent=5 // pred_check
      _
    $region10: #{basic_block_forward.2} parent=5 // pred_check_branch
      %140 = sbr.rel (%p137) target = $region12
    $region11: #{basic_block_forward.2} parent=5 // pred_region
      %s141 = ssub.s32 %s9, 1
      // Predicated region
      $region13: #{basic_block_forward.2} parent=11 // pred_check
        %p142 = pneg %p73
      $region14: #{basic_block_forward.2} parent=11 // pred_check_branch
        %144 = sbr.rel (%p142) target = $region16
      $region15: #{basic_block_forward.2} parent=11 // pred_region
        %p145 = scmp.lt.s32.totalorder %s19, 0
        %s146 = scalar_select %p145, %s19, 0
        %s147 = smul.addr %s146, 8
        %s148 = scalar_lea.vmem %s1, %s147
      $region16: #{basic_block_forward.2} parent=11 // pred_fallthru
        _
      // Predicated region
      $region17: #{basic_block_forward.2} parent=11 // pred_check
        %p149 = pneg %p99
      $region18: #{basic_block_forward.2} parent=11 // pred_check_branch
        %151 = sbr.rel (%p149) target = $region20
      $region19: #{basic_block_forward.2} parent=11 // pred_region
        %p152 = scmp.lt.s32.totalorder %s19, 0
        %s153 = scalar_select %p152, %s19, 0
        %s154 = scalar_lea.vmem %s2, %s153
      $region20: #{basic_block_forward.2} parent=11 // pred_fallthru
        _
    $region12: #{basic_block_forward.2} parent=5 // pred_fallthru
      _
    %p155 = scmp.lt.s32.totalorder %s9, 2
    // Predicated region
    $region21: #{basic_block_forward.2} parent=5 // pred_check
      %p156 = pneg %p155
    $region22: #{basic_block_forward.2} parent=5 // pred_check_branch
      %158 = sbr.rel (%p156) target = $region24
    $region23: #{basic_block_forward.2} parent=5 // pred_region
      // Predicated region
      $region25: #{basic_block_forward.2} parent=23 // pred_check
        %p159 = pneg %p41
      $region26: #{basic_block_forward.2} parent=23 // pred_check_branch
        %161 = sbr.rel (%p159) target = $region28
      $region27: #{basic_block_forward.2} parent=23 // pred_region
        %p162 = scmp.lt.s32.totalorder %s16, 1
        %s163 = scalar_select %p162, %s16, 1
        %s164 = smul.addr %s163, 54
        %s165 = smul.addr %s164, 8
        %s166 = scalar_lea.vmem %s0, %s165
      $region28: #{basic_block_forward.2} parent=23 // pred_fallthru
        _
    $region24: #{basic_block_forward.2} parent=5 // pred_fallthru
      _
    %p167 = scmp.le.s32.totalorder 1, %s9
    %p168 = scmp.lt.s32.totalorder %s9, 3
    %p169 = pnand %p167, %p168
    %p170 = pneg %p169
    // Predicated region
    $region29: #{basic_block_forward.2} parent=5 // pred_check
      _
    $region30: #{basic_block_forward.2} parent=5 // pred_check_branch
      %172 = sbr.rel (%p169) target = $region32
    $region31: #{basic_block_forward.2} parent=5 // pred_region
      %s173 = ssub.s32 %s9, 1
      %p174 = scmp.lt.s32.totalorder %s18, 1
      %s175 = scalar_select %p174, %s18, 1
      %s176 = smul.addr %s175, 54
      %s177 = smul.addr %s176, 8
      %s178 = scalar_lea.vmem %s0, %s177
      %p179 = pneg %p47
      %p180 = pneg %p44
      %p181 = scmp.lt.s32.totalorder %s19, 0
      %s182 = scalar_select %p181, %s19, 0
      %s183 = smul.addr %s182, 8
      %s184 = scalar_lea.vmem %s1, %s183
      %p185 = pneg %p73
      %p186 = pneg %p70
      %p187 = scmp.lt.s32.totalorder %s19, 0
      %s188 = scalar_select %p187, %s19, 0
      %s189 = scalar_lea.vmem %s2, %s188
      %p190 = pneg %p99
      %p191 = pneg %p96
      %p192 = pneg %p127
      %p193 = pneg %p124
      %p194 = scmp.lt.s32.totalorder %s18, 1
      %s195 = scalar_select %p194, %s18, 1
      %p196 = scmp.lt.s32.totalorder %s19, 0
      %s197 = scalar_select %p196, %s19, 0
      %s198 = smul.addr %s195, 32
      %s199 = sadd.s32 %s197, %s198
      %s200 = smul.addr %s199, 8
      %s201 = scalar_lea.vmem %s3, %s200
      %p202 = scmp.lt.s32.totalorder %s18, 1
      %s203 = scalar_select %p202, %s18, 1
      %s204 = smul.addr %s203, 54
      %s205 = smul.addr %s204, 8
      %s206 = scalar_lea.vmem %s0, %s205
      %p207 = scmp.lt.s32.totalorder %s19, 0
      %s208 = scalar_select %p207, %s19, 0
      %s209 = smul.addr %s208, 8
      %s210 = scalar_lea.vmem %s1, %s209
      %p211 = scmp.lt.s32.totalorder %s19, 0
      %s212 = scalar_select %p211, %s19, 0
      %s213 = scalar_lea.vmem %s2, %s212
      %p214 = scmp.lt.s32.totalorder %s18, 1
      %s215 = scalar_select %p214, %s18, 1
      %p216 = scmp.lt.s32.totalorder %s19, 0
      %s217 = scalar_select %p216, %s19, 0
      %s218 = smul.addr %s215, 32
      %s219 = sadd.s32 %s217, %s218
      %s220 = smul.addr %s219, 8
      %s221 = scalar_lea.vmem %s3, %s220
      %v222 = vld [vmem:[%s206] sm:$0xff]
      %v223 = vld [vmem:[%s206 + $0x8] sm:$0xff]
      %v224 = vld [vmem:[%s206 + $0x10] sm:$0x3]
      %v225 = vld [vmem:[%s206 + $0x18] sm:$0xff]
      %v226 = vld [vmem:[%s206 + $0x20] sm:$0xff]
      %v227 = vld [vmem:[%s206 + $0x28] sm:$0x3]
      %v228 = vld [vmem:[%s206 + $0x30] sm:$0xff]
      %v229 = vld [vmem:[%s206 + $0x38] sm:$0xff]
      %v230 = vld [vmem:[%s206 + $0x40] sm:$0x3]
      %v231 = vld [vmem:[%s206 + $0x48] sm:$0xff]
      %v232 = vld [vmem:[%s206 + $0x50] sm:$0xff]
      %v233 = vld [vmem:[%s206 + $0x58] sm:$0x3]
      %v234 = vld [vmem:[%s206 + $0x60] sm:$0xff]
      %v235 = vld [vmem:[%s206 + $0x68] sm:$0xff]
      %v236 = vld [vmem:[%s206 + $0x70] sm:$0x3]
      %v237 = vld [vmem:[%s206 + $0x78] sm:$0xff]
      %v238 = vld [vmem:[%s206 + $0x80] sm:$0xff]
      %v239 = vld [vmem:[%s206 + $0x88] sm:$0x3]
      %v240 = vld [vmem:[%s206 + $0x90] sm:$0xff]
      %v241 = vld [vmem:[%s206 + $0x98] sm:$0xff]
      %v242 = vld [vmem:[%s206 + $0xa0] sm:$0x3]
      %v243 = vld [vmem:[%s206 + $0xa8] sm:$0xff]
      %v244 = vld [vmem:[%s206 + $0xb0] sm:$0xff]
      %v245 = vld [vmem:[%s206 + $0xb8] sm:$0x3]
      %v246 = vld [vmem:[%s206 + $0xc0] sm:$0xff]
      %v247 = vld [vmem:[%s206 + $0xc8] sm:$0xff]
      %v248 = vld [vmem:[%s206 + $0xd0] sm:$0x3]
      %v249 = vld [vmem:[%s206 + $0xd8] sm:$0xff]
      %v250 = vld [vmem:[%s206 + $0xe0] sm:$0xff]
      %v251 = vld [vmem:[%s206 + $0xe8] sm:$0x3]
      %v252 = vld [vmem:[%s206 + $0xf0] sm:$0xff]
      %v253 = vld [vmem:[%s206 + $0xf8] sm:$0xff]
      %v254 = vld [vmem:[%s206 + $0x100] sm:$0x3]
      %v255 = vld [vmem:[%s206 + $0x108] sm:$0xff]
      %v256 = vld [vmem:[%s206 + $0x110] sm:$0xff]
      %v257 = vld [vmem:[%s206 + $0x118] sm:$0x3]
      %v258 = vld [vmem:[%s206 + $0x120] sm:$0xff]
      %v259 = vld [vmem:[%s206 + $0x128] sm:$0xff]
      %v260 = vld [vmem:[%s206 + $0x130] sm:$0x3]
      %v261 = vld [vmem:[%s206 + $0x138] sm:$0xff]
      %v262 = vld [vmem:[%s206 + $0x140] sm:$0xff]
      %v263 = vld [vmem:[%s206 + $0x148] sm:$0x3]
      %v264 = vld [vmem:[%s206 + $0x150] sm:$0xff]
      %v265 = vld [vmem:[%s206 + $0x158] sm:$0xff]
      %v266 = vld [vmem:[%s206 + $0x160] sm:$0x3]
      %v267 = vld [vmem:[%s206 + $0x168] sm:$0xff]
      %v268 = vld [vmem:[%s206 + $0x170] sm:$0xff]
      %v269 = vld [vmem:[%s206 + $0x178] sm:$0x3]
      %v270 = vld [vmem:[%s206 + $0x180] sm:$0xff]
      %v271 = vld [vmem:[%s206 + $0x188] sm:$0xff]
      %v272 = vld [vmem:[%s206 + $0x190] sm:$0x3]
      %v273 = vld [vmem:[%s206 + $0x198] sm:$0xff]
      %v274 = vld [vmem:[%s206 + $0x1a0] sm:$0xff]
      %v275 = vld [vmem:[%s206 + $0x1a8] sm:$0x3]
      %v276 = vld [vmem:[%s210] sm:$0xff]
      %v277 = vld [vmem:[%s210 + $0x8] sm:$0xff]
      %v278 = vld [vmem:[%s210 + $0x10] sm:$0xff]
      %v279 = vld [vmem:[%s210 + $0x18] sm:$0xff]
      %v280 = vld [vmem:[%s210 + $0x20] sm:$0xff]
      %v281 = vld [vmem:[%s210 + $0x28] sm:$0xff]
      %v282 = vld [vmem:[%s210 + $0x30] sm:$0xff]
      %v283 = vld [vmem:[%s210 + $0x38] sm:$0xff]
      %vm332 = vcmask 1046528
      %v333 = vrot.slane %v222, 1
      %v334 = vrot.slane %v223, 1
      %v335 = vsel %vm332, %v333, %v334
      %v336 = vrot.slane %v224, 1
      %v337 = vsel %vm332, %v334, %v336
      %v338 = vrot.slane %v225, 1
      %v339 = vrot.slane %v226, 1
      %v340 = vsel %vm332, %v338, %v339
      %v341 = vrot.slane %v227, 1
      %v342 = vsel %vm332, %v339, %v341
      %v343 = vrot.slane %v228, 1
      %v344 = vrot.slane %v229, 1
      %v345 = vsel %vm332, %v343, %v344
      %v346 = vrot.slane %v230, 1
      %v347 = vsel %vm332, %v344, %v346
      %v348 = vrot.slane %v231, 1
      %v349 = vrot.slane %v232, 1
      %v350 = vsel %vm332, %v348, %v349
      %v351 = vrot.slane %v233, 1
      %v352 = vsel %vm332, %v349, %v351
      %v353 = vrot.slane %v234, 1
      %v354 = vrot.slane %v235, 1
      %v355 = vsel %vm332, %v353, %v354
      %v356 = vrot.slane %v236, 1
      %v357 = vsel %vm332, %v354, %v356
      %v358 = vrot.slane %v237, 1
      %v359 = vrot.slane %v238, 1
      %v360 = vsel %vm332, %v358, %v359
      %v361 = vrot.slane %v239, 1
      %v362 = vsel %vm332, %v359, %v361
      %v363 = vrot.slane %v240, 1
      %v364 = vrot.slane %v241, 1
      %v365 = vsel %vm332, %v363, %v364
      %v366 = vrot.slane %v242, 1
      %v367 = vsel %vm332, %v364, %v366
      %v368 = vrot.slane %v243, 1
      %v369 = vrot.slane %v244, 1
      %v370 = vsel %vm332, %v368, %v369
      %v371 = vrot.slane %v245, 1
      %v372 = vsel %vm332, %v369, %v371
      %v373 = vrot.slane %v246, 1
      %v374 = vrot.slane %v247, 1
      %v375 = vsel %vm332, %v373, %v374
      %v376 = vrot.slane %v248, 1
      %v377 = vsel %vm332, %v374, %v376
      %v378 = vrot.slane %v249, 1
      %v379 = vrot.slane %v250, 1
      %v380 = vsel %vm332, %v378, %v379
      %v381 = vrot.slane %v251, 1
      %v382 = vsel %vm332, %v379, %v381
      %v383 = vrot.slane %v252, 1
      %v384 = vrot.slane %v253, 1
      %v385 = vsel %vm332, %v383, %v384
      %v386 = vrot.slane %v254, 1
      %v387 = vsel %vm332, %v384, %v386
      %v388 = vrot.slane %v255, 1
      %v389 = vrot.slane %v256, 1
      %v390 = vsel %vm332, %v388, %v389
      %v391 = vrot.slane %v257, 1
      %v392 = vsel %vm332, %v389, %v391
      %v393 = vrot.slane %v258, 1
      %v394 = vrot.slane %v259, 1
      %v395 = vsel %vm332, %v393, %v394
      %v396 = vrot.slane %v260, 1
      %v397 = vsel %vm332, %v394, %v396
      %v398 = vrot.slane %v261, 1
      %v399 = vrot.slane %v262, 1
      %v400 = vsel %vm332, %v398, %v399
      %v401 = vrot.slane %v263, 1
      %v402 = vsel %vm332, %v399, %v401
      %v403 = vrot.slane %v264, 1
      %v404 = vrot.slane %v265, 1
      %v405 = vsel %vm332, %v403, %v404
      %v406 = vrot.slane %v266, 1
      %v407 = vsel %vm332, %v404, %v406
      %v408 = vrot.slane %v267, 1
      %v409 = vrot.slane %v268, 1
      %v410 = vsel %vm332, %v408, %v409
      %v411 = vrot.slane %v269, 1
      %v412 = vsel %vm332, %v409, %v411
      %s413 = scalar_lea.vmem %s210, 64
      %v414 = vld [vmem:[%s413] sm:$0xff]
      %v415 = vld [vmem:[%s413 + $0x8] sm:$0xff]
      %v416 = vld [vmem:[%s413 + $0x10] sm:$0xff]
      %v417 = vld [vmem:[%s413 + $0x18] sm:$0xff]
      %v418 = vld [vmem:[%s413 + $0x20] sm:$0xff]
      %v419 = vld [vmem:[%s413 + $0x28] sm:$0xff]
      %v420 = vld [vmem:[%s413 + $0x30] sm:$0xff]
      %v421 = vld [vmem:[%s413 + $0x38] sm:$0xff]
      %vm422 = vcmask 523264
      %v423 = vsel %vm422, %v335, 0
      %v425 = vsel %vm422, %v337, 0
      %v427 = vsel %vm422, %v340, 0
      %v429 = vsel %vm422, %v342, 0
      %v431 = vsel %vm422, %v345, 0
      %v433 = vsel %vm422, %v347, 0
      %v435 = vsel %vm422, %v350, 0
      %v437 = vsel %vm422, %v352, 0
      %v439 = vsel %vm422, %v355, 0
      %v441 = vsel %vm422, %v357, 0
      %v443 = vsel %vm422, %v360, 0
      %v445 = vsel %vm422, %v362, 0
      %v447 = vsel %vm422, %v365, 0
      %v449 = vsel %vm422, %v367, 0
      %v451 = vsel %vm422, %v370, 0
      %v453 = vsel %vm422, %v372, 0
      %v455 = vsel %vm422, %v375, 0
      %v457 = vsel %vm422, %v377, 0
      %v459 = vsel %vm422, %v380, 0
      %v461 = vsel %vm422, %v382, 0
      %v463 = vsel %vm422, %v385, 0
      %v465 = vsel %vm422, %v387, 0
      %v467 = vsel %vm422, %v390, 0
      %v469 = vsel %vm422, %v392, 0
      %v471 = vsel %vm422, %v395, 0
      %v473 = vsel %vm422, %v397, 0
      %v475 = vsel %vm422, %v400, 0
      %v477 = vsel %vm422, %v402, 0
      %v479 = vsel %vm422, %v405, 0
      %v481 = vsel %vm422, %v407, 0
      %v483 = vsel %vm422, %v410, 0
      %v485 = vsel %vm422, %v412, 0
      %487 = vmatprep.subr.mxu0 0.0
      %488 = vmatpush1.msra.mxu0 0.0
      %489 = vmatprep.subr.mxu0 0.0
      %490 = vmatpush1.msra.mxu0 0.0
      %491 = vmatprep.subr.mxu0 0.0
      %492 = vmatpush1.msra.mxu0 0.0
      %493 = vmatprep.subr.mxu0 0.0
      %494 = vmatpush1.msra.mxu0 0.0
      %495 = vmatprep.subr.mxu0 0.0
      %496 = vmatpush1.msra.mxu0 0.0
      %497 = vmatprep.subr.mxu0 0.0
      %498 = vmatpush1.msra.mxu0 0.0
      %499 = vmatprep.subr.mxu0 0.0
      %500 = vmatpush1.msra.mxu0 0.0
      %501 = vmatprep.subr.mxu0 0.0
      %502 = vmatpush1.msra.mxu0 0.0
      %503 = vmatprep.subr.mxu0 0.0
      %504 = vmatpush1.msra.mxu0 %v421
      %505 = vmatprep.subr.mxu0 0.0
      %506 = vmatpush1.msra.mxu0 %v420
      %507 = vmatprep.subr.mxu0 0.0
      %508 = vmatpush1.msra.mxu0 %v419
      %509 = vmatprep.subr.mxu0 0.0
      %510 = vmatpush1.msra.mxu0 %v418
      %511 = vmatprep.subr.mxu0 0.0
      %512 = vmatpush1.msra.mxu0 %v417
      %513 = vmatprep.subr.mxu0 0.0
      %514 = vmatpush1.msra.mxu0 %v416
      %515 = vmatprep.subr.mxu0 0.0
      %516 = vmatpush1.msra.mxu0 %v415
      %517 = vmatprep.subr.mxu0 0.0
      %518 = vmatpush1.msra.mxu0 %v414
      %519 = vmatprep.subr.mxu0 0.0
      %520 = vmatpush2.msra.mxu0 0.0
      %521 = vmatprep.subr.mxu0 0.0
      %522 = vmatpush2.msra.mxu0 0.0
      %523 = vmatprep.subr.mxu0 0.0
      %524 = vmatpush2.msra.mxu0 0.0
      %525 = vmatprep.subr.mxu0 0.0
      %526 = vmatpush2.msra.mxu0 0.0
      %527 = vmatprep.subr.mxu0 0.0
      %528 = vmatpush2.msra.mxu0 0.0
      %529 = vmatprep.subr.mxu0 0.0
      %530 = vmatpush2.msra.mxu0 0.0
      %531 = vmatprep.subr.mxu0 0.0
      %532 = vmatpush2.msra.mxu0 0.0
      %533 = vmatprep.subr.mxu0 0.0
      %534 = vmatpush2.msra.mxu0 0.0
      %535 = vmatprep.subr.mxu0 0.0
      %536 = vmatpush2.msra.mxu0 0.0
      %537 = vmatprep.subr.mxu0 0.0
      %538 = vmatpush2.msra.mxu0 0.0
      %539 = vmatprep.subr.mxu0 0.0
      %540 = vmatpush2.msra.mxu0 0.0
      %541 = vmatprep.subr.mxu0 0.0
      %542 = vmatpush2.msra.mxu0 0.0
      %543 = vmatprep.subr.mxu0 0.0
      %544 = vmatpush2.msra.mxu0 0.0
      %545 = vmatprep.subr.mxu0 0.0
      %546 = vmatpush2.msra.mxu0 0.0
      %547 = vmatprep.subr.mxu0 0.0
      %548 = vmatpush2.msra.mxu0 0.0
      %549 = vmatprep.subr.mxu0 0.0
      %550 = vmatpush2.msra.mxu0 0.0
      %551 = vmatprep.mubr.f32.mxu0 0.0
      %552 = vmatmul.mubr.f32.gmra.mxu0 %v423
      %v553 = vpop.f32.mrf.mxu0
      %v554 = vadd.f32 0.0, %v553
      %v555 = vpop.f32.mrf.mxu0
      %556 = vmatprep.mubr.f32.mxu0 0.0
      %557 = vmatmul.mubr.f32.gmra.mxu0 %v425
      %v558 = vpop.f32.mrf.mxu0
      %v559 = vadd.f32 0.0, %v558
      %v560 = vpop.f32.mrf.mxu0
      %561 = vmatprep.mubr.f32.mxu0 0.0
      %562 = vmatmul.mubr.f32.gmra.mxu0 %v427
      %v563 = vpop.f32.mrf.mxu0
      %v564 = vadd.f32 0.0, %v563
      %v565 = vpop.f32.mrf.mxu0
      %566 = vmatprep.mubr.f32.mxu0 0.0
      %567 = vmatmul.mubr.f32.gmra.mxu0 %v429
      %v568 = vpop.f32.mrf.mxu0
      %v569 = vadd.f32 0.0, %v568
      %v570 = vpop.f32.mrf.mxu0
      %571 = vmatprep.mubr.f32.mxu0 0.0
      %572 = vmatmul.mubr.f32.gmra.mxu0 %v431
      %v573 = vpop.f32.mrf.mxu0
      %v574 = vadd.f32 0.0, %v573
      %v575 = vpop.f32.mrf.mxu0
      %576 = vmatprep.mubr.f32.mxu0 0.0
      %577 = vmatmul.mubr.f32.gmra.mxu0 %v433
      %v578 = vpop.f32.mrf.mxu0
      %v579 = vadd.f32 0.0, %v578
      %v580 = vpop.f32.mrf.mxu0
      %581 = vmatprep.mubr.f32.mxu0 0.0
      %582 = vmatmul.mubr.f32.gmra.mxu0 %v435
      %v583 = vpop.f32.mrf.mxu0
      %v584 = vadd.f32 0.0, %v583
      %v585 = vpop.f32.mrf.mxu0
      %586 = vmatprep.mubr.f32.mxu0 0.0
      %587 = vmatmul.mubr.f32.gmra.mxu0 %v437
      %v588 = vpop.f32.mrf.mxu0
      %v589 = vadd.f32 0.0, %v588
      %v590 = vpop.f32.mrf.mxu0
      %591 = vmatprep.mubr.f32.mxu0 0.0
      %592 = vmatmul.mubr.f32.gmra.mxu0 %v439
      %v593 = vpop.f32.mrf.mxu0
      %v594 = vadd.f32 0.0, %v593
      %v595 = vpop.f32.mrf.mxu0
      %596 = vmatprep.mubr.f32.mxu0 0.0
      %597 = vmatmul.mubr.f32.gmra.mxu0 %v441
      %v598 = vpop.f32.mrf.mxu0
      %v599 = vadd.f32 0.0, %v598
      %v600 = vpop.f32.mrf.mxu0
      %601 = vmatprep.mubr.f32.mxu0 0.0
      %602 = vmatmul.mubr.f32.gmra.mxu0 %v443
      %v603 = vpop.f32.mrf.mxu0
      %v604 = vadd.f32 0.0, %v603
      %v605 = vpop.f32.mrf.mxu0
      %606 = vmatprep.mubr.f32.mxu0 0.0
      %607 = vmatmul.mubr.f32.gmra.mxu0 %v445
      %v608 = vpop.f32.mrf.mxu0
      %v609 = vadd.f32 0.0, %v608
      %v610 = vpop.f32.mrf.mxu0
      %611 = vmatprep.mubr.f32.mxu0 0.0
      %612 = vmatmul.mubr.f32.gmra.mxu0 %v447
      %v613 = vpop.f32.mrf.mxu0
      %v614 = vadd.f32 0.0, %v613
      %v615 = vpop.f32.mrf.mxu0
      %616 = vmatprep.mubr.f32.mxu0 0.0
      %617 = vmatmul.mubr.f32.gmra.mxu0 %v449
      %v618 = vpop.f32.mrf.mxu0
      %v619 = vadd.f32 0.0, %v618
      %v620 = vpop.f32.mrf.mxu0
      %621 = vmatprep.mubr.f32.mxu0 0.0
      %622 = vmatmul.mubr.f32.gmra.mxu0 %v451
      %v623 = vpop.f32.mrf.mxu0
      %v624 = vadd.f32 0.0, %v623
      %v625 = vpop.f32.mrf.mxu0
      %626 = vmatprep.mubr.f32.mxu0 0.0
      %627 = vmatmul.mubr.f32.gmra.mxu0 %v453
      %v628 = vpop.f32.mrf.mxu0
      %v629 = vadd.f32 0.0, %v628
      %v630 = vpop.f32.mrf.mxu0
      %631 = vmatprep.mubr.f32.mxu0 0.0
      %632 = vmatmul.mubr.f32.gmra.mxu0 %v455
      %v633 = vpop.f32.mrf.mxu0
      %v634 = vadd.f32 0.0, %v633
      %v635 = vpop.f32.mrf.mxu0
      %636 = vmatprep.mubr.f32.mxu0 0.0
      %637 = vmatmul.mubr.f32.gmra.mxu0 %v457
      %v638 = vpop.f32.mrf.mxu0
      %v639 = vadd.f32 0.0, %v638
      %v640 = vpop.f32.mrf.mxu0
      %641 = vmatprep.mubr.f32.mxu0 0.0
      %642 = vmatmul.mubr.f32.gmra.mxu0 %v459
      %v643 = vpop.f32.mrf.mxu0
      %v644 = vadd.f32 0.0, %v643
      %v645 = vpop.f32.mrf.mxu0
      %646 = vmatprep.mubr.f32.mxu0 0.0
      %647 = vmatmul.mubr.f32.gmra.mxu0 %v461
      %v648 = vpop.f32.mrf.mxu0
      %v649 = vadd.f32 0.0, %v648
      %v650 = vpop.f32.mrf.mxu0
      %651 = vmatprep.mubr.f32.mxu0 0.0
      %652 = vmatmul.mubr.f32.gmra.mxu0 %v463
      %v653 = vpop.f32.mrf.mxu0
      %v654 = vadd.f32 0.0, %v653
      %v655 = vpop.f32.mrf.mxu0
      %656 = vmatprep.mubr.f32.mxu0 0.0
      %657 = vmatmul.mubr.f32.gmra.mxu0 %v465
      %v658 = vpop.f32.mrf.mxu0
      %v659 = vadd.f32 0.0, %v658
      %v660 = vpop.f32.mrf.mxu0
      %661 = vmatprep.mubr.f32.mxu0 0.0
      %662 = vmatmul.mubr.f32.gmra.mxu0 %v467
      %v663 = vpop.f32.mrf.mxu0
      %v664 = vadd.f32 0.0, %v663
      %v665 = vpop.f32.mrf.mxu0
      %666 = vmatprep.mubr.f32.mxu0 0.0
      %667 = vmatmul.mubr.f32.gmra.mxu0 %v469
      %v668 = vpop.f32.mrf.mxu0
      %v669 = vadd.f32 0.0, %v668
      %v670 = vpop.f32.mrf.mxu0
      %671 = vmatprep.mubr.f32.mxu0 0.0
      %672 = vmatmul.mubr.f32.gmra.mxu0 %v471
      %v673 = vpop.f32.mrf.mxu0
      %v674 = vadd.f32 0.0, %v673
      %v675 = vpop.f32.mrf.mxu0
      %676 = vmatprep.mubr.f32.mxu0 0.0
      %677 = vmatmul.mubr.f32.gmra.mxu0 %v473
      %v678 = vpop.f32.mrf.mxu0
      %v679 = vadd.f32 0.0, %v678
      %v680 = vpop.f32.mrf.mxu0
      %681 = vmatprep.mubr.f32.mxu0 0.0
      %682 = vmatmul.mubr.f32.gmra.mxu0 %v475
      %v683 = vpop.f32.mrf.mxu0
      %v684 = vadd.f32 0.0, %v683
      %v685 = vpop.f32.mrf.mxu0
      %686 = vmatprep.mubr.f32.mxu0 0.0
      %687 = vmatmul.mubr.f32.gmra.mxu0 %v477
      %v688 = vpop.f32.mrf.mxu0
      %v689 = vadd.f32 0.0, %v688
      %v690 = vpop.f32.mrf.mxu0
      %691 = vmatprep.mubr.f32.mxu0 0.0
      %692 = vmatmul.mubr.f32.gmra.mxu0 %v479
      %v693 = vpop.f32.mrf.mxu0
      %v694 = vadd.f32 0.0, %v693
      %v695 = vpop.f32.mrf.mxu0
      %696 = vmatprep.mubr.f32.mxu0 0.0
      %697 = vmatmul.mubr.f32.gmra.mxu0 %v481
      %v698 = vpop.f32.mrf.mxu0
      %v699 = vadd.f32 0.0, %v698
      %v700 = vpop.f32.mrf.mxu0
      %701 = vmatprep.mubr.f32.mxu0 0.0
      %702 = vmatmul.mubr.f32.gmra.mxu0 %v483
      %v703 = vpop.f32.mrf.mxu0
      %v704 = vadd.f32 0.0, %v703
      %v705 = vpop.f32.mrf.mxu0
      %706 = vmatprep.mubr.f32.mxu0 0.0
      %707 = vmatmul.mubr.f32.gmra.mxu0 %v485
      %v708 = vpop.f32.mrf.mxu0
      %v709 = vadd.f32 0.0, %v708
      %v710 = vpop.f32.mrf.mxu0
      %711 = vdwg.mxu0
      %v712 = vsel %vm422, %v222, 0
      %v714 = vsel %vm422, %v223, 0
      %v716 = vsel %vm422, %v225, 0
      %v718 = vsel %vm422, %v226, 0
      %v720 = vsel %vm422, %v228, 0
      %v722 = vsel %vm422, %v229, 0
      %v724 = vsel %vm422, %v231, 0
      %v726 = vsel %vm422, %v232, 0
      %v728 = vsel %vm422, %v234, 0
      %v730 = vsel %vm422, %v235, 0
      %v732 = vsel %vm422, %v237, 0
      %v734 = vsel %vm422, %v238, 0
      %v736 = vsel %vm422, %v240, 0
      %v738 = vsel %vm422, %v241, 0
      %v740 = vsel %vm422, %v243, 0
      %v742 = vsel %vm422, %v244, 0
      %v744 = vsel %vm422, %v246, 0
      %v746 = vsel %vm422, %v247, 0
      %v748 = vsel %vm422, %v249, 0
      %v750 = vsel %vm422, %v250, 0
      %v752 = vsel %vm422, %v252, 0
      %v754 = vsel %vm422, %v253, 0
      %v756 = vsel %vm422, %v255, 0
      %v758 = vsel %vm422, %v256, 0
      %v760 = vsel %vm422, %v258, 0
      %v762 = vsel %vm422, %v259, 0
      %v764 = vsel %vm422, %v261, 0
      %v766 = vsel %vm422, %v262, 0
      %v768 = vsel %vm422, %v264, 0
      %v770 = vsel %vm422, %v265, 0
      %v772 = vsel %vm422, %v267, 0
      %v774 = vsel %vm422, %v268, 0
      %776 = vmatprep.subr.mxu0 0.0
      %777 = vmatpush1.msra.mxu0 0.0
      %778 = vmatprep.subr.mxu0 0.0
      %779 = vmatpush1.msra.mxu0 0.0
      %780 = vmatprep.subr.mxu0 0.0
      %781 = vmatpush1.msra.mxu0 0.0
      %782 = vmatprep.subr.mxu0 0.0
      %783 = vmatpush1.msra.mxu0 0.0
      %784 = vmatprep.subr.mxu0 0.0
      %785 = vmatpush1.msra.mxu0 0.0
      %786 = vmatprep.subr.mxu0 0.0
      %787 = vmatpush1.msra.mxu0 0.0
      %788 = vmatprep.subr.mxu0 0.0
      %789 = vmatpush1.msra.mxu0 0.0
      %790 = vmatprep.subr.mxu0 0.0
      %791 = vmatpush1.msra.mxu0 0.0
      %792 = vmatprep.subr.mxu0 0.0
      %793 = vmatpush1.msra.mxu0 %v283
      %794 = vmatprep.subr.mxu0 0.0
      %795 = vmatpush1.msra.mxu0 %v282
      %796 = vmatprep.subr.mxu0 0.0
      %797 = vmatpush1.msra.mxu0 %v281
      %798 = vmatprep.subr.mxu0 0.0
      %799 = vmatpush1.msra.mxu0 %v280
      %800 = vmatprep.subr.mxu0 0.0
      %801 = vmatpush1.msra.mxu0 %v279
      %802 = vmatprep.subr.mxu0 0.0
      %803 = vmatpush1.msra.mxu0 %v278
      %804 = vmatprep.subr.mxu0 0.0
      %805 = vmatpush1.msra.mxu0 %v277
      %806 = vmatprep.subr.mxu0 0.0
      %807 = vmatpush1.msra.mxu0 %v276
      %808 = vmatprep.subr.mxu0 0.0
      %809 = vmatpush2.msra.mxu0 0.0
      %810 = vmatprep.subr.mxu0 0.0
      %811 = vmatpush2.msra.mxu0 0.0
      %812 = vmatprep.subr.mxu0 0.0
      %813 = vmatpush2.msra.mxu0 0.0
      %814 = vmatprep.subr.mxu0 0.0
      %815 = vmatpush2.msra.mxu0 0.0
      %816 = vmatprep.subr.mxu0 0.0
      %817 = vmatpush2.msra.mxu0 0.0
      %818 = vmatprep.subr.mxu0 0.0
      %819 = vmatpush2.msra.mxu0 0.0
      %820 = vmatprep.subr.mxu0 0.0
      %821 = vmatpush2.msra.mxu0 0.0
      %822 = vmatprep.subr.mxu0 0.0
      %823 = vmatpush2.msra.mxu0 0.0
      %824 = vmatprep.subr.mxu0 0.0
      %825 = vmatpush2.msra.mxu0 0.0
      %826 = vmatprep.subr.mxu0 0.0
      %827 = vmatpush2.msra.mxu0 0.0
      %828 = vmatprep.subr.mxu0 0.0
      %829 = vmatpush2.msra.mxu0 0.0
      %830 = vmatprep.subr.mxu0 0.0
      %831 = vmatpush2.msra.mxu0 0.0
      %832 = vmatprep.subr.mxu0 0.0
      %833 = vmatpush2.msra.mxu0 0.0
      %834 = vmatprep.subr.mxu0 0.0
      %835 = vmatpush2.msra.mxu0 0.0
      %836 = vmatprep.subr.mxu0 0.0
      %837 = vmatpush2.msra.mxu0 0.0
      %838 = vmatprep.subr.mxu0 0.0
      %839 = vmatpush2.msra.mxu0 0.0
      %840 = vmatprep.mubr.f32.mxu0 0.0
      %841 = vmatmul.mubr.f32.gmra.mxu0 %v712
      %v842 = vpop.f32.mrf.mxu0
      %v843 = vadd.f32 %v554, %v842
      %v844 = vpop.f32.mrf.mxu0
      %845 = vmatprep.mubr.f32.mxu0 0.0
      %846 = vmatmul.mubr.f32.gmra.mxu0 %v714
      %v847 = vpop.f32.mrf.mxu0
      %v848 = vadd.f32 %v559, %v847
      %v849 = vpop.f32.mrf.mxu0
      %850 = vmatprep.mubr.f32.mxu0 0.0
      %851 = vmatmul.mubr.f32.gmra.mxu0 %v716
      %v852 = vpop.f32.mrf.mxu0
      %v853 = vadd.f32 %v564, %v852
      %v854 = vpop.f32.mrf.mxu0
      %855 = vmatprep.mubr.f32.mxu0 0.0
      %856 = vmatmul.mubr.f32.gmra.mxu0 %v718
      %v857 = vpop.f32.mrf.mxu0
      %v858 = vadd.f32 %v569, %v857
      %v859 = vpop.f32.mrf.mxu0
      %860 = vmatprep.mubr.f32.mxu0 0.0
      %861 = vmatmul.mubr.f32.gmra.mxu0 %v720
      %v862 = vpop.f32.mrf.mxu0
      %v863 = vadd.f32 %v574, %v862
      %v864 = vpop.f32.mrf.mxu0
      %865 = vmatprep.mubr.f32.mxu0 0.0
      %866 = vmatmul.mubr.f32.gmra.mxu0 %v722
      %v867 = vpop.f32.mrf.mxu0
      %v868 = vadd.f32 %v579, %v867
      %v869 = vpop.f32.mrf.mxu0
      %870 = vmatprep.mubr.f32.mxu0 0.0
      %871 = vmatmul.mubr.f32.gmra.mxu0 %v724
      %v872 = vpop.f32.mrf.mxu0
      %v873 = vadd.f32 %v584, %v872
      %v874 = vpop.f32.mrf.mxu0
      %875 = vmatprep.mubr.f32.mxu0 0.0
      %876 = vmatmul.mubr.f32.gmra.mxu0 %v726
      %v877 = vpop.f32.mrf.mxu0
      %v878 = vadd.f32 %v589, %v877
      %v879 = vpop.f32.mrf.mxu0
      %880 = vmatprep.mubr.f32.mxu0 0.0
      %881 = vmatmul.mubr.f32.gmra.mxu0 %v728
      %v882 = vpop.f32.mrf.mxu0
      %v883 = vadd.f32 %v594, %v882
      %v884 = vpop.f32.mrf.mxu0
      %885 = vmatprep.mubr.f32.mxu0 0.0
      %886 = vmatmul.mubr.f32.gmra.mxu0 %v730
      %v887 = vpop.f32.mrf.mxu0
      %v888 = vadd.f32 %v599, %v887
      %v889 = vpop.f32.mrf.mxu0
      %890 = vmatprep.mubr.f32.mxu0 0.0
      %891 = vmatmul.mubr.f32.gmra.mxu0 %v732
      %v892 = vpop.f32.mrf.mxu0
      %v893 = vadd.f32 %v604, %v892
      %v894 = vpop.f32.mrf.mxu0
      %895 = vmatprep.mubr.f32.mxu0 0.0
      %896 = vmatmul.mubr.f32.gmra.mxu0 %v734
      %v897 = vpop.f32.mrf.mxu0
      %v898 = vadd.f32 %v609, %v897
      %v899 = vpop.f32.mrf.mxu0
      %900 = vmatprep.mubr.f32.mxu0 0.0
      %901 = vmatmul.mubr.f32.gmra.mxu0 %v736
      %v902 = vpop.f32.mrf.mxu0
      %v903 = vadd.f32 %v614, %v902
      %v904 = vpop.f32.mrf.mxu0
      %905 = vmatprep.mubr.f32.mxu0 0.0
      %906 = vmatmul.mubr.f32.gmra.mxu0 %v738
      %v907 = vpop.f32.mrf.mxu0
      %v908 = vadd.f32 %v619, %v907
      %v909 = vpop.f32.mrf.mxu0
      %910 = vmatprep.mubr.f32.mxu0 0.0
      %911 = vmatmul.mubr.f32.gmra.mxu0 %v740
      %v912 = vpop.f32.mrf.mxu0
      %v913 = vadd.f32 %v624, %v912
      %v914 = vpop.f32.mrf.mxu0
      %915 = vmatprep.mubr.f32.mxu0 0.0
      %916 = vmatmul.mubr.f32.gmra.mxu0 %v742
      %v917 = vpop.f32.mrf.mxu0
      %v918 = vadd.f32 %v629, %v917
      %v919 = vpop.f32.mrf.mxu0
      %920 = vmatprep.mubr.f32.mxu0 0.0
      %921 = vmatmul.mubr.f32.gmra.mxu0 %v744
      %v922 = vpop.f32.mrf.mxu0
      %v923 = vadd.f32 %v634, %v922
      %v924 = vpop.f32.mrf.mxu0
      %925 = vmatprep.mubr.f32.mxu0 0.0
      %926 = vmatmul.mubr.f32.gmra.mxu0 %v746
      %v927 = vpop.f32.mrf.mxu0
      %v928 = vadd.f32 %v639, %v927
      %v929 = vpop.f32.mrf.mxu0
      %930 = vmatprep.mubr.f32.mxu0 0.0
      %931 = vmatmul.mubr.f32.gmra.mxu0 %v748
      %v932 = vpop.f32.mrf.mxu0
      %v933 = vadd.f32 %v644, %v932
      %v934 = vpop.f32.mrf.mxu0
      %935 = vmatprep.mubr.f32.mxu0 0.0
      %936 = vmatmul.mubr.f32.gmra.mxu0 %v750
      %v937 = vpop.f32.mrf.mxu0
      %v938 = vadd.f32 %v649, %v937
      %v939 = vpop.f32.mrf.mxu0
      %940 = vmatprep.mubr.f32.mxu0 0.0
      %941 = vmatmul.mubr.f32.gmra.mxu0 %v752
      %v942 = vpop.f32.mrf.mxu0
      %v943 = vadd.f32 %v654, %v942
      %v944 = vpop.f32.mrf.mxu0
      %945 = vmatprep.mubr.f32.mxu0 0.0
      %946 = vmatmul.mubr.f32.gmra.mxu0 %v754
      %v947 = vpop.f32.mrf.mxu0
      %v948 = vadd.f32 %v659, %v947
      %v949 = vpop.f32.mrf.mxu0
      %950 = vmatprep.mubr.f32.mxu0 0.0
      %951 = vmatmul.mubr.f32.gmra.mxu0 %v756
      %v952 = vpop.f32.mrf.mxu0
      %v953 = vadd.f32 %v664, %v952
      %v954 = vpop.f32.mrf.mxu0
      %955 = vmatprep.mubr.f32.mxu0 0.0
      %956 = vmatmul.mubr.f32.gmra.mxu0 %v758
      %v957 = vpop.f32.mrf.mxu0
      %v958 = vadd.f32 %v669, %v957
      %v959 = vpop.f32.mrf.mxu0
      %960 = vmatprep.mubr.f32.mxu0 0.0
      %961 = vmatmul.mubr.f32.gmra.mxu0 %v760
      %v962 = vpop.f32.mrf.mxu0
      %v963 = vadd.f32 %v674, %v962
      %v964 = vpop.f32.mrf.mxu0
      %965 = vmatprep.mubr.f32.mxu0 0.0
      %966 = vmatmul.mubr.f32.gmra.mxu0 %v762
      %v967 = vpop.f32.mrf.mxu0
      %v968 = vadd.f32 %v679, %v967
      %v969 = vpop.f32.mrf.mxu0
      %970 = vmatprep.mubr.f32.mxu0 0.0
      %971 = vmatmul.mubr.f32.gmra.mxu0 %v764
      %v972 = vpop.f32.mrf.mxu0
      %v973 = vadd.f32 %v684, %v972
      %v974 = vpop.f32.mrf.mxu0
      %975 = vmatprep.mubr.f32.mxu0 0.0
      %976 = vmatmul.mubr.f32.gmra.mxu0 %v766
      %v977 = vpop.f32.mrf.mxu0
      %v978 = vadd.f32 %v689, %v977
      %v979 = vpop.f32.mrf.mxu0
      %980 = vmatprep.mubr.f32.mxu0 0.0
      %981 = vmatmul.mubr.f32.gmra.mxu0 %v768
      %v982 = vpop.f32.mrf.mxu0
      %v983 = vadd.f32 %v694, %v982
      %v984 = vpop.f32.mrf.mxu0
      %985 = vmatprep.mubr.f32.mxu0 0.0
      %986 = vmatmul.mubr.f32.gmra.mxu0 %v770
      %v987 = vpop.f32.mrf.mxu0
      %v988 = vadd.f32 %v699, %v987
      %v989 = vpop.f32.mrf.mxu0
      %990 = vmatprep.mubr.f32.mxu0 0.0
      %991 = vmatmul.mubr.f32.gmra.mxu0 %v772
      %v992 = vpop.f32.mrf.mxu0
      %v993 = vadd.f32 %v704, %v992
      %v994 = vpop.f32.mrf.mxu0
      %995 = vmatprep.mubr.f32.mxu0 0.0
      %996 = vmatmul.mubr.f32.gmra.mxu0 %v774
      %v997 = vpop.f32.mrf.mxu0
      %v998 = vadd.f32 %v709, %v997
      %v999 = vpop.f32.mrf.mxu0
      %1000 = vdwg.mxu0
      %vm1001 = vcmask 1045504
      %v1002 = vrot.slane %v222, 2
      %v1003 = vrot.slane %v223, 2
      %v1004 = vsel %vm1001, %v1002, %v1003
      %v1005 = vrot.slane %v224, 2
      %v1006 = vsel %vm1001, %v1003, %v1005
      %v1007 = vrot.slane %v225, 2
      %v1008 = vrot.slane %v226, 2
      %v1009 = vsel %vm1001, %v1007, %v1008
      %v1010 = vrot.slane %v227, 2
      %v1011 = vsel %vm1001, %v1008, %v1010
      %v1012 = vrot.slane %v228, 2
      %v1013 = vrot.slane %v229, 2
      %v1014 = vsel %vm1001, %v1012, %v1013
      %v1015 = vrot.slane %v230, 2
      %v1016 = vsel %vm1001, %v1013, %v1015
      %v1017 = vrot.slane %v231, 2
      %v1018 = vrot.slane %v232, 2
      %v1019 = vsel %vm1001, %v1017, %v1018
      %v1020 = vrot.slane %v233, 2
      %v1021 = vsel %vm1001, %v1018, %v1020
      %v1022 = vrot.slane %v234, 2
      %v1023 = vrot.slane %v235, 2
      %v1024 = vsel %vm1001, %v1022, %v1023
      %v1025 = vrot.slane %v236, 2
      %v1026 = vsel %vm1001, %v1023, %v1025
      %v1027 = vrot.slane %v237, 2
      %v1028 = vrot.slane %v238, 2
      %v1029 = vsel %vm1001, %v1027, %v1028
      %v1030 = vrot.slane %v239, 2
      %v1031 = vsel %vm1001, %v1028, %v1030
      %v1032 = vrot.slane %v240, 2
      %v1033 = vrot.slane %v241, 2
      %v1034 = vsel %vm1001, %v1032, %v1033
      %v1035 = vrot.slane %v242, 2
      %v1036 = vsel %vm1001, %v1033, %v1035
      %v1037 = vrot.slane %v243, 2
      %v1038 = vrot.slane %v244, 2
      %v1039 = vsel %vm1001, %v1037, %v1038
      %v1040 = vrot.slane %v245, 2
      %v1041 = vsel %vm1001, %v1038, %v1040
      %v1042 = vrot.slane %v246, 2
      %v1043 = vrot.slane %v247, 2
      %v1044 = vsel %vm1001, %v1042, %v1043
      %v1045 = vrot.slane %v248, 2
      %v1046 = vsel %vm1001, %v1043, %v1045
      %v1047 = vrot.slane %v249, 2
      %v1048 = vrot.slane %v250, 2
      %v1049 = vsel %vm1001, %v1047, %v1048
      %v1050 = vrot.slane %v251, 2
      %v1051 = vsel %vm1001, %v1048, %v1050
      %v1052 = vrot.slane %v252, 2
      %v1053 = vrot.slane %v253, 2
      %v1054 = vsel %vm1001, %v1052, %v1053
      %v1055 = vrot.slane %v254, 2
      %v1056 = vsel %vm1001, %v1053, %v1055
      %v1057 = vrot.slane %v255, 2
      %v1058 = vrot.slane %v256, 2
      %v1059 = vsel %vm1001, %v1057, %v1058
      %v1060 = vrot.slane %v257, 2
      %v1061 = vsel %vm1001, %v1058, %v1060
      %v1062 = vrot.slane %v258, 2
      %v1063 = vrot.slane %v259, 2
      %v1064 = vsel %vm1001, %v1062, %v1063
      %v1065 = vrot.slane %v260, 2
      %v1066 = vsel %vm1001, %v1063, %v1065
      %v1067 = vrot.slane %v261, 2
      %v1068 = vrot.slane %v262, 2
      %v1069 = vsel %vm1001, %v1067, %v1068
      %v1070 = vrot.slane %v263, 2
      %v1071 = vsel %vm1001, %v1068, %v1070
      %v1072 = vrot.slane %v264, 2
      %v1073 = vrot.slane %v265, 2
      %v1074 = vsel %vm1001, %v1072, %v1073
      %v1075 = vrot.slane %v266, 2
      %v1076 = vsel %vm1001, %v1073, %v1075
      %v1077 = vrot.slane %v267, 2
      %v1078 = vrot.slane %v268, 2
      %v1079 = vsel %vm1001, %v1077, %v1078
      %v1080 = vrot.slane %v269, 2
      %v1081 = vsel %vm1001, %v1078, %v1080
      %s1082 = scalar_lea.vmem %s210, 128
      %v1083 = vld [vmem:[%s1082] sm:$0xff]
      %v1084 = vld [vmem:[%s1082 + $0x8] sm:$0xff]
      %v1085 = vld [vmem:[%s1082 + $0x10] sm:$0xff]
      %v1086 = vld [vmem:[%s1082 + $0x18] sm:$0xff]
      %v1087 = vld [vmem:[%s1082 + $0x20] sm:$0xff]
      %v1088 = vld [vmem:[%s1082 + $0x28] sm:$0xff]
      %v1089 = vld [vmem:[%s1082 + $0x30] sm:$0xff]
      %v1090 = vld [vmem:[%s1082 + $0x38] sm:$0xff]
      %v1091 = vsel %vm422, %v1004, 0
      %v1093 = vsel %vm422, %v1006, 0
      %v1095 = vsel %vm422, %v1009, 0
      %v1097 = vsel %vm422, %v1011, 0
      %v1099 = vsel %vm422, %v1014, 0
      %v1101 = vsel %vm422, %v1016, 0
      %v1103 = vsel %vm422, %v1019, 0
      %v1105 = vsel %vm422, %v1021, 0
      %v1107 = vsel %vm422, %v1024, 0
      %v1109 = vsel %vm422, %v1026, 0
      %v1111 = vsel %vm422, %v1029, 0
      %v1113 = vsel %vm422, %v1031, 0
      %v1115 = vsel %vm422, %v1034, 0
      %v1117 = vsel %vm422, %v1036, 0
      %v1119 = vsel %vm422, %v1039, 0
      %v1121 = vsel %vm422, %v1041, 0
      %v1123 = vsel %vm422, %v1044, 0
      %v1125 = vsel %vm422, %v1046, 0
      %v1127 = vsel %vm422, %v1049, 0
      %v1129 = vsel %vm422, %v1051, 0
      %v1131 = vsel %vm422, %v1054, 0
      %v1133 = vsel %vm422, %v1056, 0
      %v1135 = vsel %vm422, %v1059, 0
      %v1137 = vsel %vm422, %v1061, 0
      %v1139 = vsel %vm422, %v1064, 0
      %v1141 = vsel %vm422, %v1066, 0
      %v1143 = vsel %vm422, %v1069, 0
      %v1145 = vsel %vm422, %v1071, 0
      %v1147 = vsel %vm422, %v1074, 0
      %v1149 = vsel %vm422, %v1076, 0
      %v1151 = vsel %vm422, %v1079, 0
      %v1153 = vsel %vm422, %v1081, 0
      %1155 = vmatprep.subr.mxu0 0.0
      %1156 = vmatpush1.msra.mxu0 0.0
      %1157 = vmatprep.subr.mxu0 0.0
      %1158 = vmatpush1.msra.mxu0 0.0
      %1159 = vmatprep.subr.mxu0 0.0
      %1160 = vmatpush1.msra.mxu0 0.0
      %1161 = vmatprep.subr.mxu0 0.0
      %1162 = vmatpush1.msra.mxu0 0.0
      %1163 = vmatprep.subr.mxu0 0.0
      %1164 = vmatpush1.msra.mxu0 0.0
      %1165 = vmatprep.subr.mxu0 0.0
      %1166 = vmatpush1.msra.mxu0 0.0
      %1167 = vmatprep.subr.mxu0 0.0
      %1168 = vmatpush1.msra.mxu0 0.0
      %1169 = vmatprep.subr.mxu0 0.0
      %1170 = vmatpush1.msra.mxu0 0.0
      %1171 = vmatprep.subr.mxu0 0.0
      %1172 = vmatpush1.msra.mxu0 %v1090
      %1173 = vmatprep.subr.mxu0 0.0
      %1174 = vmatpush1.msra.mxu0 %v1089
      %1175 = vmatprep.subr.mxu0 0.0
      %1176 = vmatpush1.msra.mxu0 %v1088
      %1177 = vmatprep.subr.mxu0 0.0
      %1178 = vmatpush1.msra.mxu0 %v1087
      %1179 = vmatprep.subr.mxu0 0.0
      %1180 = vmatpush1.msra.mxu0 %v1086
      %1181 = vmatprep.subr.mxu0 0.0
      %1182 = vmatpush1.msra.mxu0 %v1085
      %1183 = vmatprep.subr.mxu0 0.0
      %1184 = vmatpush1.msra.mxu0 %v1084
      %1185 = vmatprep.subr.mxu0 0.0
      %1186 = vmatpush1.msra.mxu0 %v1083
      %1187 = vmatprep.subr.mxu0 0.0
      %1188 = vmatpush2.msra.mxu0 0.0
      %1189 = vmatprep.subr.mxu0 0.0
      %1190 = vmatpush2.msra.mxu0 0.0
      %1191 = vmatprep.subr.mxu0 0.0
      %1192 = vmatpush2.msra.mxu0 0.0
      %1193 = vmatprep.subr.mxu0 0.0
      %1194 = vmatpush2.msra.mxu0 0.0
      %1195 = vmatprep.subr.mxu0 0.0
      %1196 = vmatpush2.msra.mxu0 0.0
      %1197 = vmatprep.subr.mxu0 0.0
      %1198 = vmatpush2.msra.mxu0 0.0
      %1199 = vmatprep.subr.mxu0 0.0
      %1200 = vmatpush2.msra.mxu0 0.0
      %1201 = vmatprep.subr.mxu0 0.0
      %1202 = vmatpush2.msra.mxu0 0.0
      %1203 = vmatprep.subr.mxu0 0.0
      %1204 = vmatpush2.msra.mxu0 0.0
      %1205 = vmatprep.subr.mxu0 0.0
      %1206 = vmatpush2.msra.mxu0 0.0
      %1207 = vmatprep.subr.mxu0 0.0
      %1208 = vmatpush2.msra.mxu0 0.0
      %1209 = vmatprep.subr.mxu0 0.0
      %1210 = vmatpush2.msra.mxu0 0.0
      %1211 = vmatprep.subr.mxu0 0.0
      %1212 = vmatpush2.msra.mxu0 0.0
      %1213 = vmatprep.subr.mxu0 0.0
      %1214 = vmatpush2.msra.mxu0 0.0
      %1215 = vmatprep.subr.mxu0 0.0
      %1216 = vmatpush2.msra.mxu0 0.0
      %1217 = vmatprep.subr.mxu0 0.0
      %1218 = vmatpush2.msra.mxu0 0.0
      %1219 = vmatprep.mubr.f32.mxu0 0.0
      %1220 = vmatmul.mubr.f32.gmra.mxu0 %v1091
      %v1221 = vpop.f32.mrf.mxu0
      %v1222 = vadd.f32 0.0, %v1221
      %v1223 = vpop.f32.mrf.mxu0
      %1224 = vmatprep.mubr.f32.mxu0 0.0
      %1225 = vmatmul.mubr.f32.gmra.mxu0 %v1093
      %v1226 = vpop.f32.mrf.mxu0
      %v1227 = vadd.f32 0.0, %v1226
      %v1228 = vpop.f32.mrf.mxu0
      %1229 = vmatprep.mubr.f32.mxu0 0.0
      %1230 = vmatmul.mubr.f32.gmra.mxu0 %v1095
      %v1231 = vpop.f32.mrf.mxu0
      %v1232 = vadd.f32 0.0, %v1231
      %v1233 = vpop.f32.mrf.mxu0
      %1234 = vmatprep.mubr.f32.mxu0 0.0
      %1235 = vmatmul.mubr.f32.gmra.mxu0 %v1097
      %v1236 = vpop.f32.mrf.mxu0
      %v1237 = vadd.f32 0.0, %v1236
      %v1238 = vpop.f32.mrf.mxu0
      %1239 = vmatprep.mubr.f32.mxu0 0.0
      %1240 = vmatmul.mubr.f32.gmra.mxu0 %v1099
      %v1241 = vpop.f32.mrf.mxu0
      %v1242 = vadd.f32 0.0, %v1241
      %v1243 = vpop.f32.mrf.mxu0
      %1244 = vmatprep.mubr.f32.mxu0 0.0
      %1245 = vmatmul.mubr.f32.gmra.mxu0 %v1101
      %v1246 = vpop.f32.mrf.mxu0
      %v1247 = vadd.f32 0.0, %v1246
      %v1248 = vpop.f32.mrf.mxu0
      %1249 = vmatprep.mubr.f32.mxu0 0.0
      %1250 = vmatmul.mubr.f32.gmra.mxu0 %v1103
      %v1251 = vpop.f32.mrf.mxu0
      %v1252 = vadd.f32 0.0, %v1251
      %v1253 = vpop.f32.mrf.mxu0
      %1254 = vmatprep.mubr.f32.mxu0 0.0
      %1255 = vmatmul.mubr.f32.gmra.mxu0 %v1105
      %v1256 = vpop.f32.mrf.mxu0
      %v1257 = vadd.f32 0.0, %v1256
      %v1258 = vpop.f32.mrf.mxu0
      %1259 = vmatprep.mubr.f32.mxu0 0.0
      %1260 = vmatmul.mubr.f32.gmra.mxu0 %v1107
      %v1261 = vpop.f32.mrf.mxu0
      %v1262 = vadd.f32 0.0, %v1261
      %v1263 = vpop.f32.mrf.mxu0
      %1264 = vmatprep.mubr.f32.mxu0 0.0
      %1265 = vmatmul.mubr.f32.gmra.mxu0 %v1109
      %v1266 = vpop.f32.mrf.mxu0
      %v1267 = vadd.f32 0.0, %v1266
      %v1268 = vpop.f32.mrf.mxu0
      %1269 = vmatprep.mubr.f32.mxu0 0.0
      %1270 = vmatmul.mubr.f32.gmra.mxu0 %v1111
      %v1271 = vpop.f32.mrf.mxu0
      %v1272 = vadd.f32 0.0, %v1271
      %v1273 = vpop.f32.mrf.mxu0
      %1274 = vmatprep.mubr.f32.mxu0 0.0
      %1275 = vmatmul.mubr.f32.gmra.mxu0 %v1113
      %v1276 = vpop.f32.mrf.mxu0
      %v1277 = vadd.f32 0.0, %v1276
      %v1278 = vpop.f32.mrf.mxu0
      %1279 = vmatprep.mubr.f32.mxu0 0.0
      %1280 = vmatmul.mubr.f32.gmra.mxu0 %v1115
      %v1281 = vpop.f32.mrf.mxu0
      %v1282 = vadd.f32 0.0, %v1281
      %v1283 = vpop.f32.mrf.mxu0
      %1284 = vmatprep.mubr.f32.mxu0 0.0
      %1285 = vmatmul.mubr.f32.gmra.mxu0 %v1117
      %v1286 = vpop.f32.mrf.mxu0
      %v1287 = vadd.f32 0.0, %v1286
      %v1288 = vpop.f32.mrf.mxu0
      %1289 = vmatprep.mubr.f32.mxu0 0.0
      %1290 = vmatmul.mubr.f32.gmra.mxu0 %v1119
      %v1291 = vpop.f32.mrf.mxu0
      %v1292 = vadd.f32 0.0, %v1291
      %v1293 = vpop.f32.mrf.mxu0
      %1294 = vmatprep.mubr.f32.mxu0 0.0
      %1295 = vmatmul.mubr.f32.gmra.mxu0 %v1121
      %v1296 = vpop.f32.mrf.mxu0
      %v1297 = vadd.f32 0.0, %v1296
      %v1298 = vpop.f32.mrf.mxu0
      %1299 = vmatprep.mubr.f32.mxu0 0.0
      %1300 = vmatmul.mubr.f32.gmra.mxu0 %v1123
      %v1301 = vpop.f32.mrf.mxu0
      %v1302 = vadd.f32 0.0, %v1301
      %v1303 = vpop.f32.mrf.mxu0
      %1304 = vmatprep.mubr.f32.mxu0 0.0
      %1305 = vmatmul.mubr.f32.gmra.mxu0 %v1125
      %v1306 = vpop.f32.mrf.mxu0
      %v1307 = vadd.f32 0.0, %v1306
      %v1308 = vpop.f32.mrf.mxu0
      %1309 = vmatprep.mubr.f32.mxu0 0.0
      %1310 = vmatmul.mubr.f32.gmra.mxu0 %v1127
      %v1311 = vpop.f32.mrf.mxu0
      %v1312 = vadd.f32 0.0, %v1311
      %v1313 = vpop.f32.mrf.mxu0
      %1314 = vmatprep.mubr.f32.mxu0 0.0
      %1315 = vmatmul.mubr.f32.gmra.mxu0 %v1129
      %v1316 = vpop.f32.mrf.mxu0
      %v1317 = vadd.f32 0.0, %v1316
      %v1318 = vpop.f32.mrf.mxu0
      %1319 = vmatprep.mubr.f32.mxu0 0.0
      %1320 = vmatmul.mubr.f32.gmra.mxu0 %v1131
      %v1321 = vpop.f32.mrf.mxu0
      %v1322 = vadd.f32 0.0, %v1321
      %v1323 = vpop.f32.mrf.mxu0
      %1324 = vmatprep.mubr.f32.mxu0 0.0
      %1325 = vmatmul.mubr.f32.gmra.mxu0 %v1133
      %v1326 = vpop.f32.mrf.mxu0
      %v1327 = vadd.f32 0.0, %v1326
      %v1328 = vpop.f32.mrf.mxu0
      %1329 = vmatprep.mubr.f32.mxu0 0.0
      %1330 = vmatmul.mubr.f32.gmra.mxu0 %v1135
      %v1331 = vpop.f32.mrf.mxu0
      %v1332 = vadd.f32 0.0, %v1331
      %v1333 = vpop.f32.mrf.mxu0
      %1334 = vmatprep.mubr.f32.mxu0 0.0
      %1335 = vmatmul.mubr.f32.gmra.mxu0 %v1137
      %v1336 = vpop.f32.mrf.mxu0
      %v1337 = vadd.f32 0.0, %v1336
      %v1338 = vpop.f32.mrf.mxu0
      %1339 = vmatprep.mubr.f32.mxu0 0.0
      %1340 = vmatmul.mubr.f32.gmra.mxu0 %v1139
      %v1341 = vpop.f32.mrf.mxu0
      %v1342 = vadd.f32 0.0, %v1341
      %v1343 = vpop.f32.mrf.mxu0
      %1344 = vmatprep.mubr.f32.mxu0 0.0
      %1345 = vmatmul.mubr.f32.gmra.mxu0 %v1141
      %v1346 = vpop.f32.mrf.mxu0
      %v1347 = vadd.f32 0.0, %v1346
      %v1348 = vpop.f32.mrf.mxu0
      %1349 = vmatprep.mubr.f32.mxu0 0.0
      %1350 = vmatmul.mubr.f32.gmra.mxu0 %v1143
      %v1351 = vpop.f32.mrf.mxu0
      %v1352 = vadd.f32 0.0, %v1351
      %v1353 = vpop.f32.mrf.mxu0
      %1354 = vmatprep.mubr.f32.mxu0 0.0
      %1355 = vmatmul.mubr.f32.gmra.mxu0 %v1145
      %v1356 = vpop.f32.mrf.mxu0
      %v1357 = vadd.f32 0.0, %v1356
      %v1358 = vpop.f32.mrf.mxu0
      %1359 = vmatprep.mubr.f32.mxu0 0.0
      %1360 = vmatmul.mubr.f32.gmra.mxu0 %v1147
      %v1361 = vpop.f32.mrf.mxu0
      %v1362 = vadd.f32 0.0, %v1361
      %v1363 = vpop.f32.mrf.mxu0
      %1364 = vmatprep.mubr.f32.mxu0 0.0
      %1365 = vmatmul.mubr.f32.gmra.mxu0 %v1149
      %v1366 = vpop.f32.mrf.mxu0
      %v1367 = vadd.f32 0.0, %v1366
      %v1368 = vpop.f32.mrf.mxu0
      %1369 = vmatprep.mubr.f32.mxu0 0.0
      %1370 = vmatmul.mubr.f32.gmra.mxu0 %v1151
      %v1371 = vpop.f32.mrf.mxu0
      %v1372 = vadd.f32 0.0, %v1371
      %v1373 = vpop.f32.mrf.mxu0
      %1374 = vmatprep.mubr.f32.mxu0 0.0
      %1375 = vmatmul.mubr.f32.gmra.mxu0 %v1153
      %v1376 = vpop.f32.mrf.mxu0
      %v1377 = vadd.f32 0.0, %v1376
      %v1378 = vpop.f32.mrf.mxu0
      %1379 = vdwg.mxu0
      %v1380 = vadd.f32 %v843, %v1222
      %v1381 = vadd.f32 %v848, %v1227
      %v1382 = vadd.f32 %v853, %v1232
      %v1383 = vadd.f32 %v858, %v1237
      %v1384 = vadd.f32 %v863, %v1242
      %v1385 = vadd.f32 %v868, %v1247
      %v1386 = vadd.f32 %v873, %v1252
      %v1387 = vadd.f32 %v878, %v1257
      %v1388 = vadd.f32 %v883, %v1262
      %v1389 = vadd.f32 %v888, %v1267
      %v1390 = vadd.f32 %v893, %v1272
      %v1391 = vadd.f32 %v898, %v1277
      %v1392 = vadd.f32 %v903, %v1282
      %v1393 = vadd.f32 %v908, %v1287
      %v1394 = vadd.f32 %v913, %v1292
      %v1395 = vadd.f32 %v918, %v1297
      %v1396 = vadd.f32 %v923, %v1302
      %v1397 = vadd.f32 %v928, %v1307
      %v1398 = vadd.f32 %v933, %v1312
      %v1399 = vadd.f32 %v938, %v1317
      %v1400 = vadd.f32 %v943, %v1322
      %v1401 = vadd.f32 %v948, %v1327
      %v1402 = vadd.f32 %v953, %v1332
      %v1403 = vadd.f32 %v958, %v1337
      %v1404 = vadd.f32 %v963, %v1342
      %v1405 = vadd.f32 %v968, %v1347
      %v1406 = vadd.f32 %v973, %v1352
      %v1407 = vadd.f32 %v978, %v1357
      %v1408 = vadd.f32 %v983, %v1362
      %v1409 = vadd.f32 %v988, %v1367
      %v1410 = vadd.f32 %v993, %v1372
      %v1411 = vadd.f32 %v998, %v1377
      %s1412 = scalar_lea.vmem %s210, 192
      %v1413 = vld [vmem:[%s1412] sm:$0xff]
      %v1414 = vld [vmem:[%s1412 + $0x8] sm:$0xff]
      %v1415 = vld [vmem:[%s1412 + $0x10] sm:$0xff]
      %v1416 = vld [vmem:[%s1412 + $0x18] sm:$0xff]
      %v1417 = vld [vmem:[%s1412 + $0x20] sm:$0xff]
      %v1418 = vld [vmem:[%s1412 + $0x28] sm:$0xff]
      %v1419 = vld [vmem:[%s1412 + $0x30] sm:$0xff]
      %v1420 = vld [vmem:[%s1412 + $0x38] sm:$0xff]
      %v1422 = vsel %vm422, %v270, 0
      %v1425 = vsel %vm422, %v271, 0
      %1427 = vmatprep.subr.mxu0 0.0
      %1428 = vmatpush1.msra.mxu0 0.0
      %1429 = vmatprep.subr.mxu0 0.0
      %1430 = vmatpush1.msra.mxu0 0.0
      %1431 = vmatprep.subr.mxu0 0.0
      %1432 = vmatpush1.msra.mxu0 0.0
      %1433 = vmatprep.subr.mxu0 0.0
      %1434 = vmatpush1.msra.mxu0 0.0
      %1435 = vmatprep.subr.mxu0 0.0
      %1436 = vmatpush1.msra.mxu0 0.0
      %1437 = vmatprep.subr.mxu0 0.0
      %1438 = vmatpush1.msra.mxu0 0.0
      %1439 = vmatprep.subr.mxu0 0.0
      %1440 = vmatpush1.msra.mxu0 0.0
      %1441 = vmatprep.subr.mxu0 0.0
      %1442 = vmatpush1.msra.mxu0 0.0
      %1443 = vmatprep.subr.mxu0 0.0
      %1444 = vmatpush1.msra.mxu0 %v1420
      %1445 = vmatprep.subr.mxu0 0.0
      %1446 = vmatpush1.msra.mxu0 %v1419
      %1447 = vmatprep.subr.mxu0 0.0
      %1448 = vmatpush1.msra.mxu0 %v1418
      %1449 = vmatprep.subr.mxu0 0.0
      %1450 = vmatpush1.msra.mxu0 %v1417
      %1451 = vmatprep.subr.mxu0 0.0
      %1452 = vmatpush1.msra.mxu0 %v1416
      %1453 = vmatprep.subr.mxu0 0.0
      %1454 = vmatpush1.msra.mxu0 %v1415
      %1455 = vmatprep.subr.mxu0 0.0
      %1456 = vmatpush1.msra.mxu0 %v1414
      %1457 = vmatprep.subr.mxu0 0.0
      %1458 = vmatpush1.msra.mxu0 %v1413
      %1459 = vmatprep.subr.mxu0 0.0
      %1460 = vmatpush2.msra.mxu0 0.0
      %1461 = vmatprep.subr.mxu0 0.0
      %1462 = vmatpush2.msra.mxu0 0.0
      %1463 = vmatprep.subr.mxu0 0.0
      %1464 = vmatpush2.msra.mxu0 0.0
      %1465 = vmatprep.subr.mxu0 0.0
      %1466 = vmatpush2.msra.mxu0 0.0
      %1467 = vmatprep.subr.mxu0 0.0
      %1468 = vmatpush2.msra.mxu0 0.0
      %1469 = vmatprep.subr.mxu0 0.0
      %1470 = vmatpush2.msra.mxu0 0.0
      %1471 = vmatprep.subr.mxu0 0.0
      %1472 = vmatpush2.msra.mxu0 0.0
      %1473 = vmatprep.subr.mxu0 0.0
      %1474 = vmatpush2.msra.mxu0 0.0
      %1475 = vmatprep.subr.mxu0 0.0
      %1476 = vmatpush2.msra.mxu0 0.0
      %1477 = vmatprep.subr.mxu0 0.0
      %1478 = vmatpush2.msra.mxu0 0.0
      %1479 = vmatprep.subr.mxu0 0.0
      %1480 = vmatpush2.msra.mxu0 0.0
      %1481 = vmatprep.subr.mxu0 0.0
      %1482 = vmatpush2.msra.mxu0 0.0
      %1483 = vmatprep.subr.mxu0 0.0
      %1484 = vmatpush2.msra.mxu0 0.0
      %1485 = vmatprep.subr.mxu0 0.0
      %1486 = vmatpush2.msra.mxu0 0.0
      %1487 = vmatprep.subr.mxu0 0.0
      %1488 = vmatpush2.msra.mxu0 0.0
      %1489 = vmatprep.subr.mxu0 0.0
      %1490 = vmatpush2.msra.mxu0 0.0
      %1491 = vmatprep.mubr.f32.mxu0 0.0
      %1492 = vmatmul.mubr.f32.gmra.mxu0 %v716
      %v1493 = vpop.f32.mrf.mxu0
      %v1494 = vadd.f32 0.0, %v1493
      %v1495 = vpop.f32.mrf.mxu0
      %1496 = vmatprep.mubr.f32.mxu0 0.0
      %1497 = vmatmul.mubr.f32.gmra.mxu0 %v718
      %v1498 = vpop.f32.mrf.mxu0
      %v1499 = vadd.f32 0.0, %v1498
      %v1500 = vpop.f32.mrf.mxu0
      %1501 = vmatprep.mubr.f32.mxu0 0.0
      %1502 = vmatmul.mubr.f32.gmra.mxu0 %v720
      %v1503 = vpop.f32.mrf.mxu0
      %v1504 = vadd.f32 0.0, %v1503
      %v1505 = vpop.f32.mrf.mxu0
      %1506 = vmatprep.mubr.f32.mxu0 0.0
      %1507 = vmatmul.mubr.f32.gmra.mxu0 %v722
      %v1508 = vpop.f32.mrf.mxu0
      %v1509 = vadd.f32 0.0, %v1508
      %v1510 = vpop.f32.mrf.mxu0
      %1511 = vmatprep.mubr.f32.mxu0 0.0
      %1512 = vmatmul.mubr.f32.gmra.mxu0 %v724
      %v1513 = vpop.f32.mrf.mxu0
      %v1514 = vadd.f32 0.0, %v1513
      %v1515 = vpop.f32.mrf.mxu0
      %1516 = vmatprep.mubr.f32.mxu0 0.0
      %1517 = vmatmul.mubr.f32.gmra.mxu0 %v726
      %v1518 = vpop.f32.mrf.mxu0
      %v1519 = vadd.f32 0.0, %v1518
      %v1520 = vpop.f32.mrf.mxu0
      %1521 = vmatprep.mubr.f32.mxu0 0.0
      %1522 = vmatmul.mubr.f32.gmra.mxu0 %v728
      %v1523 = vpop.f32.mrf.mxu0
      %v1524 = vadd.f32 0.0, %v1523
      %v1525 = vpop.f32.mrf.mxu0
      %1526 = vmatprep.mubr.f32.mxu0 0.0
      %1527 = vmatmul.mubr.f32.gmra.mxu0 %v730
      %v1528 = vpop.f32.mrf.mxu0
      %v1529 = vadd.f32 0.0, %v1528
      %v1530 = vpop.f32.mrf.mxu0
      %1531 = vmatprep.mubr.f32.mxu0 0.0
      %1532 = vmatmul.mubr.f32.gmra.mxu0 %v732
      %v1533 = vpop.f32.mrf.mxu0
      %v1534 = vadd.f32 0.0, %v1533
      %v1535 = vpop.f32.mrf.mxu0
      %1536 = vmatprep.mubr.f32.mxu0 0.0
      %1537 = vmatmul.mubr.f32.gmra.mxu0 %v734
      %v1538 = vpop.f32.mrf.mxu0
      %v1539 = vadd.f32 0.0, %v1538
      %v1540 = vpop.f32.mrf.mxu0
      %1541 = vmatprep.mubr.f32.mxu0 0.0
      %1542 = vmatmul.mubr.f32.gmra.mxu0 %v736
      %v1543 = vpop.f32.mrf.mxu0
      %v1544 = vadd.f32 0.0, %v1543
      %v1545 = vpop.f32.mrf.mxu0
      %1546 = vmatprep.mubr.f32.mxu0 0.0
      %1547 = vmatmul.mubr.f32.gmra.mxu0 %v738
      %v1548 = vpop.f32.mrf.mxu0
      %v1549 = vadd.f32 0.0, %v1548
      %v1550 = vpop.f32.mrf.mxu0
      %1551 = vmatprep.mubr.f32.mxu0 0.0
      %1552 = vmatmul.mubr.f32.gmra.mxu0 %v740
      %v1553 = vpop.f32.mrf.mxu0
      %v1554 = vadd.f32 0.0, %v1553
      %v1555 = vpop.f32.mrf.mxu0
      %1556 = vmatprep.mubr.f32.mxu0 0.0
      %1557 = vmatmul.mubr.f32.gmra.mxu0 %v742
      %v1558 = vpop.f32.mrf.mxu0
      %v1559 = vadd.f32 0.0, %v1558
      %v1560 = vpop.f32.mrf.mxu0
      %1561 = vmatprep.mubr.f32.mxu0 0.0
      %1562 = vmatmul.mubr.f32.gmra.mxu0 %v744
      %v1563 = vpop.f32.mrf.mxu0
      %v1564 = vadd.f32 0.0, %v1563
      %v1565 = vpop.f32.mrf.mxu0
      %1566 = vmatprep.mubr.f32.mxu0 0.0
      %1567 = vmatmul.mubr.f32.gmra.mxu0 %v746
      %v1568 = vpop.f32.mrf.mxu0
      %v1569 = vadd.f32 0.0, %v1568
      %v1570 = vpop.f32.mrf.mxu0
      %1571 = vmatprep.mubr.f32.mxu0 0.0
      %1572 = vmatmul.mubr.f32.gmra.mxu0 %v748
      %v1573 = vpop.f32.mrf.mxu0
      %v1574 = vadd.f32 0.0, %v1573
      %v1575 = vpop.f32.mrf.mxu0
      %1576 = vmatprep.mubr.f32.mxu0 0.0
      %1577 = vmatmul.mubr.f32.gmra.mxu0 %v750
      %v1578 = vpop.f32.mrf.mxu0
      %v1579 = vadd.f32 0.0, %v1578
      %v1580 = vpop.f32.mrf.mxu0
      %1581 = vmatprep.mubr.f32.mxu0 0.0
      %1582 = vmatmul.mubr.f32.gmra.mxu0 %v752
      %v1583 = vpop.f32.mrf.mxu0
      %v1584 = vadd.f32 0.0, %v1583
      %v1585 = vpop.f32.mrf.mxu0
      %1586 = vmatprep.mubr.f32.mxu0 0.0
      %1587 = vmatmul.mubr.f32.gmra.mxu0 %v754
      %v1588 = vpop.f32.mrf.mxu0
      %v1589 = vadd.f32 0.0, %v1588
      %v1590 = vpop.f32.mrf.mxu0
      %1591 = vmatprep.mubr.f32.mxu0 0.0
      %1592 = vmatmul.mubr.f32.gmra.mxu0 %v756
      %v1593 = vpop.f32.mrf.mxu0
      %v1594 = vadd.f32 0.0, %v1593
      %v1595 = vpop.f32.mrf.mxu0
      %1596 = vmatprep.mubr.f32.mxu0 0.0
      %1597 = vmatmul.mubr.f32.gmra.mxu0 %v758
      %v1598 = vpop.f32.mrf.mxu0
      %v1599 = vadd.f32 0.0, %v1598
      %v1600 = vpop.f32.mrf.mxu0
      %1601 = vmatprep.mubr.f32.mxu0 0.0
      %1602 = vmatmul.mubr.f32.gmra.mxu0 %v760
      %v1603 = vpop.f32.mrf.mxu0
      %v1604 = vadd.f32 0.0, %v1603
      %v1605 = vpop.f32.mrf.mxu0
      %1606 = vmatprep.mubr.f32.mxu0 0.0
      %1607 = vmatmul.mubr.f32.gmra.mxu0 %v762
      %v1608 = vpop.f32.mrf.mxu0
      %v1609 = vadd.f32 0.0, %v1608
      %v1610 = vpop.f32.mrf.mxu0
      %1611 = vmatprep.mubr.f32.mxu0 0.0
      %1612 = vmatmul.mubr.f32.gmra.mxu0 %v764
      %v1613 = vpop.f32.mrf.mxu0
      %v1614 = vadd.f32 0.0, %v1613
      %v1615 = vpop.f32.mrf.mxu0
      %1616 = vmatprep.mubr.f32.mxu0 0.0
      %1617 = vmatmul.mubr.f32.gmra.mxu0 %v766
      %v1618 = vpop.f32.mrf.mxu0
      %v1619 = vadd.f32 0.0, %v1618
      %v1620 = vpop.f32.mrf.mxu0
      %1621 = vmatprep.mubr.f32.mxu0 0.0
      %1622 = vmatmul.mubr.f32.gmra.mxu0 %v768
      %v1623 = vpop.f32.mrf.mxu0
      %v1624 = vadd.f32 0.0, %v1623
      %v1625 = vpop.f32.mrf.mxu0
      %1626 = vmatprep.mubr.f32.mxu0 0.0
      %1627 = vmatmul.mubr.f32.gmra.mxu0 %v770
      %v1628 = vpop.f32.mrf.mxu0
      %v1629 = vadd.f32 0.0, %v1628
      %v1630 = vpop.f32.mrf.mxu0
      %1631 = vmatprep.mubr.f32.mxu0 0.0
      %1632 = vmatmul.mubr.f32.gmra.mxu0 %v772
      %v1633 = vpop.f32.mrf.mxu0
      %v1634 = vadd.f32 0.0, %v1633
      %v1635 = vpop.f32.mrf.mxu0
      %1636 = vmatprep.mubr.f32.mxu0 0.0
      %1637 = vmatmul.mubr.f32.gmra.mxu0 %v774
      %v1638 = vpop.f32.mrf.mxu0
      %v1639 = vadd.f32 0.0, %v1638
      %v1640 = vpop.f32.mrf.mxu0
      %1641 = vmatprep.mubr.f32.mxu0 0.0
      %1642 = vmatmul.mubr.f32.gmra.mxu0 %v1422
      %v1643 = vpop.f32.mrf.mxu0
      %v1644 = vadd.f32 0.0, %v1643
      %v1645 = vpop.f32.mrf.mxu0
      %1646 = vmatprep.mubr.f32.mxu0 0.0
      %1647 = vmatmul.mubr.f32.gmra.mxu0 %v1425
      %v1648 = vpop.f32.mrf.mxu0
      %v1649 = vadd.f32 0.0, %v1648
      %v1650 = vpop.f32.mrf.mxu0
      %1651 = vdwg.mxu0
      %v1652 = vadd.f32 %v1380, %v1494
      %v1653 = vadd.f32 %v1381, %v1499
      %v1654 = vadd.f32 %v1382, %v1504
      %v1655 = vadd.f32 %v1383, %v1509
      %v1656 = vadd.f32 %v1384, %v1514
      %v1657 = vadd.f32 %v1385, %v1519
      %v1658 = vadd.f32 %v1386, %v1524
      %v1659 = vadd.f32 %v1387, %v1529
      %v1660 = vadd.f32 %v1388, %v1534
      %v1661 = vadd.f32 %v1389, %v1539
      %v1662 = vadd.f32 %v1390, %v1544
      %v1663 = vadd.f32 %v1391, %v1549
      %v1664 = vadd.f32 %v1392, %v1554
      %v1665 = vadd.f32 %v1393, %v1559
      %v1666 = vadd.f32 %v1394, %v1564
      %v1667 = vadd.f32 %v1395, %v1569
      %v1668 = vadd.f32 %v1396, %v1574
      %v1669 = vadd.f32 %v1397, %v1579
      %v1670 = vadd.f32 %v1398, %v1584
      %v1671 = vadd.f32 %v1399, %v1589
      %v1672 = vadd.f32 %v1400, %v1594
      %v1673 = vadd.f32 %v1401, %v1599
      %v1674 = vadd.f32 %v1402, %v1604
      %v1675 = vadd.f32 %v1403, %v1609
      %v1676 = vadd.f32 %v1404, %v1614
      %v1677 = vadd.f32 %v1405, %v1619
      %v1678 = vadd.f32 %v1406, %v1624
      %v1679 = vadd.f32 %v1407, %v1629
      %v1680 = vadd.f32 %v1408, %v1634
      %v1681 = vadd.f32 %v1409, %v1639
      %v1682 = vadd.f32 %v1410, %v1644
      %v1683 = vadd.f32 %v1411, %v1649
      %v1685 = vrot.slane %v270, 1
      %v1686 = vrot.slane %v271, 1
      %v1687 = vsel %vm332, %v1685, %v1686
      %v1688 = vrot.slane %v272, 1
      %v1689 = vsel %vm332, %v1686, %v1688
      %s1690 = scalar_lea.vmem %s210, 256
      %v1691 = vld [vmem:[%s1690] sm:$0xff]
      %v1692 = vld [vmem:[%s1690 + $0x8] sm:$0xff]
      %v1693 = vld [vmem:[%s1690 + $0x10] sm:$0xff]
      %v1694 = vld [vmem:[%s1690 + $0x18] sm:$0xff]
      %v1695 = vld [vmem:[%s1690 + $0x20] sm:$0xff]
      %v1696 = vld [vmem:[%s1690 + $0x28] sm:$0xff]
      %v1697 = vld [vmem:[%s1690 + $0x30] sm:$0xff]
      %v1698 = vld [vmem:[%s1690 + $0x38] sm:$0xff]
      %v1699 = vsel %vm422, %v1687, 0
      %v1701 = vsel %vm422, %v1689, 0
      %1703 = vmatprep.subr.mxu0 0.0
      %1704 = vmatpush1.msra.mxu0 0.0
      %1705 = vmatprep.subr.mxu0 0.0
      %1706 = vmatpush1.msra.mxu0 0.0
      %1707 = vmatprep.subr.mxu0 0.0
      %1708 = vmatpush1.msra.mxu0 0.0
      %1709 = vmatprep.subr.mxu0 0.0
      %1710 = vmatpush1.msra.mxu0 0.0
      %1711 = vmatprep.subr.mxu0 0.0
      %1712 = vmatpush1.msra.mxu0 0.0
      %1713 = vmatprep.subr.mxu0 0.0
      %1714 = vmatpush1.msra.mxu0 0.0
      %1715 = vmatprep.subr.mxu0 0.0
      %1716 = vmatpush1.msra.mxu0 0.0
      %1717 = vmatprep.subr.mxu0 0.0
      %1718 = vmatpush1.msra.mxu0 0.0
      %1719 = vmatprep.subr.mxu0 0.0
      %1720 = vmatpush1.msra.mxu0 %v1698
      %1721 = vmatprep.subr.mxu0 0.0
      %1722 = vmatpush1.msra.mxu0 %v1697
      %1723 = vmatprep.subr.mxu0 0.0
      %1724 = vmatpush1.msra.mxu0 %v1696
      %1725 = vmatprep.subr.mxu0 0.0
      %1726 = vmatpush1.msra.mxu0 %v1695
      %1727 = vmatprep.subr.mxu0 0.0
      %1728 = vmatpush1.msra.mxu0 %v1694
      %1729 = vmatprep.subr.mxu0 0.0
      %1730 = vmatpush1.msra.mxu0 %v1693
      %1731 = vmatprep.subr.mxu0 0.0
      %1732 = vmatpush1.msra.mxu0 %v1692
      %1733 = vmatprep.subr.mxu0 0.0
      %1734 = vmatpush1.msra.mxu0 %v1691
      %1735 = vmatprep.subr.mxu0 0.0
      %1736 = vmatpush2.msra.mxu0 0.0
      %1737 = vmatprep.subr.mxu0 0.0
      %1738 = vmatpush2.msra.mxu0 0.0
      %1739 = vmatprep.subr.mxu0 0.0
      %1740 = vmatpush2.msra.mxu0 0.0
      %1741 = vmatprep.subr.mxu0 0.0
      %1742 = vmatpush2.msra.mxu0 0.0
      %1743 = vmatprep.subr.mxu0 0.0
      %1744 = vmatpush2.msra.mxu0 0.0
      %1745 = vmatprep.subr.mxu0 0.0
      %1746 = vmatpush2.msra.mxu0 0.0
      %1747 = vmatprep.subr.mxu0 0.0
      %1748 = vmatpush2.msra.mxu0 0.0
      %1749 = vmatprep.subr.mxu0 0.0
      %1750 = vmatpush2.msra.mxu0 0.0
      %1751 = vmatprep.subr.mxu0 0.0
      %1752 = vmatpush2.msra.mxu0 0.0
      %1753 = vmatprep.subr.mxu0 0.0
      %1754 = vmatpush2.msra.mxu0 0.0
      %1755 = vmatprep.subr.mxu0 0.0
      %1756 = vmatpush2.msra.mxu0 0.0
      %1757 = vmatprep.subr.mxu0 0.0
      %1758 = vmatpush2.msra.mxu0 0.0
      %1759 = vmatprep.subr.mxu0 0.0
      %1760 = vmatpush2.msra.mxu0 0.0
      %1761 = vmatprep.subr.mxu0 0.0
      %1762 = vmatpush2.msra.mxu0 0.0
      %1763 = vmatprep.subr.mxu0 0.0
      %1764 = vmatpush2.msra.mxu0 0.0
      %1765 = vmatprep.subr.mxu0 0.0
      %1766 = vmatpush2.msra.mxu0 0.0
      %1767 = vmatprep.mubr.f32.mxu0 0.0
      %1768 = vmatmul.mubr.f32.gmra.mxu0 %v427
      %v1769 = vpop.f32.mrf.mxu0
      %v1770 = vadd.f32 0.0, %v1769
      %v1771 = vpop.f32.mrf.mxu0
      %1772 = vmatprep.mubr.f32.mxu0 0.0
      %1773 = vmatmul.mubr.f32.gmra.mxu0 %v429
      %v1774 = vpop.f32.mrf.mxu0
      %v1775 = vadd.f32 0.0, %v1774
      %v1776 = vpop.f32.mrf.mxu0
      %1777 = vmatprep.mubr.f32.mxu0 0.0
      %1778 = vmatmul.mubr.f32.gmra.mxu0 %v431
      %v1779 = vpop.f32.mrf.mxu0
      %v1780 = vadd.f32 0.0, %v1779
      %v1781 = vpop.f32.mrf.mxu0
      %1782 = vmatprep.mubr.f32.mxu0 0.0
      %1783 = vmatmul.mubr.f32.gmra.mxu0 %v433
      %v1784 = vpop.f32.mrf.mxu0
      %v1785 = vadd.f32 0.0, %v1784
      %v1786 = vpop.f32.mrf.mxu0
      %1787 = vmatprep.mubr.f32.mxu0 0.0
      %1788 = vmatmul.mubr.f32.gmra.mxu0 %v435
      %v1789 = vpop.f32.mrf.mxu0
      %v1790 = vadd.f32 0.0, %v1789
      %v1791 = vpop.f32.mrf.mxu0
      %1792 = vmatprep.mubr.f32.mxu0 0.0
      %1793 = vmatmul.mubr.f32.gmra.mxu0 %v437
      %v1794 = vpop.f32.mrf.mxu0
      %v1795 = vadd.f32 0.0, %v1794
      %v1796 = vpop.f32.mrf.mxu0
      %1797 = vmatprep.mubr.f32.mxu0 0.0
      %1798 = vmatmul.mubr.f32.gmra.mxu0 %v439
      %v1799 = vpop.f32.mrf.mxu0
      %v1800 = vadd.f32 0.0, %v1799
      %v1801 = vpop.f32.mrf.mxu0
      %1802 = vmatprep.mubr.f32.mxu0 0.0
      %1803 = vmatmul.mubr.f32.gmra.mxu0 %v441
      %v1804 = vpop.f32.mrf.mxu0
      %v1805 = vadd.f32 0.0, %v1804
      %v1806 = vpop.f32.mrf.mxu0
      %1807 = vmatprep.mubr.f32.mxu0 0.0
      %1808 = vmatmul.mubr.f32.gmra.mxu0 %v443
      %v1809 = vpop.f32.mrf.mxu0
      %v1810 = vadd.f32 0.0, %v1809
      %v1811 = vpop.f32.mrf.mxu0
      %1812 = vmatprep.mubr.f32.mxu0 0.0
      %1813 = vmatmul.mubr.f32.gmra.mxu0 %v445
      %v1814 = vpop.f32.mrf.mxu0
      %v1815 = vadd.f32 0.0, %v1814
      %v1816 = vpop.f32.mrf.mxu0
      %1817 = vmatprep.mubr.f32.mxu0 0.0
      %1818 = vmatmul.mubr.f32.gmra.mxu0 %v447
      %v1819 = vpop.f32.mrf.mxu0
      %v1820 = vadd.f32 0.0, %v1819
      %v1821 = vpop.f32.mrf.mxu0
      %1822 = vmatprep.mubr.f32.mxu0 0.0
      %1823 = vmatmul.mubr.f32.gmra.mxu0 %v449
      %v1824 = vpop.f32.mrf.mxu0
      %v1825 = vadd.f32 0.0, %v1824
      %v1826 = vpop.f32.mrf.mxu0
      %1827 = vmatprep.mubr.f32.mxu0 0.0
      %1828 = vmatmul.mubr.f32.gmra.mxu0 %v451
      %v1829 = vpop.f32.mrf.mxu0
      %v1830 = vadd.f32 0.0, %v1829
      %v1831 = vpop.f32.mrf.mxu0
      %1832 = vmatprep.mubr.f32.mxu0 0.0
      %1833 = vmatmul.mubr.f32.gmra.mxu0 %v453
      %v1834 = vpop.f32.mrf.mxu0
      %v1835 = vadd.f32 0.0, %v1834
      %v1836 = vpop.f32.mrf.mxu0
      %1837 = vmatprep.mubr.f32.mxu0 0.0
      %1838 = vmatmul.mubr.f32.gmra.mxu0 %v455
      %v1839 = vpop.f32.mrf.mxu0
      %v1840 = vadd.f32 0.0, %v1839
      %v1841 = vpop.f32.mrf.mxu0
      %1842 = vmatprep.mubr.f32.mxu0 0.0
      %1843 = vmatmul.mubr.f32.gmra.mxu0 %v457
      %v1844 = vpop.f32.mrf.mxu0
      %v1845 = vadd.f32 0.0, %v1844
      %v1846 = vpop.f32.mrf.mxu0
      %1847 = vmatprep.mubr.f32.mxu0 0.0
      %1848 = vmatmul.mubr.f32.gmra.mxu0 %v459
      %v1849 = vpop.f32.mrf.mxu0
      %v1850 = vadd.f32 0.0, %v1849
      %v1851 = vpop.f32.mrf.mxu0
      %1852 = vmatprep.mubr.f32.mxu0 0.0
      %1853 = vmatmul.mubr.f32.gmra.mxu0 %v461
      %v1854 = vpop.f32.mrf.mxu0
      %v1855 = vadd.f32 0.0, %v1854
      %v1856 = vpop.f32.mrf.mxu0
      %1857 = vmatprep.mubr.f32.mxu0 0.0
      %1858 = vmatmul.mubr.f32.gmra.mxu0 %v463
      %v1859 = vpop.f32.mrf.mxu0
      %v1860 = vadd.f32 0.0, %v1859
      %v1861 = vpop.f32.mrf.mxu0
      %1862 = vmatprep.mubr.f32.mxu0 0.0
      %1863 = vmatmul.mubr.f32.gmra.mxu0 %v465
      %v1864 = vpop.f32.mrf.mxu0
      %v1865 = vadd.f32 0.0, %v1864
      %v1866 = vpop.f32.mrf.mxu0
      %1867 = vmatprep.mubr.f32.mxu0 0.0
      %1868 = vmatmul.mubr.f32.gmra.mxu0 %v467
      %v1869 = vpop.f32.mrf.mxu0
      %v1870 = vadd.f32 0.0, %v1869
      %v1871 = vpop.f32.mrf.mxu0
      %1872 = vmatprep.mubr.f32.mxu0 0.0
      %1873 = vmatmul.mubr.f32.gmra.mxu0 %v469
      %v1874 = vpop.f32.mrf.mxu0
      %v1875 = vadd.f32 0.0, %v1874
      %v1876 = vpop.f32.mrf.mxu0
      %1877 = vmatprep.mubr.f32.mxu0 0.0
      %1878 = vmatmul.mubr.f32.gmra.mxu0 %v471
      %v1879 = vpop.f32.mrf.mxu0
      %v1880 = vadd.f32 0.0, %v1879
      %v1881 = vpop.f32.mrf.mxu0
      %1882 = vmatprep.mubr.f32.mxu0 0.0
      %1883 = vmatmul.mubr.f32.gmra.mxu0 %v473
      %v1884 = vpop.f32.mrf.mxu0
      %v1885 = vadd.f32 0.0, %v1884
      %v1886 = vpop.f32.mrf.mxu0
      %1887 = vmatprep.mubr.f32.mxu0 0.0
      %1888 = vmatmul.mubr.f32.gmra.mxu0 %v475
      %v1889 = vpop.f32.mrf.mxu0
      %v1890 = vadd.f32 0.0, %v1889
      %v1891 = vpop.f32.mrf.mxu0
      %1892 = vmatprep.mubr.f32.mxu0 0.0
      %1893 = vmatmul.mubr.f32.gmra.mxu0 %v477
      %v1894 = vpop.f32.mrf.mxu0
      %v1895 = vadd.f32 0.0, %v1894
      %v1896 = vpop.f32.mrf.mxu0
      %1897 = vmatprep.mubr.f32.mxu0 0.0
      %1898 = vmatmul.mubr.f32.gmra.mxu0 %v479
      %v1899 = vpop.f32.mrf.mxu0
      %v1900 = vadd.f32 0.0, %v1899
      %v1901 = vpop.f32.mrf.mxu0
      %1902 = vmatprep.mubr.f32.mxu0 0.0
      %1903 = vmatmul.mubr.f32.gmra.mxu0 %v481
      %v1904 = vpop.f32.mrf.mxu0
      %v1905 = vadd.f32 0.0, %v1904
      %v1906 = vpop.f32.mrf.mxu0
      %1907 = vmatprep.mubr.f32.mxu0 0.0
      %1908 = vmatmul.mubr.f32.gmra.mxu0 %v483
      %v1909 = vpop.f32.mrf.mxu0
      %v1910 = vadd.f32 0.0, %v1909
      %v1911 = vpop.f32.mrf.mxu0
      %1912 = vmatprep.mubr.f32.mxu0 0.0
      %1913 = vmatmul.mubr.f32.gmra.mxu0 %v485
      %v1914 = vpop.f32.mrf.mxu0
      %v1915 = vadd.f32 0.0, %v1914
      %v1916 = vpop.f32.mrf.mxu0
      %1917 = vmatprep.mubr.f32.mxu0 0.0
      %1918 = vmatmul.mubr.f32.gmra.mxu0 %v1699
      %v1919 = vpop.f32.mrf.mxu0
      %v1920 = vadd.f32 0.0, %v1919
      %v1921 = vpop.f32.mrf.mxu0
      %1922 = vmatprep.mubr.f32.mxu0 0.0
      %1923 = vmatmul.mubr.f32.gmra.mxu0 %v1701
      %v1924 = vpop.f32.mrf.mxu0
      %v1925 = vadd.f32 0.0, %v1924
      %v1926 = vpop.f32.mrf.mxu0
      %1927 = vdwg.mxu0
      %v1928 = vadd.f32 %v1652, %v1770
      %v1929 = vadd.f32 %v1653, %v1775
      %v1930 = vadd.f32 %v1654, %v1780
      %v1931 = vadd.f32 %v1655, %v1785
      %v1932 = vadd.f32 %v1656, %v1790
      %v1933 = vadd.f32 %v1657, %v1795
      %v1934 = vadd.f32 %v1658, %v1800
      %v1935 = vadd.f32 %v1659, %v1805
      %v1936 = vadd.f32 %v1660, %v1810
      %v1937 = vadd.f32 %v1661, %v1815
      %v1938 = vadd.f32 %v1662, %v1820
      %v1939 = vadd.f32 %v1663, %v1825
      %v1940 = vadd.f32 %v1664, %v1830
      %v1941 = vadd.f32 %v1665, %v1835
      %v1942 = vadd.f32 %v1666, %v1840
      %v1943 = vadd.f32 %v1667, %v1845
      %v1944 = vadd.f32 %v1668, %v1850
      %v1945 = vadd.f32 %v1669, %v1855
      %v1946 = vadd.f32 %v1670, %v1860
      %v1947 = vadd.f32 %v1671, %v1865
      %v1948 = vadd.f32 %v1672, %v1870
      %v1949 = vadd.f32 %v1673, %v1875
      %v1950 = vadd.f32 %v1674, %v1880
      %v1951 = vadd.f32 %v1675, %v1885
      %v1952 = vadd.f32 %v1676, %v1890
      %v1953 = vadd.f32 %v1677, %v1895
      %v1954 = vadd.f32 %v1678, %v1900
      %v1955 = vadd.f32 %v1679, %v1905
      %v1956 = vadd.f32 %v1680, %v1910
      %v1957 = vadd.f32 %v1681, %v1915
      %v1958 = vadd.f32 %v1682, %v1920
      %v1959 = vadd.f32 %v1683, %v1925
      %v1960 = vrot.slane %v270, 2
      %v1961 = vrot.slane %v271, 2
      %v1962 = vsel %vm1001, %v1960, %v1961
      %v1963 = vrot.slane %v272, 2
      %v1964 = vsel %vm1001, %v1961, %v1963
      %s1965 = scalar_lea.vmem %s210, 320
      %v1966 = vld [vmem:[%s1965] sm:$0xff]
      %v1967 = vld [vmem:[%s1965 + $0x8] sm:$0xff]
      %v1968 = vld [vmem:[%s1965 + $0x10] sm:$0xff]
      %v1969 = vld [vmem:[%s1965 + $0x18] sm:$0xff]
      %v1970 = vld [vmem:[%s1965 + $0x20] sm:$0xff]
      %v1971 = vld [vmem:[%s1965 + $0x28] sm:$0xff]
      %v1972 = vld [vmem:[%s1965 + $0x30] sm:$0xff]
      %v1973 = vld [vmem:[%s1965 + $0x38] sm:$0xff]
      %v1974 = vsel %vm422, %v1962, 0
      %v1976 = vsel %vm422, %v1964, 0
      %1978 = vmatprep.subr.mxu0 0.0
      %1979 = vmatpush1.msra.mxu0 0.0
      %1980 = vmatprep.subr.mxu0 0.0
      %1981 = vmatpush1.msra.mxu0 0.0
      %1982 = vmatprep.subr.mxu0 0.0
      %1983 = vmatpush1.msra.mxu0 0.0
      %1984 = vmatprep.subr.mxu0 0.0
      %1985 = vmatpush1.msra.mxu0 0.0
      %1986 = vmatprep.subr.mxu0 0.0
      %1987 = vmatpush1.msra.mxu0 0.0
      %1988 = vmatprep.subr.mxu0 0.0
      %1989 = vmatpush1.msra.mxu0 0.0
      %1990 = vmatprep.subr.mxu0 0.0
      %1991 = vmatpush1.msra.mxu0 0.0
      %1992 = vmatprep.subr.mxu0 0.0
      %1993 = vmatpush1.msra.mxu0 0.0
      %1994 = vmatprep.subr.mxu0 0.0
      %1995 = vmatpush1.msra.mxu0 %v1973
      %1996 = vmatprep.subr.mxu0 0.0
      %1997 = vmatpush1.msra.mxu0 %v1972
      %1998 = vmatprep.subr.mxu0 0.0
      %1999 = vmatpush1.msra.mxu0 %v1971
      %2000 = vmatprep.subr.mxu0 0.0
      %2001 = vmatpush1.msra.mxu0 %v1970
      %2002 = vmatprep.subr.mxu0 0.0
      %2003 = vmatpush1.msra.mxu0 %v1969
      %2004 = vmatprep.subr.mxu0 0.0
      %2005 = vmatpush1.msra.mxu0 %v1968
      %2006 = vmatprep.subr.mxu0 0.0
      %2007 = vmatpush1.msra.mxu0 %v1967
      %2008 = vmatprep.subr.mxu0 0.0
      %2009 = vmatpush1.msra.mxu0 %v1966
      %2010 = vmatprep.subr.mxu0 0.0
      %2011 = vmatpush2.msra.mxu0 0.0
      %2012 = vmatprep.subr.mxu0 0.0
      %2013 = vmatpush2.msra.mxu0 0.0
      %2014 = vmatprep.subr.mxu0 0.0
      %2015 = vmatpush2.msra.mxu0 0.0
      %2016 = vmatprep.subr.mxu0 0.0
      %2017 = vmatpush2.msra.mxu0 0.0
      %2018 = vmatprep.subr.mxu0 0.0
      %2019 = vmatpush2.msra.mxu0 0.0
      %2020 = vmatprep.subr.mxu0 0.0
      %2021 = vmatpush2.msra.mxu0 0.0
      %2022 = vmatprep.subr.mxu0 0.0
      %2023 = vmatpush2.msra.mxu0 0.0
      %2024 = vmatprep.subr.mxu0 0.0
      %2025 = vmatpush2.msra.mxu0 0.0
      %2026 = vmatprep.subr.mxu0 0.0
      %2027 = vmatpush2.msra.mxu0 0.0
      %2028 = vmatprep.subr.mxu0 0.0
      %2029 = vmatpush2.msra.mxu0 0.0
      %2030 = vmatprep.subr.mxu0 0.0
      %2031 = vmatpush2.msra.mxu0 0.0
      %2032 = vmatprep.subr.mxu0 0.0
      %2033 = vmatpush2.msra.mxu0 0.0
      %2034 = vmatprep.subr.mxu0 0.0
      %2035 = vmatpush2.msra.mxu0 0.0
      %2036 = vmatprep.subr.mxu0 0.0
      %2037 = vmatpush2.msra.mxu0 0.0
      %2038 = vmatprep.subr.mxu0 0.0
      %2039 = vmatpush2.msra.mxu0 0.0
      %2040 = vmatprep.subr.mxu0 0.0
      %2041 = vmatpush2.msra.mxu0 0.0
      %2042 = vmatprep.mubr.f32.mxu0 0.0
      %2043 = vmatmul.mubr.f32.gmra.mxu0 %v1095
      %v2044 = vpop.f32.mrf.mxu0
      %v2045 = vadd.f32 0.0, %v2044
      %v2046 = vpop.f32.mrf.mxu0
      %2047 = vmatprep.mubr.f32.mxu0 0.0
      %2048 = vmatmul.mubr.f32.gmra.mxu0 %v1097
      %v2049 = vpop.f32.mrf.mxu0
      %v2050 = vadd.f32 0.0, %v2049
      %v2051 = vpop.f32.mrf.mxu0
      %2052 = vmatprep.mubr.f32.mxu0 0.0
      %2053 = vmatmul.mubr.f32.gmra.mxu0 %v1099
      %v2054 = vpop.f32.mrf.mxu0
      %v2055 = vadd.f32 0.0, %v2054
      %v2056 = vpop.f32.mrf.mxu0
      %2057 = vmatprep.mubr.f32.mxu0 0.0
      %2058 = vmatmul.mubr.f32.gmra.mxu0 %v1101
      %v2059 = vpop.f32.mrf.mxu0
      %v2060 = vadd.f32 0.0, %v2059
      %v2061 = vpop.f32.mrf.mxu0
      %2062 = vmatprep.mubr.f32.mxu0 0.0
      %2063 = vmatmul.mubr.f32.gmra.mxu0 %v1103
      %v2064 = vpop.f32.mrf.mxu0
      %v2065 = vadd.f32 0.0, %v2064
      %v2066 = vpop.f32.mrf.mxu0
      %2067 = vmatprep.mubr.f32.mxu0 0.0
      %2068 = vmatmul.mubr.f32.gmra.mxu0 %v1105
      %v2069 = vpop.f32.mrf.mxu0
      %v2070 = vadd.f32 0.0, %v2069
      %v2071 = vpop.f32.mrf.mxu0
      %2072 = vmatprep.mubr.f32.mxu0 0.0
      %2073 = vmatmul.mubr.f32.gmra.mxu0 %v1107
      %v2074 = vpop.f32.mrf.mxu0
      %v2075 = vadd.f32 0.0, %v2074
      %v2076 = vpop.f32.mrf.mxu0
      %2077 = vmatprep.mubr.f32.mxu0 0.0
      %2078 = vmatmul.mubr.f32.gmra.mxu0 %v1109
      %v2079 = vpop.f32.mrf.mxu0
      %v2080 = vadd.f32 0.0, %v2079
      %v2081 = vpop.f32.mrf.mxu0
      %2082 = vmatprep.mubr.f32.mxu0 0.0
      %2083 = vmatmul.mubr.f32.gmra.mxu0 %v1111
      %v2084 = vpop.f32.mrf.mxu0
      %v2085 = vadd.f32 0.0, %v2084
      %v2086 = vpop.f32.mrf.mxu0
      %2087 = vmatprep.mubr.f32.mxu0 0.0
      %2088 = vmatmul.mubr.f32.gmra.mxu0 %v1113
      %v2089 = vpop.f32.mrf.mxu0
      %v2090 = vadd.f32 0.0, %v2089
      %v2091 = vpop.f32.mrf.mxu0
      %2092 = vmatprep.mubr.f32.mxu0 0.0
      %2093 = vmatmul.mubr.f32.gmra.mxu0 %v1115
      %v2094 = vpop.f32.mrf.mxu0
      %v2095 = vadd.f32 0.0, %v2094
      %v2096 = vpop.f32.mrf.mxu0
      %2097 = vmatprep.mubr.f32.mxu0 0.0
      %2098 = vmatmul.mubr.f32.gmra.mxu0 %v1117
      %v2099 = vpop.f32.mrf.mxu0
      %v2100 = vadd.f32 0.0, %v2099
      %v2101 = vpop.f32.mrf.mxu0
      %2102 = vmatprep.mubr.f32.mxu0 0.0
      %2103 = vmatmul.mubr.f32.gmra.mxu0 %v1119
      %v2104 = vpop.f32.mrf.mxu0
      %v2105 = vadd.f32 0.0, %v2104
      %v2106 = vpop.f32.mrf.mxu0
      %2107 = vmatprep.mubr.f32.mxu0 0.0
      %2108 = vmatmul.mubr.f32.gmra.mxu0 %v1121
      %v2109 = vpop.f32.mrf.mxu0
      %v2110 = vadd.f32 0.0, %v2109
      %v2111 = vpop.f32.mrf.mxu0
      %2112 = vmatprep.mubr.f32.mxu0 0.0
      %2113 = vmatmul.mubr.f32.gmra.mxu0 %v1123
      %v2114 = vpop.f32.mrf.mxu0
      %v2115 = vadd.f32 0.0, %v2114
      %v2116 = vpop.f32.mrf.mxu0
      %2117 = vmatprep.mubr.f32.mxu0 0.0
      %2118 = vmatmul.mubr.f32.gmra.mxu0 %v1125
      %v2119 = vpop.f32.mrf.mxu0
      %v2120 = vadd.f32 0.0, %v2119
      %v2121 = vpop.f32.mrf.mxu0
      %2122 = vmatprep.mubr.f32.mxu0 0.0
      %2123 = vmatmul.mubr.f32.gmra.mxu0 %v1127
      %v2124 = vpop.f32.mrf.mxu0
      %v2125 = vadd.f32 0.0, %v2124
      %v2126 = vpop.f32.mrf.mxu0
      %2127 = vmatprep.mubr.f32.mxu0 0.0
      %2128 = vmatmul.mubr.f32.gmra.mxu0 %v1129
      %v2129 = vpop.f32.mrf.mxu0
      %v2130 = vadd.f32 0.0, %v2129
      %v2131 = vpop.f32.mrf.mxu0
      %2132 = vmatprep.mubr.f32.mxu0 0.0
      %2133 = vmatmul.mubr.f32.gmra.mxu0 %v1131
      %v2134 = vpop.f32.mrf.mxu0
      %v2135 = vadd.f32 0.0, %v2134
      %v2136 = vpop.f32.mrf.mxu0
      %2137 = vmatprep.mubr.f32.mxu0 0.0
      %2138 = vmatmul.mubr.f32.gmra.mxu0 %v1133
      %v2139 = vpop.f32.mrf.mxu0
      %v2140 = vadd.f32 0.0, %v2139
      %v2141 = vpop.f32.mrf.mxu0
      %2142 = vmatprep.mubr.f32.mxu0 0.0
      %2143 = vmatmul.mubr.f32.gmra.mxu0 %v1135
      %v2144 = vpop.f32.mrf.mxu0
      %v2145 = vadd.f32 0.0, %v2144
      %v2146 = vpop.f32.mrf.mxu0
      %2147 = vmatprep.mubr.f32.mxu0 0.0
      %2148 = vmatmul.mubr.f32.gmra.mxu0 %v1137
      %v2149 = vpop.f32.mrf.mxu0
      %v2150 = vadd.f32 0.0, %v2149
      %v2151 = vpop.f32.mrf.mxu0
      %2152 = vmatprep.mubr.f32.mxu0 0.0
      %2153 = vmatmul.mubr.f32.gmra.mxu0 %v1139
      %v2154 = vpop.f32.mrf.mxu0
      %v2155 = vadd.f32 0.0, %v2154
      %v2156 = vpop.f32.mrf.mxu0
      %2157 = vmatprep.mubr.f32.mxu0 0.0
      %2158 = vmatmul.mubr.f32.gmra.mxu0 %v1141
      %v2159 = vpop.f32.mrf.mxu0
      %v2160 = vadd.f32 0.0, %v2159
      %v2161 = vpop.f32.mrf.mxu0
      %2162 = vmatprep.mubr.f32.mxu0 0.0
      %2163 = vmatmul.mubr.f32.gmra.mxu0 %v1143
      %v2164 = vpop.f32.mrf.mxu0
      %v2165 = vadd.f32 0.0, %v2164
      %v2166 = vpop.f32.mrf.mxu0
      %2167 = vmatprep.mubr.f32.mxu0 0.0
      %2168 = vmatmul.mubr.f32.gmra.mxu0 %v1145
      %v2169 = vpop.f32.mrf.mxu0
      %v2170 = vadd.f32 0.0, %v2169
      %v2171 = vpop.f32.mrf.mxu0
      %2172 = vmatprep.mubr.f32.mxu0 0.0
      %2173 = vmatmul.mubr.f32.gmra.mxu0 %v1147
      %v2174 = vpop.f32.mrf.mxu0
      %v2175 = vadd.f32 0.0, %v2174
      %v2176 = vpop.f32.mrf.mxu0
      %2177 = vmatprep.mubr.f32.mxu0 0.0
      %2178 = vmatmul.mubr.f32.gmra.mxu0 %v1149
      %v2179 = vpop.f32.mrf.mxu0
      %v2180 = vadd.f32 0.0, %v2179
      %v2181 = vpop.f32.mrf.mxu0
      %2182 = vmatprep.mubr.f32.mxu0 0.0
      %2183 = vmatmul.mubr.f32.gmra.mxu0 %v1151
      %v2184 = vpop.f32.mrf.mxu0
      %v2185 = vadd.f32 0.0, %v2184
      %v2186 = vpop.f32.mrf.mxu0
      %2187 = vmatprep.mubr.f32.mxu0 0.0
      %2188 = vmatmul.mubr.f32.gmra.mxu0 %v1153
      %v2189 = vpop.f32.mrf.mxu0
      %v2190 = vadd.f32 0.0, %v2189
      %v2191 = vpop.f32.mrf.mxu0
      %2192 = vmatprep.mubr.f32.mxu0 0.0
      %2193 = vmatmul.mubr.f32.gmra.mxu0 %v1974
      %v2194 = vpop.f32.mrf.mxu0
      %v2195 = vadd.f32 0.0, %v2194
      %v2196 = vpop.f32.mrf.mxu0
      %2197 = vmatprep.mubr.f32.mxu0 0.0
      %2198 = vmatmul.mubr.f32.gmra.mxu0 %v1976
      %v2199 = vpop.f32.mrf.mxu0
      %v2200 = vadd.f32 0.0, %v2199
      %v2201 = vpop.f32.mrf.mxu0
      %2202 = vdwg.mxu0
      %v2203 = vadd.f32 %v1928, %v2045
      %v2204 = vadd.f32 %v1929, %v2050
      %v2205 = vadd.f32 %v1930, %v2055
      %v2206 = vadd.f32 %v1931, %v2060
      %v2207 = vadd.f32 %v1932, %v2065
      %v2208 = vadd.f32 %v1933, %v2070
      %v2209 = vadd.f32 %v1934, %v2075
      %v2210 = vadd.f32 %v1935, %v2080
      %v2211 = vadd.f32 %v1936, %v2085
      %v2212 = vadd.f32 %v1937, %v2090
      %v2213 = vadd.f32 %v1938, %v2095
      %v2214 = vadd.f32 %v1939, %v2100
      %v2215 = vadd.f32 %v1940, %v2105
      %v2216 = vadd.f32 %v1941, %v2110
      %v2217 = vadd.f32 %v1942, %v2115
      %v2218 = vadd.f32 %v1943, %v2120
      %v2219 = vadd.f32 %v1944, %v2125
      %v2220 = vadd.f32 %v1945, %v2130
      %v2221 = vadd.f32 %v1946, %v2135
      %v2222 = vadd.f32 %v1947, %v2140
      %v2223 = vadd.f32 %v1948, %v2145
      %v2224 = vadd.f32 %v1949, %v2150
      %v2225 = vadd.f32 %v1950, %v2155
      %v2226 = vadd.f32 %v1951, %v2160
      %v2227 = vadd.f32 %v1952, %v2165
      %v2228 = vadd.f32 %v1953, %v2170
      %v2229 = vadd.f32 %v1954, %v2175
      %v2230 = vadd.f32 %v1955, %v2180
      %v2231 = vadd.f32 %v1956, %v2185
      %v2232 = vadd.f32 %v1957, %v2190
      %v2233 = vadd.f32 %v1958, %v2195
      %v2234 = vadd.f32 %v1959, %v2200
      %s2235 = scalar_lea.vmem %s210, 384
      %v2236 = vld [vmem:[%s2235] sm:$0xff]
      %v2237 = vld [vmem:[%s2235 + $0x8] sm:$0xff]
      %v2238 = vld [vmem:[%s2235 + $0x10] sm:$0xff]
      %v2239 = vld [vmem:[%s2235 + $0x18] sm:$0xff]
      %v2240 = vld [vmem:[%s2235 + $0x20] sm:$0xff]
      %v2241 = vld [vmem:[%s2235 + $0x28] sm:$0xff]
      %v2242 = vld [vmem:[%s2235 + $0x30] sm:$0xff]
      %v2243 = vld [vmem:[%s2235 + $0x38] sm:$0xff]
      %v2245 = vsel %vm422, %v273, 0
      %v2248 = vsel %vm422, %v274, 0
      %2250 = vmatprep.subr.mxu0 0.0
      %2251 = vmatpush1.msra.mxu0 0.0
      %2252 = vmatprep.subr.mxu0 0.0
      %2253 = vmatpush1.msra.mxu0 0.0
      %2254 = vmatprep.subr.mxu0 0.0
      %2255 = vmatpush1.msra.mxu0 0.0
      %2256 = vmatprep.subr.mxu0 0.0
      %2257 = vmatpush1.msra.mxu0 0.0
      %2258 = vmatprep.subr.mxu0 0.0
      %2259 = vmatpush1.msra.mxu0 0.0
      %2260 = vmatprep.subr.mxu0 0.0
      %2261 = vmatpush1.msra.mxu0 0.0
      %2262 = vmatprep.subr.mxu0 0.0
      %2263 = vmatpush1.msra.mxu0 0.0
      %2264 = vmatprep.subr.mxu0 0.0
      %2265 = vmatpush1.msra.mxu0 0.0
      %2266 = vmatprep.subr.mxu0 0.0
      %2267 = vmatpush1.msra.mxu0 %v2243
      %2268 = vmatprep.subr.mxu0 0.0
      %2269 = vmatpush1.msra.mxu0 %v2242
      %2270 = vmatprep.subr.mxu0 0.0
      %2271 = vmatpush1.msra.mxu0 %v2241
      %2272 = vmatprep.subr.mxu0 0.0
      %2273 = vmatpush1.msra.mxu0 %v2240
      %2274 = vmatprep.subr.mxu0 0.0
      %2275 = vmatpush1.msra.mxu0 %v2239
      %2276 = vmatprep.subr.mxu0 0.0
      %2277 = vmatpush1.msra.mxu0 %v2238
      %2278 = vmatprep.subr.mxu0 0.0
      %2279 = vmatpush1.msra.mxu0 %v2237
      %2280 = vmatprep.subr.mxu0 0.0
      %2281 = vmatpush1.msra.mxu0 %v2236
      %2282 = vmatprep.subr.mxu0 0.0
      %2283 = vmatpush2.msra.mxu0 0.0
      %2284 = vmatprep.subr.mxu0 0.0
      %2285 = vmatpush2.msra.mxu0 0.0
      %2286 = vmatprep.subr.mxu0 0.0
      %2287 = vmatpush2.msra.mxu0 0.0
      %2288 = vmatprep.subr.mxu0 0.0
      %2289 = vmatpush2.msra.mxu0 0.0
      %2290 = vmatprep.subr.mxu0 0.0
      %2291 = vmatpush2.msra.mxu0 0.0
      %2292 = vmatprep.subr.mxu0 0.0
      %2293 = vmatpush2.msra.mxu0 0.0
      %2294 = vmatprep.subr.mxu0 0.0
      %2295 = vmatpush2.msra.mxu0 0.0
      %2296 = vmatprep.subr.mxu0 0.0
      %2297 = vmatpush2.msra.mxu0 0.0
      %2298 = vmatprep.subr.mxu0 0.0
      %2299 = vmatpush2.msra.mxu0 0.0
      %2300 = vmatprep.subr.mxu0 0.0
      %2301 = vmatpush2.msra.mxu0 0.0
      %2302 = vmatprep.subr.mxu0 0.0
      %2303 = vmatpush2.msra.mxu0 0.0
      %2304 = vmatprep.subr.mxu0 0.0
      %2305 = vmatpush2.msra.mxu0 0.0
      %2306 = vmatprep.subr.mxu0 0.0
      %2307 = vmatpush2.msra.mxu0 0.0
      %2308 = vmatprep.subr.mxu0 0.0
      %2309 = vmatpush2.msra.mxu0 0.0
      %2310 = vmatprep.subr.mxu0 0.0
      %2311 = vmatpush2.msra.mxu0 0.0
      %2312 = vmatprep.subr.mxu0 0.0
      %2313 = vmatpush2.msra.mxu0 0.0
      %2314 = vmatprep.mubr.f32.mxu0 0.0
      %2315 = vmatmul.mubr.f32.gmra.mxu0 %v720
      %v2316 = vpop.f32.mrf.mxu0
      %v2317 = vadd.f32 0.0, %v2316
      %v2318 = vpop.f32.mrf.mxu0
      %2319 = vmatprep.mubr.f32.mxu0 0.0
      %2320 = vmatmul.mubr.f32.gmra.mxu0 %v722
      %v2321 = vpop.f32.mrf.mxu0
      %v2322 = vadd.f32 0.0, %v2321
      %v2323 = vpop.f32.mrf.mxu0
      %2324 = vmatprep.mubr.f32.mxu0 0.0
      %2325 = vmatmul.mubr.f32.gmra.mxu0 %v724
      %v2326 = vpop.f32.mrf.mxu0
      %v2327 = vadd.f32 0.0, %v2326
      %v2328 = vpop.f32.mrf.mxu0
      %2329 = vmatprep.mubr.f32.mxu0 0.0
      %2330 = vmatmul.mubr.f32.gmra.mxu0 %v726
      %v2331 = vpop.f32.mrf.mxu0
      %v2332 = vadd.f32 0.0, %v2331
      %v2333 = vpop.f32.mrf.mxu0
      %2334 = vmatprep.mubr.f32.mxu0 0.0
      %2335 = vmatmul.mubr.f32.gmra.mxu0 %v728
      %v2336 = vpop.f32.mrf.mxu0
      %v2337 = vadd.f32 0.0, %v2336
      %v2338 = vpop.f32.mrf.mxu0
      %2339 = vmatprep.mubr.f32.mxu0 0.0
      %2340 = vmatmul.mubr.f32.gmra.mxu0 %v730
      %v2341 = vpop.f32.mrf.mxu0
      %v2342 = vadd.f32 0.0, %v2341
      %v2343 = vpop.f32.mrf.mxu0
      %2344 = vmatprep.mubr.f32.mxu0 0.0
      %2345 = vmatmul.mubr.f32.gmra.mxu0 %v732
      %v2346 = vpop.f32.mrf.mxu0
      %v2347 = vadd.f32 0.0, %v2346
      %v2348 = vpop.f32.mrf.mxu0
      %2349 = vmatprep.mubr.f32.mxu0 0.0
      %2350 = vmatmul.mubr.f32.gmra.mxu0 %v734
      %v2351 = vpop.f32.mrf.mxu0
      %v2352 = vadd.f32 0.0, %v2351
      %v2353 = vpop.f32.mrf.mxu0
      %2354 = vmatprep.mubr.f32.mxu0 0.0
      %2355 = vmatmul.mubr.f32.gmra.mxu0 %v736
      %v2356 = vpop.f32.mrf.mxu0
      %v2357 = vadd.f32 0.0, %v2356
      %v2358 = vpop.f32.mrf.mxu0
      %2359 = vmatprep.mubr.f32.mxu0 0.0
      %2360 = vmatmul.mubr.f32.gmra.mxu0 %v738
      %v2361 = vpop.f32.mrf.mxu0
      %v2362 = vadd.f32 0.0, %v2361
      %v2363 = vpop.f32.mrf.mxu0
      %2364 = vmatprep.mubr.f32.mxu0 0.0
      %2365 = vmatmul.mubr.f32.gmra.mxu0 %v740
      %v2366 = vpop.f32.mrf.mxu0
      %v2367 = vadd.f32 0.0, %v2366
      %v2368 = vpop.f32.mrf.mxu0
      %2369 = vmatprep.mubr.f32.mxu0 0.0
      %2370 = vmatmul.mubr.f32.gmra.mxu0 %v742
      %v2371 = vpop.f32.mrf.mxu0
      %v2372 = vadd.f32 0.0, %v2371
      %v2373 = vpop.f32.mrf.mxu0
      %2374 = vmatprep.mubr.f32.mxu0 0.0
      %2375 = vmatmul.mubr.f32.gmra.mxu0 %v744
      %v2376 = vpop.f32.mrf.mxu0
      %v2377 = vadd.f32 0.0, %v2376
      %v2378 = vpop.f32.mrf.mxu0
      %2379 = vmatprep.mubr.f32.mxu0 0.0
      %2380 = vmatmul.mubr.f32.gmra.mxu0 %v746
      %v2381 = vpop.f32.mrf.mxu0
      %v2382 = vadd.f32 0.0, %v2381
      %v2383 = vpop.f32.mrf.mxu0
      %2384 = vmatprep.mubr.f32.mxu0 0.0
      %2385 = vmatmul.mubr.f32.gmra.mxu0 %v748
      %v2386 = vpop.f32.mrf.mxu0
      %v2387 = vadd.f32 0.0, %v2386
      %v2388 = vpop.f32.mrf.mxu0
      %2389 = vmatprep.mubr.f32.mxu0 0.0
      %2390 = vmatmul.mubr.f32.gmra.mxu0 %v750
      %v2391 = vpop.f32.mrf.mxu0
      %v2392 = vadd.f32 0.0, %v2391
      %v2393 = vpop.f32.mrf.mxu0
      %2394 = vmatprep.mubr.f32.mxu0 0.0
      %2395 = vmatmul.mubr.f32.gmra.mxu0 %v752
      %v2396 = vpop.f32.mrf.mxu0
      %v2397 = vadd.f32 0.0, %v2396
      %v2398 = vpop.f32.mrf.mxu0
      %2399 = vmatprep.mubr.f32.mxu0 0.0
      %2400 = vmatmul.mubr.f32.gmra.mxu0 %v754
      %v2401 = vpop.f32.mrf.mxu0
      %v2402 = vadd.f32 0.0, %v2401
      %v2403 = vpop.f32.mrf.mxu0
      %2404 = vmatprep.mubr.f32.mxu0 0.0
      %2405 = vmatmul.mubr.f32.gmra.mxu0 %v756
      %v2406 = vpop.f32.mrf.mxu0
      %v2407 = vadd.f32 0.0, %v2406
      %v2408 = vpop.f32.mrf.mxu0
      %2409 = vmatprep.mubr.f32.mxu0 0.0
      %2410 = vmatmul.mubr.f32.gmra.mxu0 %v758
      %v2411 = vpop.f32.mrf.mxu0
      %v2412 = vadd.f32 0.0, %v2411
      %v2413 = vpop.f32.mrf.mxu0
      %2414 = vmatprep.mubr.f32.mxu0 0.0
      %2415 = vmatmul.mubr.f32.gmra.mxu0 %v760
      %v2416 = vpop.f32.mrf.mxu0
      %v2417 = vadd.f32 0.0, %v2416
      %v2418 = vpop.f32.mrf.mxu0
      %2419 = vmatprep.mubr.f32.mxu0 0.0
      %2420 = vmatmul.mubr.f32.gmra.mxu0 %v762
      %v2421 = vpop.f32.mrf.mxu0
      %v2422 = vadd.f32 0.0, %v2421
      %v2423 = vpop.f32.mrf.mxu0
      %2424 = vmatprep.mubr.f32.mxu0 0.0
      %2425 = vmatmul.mubr.f32.gmra.mxu0 %v764
      %v2426 = vpop.f32.mrf.mxu0
      %v2427 = vadd.f32 0.0, %v2426
      %v2428 = vpop.f32.mrf.mxu0
      %2429 = vmatprep.mubr.f32.mxu0 0.0
      %2430 = vmatmul.mubr.f32.gmra.mxu0 %v766
      %v2431 = vpop.f32.mrf.mxu0
      %v2432 = vadd.f32 0.0, %v2431
      %v2433 = vpop.f32.mrf.mxu0
      %2434 = vmatprep.mubr.f32.mxu0 0.0
      %2435 = vmatmul.mubr.f32.gmra.mxu0 %v768
      %v2436 = vpop.f32.mrf.mxu0
      %v2437 = vadd.f32 0.0, %v2436
      %v2438 = vpop.f32.mrf.mxu0
      %2439 = vmatprep.mubr.f32.mxu0 0.0
      %2440 = vmatmul.mubr.f32.gmra.mxu0 %v770
      %v2441 = vpop.f32.mrf.mxu0
      %v2442 = vadd.f32 0.0, %v2441
      %v2443 = vpop.f32.mrf.mxu0
      %2444 = vmatprep.mubr.f32.mxu0 0.0
      %2445 = vmatmul.mubr.f32.gmra.mxu0 %v772
      %v2446 = vpop.f32.mrf.mxu0
      %v2447 = vadd.f32 0.0, %v2446
      %v2448 = vpop.f32.mrf.mxu0
      %2449 = vmatprep.mubr.f32.mxu0 0.0
      %2450 = vmatmul.mubr.f32.gmra.mxu0 %v774
      %v2451 = vpop.f32.mrf.mxu0
      %v2452 = vadd.f32 0.0, %v2451
      %v2453 = vpop.f32.mrf.mxu0
      %2454 = vmatprep.mubr.f32.mxu0 0.0
      %2455 = vmatmul.mubr.f32.gmra.mxu0 %v1422
      %v2456 = vpop.f32.mrf.mxu0
      %v2457 = vadd.f32 0.0, %v2456
      %v2458 = vpop.f32.mrf.mxu0
      %2459 = vmatprep.mubr.f32.mxu0 0.0
      %2460 = vmatmul.mubr.f32.gmra.mxu0 %v1425
      %v2461 = vpop.f32.mrf.mxu0
      %v2462 = vadd.f32 0.0, %v2461
      %v2463 = vpop.f32.mrf.mxu0
      %2464 = vmatprep.mubr.f32.mxu0 0.0
      %2465 = vmatmul.mubr.f32.gmra.mxu0 %v2245
      %v2466 = vpop.f32.mrf.mxu0
      %v2467 = vadd.f32 0.0, %v2466
      %v2468 = vpop.f32.mrf.mxu0
      %2469 = vmatprep.mubr.f32.mxu0 0.0
      %2470 = vmatmul.mubr.f32.gmra.mxu0 %v2248
      %v2471 = vpop.f32.mrf.mxu0
      %v2472 = vadd.f32 0.0, %v2471
      %v2473 = vpop.f32.mrf.mxu0
      %2474 = vdwg.mxu0
      %v2475 = vadd.f32 %v2203, %v2317
      %v2476 = vadd.f32 %v2204, %v2322
      %v2477 = vadd.f32 %v2205, %v2327
      %v2478 = vadd.f32 %v2206, %v2332
      %v2479 = vadd.f32 %v2207, %v2337
      %v2480 = vadd.f32 %v2208, %v2342
      %v2481 = vadd.f32 %v2209, %v2347
      %v2482 = vadd.f32 %v2210, %v2352
      %v2483 = vadd.f32 %v2211, %v2357
      %v2484 = vadd.f32 %v2212, %v2362
      %v2485 = vadd.f32 %v2213, %v2367
      %v2486 = vadd.f32 %v2214, %v2372
      %v2487 = vadd.f32 %v2215, %v2377
      %v2488 = vadd.f32 %v2216, %v2382
      %v2489 = vadd.f32 %v2217, %v2387
      %v2490 = vadd.f32 %v2218, %v2392
      %v2491 = vadd.f32 %v2219, %v2397
      %v2492 = vadd.f32 %v2220, %v2402
      %v2493 = vadd.f32 %v2221, %v2407
      %v2494 = vadd.f32 %v2222, %v2412
      %v2495 = vadd.f32 %v2223, %v2417
      %v2496 = vadd.f32 %v2224, %v2422
      %v2497 = vadd.f32 %v2225, %v2427
      %v2498 = vadd.f32 %v2226, %v2432
      %v2499 = vadd.f32 %v2227, %v2437
      %v2500 = vadd.f32 %v2228, %v2442
      %v2501 = vadd.f32 %v2229, %v2447
      %v2502 = vadd.f32 %v2230, %v2452
      %v2503 = vadd.f32 %v2231, %v2457
      %v2504 = vadd.f32 %v2232, %v2462
      %v2505 = vadd.f32 %v2233, %v2467
      %v2506 = vadd.f32 %v2234, %v2472
      %v2508 = vrot.slane %v273, 1
      %v2509 = vrot.slane %v274, 1
      %v2510 = vsel %vm332, %v2508, %v2509
      %v2511 = vrot.slane %v275, 1
      %v2512 = vsel %vm332, %v2509, %v2511
      %s2513 = scalar_lea.vmem %s210, 448
      %v2514 = vld [vmem:[%s2513] sm:$0xff]
      %v2515 = vld [vmem:[%s2513 + $0x8] sm:$0xff]
      %v2516 = vld [vmem:[%s2513 + $0x10] sm:$0xff]
      %v2517 = vld [vmem:[%s2513 + $0x18] sm:$0xff]
      %v2518 = vld [vmem:[%s2513 + $0x20] sm:$0xff]
      %v2519 = vld [vmem:[%s2513 + $0x28] sm:$0xff]
      %v2520 = vld [vmem:[%s2513 + $0x30] sm:$0xff]
      %v2521 = vld [vmem:[%s2513 + $0x38] sm:$0xff]
      %v2522 = vsel %vm422, %v2510, 0
      %v2524 = vsel %vm422, %v2512, 0
      %2526 = vmatprep.subr.mxu0 0.0
      %2527 = vmatpush1.msra.mxu0 0.0
      %2528 = vmatprep.subr.mxu0 0.0
      %2529 = vmatpush1.msra.mxu0 0.0
      %2530 = vmatprep.subr.mxu0 0.0
      %2531 = vmatpush1.msra.mxu0 0.0
      %2532 = vmatprep.subr.mxu0 0.0
      %2533 = vmatpush1.msra.mxu0 0.0
      %2534 = vmatprep.subr.mxu0 0.0
      %2535 = vmatpush1.msra.mxu0 0.0
      %2536 = vmatprep.subr.mxu0 0.0
      %2537 = vmatpush1.msra.mxu0 0.0
      %2538 = vmatprep.subr.mxu0 0.0
      %2539 = vmatpush1.msra.mxu0 0.0
      %2540 = vmatprep.subr.mxu0 0.0
      %2541 = vmatpush1.msra.mxu0 0.0
      %2542 = vmatprep.subr.mxu0 0.0
      %2543 = vmatpush1.msra.mxu0 %v2521
      %2544 = vmatprep.subr.mxu0 0.0
      %2545 = vmatpush1.msra.mxu0 %v2520
      %2546 = vmatprep.subr.mxu0 0.0
      %2547 = vmatpush1.msra.mxu0 %v2519
      %2548 = vmatprep.subr.mxu0 0.0
      %2549 = vmatpush1.msra.mxu0 %v2518
      %2550 = vmatprep.subr.mxu0 0.0
      %2551 = vmatpush1.msra.mxu0 %v2517
      %2552 = vmatprep.subr.mxu0 0.0
      %2553 = vmatpush1.msra.mxu0 %v2516
      %2554 = vmatprep.subr.mxu0 0.0
      %2555 = vmatpush1.msra.mxu0 %v2515
      %2556 = vmatprep.subr.mxu0 0.0
      %2557 = vmatpush1.msra.mxu0 %v2514
      %2558 = vmatprep.subr.mxu0 0.0
      %2559 = vmatpush2.msra.mxu0 0.0
      %2560 = vmatprep.subr.mxu0 0.0
      %2561 = vmatpush2.msra.mxu0 0.0
      %2562 = vmatprep.subr.mxu0 0.0
      %2563 = vmatpush2.msra.mxu0 0.0
      %2564 = vmatprep.subr.mxu0 0.0
      %2565 = vmatpush2.msra.mxu0 0.0
      %2566 = vmatprep.subr.mxu0 0.0
      %2567 = vmatpush2.msra.mxu0 0.0
      %2568 = vmatprep.subr.mxu0 0.0
      %2569 = vmatpush2.msra.mxu0 0.0
      %2570 = vmatprep.subr.mxu0 0.0
      %2571 = vmatpush2.msra.mxu0 0.0
      %2572 = vmatprep.subr.mxu0 0.0
      %2573 = vmatpush2.msra.mxu0 0.0
      %2574 = vmatprep.subr.mxu0 0.0
      %2575 = vmatpush2.msra.mxu0 0.0
      %2576 = vmatprep.subr.mxu0 0.0
      %2577 = vmatpush2.msra.mxu0 0.0
      %2578 = vmatprep.subr.mxu0 0.0
      %2579 = vmatpush2.msra.mxu0 0.0
      %2580 = vmatprep.subr.mxu0 0.0
      %2581 = vmatpush2.msra.mxu0 0.0
      %2582 = vmatprep.subr.mxu0 0.0
      %2583 = vmatpush2.msra.mxu0 0.0
      %2584 = vmatprep.subr.mxu0 0.0
      %2585 = vmatpush2.msra.mxu0 0.0
      %2586 = vmatprep.subr.mxu0 0.0
      %2587 = vmatpush2.msra.mxu0 0.0
      %2588 = vmatprep.subr.mxu0 0.0
      %2589 = vmatpush2.msra.mxu0 0.0
      %2590 = vmatprep.mubr.f32.mxu0 0.0
      %2591 = vmatmul.mubr.f32.gmra.mxu0 %v431
      %v2592 = vpop.f32.mrf.mxu0
      %v2593 = vadd.f32 0.0, %v2592
      %v2594 = vpop.f32.mrf.mxu0
      %2595 = vmatprep.mubr.f32.mxu0 0.0
      %2596 = vmatmul.mubr.f32.gmra.mxu0 %v433
      %v2597 = vpop.f32.mrf.mxu0
      %v2598 = vadd.f32 0.0, %v2597
      %v2599 = vpop.f32.mrf.mxu0
      %2600 = vmatprep.mubr.f32.mxu0 0.0
      %2601 = vmatmul.mubr.f32.gmra.mxu0 %v435
      %v2602 = vpop.f32.mrf.mxu0
      %v2603 = vadd.f32 0.0, %v2602
      %v2604 = vpop.f32.mrf.mxu0
      %2605 = vmatprep.mubr.f32.mxu0 0.0
      %2606 = vmatmul.mubr.f32.gmra.mxu0 %v437
      %v2607 = vpop.f32.mrf.mxu0
      %v2608 = vadd.f32 0.0, %v2607
      %v2609 = vpop.f32.mrf.mxu0
      %2610 = vmatprep.mubr.f32.mxu0 0.0
      %2611 = vmatmul.mubr.f32.gmra.mxu0 %v439
      %v2612 = vpop.f32.mrf.mxu0
      %v2613 = vadd.f32 0.0, %v2612
      %v2614 = vpop.f32.mrf.mxu0
      %2615 = vmatprep.mubr.f32.mxu0 0.0
      %2616 = vmatmul.mubr.f32.gmra.mxu0 %v441
      %v2617 = vpop.f32.mrf.mxu0
      %v2618 = vadd.f32 0.0, %v2617
      %v2619 = vpop.f32.mrf.mxu0
      %2620 = vmatprep.mubr.f32.mxu0 0.0
      %2621 = vmatmul.mubr.f32.gmra.mxu0 %v443
      %v2622 = vpop.f32.mrf.mxu0
      %v2623 = vadd.f32 0.0, %v2622
      %v2624 = vpop.f32.mrf.mxu0
      %2625 = vmatprep.mubr.f32.mxu0 0.0
      %2626 = vmatmul.mubr.f32.gmra.mxu0 %v445
      %v2627 = vpop.f32.mrf.mxu0
      %v2628 = vadd.f32 0.0, %v2627
      %v2629 = vpop.f32.mrf.mxu0
      %2630 = vmatprep.mubr.f32.mxu0 0.0
      %2631 = vmatmul.mubr.f32.gmra.mxu0 %v447
      %v2632 = vpop.f32.mrf.mxu0
      %v2633 = vadd.f32 0.0, %v2632
      %v2634 = vpop.f32.mrf.mxu0
      %2635 = vmatprep.mubr.f32.mxu0 0.0
      %2636 = vmatmul.mubr.f32.gmra.mxu0 %v449
      %v2637 = vpop.f32.mrf.mxu0
      %v2638 = vadd.f32 0.0, %v2637
      %v2639 = vpop.f32.mrf.mxu0
      %2640 = vmatprep.mubr.f32.mxu0 0.0
      %2641 = vmatmul.mubr.f32.gmra.mxu0 %v451
      %v2642 = vpop.f32.mrf.mxu0
      %v2643 = vadd.f32 0.0, %v2642
      %v2644 = vpop.f32.mrf.mxu0
      %2645 = vmatprep.mubr.f32.mxu0 0.0
      %2646 = vmatmul.mubr.f32.gmra.mxu0 %v453
      %v2647 = vpop.f32.mrf.mxu0
      %v2648 = vadd.f32 0.0, %v2647
      %v2649 = vpop.f32.mrf.mxu0
      %2650 = vmatprep.mubr.f32.mxu0 0.0
      %2651 = vmatmul.mubr.f32.gmra.mxu0 %v455
      %v2652 = vpop.f32.mrf.mxu0
      %v2653 = vadd.f32 0.0, %v2652
      %v2654 = vpop.f32.mrf.mxu0
      %2655 = vmatprep.mubr.f32.mxu0 0.0
      %2656 = vmatmul.mubr.f32.gmra.mxu0 %v457
      %v2657 = vpop.f32.mrf.mxu0
      %v2658 = vadd.f32 0.0, %v2657
      %v2659 = vpop.f32.mrf.mxu0
      %2660 = vmatprep.mubr.f32.mxu0 0.0
      %2661 = vmatmul.mubr.f32.gmra.mxu0 %v459
      %v2662 = vpop.f32.mrf.mxu0
      %v2663 = vadd.f32 0.0, %v2662
      %v2664 = vpop.f32.mrf.mxu0
      %2665 = vmatprep.mubr.f32.mxu0 0.0
      %2666 = vmatmul.mubr.f32.gmra.mxu0 %v461
      %v2667 = vpop.f32.mrf.mxu0
      %v2668 = vadd.f32 0.0, %v2667
      %v2669 = vpop.f32.mrf.mxu0
      %2670 = vmatprep.mubr.f32.mxu0 0.0
      %2671 = vmatmul.mubr.f32.gmra.mxu0 %v463
      %v2672 = vpop.f32.mrf.mxu0
      %v2673 = vadd.f32 0.0, %v2672
      %v2674 = vpop.f32.mrf.mxu0
      %2675 = vmatprep.mubr.f32.mxu0 0.0
      %2676 = vmatmul.mubr.f32.gmra.mxu0 %v465
      %v2677 = vpop.f32.mrf.mxu0
      %v2678 = vadd.f32 0.0, %v2677
      %v2679 = vpop.f32.mrf.mxu0
      %2680 = vmatprep.mubr.f32.mxu0 0.0
      %2681 = vmatmul.mubr.f32.gmra.mxu0 %v467
      %v2682 = vpop.f32.mrf.mxu0
      %v2683 = vadd.f32 0.0, %v2682
      %v2684 = vpop.f32.mrf.mxu0
      %2685 = vmatprep.mubr.f32.mxu0 0.0
      %2686 = vmatmul.mubr.f32.gmra.mxu0 %v469
      %v2687 = vpop.f32.mrf.mxu0
      %v2688 = vadd.f32 0.0, %v2687
      %v2689 = vpop.f32.mrf.mxu0
      %2690 = vmatprep.mubr.f32.mxu0 0.0
      %2691 = vmatmul.mubr.f32.gmra.mxu0 %v471
      %v2692 = vpop.f32.mrf.mxu0
      %v2693 = vadd.f32 0.0, %v2692
      %v2694 = vpop.f32.mrf.mxu0
      %2695 = vmatprep.mubr.f32.mxu0 0.0
      %2696 = vmatmul.mubr.f32.gmra.mxu0 %v473
      %v2697 = vpop.f32.mrf.mxu0
      %v2698 = vadd.f32 0.0, %v2697
      %v2699 = vpop.f32.mrf.mxu0
      %2700 = vmatprep.mubr.f32.mxu0 0.0
      %2701 = vmatmul.mubr.f32.gmra.mxu0 %v475
      %v2702 = vpop.f32.mrf.mxu0
      %v2703 = vadd.f32 0.0, %v2702
      %v2704 = vpop.f32.mrf.mxu0
      %2705 = vmatprep.mubr.f32.mxu0 0.0
      %2706 = vmatmul.mubr.f32.gmra.mxu0 %v477
      %v2707 = vpop.f32.mrf.mxu0
      %v2708 = vadd.f32 0.0, %v2707
      %v2709 = vpop.f32.mrf.mxu0
      %2710 = vmatprep.mubr.f32.mxu0 0.0
      %2711 = vmatmul.mubr.f32.gmra.mxu0 %v479
      %v2712 = vpop.f32.mrf.mxu0
      %v2713 = vadd.f32 0.0, %v2712
      %v2714 = vpop.f32.mrf.mxu0
      %2715 = vmatprep.mubr.f32.mxu0 0.0
      %2716 = vmatmul.mubr.f32.gmra.mxu0 %v481
      %v2717 = vpop.f32.mrf.mxu0
      %v2718 = vadd.f32 0.0, %v2717
      %v2719 = vpop.f32.mrf.mxu0
      %2720 = vmatprep.mubr.f32.mxu0 0.0
      %2721 = vmatmul.mubr.f32.gmra.mxu0 %v483
      %v2722 = vpop.f32.mrf.mxu0
      %v2723 = vadd.f32 0.0, %v2722
      %v2724 = vpop.f32.mrf.mxu0
      %2725 = vmatprep.mubr.f32.mxu0 0.0
      %2726 = vmatmul.mubr.f32.gmra.mxu0 %v485
      %v2727 = vpop.f32.mrf.mxu0
      %v2728 = vadd.f32 0.0, %v2727
      %v2729 = vpop.f32.mrf.mxu0
      %2730 = vmatprep.mubr.f32.mxu0 0.0
      %2731 = vmatmul.mubr.f32.gmra.mxu0 %v1699
      %v2732 = vpop.f32.mrf.mxu0
      %v2733 = vadd.f32 0.0, %v2732
      %v2734 = vpop.f32.mrf.mxu0
      %2735 = vmatprep.mubr.f32.mxu0 0.0
      %2736 = vmatmul.mubr.f32.gmra.mxu0 %v1701
      %v2737 = vpop.f32.mrf.mxu0
      %v2738 = vadd.f32 0.0, %v2737
      %v2739 = vpop.f32.mrf.mxu0
      %2740 = vmatprep.mubr.f32.mxu0 0.0
      %2741 = vmatmul.mubr.f32.gmra.mxu0 %v2522
      %v2742 = vpop.f32.mrf.mxu0
      %v2743 = vadd.f32 0.0, %v2742
      %v2744 = vpop.f32.mrf.mxu0
      %2745 = vmatprep.mubr.f32.mxu0 0.0
      %2746 = vmatmul.mubr.f32.gmra.mxu0 %v2524
      %v2747 = vpop.f32.mrf.mxu0
      %v2748 = vadd.f32 0.0, %v2747
      %v2749 = vpop.f32.mrf.mxu0
      %2750 = vdwg.mxu0
      %v2751 = vadd.f32 %v2475, %v2593
      %v2752 = vadd.f32 %v2476, %v2598
      %v2753 = vadd.f32 %v2477, %v2603
      %v2754 = vadd.f32 %v2478, %v2608
      %v2755 = vadd.f32 %v2479, %v2613
      %v2756 = vadd.f32 %v2480, %v2618
      %v2757 = vadd.f32 %v2481, %v2623
      %v2758 = vadd.f32 %v2482, %v2628
      %v2759 = vadd.f32 %v2483, %v2633
      %v2760 = vadd.f32 %v2484, %v2638
      %v2761 = vadd.f32 %v2485, %v2643
      %v2762 = vadd.f32 %v2486, %v2648
      %v2763 = vadd.f32 %v2487, %v2653
      %v2764 = vadd.f32 %v2488, %v2658
      %v2765 = vadd.f32 %v2489, %v2663
      %v2766 = vadd.f32 %v2490, %v2668
      %v2767 = vadd.f32 %v2491, %v2673
      %v2768 = vadd.f32 %v2492, %v2678
      %v2769 = vadd.f32 %v2493, %v2683
      %v2770 = vadd.f32 %v2494, %v2688
      %v2771 = vadd.f32 %v2495, %v2693
      %v2772 = vadd.f32 %v2496, %v2698
      %v2773 = vadd.f32 %v2497, %v2703
      %v2774 = vadd.f32 %v2498, %v2708
      %v2775 = vadd.f32 %v2499, %v2713
      %v2776 = vadd.f32 %v2500, %v2718
      %v2777 = vadd.f32 %v2501, %v2723
      %v2778 = vadd.f32 %v2502, %v2728
      %v2779 = vadd.f32 %v2503, %v2733
      %v2780 = vadd.f32 %v2504, %v2738
      %v2781 = vadd.f32 %v2505, %v2743
      %v2782 = vadd.f32 %v2506, %v2748
      %v2783 = vrot.slane %v273, 2
      %v2784 = vrot.slane %v274, 2
      %v2785 = vsel %vm1001, %v2783, %v2784
      %v2786 = vrot.slane %v275, 2
      %v2787 = vsel %vm1001, %v2784, %v2786
      %s2788 = scalar_lea.vmem %s210, 512
      %v2789 = vld [vmem:[%s2788] sm:$0xff]
      %v2790 = vld [vmem:[%s2788 + $0x8] sm:$0xff]
      %v2791 = vld [vmem:[%s2788 + $0x10] sm:$0xff]
      %v2792 = vld [vmem:[%s2788 + $0x18] sm:$0xff]
      %v2793 = vld [vmem:[%s2788 + $0x20] sm:$0xff]
      %v2794 = vld [vmem:[%s2788 + $0x28] sm:$0xff]
      %v2795 = vld [vmem:[%s2788 + $0x30] sm:$0xff]
      %v2796 = vld [vmem:[%s2788 + $0x38] sm:$0xff]
      %v2797 = vsel %vm422, %v2785, 0
      %v2799 = vsel %vm422, %v2787, 0
      %2801 = vmatprep.subr.mxu0 0.0
      %2802 = vmatpush1.msra.mxu0 0.0
      %2803 = vmatprep.subr.mxu0 0.0
      %2804 = vmatpush1.msra.mxu0 0.0
      %2805 = vmatprep.subr.mxu0 0.0
      %2806 = vmatpush1.msra.mxu0 0.0
      %2807 = vmatprep.subr.mxu0 0.0
      %2808 = vmatpush1.msra.mxu0 0.0
      %2809 = vmatprep.subr.mxu0 0.0
      %2810 = vmatpush1.msra.mxu0 0.0
      %2811 = vmatprep.subr.mxu0 0.0
      %2812 = vmatpush1.msra.mxu0 0.0
      %2813 = vmatprep.subr.mxu0 0.0
      %2814 = vmatpush1.msra.mxu0 0.0
      %2815 = vmatprep.subr.mxu0 0.0
      %2816 = vmatpush1.msra.mxu0 0.0
      %2817 = vmatprep.subr.mxu0 0.0
      %2818 = vmatpush1.msra.mxu0 %v2796
      %2819 = vmatprep.subr.mxu0 0.0
      %2820 = vmatpush1.msra.mxu0 %v2795
      %2821 = vmatprep.subr.mxu0 0.0
      %2822 = vmatpush1.msra.mxu0 %v2794
      %2823 = vmatprep.subr.mxu0 0.0
      %2824 = vmatpush1.msra.mxu0 %v2793
      %2825 = vmatprep.subr.mxu0 0.0
      %2826 = vmatpush1.msra.mxu0 %v2792
      %2827 = vmatprep.subr.mxu0 0.0
      %2828 = vmatpush1.msra.mxu0 %v2791
      %2829 = vmatprep.subr.mxu0 0.0
      %2830 = vmatpush1.msra.mxu0 %v2790
      %2831 = vmatprep.subr.mxu0 0.0
      %2832 = vmatpush1.msra.mxu0 %v2789
      %2833 = vmatprep.subr.mxu0 0.0
      %2834 = vmatpush2.msra.mxu0 0.0
      %2835 = vmatprep.subr.mxu0 0.0
      %2836 = vmatpush2.msra.mxu0 0.0
      %2837 = vmatprep.subr.mxu0 0.0
      %2838 = vmatpush2.msra.mxu0 0.0
      %2839 = vmatprep.subr.mxu0 0.0
      %2840 = vmatpush2.msra.mxu0 0.0
      %2841 = vmatprep.subr.mxu0 0.0
      %2842 = vmatpush2.msra.mxu0 0.0
      %2843 = vmatprep.subr.mxu0 0.0
      %2844 = vmatpush2.msra.mxu0 0.0
      %2845 = vmatprep.subr.mxu0 0.0
      %2846 = vmatpush2.msra.mxu0 0.0
      %2847 = vmatprep.subr.mxu0 0.0
      %2848 = vmatpush2.msra.mxu0 0.0
      %2849 = vmatprep.subr.mxu0 0.0
      %2850 = vmatpush2.msra.mxu0 0.0
      %2851 = vmatprep.subr.mxu0 0.0
      %2852 = vmatpush2.msra.mxu0 0.0
      %2853 = vmatprep.subr.mxu0 0.0
      %2854 = vmatpush2.msra.mxu0 0.0
      %2855 = vmatprep.subr.mxu0 0.0
      %2856 = vmatpush2.msra.mxu0 0.0
      %2857 = vmatprep.subr.mxu0 0.0
      %2858 = vmatpush2.msra.mxu0 0.0
      %2859 = vmatprep.subr.mxu0 0.0
      %2860 = vmatpush2.msra.mxu0 0.0
      %2861 = vmatprep.subr.mxu0 0.0
      %2862 = vmatpush2.msra.mxu0 0.0
      %2863 = vmatprep.subr.mxu0 0.0
      %2864 = vmatpush2.msra.mxu0 0.0
      %2865 = vmatprep.mubr.f32.mxu0 0.0
      %2866 = vmatmul.mubr.f32.gmra.mxu0 %v1099
      %v2867 = vpop.f32.mrf.mxu0
      %v2868 = vadd.f32 0.0, %v2867
      %v2869 = vpop.f32.mrf.mxu0
      %2870 = vmatprep.mubr.f32.mxu0 0.0
      %2871 = vmatmul.mubr.f32.gmra.mxu0 %v1101
      %v2872 = vpop.f32.mrf.mxu0
      %v2873 = vadd.f32 0.0, %v2872
      %v2874 = vpop.f32.mrf.mxu0
      %2875 = vmatprep.mubr.f32.mxu0 0.0
      %2876 = vmatmul.mubr.f32.gmra.mxu0 %v1103
      %v2877 = vpop.f32.mrf.mxu0
      %v2878 = vadd.f32 0.0, %v2877
      %v2879 = vpop.f32.mrf.mxu0
      %2880 = vmatprep.mubr.f32.mxu0 0.0
      %2881 = vmatmul.mubr.f32.gmra.mxu0 %v1105
      %v2882 = vpop.f32.mrf.mxu0
      %v2883 = vadd.f32 0.0, %v2882
      %v2884 = vpop.f32.mrf.mxu0
      %2885 = vmatprep.mubr.f32.mxu0 0.0
      %2886 = vmatmul.mubr.f32.gmra.mxu0 %v1107
      %v2887 = vpop.f32.mrf.mxu0
      %v2888 = vadd.f32 0.0, %v2887
      %v2889 = vpop.f32.mrf.mxu0
      %2890 = vmatprep.mubr.f32.mxu0 0.0
      %2891 = vmatmul.mubr.f32.gmra.mxu0 %v1109
      %v2892 = vpop.f32.mrf.mxu0
      %v2893 = vadd.f32 0.0, %v2892
      %v2894 = vpop.f32.mrf.mxu0
      %2895 = vmatprep.mubr.f32.mxu0 0.0
      %2896 = vmatmul.mubr.f32.gmra.mxu0 %v1111
      %v2897 = vpop.f32.mrf.mxu0
      %v2898 = vadd.f32 0.0, %v2897
      %v2899 = vpop.f32.mrf.mxu0
      %2900 = vmatprep.mubr.f32.mxu0 0.0
      %2901 = vmatmul.mubr.f32.gmra.mxu0 %v1113
      %v2902 = vpop.f32.mrf.mxu0
      %v2903 = vadd.f32 0.0, %v2902
      %v2904 = vpop.f32.mrf.mxu0
      %2905 = vmatprep.mubr.f32.mxu0 0.0
      %2906 = vmatmul.mubr.f32.gmra.mxu0 %v1115
      %v2907 = vpop.f32.mrf.mxu0
      %v2908 = vadd.f32 0.0, %v2907
      %v2909 = vpop.f32.mrf.mxu0
      %2910 = vmatprep.mubr.f32.mxu0 0.0
      %2911 = vmatmul.mubr.f32.gmra.mxu0 %v1117
      %v2912 = vpop.f32.mrf.mxu0
      %v2913 = vadd.f32 0.0, %v2912
      %v2914 = vpop.f32.mrf.mxu0
      %2915 = vmatprep.mubr.f32.mxu0 0.0
      %2916 = vmatmul.mubr.f32.gmra.mxu0 %v1119
      %v2917 = vpop.f32.mrf.mxu0
      %v2918 = vadd.f32 0.0, %v2917
      %v2919 = vpop.f32.mrf.mxu0
      %2920 = vmatprep.mubr.f32.mxu0 0.0
      %2921 = vmatmul.mubr.f32.gmra.mxu0 %v1121
      %v2922 = vpop.f32.mrf.mxu0
      %v2923 = vadd.f32 0.0, %v2922
      %v2924 = vpop.f32.mrf.mxu0
      %2925 = vmatprep.mubr.f32.mxu0 0.0
      %2926 = vmatmul.mubr.f32.gmra.mxu0 %v1123
      %v2927 = vpop.f32.mrf.mxu0
      %v2928 = vadd.f32 0.0, %v2927
      %v2929 = vpop.f32.mrf.mxu0
      %2930 = vmatprep.mubr.f32.mxu0 0.0
      %2931 = vmatmul.mubr.f32.gmra.mxu0 %v1125
      %v2932 = vpop.f32.mrf.mxu0
      %v2933 = vadd.f32 0.0, %v2932
      %v2934 = vpop.f32.mrf.mxu0
      %2935 = vmatprep.mubr.f32.mxu0 0.0
      %2936 = vmatmul.mubr.f32.gmra.mxu0 %v1127
      %v2937 = vpop.f32.mrf.mxu0
      %v2938 = vadd.f32 0.0, %v2937
      %v2939 = vpop.f32.mrf.mxu0
      %2940 = vmatprep.mubr.f32.mxu0 0.0
      %2941 = vmatmul.mubr.f32.gmra.mxu0 %v1129
      %v2942 = vpop.f32.mrf.mxu0
      %v2943 = vadd.f32 0.0, %v2942
      %v2944 = vpop.f32.mrf.mxu0
      %2945 = vmatprep.mubr.f32.mxu0 0.0
      %2946 = vmatmul.mubr.f32.gmra.mxu0 %v1131
      %v2947 = vpop.f32.mrf.mxu0
      %v2948 = vadd.f32 0.0, %v2947
      %v2949 = vpop.f32.mrf.mxu0
      %2950 = vmatprep.mubr.f32.mxu0 0.0
      %2951 = vmatmul.mubr.f32.gmra.mxu0 %v1133
      %v2952 = vpop.f32.mrf.mxu0
      %v2953 = vadd.f32 0.0, %v2952
      %v2954 = vpop.f32.mrf.mxu0
      %2955 = vmatprep.mubr.f32.mxu0 0.0
      %2956 = vmatmul.mubr.f32.gmra.mxu0 %v1135
      %v2957 = vpop.f32.mrf.mxu0
      %v2958 = vadd.f32 0.0, %v2957
      %v2959 = vpop.f32.mrf.mxu0
      %2960 = vmatprep.mubr.f32.mxu0 0.0
      %2961 = vmatmul.mubr.f32.gmra.mxu0 %v1137
      %v2962 = vpop.f32.mrf.mxu0
      %v2963 = vadd.f32 0.0, %v2962
      %v2964 = vpop.f32.mrf.mxu0
      %2965 = vmatprep.mubr.f32.mxu0 0.0
      %2966 = vmatmul.mubr.f32.gmra.mxu0 %v1139
      %v2967 = vpop.f32.mrf.mxu0
      %v2968 = vadd.f32 0.0, %v2967
      %v2969 = vpop.f32.mrf.mxu0
      %2970 = vmatprep.mubr.f32.mxu0 0.0
      %2971 = vmatmul.mubr.f32.gmra.mxu0 %v1141
      %v2972 = vpop.f32.mrf.mxu0
      %v2973 = vadd.f32 0.0, %v2972
      %v2974 = vpop.f32.mrf.mxu0
      %2975 = vmatprep.mubr.f32.mxu0 0.0
      %2976 = vmatmul.mubr.f32.gmra.mxu0 %v1143
      %v2977 = vpop.f32.mrf.mxu0
      %v2978 = vadd.f32 0.0, %v2977
      %v2979 = vpop.f32.mrf.mxu0
      %2980 = vmatprep.mubr.f32.mxu0 0.0
      %2981 = vmatmul.mubr.f32.gmra.mxu0 %v1145
      %v2982 = vpop.f32.mrf.mxu0
      %v2983 = vadd.f32 0.0, %v2982
      %v2984 = vpop.f32.mrf.mxu0
      %2985 = vmatprep.mubr.f32.mxu0 0.0
      %2986 = vmatmul.mubr.f32.gmra.mxu0 %v1147
      %v2987 = vpop.f32.mrf.mxu0
      %v2988 = vadd.f32 0.0, %v2987
      %v2989 = vpop.f32.mrf.mxu0
      %2990 = vmatprep.mubr.f32.mxu0 0.0
      %2991 = vmatmul.mubr.f32.gmra.mxu0 %v1149
      %v2992 = vpop.f32.mrf.mxu0
      %v2993 = vadd.f32 0.0, %v2992
      %v2994 = vpop.f32.mrf.mxu0
      %2995 = vmatprep.mubr.f32.mxu0 0.0
      %2996 = vmatmul.mubr.f32.gmra.mxu0 %v1151
      %v2997 = vpop.f32.mrf.mxu0
      %v2998 = vadd.f32 0.0, %v2997
      %v2999 = vpop.f32.mrf.mxu0
      %3000 = vmatprep.mubr.f32.mxu0 0.0
      %3001 = vmatmul.mubr.f32.gmra.mxu0 %v1153
      %v3002 = vpop.f32.mrf.mxu0
      %v3003 = vadd.f32 0.0, %v3002
      %v3004 = vpop.f32.mrf.mxu0
      %3005 = vmatprep.mubr.f32.mxu0 0.0
      %3006 = vmatmul.mubr.f32.gmra.mxu0 %v1974
      %v3007 = vpop.f32.mrf.mxu0
      %v3008 = vadd.f32 0.0, %v3007
      %v3009 = vpop.f32.mrf.mxu0
      %3010 = vmatprep.mubr.f32.mxu0 0.0
      %3011 = vmatmul.mubr.f32.gmra.mxu0 %v1976
      %v3012 = vpop.f32.mrf.mxu0
      %v3013 = vadd.f32 0.0, %v3012
      %v3014 = vpop.f32.mrf.mxu0
      %3015 = vmatprep.mubr.f32.mxu0 0.0
      %3016 = vmatmul.mubr.f32.gmra.mxu0 %v2797
      %v3017 = vpop.f32.mrf.mxu0
      %v3018 = vadd.f32 0.0, %v3017
      %v3019 = vpop.f32.mrf.mxu0
      %3020 = vmatprep.mubr.f32.mxu0 0.0
      %3021 = vmatmul.mubr.f32.gmra.mxu0 %v2799
      %v3022 = vpop.f32.mrf.mxu0
      %v3023 = vadd.f32 0.0, %v3022
      %v3024 = vpop.f32.mrf.mxu0
      %3025 = vdwg.mxu0
      %v3026 = vadd.f32 %v2751, %v2868
      %v3027 = vadd.f32 %v2752, %v2873
      %v3028 = vadd.f32 %v2753, %v2878
      %v3029 = vadd.f32 %v2754, %v2883
      %v3030 = vadd.f32 %v2755, %v2888
      %v3031 = vadd.f32 %v2756, %v2893
      %v3032 = vadd.f32 %v2757, %v2898
      %v3033 = vadd.f32 %v2758, %v2903
      %v3034 = vadd.f32 %v2759, %v2908
      %v3035 = vadd.f32 %v2760, %v2913
      %v3036 = vadd.f32 %v2761, %v2918
      %v3037 = vadd.f32 %v2762, %v2923
      %v3038 = vadd.f32 %v2763, %v2928
      %v3039 = vadd.f32 %v2764, %v2933
      %v3040 = vadd.f32 %v2765, %v2938
      %v3041 = vadd.f32 %v2766, %v2943
      %v3042 = vadd.f32 %v2767, %v2948
      %v3043 = vadd.f32 %v2768, %v2953
      %v3044 = vadd.f32 %v2769, %v2958
      %v3045 = vadd.f32 %v2770, %v2963
      %v3046 = vadd.f32 %v2771, %v2968
      %v3047 = vadd.f32 %v2772, %v2973
      %v3048 = vadd.f32 %v2773, %v2978
      %v3049 = vadd.f32 %v2774, %v2983
      %v3050 = vadd.f32 %v2775, %v2988
      %v3051 = vadd.f32 %v2776, %v2993
      %v3052 = vadd.f32 %v2777, %v2998
      %v3053 = vadd.f32 %v2778, %v3003
      %v3054 = vadd.f32 %v2779, %v3008
      %v3055 = vadd.f32 %v2780, %v3013
      %v3056 = vadd.f32 %v2781, %v3018
      %v3057 = vadd.f32 %v2782, %v3023
      %v3058 = vld [vmem:[%s213] sm:$0x1]
      %v3060 = vlaneseq
      %v3061 = vshrl.u32 %v3060, 7
      %v3062 = vsub.s32 0, %v3061
      %v3063 = vrot.slane %v3058, %v3062
      %v3065 = vadd.f32 %v3026, %v3063
      %v3066 = vadd.f32 %v3027, %v3063
      %v3067 = vadd.f32 %v3028, %v3063
      %v3068 = vadd.f32 %v3029, %v3063
      %v3069 = vadd.f32 %v3030, %v3063
      %v3070 = vadd.f32 %v3031, %v3063
      %v3071 = vadd.f32 %v3032, %v3063
      %v3072 = vadd.f32 %v3033, %v3063
      %v3073 = vadd.f32 %v3034, %v3063
      %v3074 = vadd.f32 %v3035, %v3063
      %v3075 = vadd.f32 %v3036, %v3063
      %v3076 = vadd.f32 %v3037, %v3063
      %v3077 = vadd.f32 %v3038, %v3063
      %v3078 = vadd.f32 %v3039, %v3063
      %v3079 = vadd.f32 %v3040, %v3063
      %v3080 = vadd.f32 %v3041, %v3063
      %v3081 = vadd.f32 %v3042, %v3063
      %v3082 = vadd.f32 %v3043, %v3063
      %v3083 = vadd.f32 %v3044, %v3063
      %v3084 = vadd.f32 %v3045, %v3063
      %v3085 = vadd.f32 %v3046, %v3063
      %v3086 = vadd.f32 %v3047, %v3063
      %v3087 = vadd.f32 %v3048, %v3063
      %v3088 = vadd.f32 %v3049, %v3063
      %v3089 = vadd.f32 %v3050, %v3063
      %v3090 = vadd.f32 %v3051, %v3063
      %v3091 = vadd.f32 %v3052, %v3063
      %v3092 = vadd.f32 %v3053, %v3063
      %v3093 = vadd.f32 %v3054, %v3063
      %v3094 = vadd.f32 %v3055, %v3063
      %v3095 = vadd.f32 %v3056, %v3063
      %v3096 = vadd.f32 %v3057, %v3063
      %v3097 = vmax.f32 %v3065, 0.0
      %v3098 = vmax.f32 %v3066, 0.0
      %v3099 = vmax.f32 %v3067, 0.0
      %v3100 = vmax.f32 %v3068, 0.0
      %v3101 = vmax.f32 %v3069, 0.0
      %v3102 = vmax.f32 %v3070, 0.0
      %v3103 = vmax.f32 %v3071, 0.0
      %v3104 = vmax.f32 %v3072, 0.0
      %v3105 = vmax.f32 %v3073, 0.0
      %v3106 = vmax.f32 %v3074, 0.0
      %v3107 = vmax.f32 %v3075, 0.0
      %v3108 = vmax.f32 %v3076, 0.0
      %v3109 = vmax.f32 %v3077, 0.0
      %v3110 = vmax.f32 %v3078, 0.0
      %v3111 = vmax.f32 %v3079, 0.0
      %v3112 = vmax.f32 %v3080, 0.0
      %v3113 = vmax.f32 %v3081, 0.0
      %v3114 = vmax.f32 %v3082, 0.0
      %v3115 = vmax.f32 %v3083, 0.0
      %v3116 = vmax.f32 %v3084, 0.0
      %v3117 = vmax.f32 %v3085, 0.0
      %v3118 = vmax.f32 %v3086, 0.0
      %v3119 = vmax.f32 %v3087, 0.0
      %v3120 = vmax.f32 %v3088, 0.0
      %v3121 = vmax.f32 %v3089, 0.0
      %v3122 = vmax.f32 %v3090, 0.0
      %v3123 = vmax.f32 %v3091, 0.0
      %v3124 = vmax.f32 %v3092, 0.0
      %v3125 = vmax.f32 %v3093, 0.0
      %v3126 = vmax.f32 %v3094, 0.0
      %v3127 = vmax.f32 %v3095, 0.0
      %v3128 = vmax.f32 %v3096, 0.0
      %3129 = vst.msk [vmem:[%s221] sm:$0xff] %vm422, %v3097
      %3130 = vst.msk [vmem:[%s221 + $0x8] sm:$0xff] %vm422, %v3098
      %3131 = vst.msk [vmem:[%s221 + $0x10] sm:$0xff] %vm422, %v3099
      %3132 = vst.msk [vmem:[%s221 + $0x18] sm:$0xff] %vm422, %v3100
      %3133 = vst.msk [vmem:[%s221 + $0x20] sm:$0xff] %vm422, %v3101
      %3134 = vst.msk [vmem:[%s221 + $0x28] sm:$0xff] %vm422, %v3102
      %3135 = vst.msk [vmem:[%s221 + $0x30] sm:$0xff] %vm422, %v3103
      %3136 = vst.msk [vmem:[%s221 + $0x38] sm:$0xff] %vm422, %v3104
      %3137 = vst.msk [vmem:[%s221 + $0x40] sm:$0xff] %vm422, %v3105
      %3138 = vst.msk [vmem:[%s221 + $0x48] sm:$0xff] %vm422, %v3106
      %3139 = vst.msk [vmem:[%s221 + $0x50] sm:$0xff] %vm422, %v3107
      %3140 = vst.msk [vmem:[%s221 + $0x58] sm:$0xff] %vm422, %v3108
      %3141 = vst.msk [vmem:[%s221 + $0x60] sm:$0xff] %vm422, %v3109
      %3142 = vst.msk [vmem:[%s221 + $0x68] sm:$0xff] %vm422, %v3110
      %3143 = vst.msk [vmem:[%s221 + $0x70] sm:$0xff] %vm422, %v3111
      %3144 = vst.msk [vmem:[%s221 + $0x78] sm:$0xff] %vm422, %v3112
      %3145 = vst.msk [vmem:[%s221 + $0x80] sm:$0xff] %vm422, %v3113
      %3146 = vst.msk [vmem:[%s221 + $0x88] sm:$0xff] %vm422, %v3114
      %3147 = vst.msk [vmem:[%s221 + $0x90] sm:$0xff] %vm422, %v3115
      %3148 = vst.msk [vmem:[%s221 + $0x98] sm:$0xff] %vm422, %v3116
      %3149 = vst.msk [vmem:[%s221 + $0xa0] sm:$0xff] %vm422, %v3117
      %3150 = vst.msk [vmem:[%s221 + $0xa8] sm:$0xff] %vm422, %v3118
      %3151 = vst.msk [vmem:[%s221 + $0xb0] sm:$0xff] %vm422, %v3119
      %3152 = vst.msk [vmem:[%s221 + $0xb8] sm:$0xff] %vm422, %v3120
      %3153 = vst.msk [vmem:[%s221 + $0xc0] sm:$0xff] %vm422, %v3121
      %3154 = vst.msk [vmem:[%s221 + $0xc8] sm:$0xff] %vm422, %v3122
      %3155 = vst.msk [vmem:[%s221 + $0xd0] sm:$0xff] %vm422, %v3123
      %3156 = vst.msk [vmem:[%s221 + $0xd8] sm:$0xff] %vm422, %v3124
      %3157 = vst.msk [vmem:[%s221 + $0xe0] sm:$0xff] %vm422, %v3125
      %3158 = vst.msk [vmem:[%s221 + $0xe8] sm:$0xff] %vm422, %v3126
      %3159 = vst.msk [vmem:[%s221 + $0xf0] sm:$0xff] %vm422, %v3127
      %3160 = vst.msk [vmem:[%s221 + $0xf8] sm:$0xff] %vm422, %v3128
      %p3161 = scmp.lt.s32.totalorder %s18, 1
      %s3162 = scalar_select %p3161, %s18, 1
      %p3163 = scmp.lt.s32.totalorder %s19, 0
      %s3164 = scalar_select %p3163, %s19, 0
      %s3165 = smul.addr %s3162, 32
      %s3166 = sadd.s32 %s3164, %s3165
      %s3167 = smul.addr %s3166, 8
      %s3168 = scalar_lea.vmem %s3, %s3167
      // Predicated region
      $region33: #{basic_block_forward.2} parent=31 // pred_check
        %p3169 = pneg %p124
      $region34: #{basic_block_forward.2} parent=31 // pred_check_branch
        %3171 = sbr.rel (%p3169) target = $region36
      $region35: #{basic_block_forward.2} parent=31 // pred_region
        _
      $region36: #{basic_block_forward.2} parent=31 // pred_fallthru
        _
    $region32: #{basic_block_forward.2} parent=5 // pred_fallthru
      _
    %p3172 = scmp.le.s32.totalorder 2, %s9
    // Predicated region
    $region37: #{basic_block_forward.2} parent=5 // pred_check
      %p3173 = pneg %p3172
    $region38: #{basic_block_forward.2} parent=5 // pred_check_branch
      %3175 = sbr.rel (%p3173) target = $region40
    $region39: #{basic_block_forward.2} parent=5 // pred_region
      %s3176 = ssub.s32 %s9, 2
      // Predicated region
      $region41: #{basic_block_forward.2} parent=39 // pred_check
        %p3177 = pneg %p130
      $region42: #{basic_block_forward.2} parent=39 // pred_check_branch
        %3179 = sbr.rel (%p3177) target = $region44
      $region43: #{basic_block_forward.2} parent=39 // pred_region
        %p3180 = scmp.lt.s32.totalorder %s20, 1
        %s3181 = scalar_select %p3180, %s20, 1
        %p3182 = scmp.lt.s32.totalorder %s21, 0
        %s3183 = scalar_select %p3182, %s21, 0
        %s3184 = smul.addr %s3181, 32
        %s3185 = sadd.s32 %s3183, %s3184
        %s3186 = smul.addr %s3185, 8
        %s3187 = scalar_lea.vmem %s3, %s3186
      $region44: #{basic_block_forward.2} parent=39 // pred_fallthru
        _
    $region40: #{basic_block_forward.2} parent=5 // pred_fallthru
      _
  $region6: #{basic_block_forward.2} parent=0 // loop_footer
    %s13 = sadd.s32 1, %s9
  $region7: #{basic_block_forward.2} parent=0 // loop_footer_branch
    %8 = sbr.rel target = $region3
  $region8: #{basic_block_forward.2} parent=0 // loop_exit
    _

// kernel: basic_block_forward.3
$region0: #{basic_block_forward.3}
  #allocation0 [shape = 'u32[]', space=smem, size = 0x4, offset = 0x4, fixed_abs, tag = 'smem constant byte address 0x4 - core index']
  #allocation1 [shape = 'u32[144,128]{1,0:T(1,128)}', space=vmem, size = 0x12000, scoped, tag = 'internal scratch']
  %s0 = inlined_call_operand.vmem [shape: f32[2,18,18,64], index: 0, kind: input, shape index: {}]
  %s1 = inlined_call_operand.vmem [shape: f32[9,64,64], index: 1, kind: input, shape index: {}]
  %s2 = inlined_call_operand.vmem [shape: f32[1,64], index: 2, kind: input, shape index: {}]
  %s3 = inlined_call_operand.vmem [shape: f32[2,16,16,64], index: 3, kind: input, shape index: {}]
  %s4 = inlined_call_operand.hbm [shape: f32[2,16,16,64], index: 4, kind: output, shape index: {}]
  %s5 = sld [smem:[#allocation0]]
  $region49: #{basic_block_forward.3} parent=0
    _
  %s7 = ssub.s32 1, %s5
  %s8 = scalar_select 0, %s7, %s5
  $region1: #{basic_block_forward.3} parent=0
    #allocation2 [shape = 'u8[262144]{0}', space=vmem, size = 0x40000, scoped, tag = 'output window, operand 0']
    #allocation3 [shape = 's32[2]{0}', space=sflag, size = 0x8, scoped, tag = 'scoped memory for basic_block_forward.3']
    %9 = vsyncpa [#allocation3], 0
    %s10 = scalar_lea.sflag [#allocation3], 1
    %11 = vsyncpa %s10, 0
    loop: start=0, step=1, limit=4
    $region2: #{basic_block_forward.3} parent=1 // loop_pre_header
      _
    $region3: #{basic_block_forward.3} parent=1 // loop_header
      %s13 = sphi 0, %s17
      %p14 = scmp.ge.s32.totalorder %s13, 4
      %s20 = sphi 0, %s32
      %s21 = sphi 0, %s28
      %s22 = sphi 0, %s20
      %s23 = sphi 0, %s21
      %s24 = sphi 0, %s22
      %s25 = sphi 0, %s23
      %s35 = sphi 0, %s37
      %s38 = sphi 0, %s35
      %s39 = sphi 0, %s38
      %s55 = sphi 0, %s39
      %s61 = sphi 0, %s63
      %s64 = sphi 0, %s61
      %s65 = sphi 0, %s64
      %s81 = sphi 0, %s65
      %s87 = sphi 0, %s89
      %s90 = sphi 0, %s87
      %s91 = sphi 0, %s90
      %s107 = sphi 0, %s91
      %s115 = sphi 0, %s117
      %s118 = sphi 0, %s115
      %s119 = sphi 0, %s118
      %s135 = sphi 0, %s119
      %s143 = sphi 0, %s145
      %s146 = sphi 0, %s143
      %s147 = sphi 0, %s146
      %s163 = sphi 0, %s147
    $region4: #{basic_block_forward.3} parent=1 // loop_header_branch
      %16 = sbr.rel (%p14) target = $region8
    $region5: #{basic_block_forward.3} parent=1 // loop_body
      %s18 = ssub.s32 %s13, 1
      %s19 = ssub.s32 %s13, 2
      %s26 = sadd.s32 1, %s21
      %p27 = scmp.ge.s32.totalorder %s26, 1
      %s28 = scalar_select %p27, 0, %s26
      %s29 = sadd.s32 1, %s20
      %s30 = scalar_select %p27, %s29, %s20
      %p31 = scmp.ge.s32.totalorder %s30, 2
      %s32 = scalar_select %p31, 0, %s30
      %s33 = ssub.s32 %s20, %s32
      %p34 = scmp.eq.s32.totalorder %s33, 0
      %s36 = sadd.s32 %s35, 1
      %s37 = scalar_select %p34, %s35, %s36
      %p40 = pneg %p34
      %p41 = scmp.eq.s32.totalorder %s13, 1
      %p42 = por %p40, %p41
      %p43 = scmp.ne.s32.totalorder %s35, %s38
      %p44 = scmp.eq.s32.totalorder %s13, 0
      %p45 = por %p43, %p44
      %p46 = scmp.ne.s32.totalorder %s35, %s38
      %p47 = scmp.eq.s32.totalorder %s18, 1
      %p48 = por %p46, %p47
      %p49 = scmp.ne.s32.totalorder %s38, %s39
      %p50 = scmp.eq.s32.totalorder %s18, 0
      %p51 = por %p49, %p50
      %p52 = scmp.ne.s32.totalorder %s38, %s39
      %p53 = scmp.eq.s32.totalorder %s19, 1
      %p54 = por %p52, %p53
      %p56 = scmp.ne.s32.totalorder %s39, %s55
      %p57 = scmp.eq.s32.totalorder %s19, 0
      %p58 = por %p56, %p57
      %s59 = ssub.s32 %s21, %s28
      %p60 = scmp.eq.s32.totalorder %s59, 0
      %s62 = sadd.s32 %s61, 1
      %s63 = scalar_select %p60, %s61, %s62
      %p66 = pneg %p60
      %p67 = scmp.eq.s32.totalorder %s13, 1
      %p68 = por %p66, %p67
      %p69 = scmp.ne.s32.totalorder %s61, %s64
      %p70 = scmp.eq.s32.totalorder %s13, 0
      %p71 = por %p69, %p70
      %p72 = scmp.ne.s32.totalorder %s61, %s64
      %p73 = scmp.eq.s32.totalorder %s18, 1
      %p74 = por %p72, %p73
      %p75 = scmp.ne.s32.totalorder %s64, %s65
      %p76 = scmp.eq.s32.totalorder %s18, 0
      %p77 = por %p75, %p76
      %p78 = scmp.ne.s32.totalorder %s64, %s65
      %p79 = scmp.eq.s32.totalorder %s19, 1
      %p80 = por %p78, %p79
      %p82 = scmp.ne.s32.totalorder %s65, %s81
      %p83 = scmp.eq.s32.totalorder %s19, 0
      %p84 = por %p82, %p83
      %s85 = ssub.s32 %s21, %s28
      %p86 = scmp.eq.s32.totalorder %s85, 0
      %s88 = sadd.s32 %s87, 1
      %s89 = scalar_select %p86, %s87, %s88
      %p92 = pneg %p86
      %p93 = scmp.eq.s32.totalorder %s13, 1
      %p94 = por %p92, %p93
      %p95 = scmp.ne.s32.totalorder %s87, %s90
      %p96 = scmp.eq.s32.totalorder %s13, 0
      %p97 = por %p95, %p96
      %p98 = scmp.ne.s32.totalorder %s87, %s90
      %p99 = scmp.eq.s32.totalorder %s18, 1
      %p100 = por %p98, %p99
      %p101 = scmp.ne.s32.totalorder %s90, %s91
      %p102 = scmp.eq.s32.totalorder %s18, 0
      %p103 = por %p101, %p102
      %p104 = scmp.ne.s32.totalorder %s90, %s91
      %p105 = scmp.eq.s32.totalorder %s19, 1
      %p106 = por %p104, %p105
      %p108 = scmp.ne.s32.totalorder %s91, %s107
      %p109 = scmp.eq.s32.totalorder %s19, 0
      %p110 = por %p108, %p109
      %s111 = ssub.s32 %s20, %s32
      %s112 = ssub.s32 %s21, %s28
      %s113 = sor.u32 %s111, %s112
      %p114 = scmp.eq.s32.totalorder %s113, 0
      %s116 = sadd.s32 %s115, 1
      %s117 = scalar_select %p114, %s115, %s116
      %p120 = pneg %p114
      %p121 = scmp.eq.s32.totalorder %s13, 1
      %p122 = por %p120, %p121
      %p123 = scmp.ne.s32.totalorder %s115, %s118
      %p124 = scmp.eq.s32.totalorder %s13, 0
      %p125 = por %p123, %p124
      %p126 = scmp.ne.s32.totalorder %s115, %s118
      %p127 = scmp.eq.s32.totalorder %s18, 1
      %p128 = por %p126, %p127
      %p129 = scmp.ne.s32.totalorder %s118, %s119
      %p130 = scmp.eq.s32.totalorder %s18, 0
      %p131 = por %p129, %p130
      %p132 = scmp.ne.s32.totalorder %s118, %s119
      %p133 = scmp.eq.s32.totalorder %s19, 1
      %p134 = por %p132, %p133
      %p136 = scmp.ne.s32.totalorder %s119, %s135
      %p137 = scmp.eq.s32.totalorder %s19, 0
      %p138 = por %p136, %p137
      %s139 = ssub.s32 %s20, %s32
      %s140 = ssub.s32 %s21, %s28
      %s141 = sor.u32 %s139, %s140
      %p142 = scmp.eq.s32.totalorder %s141, 0
      %s144 = sadd.s32 %s143, 1
      %s145 = scalar_select %p142, %s143, %s144
      %p148 = pneg %p142
      %p149 = scmp.eq.s32.totalorder %s13, 1
      %p150 = por %p148, %p149
      %p151 = scmp.ne.s32.totalorder %s143, %s146
      %p152 = scmp.eq.s32.totalorder %s13, 0
      %p153 = por %p151, %p152
      %p154 = scmp.ne.s32.totalorder %s143, %s146
      %p155 = scmp.eq.s32.totalorder %s18, 1
      %p156 = por %p154, %p155
      %p157 = scmp.ne.s32.totalorder %s146, %s147
      %p158 = scmp.eq.s32.totalorder %s18, 0
      %p159 = por %p157, %p158
      %p160 = scmp.ne.s32.totalorder %s146, %s147
      %p161 = scmp.eq.s32.totalorder %s19, 1
      %p162 = por %p160, %p161
      %p164 = scmp.ne.s32.totalorder %s147, %s163
      %p165 = scmp.eq.s32.totalorder %s19, 0
      %p166 = por %p164, %p165
      %p167 = scmp.le.s32.totalorder 1, %s13
      %p168 = scmp.lt.s32.totalorder %s13, 3
      %p169 = pnand %p167, %p168
      %p170 = pneg %p169
      // Predicated region
      $region9: #{basic_block_forward.3} parent=5 // pred_check
        _
      $region10: #{basic_block_forward.3} parent=5 // pred_check_branch
        %172 = sbr.rel (%p169) target = $region12
      $region11: #{basic_block_forward.3} parent=5 // pred_region
        %s173 = ssub.s32 %s13, 1
        // Predicated region
        $region13: #{basic_block_forward.3} parent=11 // pred_check
          %p174 = pneg %p77
        $region14: #{basic_block_forward.3} parent=11 // pred_check_branch
          %176 = sbr.rel (%p174) target = $region16
        $region15: #{basic_block_forward.3} parent=11 // pred_region
          %p177 = scmp.lt.s32.totalorder %s23, 0
          %s178 = scalar_select %p177, %s23, 0
          %s179 = smul.addr %s178, 8
          %s180 = scalar_lea.vmem %s1, %s179
        $region16: #{basic_block_forward.3} parent=11 // pred_fallthru
          _
        // Predicated region
        $region17: #{basic_block_forward.3} parent=11 // pred_check
          %p181 = pneg %p103
        $region18: #{basic_block_forward.3} parent=11 // pred_check_branch
          %183 = sbr.rel (%p181) target = $region20
        $region19: #{basic_block_forward.3} parent=11 // pred_region
          %p184 = scmp.lt.s32.totalorder %s23, 0
          %s185 = scalar_select %p184, %s23, 0
          %s186 = scalar_lea.vmem %s2, %s185
        $region20: #{basic_block_forward.3} parent=11 // pred_fallthru
          _
      $region12: #{basic_block_forward.3} parent=5 // pred_fallthru
        _
      %p187 = scmp.lt.s32.totalorder %s13, 2
      // Predicated region
      $region21: #{basic_block_forward.3} parent=5 // pred_check
        %p188 = pneg %p187
      $region22: #{basic_block_forward.3} parent=5 // pred_check_branch
        %190 = sbr.rel (%p188) target = $region24
      $region23: #{basic_block_forward.3} parent=5 // pred_region
        // Predicated region
        $region25: #{basic_block_forward.3} parent=23 // pred_check
          %p191 = pneg %p45
        $region26: #{basic_block_forward.3} parent=23 // pred_check_branch
          %193 = sbr.rel (%p191) target = $region28
        $region27: #{basic_block_forward.3} parent=23 // pred_region
          %p194 = scmp.lt.s32.totalorder %s20, 1
          %s195 = scalar_select %p194, %s20, 1
          %s196 = smul.addr %s195, 54
          %s197 = smul.addr %s196, 8
          %s198 = scalar_lea.vmem %s0, %s197
        $region28: #{basic_block_forward.3} parent=23 // pred_fallthru
          _
        // Predicated region
        $region29: #{basic_block_forward.3} parent=23 // pred_check
          %p199 = pneg %p125
        $region30: #{basic_block_forward.3} parent=23 // pred_check_branch
          %201 = sbr.rel (%p199) target = $region32
        $region31: #{basic_block_forward.3} parent=23 // pred_region
          %p202 = scmp.lt.s32.totalorder %s20, 1
          %s203 = scalar_select %p202, %s20, 1
          %p204 = scmp.lt.s32.totalorder %s21, 0
          %s205 = scalar_select %p204, %s21, 0
          %s206 = smul.addr %s203, 32
          %s207 = sadd.s32 %s205, %s206
          %s208 = smul.addr %s207, 8
          %s209 = scalar_lea.vmem %s3, %s208
        $region32: #{basic_block_forward.3} parent=23 // pred_fallthru
          _
      $region24: #{basic_block_forward.3} parent=5 // pred_fallthru
        _
      %p210 = scmp.le.s32.totalorder 1, %s13
      %p211 = scmp.lt.s32.totalorder %s13, 3
      %p212 = pnand %p210, %p211
      %p213 = pneg %p212
      // Predicated region
      $region33: #{basic_block_forward.3} parent=5 // pred_check
        _
      $region34: #{basic_block_forward.3} parent=5 // pred_check_branch
        %215 = sbr.rel (%p212) target = $region36
      $region35: #{basic_block_forward.3} parent=5 // pred_region
        %s216 = ssub.s32 %s13, 1
        %p217 = scmp.lt.s32.totalorder %s22, 1
        %s218 = scalar_select %p217, %s22, 1
        %s219 = smul.addr %s218, 54
        %s220 = smul.addr %s219, 8
        %s221 = scalar_lea.vmem %s0, %s220
        %p222 = pneg %p51
        %p223 = pneg %p48
        %p224 = scmp.lt.s32.totalorder %s23, 0
        %s225 = scalar_select %p224, %s23, 0
        %s226 = smul.addr %s225, 8
        %s227 = scalar_lea.vmem %s1, %s226
        %p228 = pneg %p77
        %p229 = pneg %p74
        %p230 = scmp.lt.s32.totalorder %s23, 0
        %s231 = scalar_select %p230, %s23, 0
        %s232 = scalar_lea.vmem %s2, %s231
        %p233 = pneg %p103
        %p234 = pneg %p100
        %p235 = scmp.lt.s32.totalorder %s22, 1
        %s236 = scalar_select %p235, %s22, 1
        %p237 = scmp.lt.s32.totalorder %s23, 0
        %s238 = scalar_select %p237, %s23, 0
        %s239 = smul.addr %s236, 32
        %s240 = sadd.s32 %s238, %s239
        %s241 = smul.addr %s240, 8
        %s242 = scalar_lea.vmem %s3, %s241
        %p243 = pneg %p131
        %p244 = pneg %p128
        %p245 = pneg %p159
        %p246 = pneg %p156
        %s247 = sand.u32 %s146, 1
        %s248 = scalar_lea.sflag [#allocation3], %s247
        %s249 = sand.u32 %s146, 1
        %s250 = smul.addr %s249, 256
        %s251 = scalar_lea.vmem [#allocation2], %s250
        %p252 = scmp.lt.s32.totalorder %s22, 1
        %s253 = scalar_select %p252, %s22, 1
        %s254 = smul.addr %s253, 54
        %s255 = smul.addr %s254, 8
        %s256 = scalar_lea.vmem %s0, %s255
        %p257 = scmp.lt.s32.totalorder %s23, 0
        %s258 = scalar_select %p257, %s23, 0
        %s259 = smul.addr %s258, 8
        %s260 = scalar_lea.vmem %s1, %s259
        %p261 = scmp.lt.s32.totalorder %s23, 0
        %s262 = scalar_select %p261, %s23, 0
        %s263 = scalar_lea.vmem %s2, %s262
        %p264 = scmp.lt.s32.totalorder %s22, 1
        %s265 = scalar_select %p264, %s22, 1
        %p266 = scmp.lt.s32.totalorder %s23, 0
        %s267 = scalar_select %p266, %s23, 0
        %s268 = smul.addr %s265, 32
        %s269 = sadd.s32 %s267, %s268
        %s270 = smul.addr %s269, 8
        %s271 = scalar_lea.vmem %s3, %s270
        %v272 = vld [vmem:[%s256] sm:$0xff]
        %v273 = vld [vmem:[%s256 + $0x8] sm:$0xff]
        %v274 = vld [vmem:[%s256 + $0x10] sm:$0x3]
        %v275 = vld [vmem:[%s256 + $0x18] sm:$0xff]
        %v276 = vld [vmem:[%s256 + $0x20] sm:$0xff]
        %v277 = vld [vmem:[%s256 + $0x28] sm:$0x3]
        %v278 = vld [vmem:[%s256 + $0x30] sm:$0xff]
        %v279 = vld [vmem:[%s256 + $0x38] sm:$0xff]
        %v280 = vld [vmem:[%s256 + $0x40] sm:$0x3]
        %v281 = vld [vmem:[%s256 + $0x48] sm:$0xff]
        %v282 = vld [vmem:[%s256 + $0x50] sm:$0xff]
        %v283 = vld [vmem:[%s256 + $0x58] sm:$0x3]
        %v284 = vld [vmem:[%s256 + $0x60] sm:$0xff]
        %v285 = vld [vmem:[%s256 + $0x68] sm:$0xff]
        %v286 = vld [vmem:[%s256 + $0x70] sm:$0x3]
        %v287 = vld [vmem:[%s256 + $0x78] sm:$0xff]
        %v288 = vld [vmem:[%s256 + $0x80] sm:$0xff]
        %v289 = vld [vmem:[%s256 + $0x88] sm:$0x3]
        %v290 = vld [vmem:[%s256 + $0x90] sm:$0xff]
        %v291 = vld [vmem:[%s256 + $0x98] sm:$0xff]
        %v292 = vld [vmem:[%s256 + $0xa0] sm:$0x3]
        %v293 = vld [vmem:[%s256 + $0xa8] sm:$0xff]
        %v294 = vld [vmem:[%s256 + $0xb0] sm:$0xff]
        %v295 = vld [vmem:[%s256 + $0xb8] sm:$0x3]
        %v296 = vld [vmem:[%s256 + $0xc0] sm:$0xff]
        %v297 = vld [vmem:[%s256 + $0xc8] sm:$0xff]
        %v298 = vld [vmem:[%s256 + $0xd0] sm:$0x3]
        %v299 = vld [vmem:[%s256 + $0xd8] sm:$0xff]
        %v300 = vld [vmem:[%s256 + $0xe0] sm:$0xff]
        %v301 = vld [vmem:[%s256 + $0xe8] sm:$0x3]
        %v302 = vld [vmem:[%s256 + $0xf0] sm:$0xff]
        %v303 = vld [vmem:[%s256 + $0xf8] sm:$0xff]
        %v304 = vld [vmem:[%s256 + $0x100] sm:$0x3]
        %v305 = vld [vmem:[%s256 + $0x108] sm:$0xff]
        %v306 = vld [vmem:[%s256 + $0x110] sm:$0xff]
        %v307 = vld [vmem:[%s256 + $0x118] sm:$0x3]
        %v308 = vld [vmem:[%s256 + $0x120] sm:$0xff]
        %v309 = vld [vmem:[%s256 + $0x128] sm:$0xff]
        %v310 = vld [vmem:[%s256 + $0x130] sm:$0x3]
        %v311 = vld [vmem:[%s256 + $0x138] sm:$0xff]
        %v312 = vld [vmem:[%s256 + $0x140] sm:$0xff]
        %v313 = vld [vmem:[%s256 + $0x148] sm:$0x3]
        %v314 = vld [vmem:[%s256 + $0x150] sm:$0xff]
        %v315 = vld [vmem:[%s256 + $0x158] sm:$0xff]
        %v316 = vld [vmem:[%s256 + $0x160] sm:$0x3]
        %v317 = vld [vmem:[%s256 + $0x168] sm:$0xff]
        %v318 = vld [vmem:[%s256 + $0x170] sm:$0xff]
        %v319 = vld [vmem:[%s256 + $0x178] sm:$0x3]
        %v320 = vld [vmem:[%s256 + $0x180] sm:$0xff]
        %v321 = vld [vmem:[%s256 + $0x188] sm:$0xff]
        %v322 = vld [vmem:[%s256 + $0x190] sm:$0x3]
        %v323 = vld [vmem:[%s256 + $0x198] sm:$0xff]
        %v324 = vld [vmem:[%s256 + $0x1a0] sm:$0xff]
        %v325 = vld [vmem:[%s256 + $0x1a8] sm:$0x3]
        %v326 = vld [vmem:[%s260] sm:$0xff]
        %v327 = vld [vmem:[%s260 + $0x8] sm:$0xff]
        %v328 = vld [vmem:[%s260 + $0x10] sm:$0xff]
        %v329 = vld [vmem:[%s260 + $0x18] sm:$0xff]
        %v330 = vld [vmem:[%s260 + $0x20] sm:$0xff]
        %v331 = vld [vmem:[%s260 + $0x28] sm:$0xff]
        %v332 = vld [vmem:[%s260 + $0x30] sm:$0xff]
        %v333 = vld [vmem:[%s260 + $0x38] sm:$0xff]
        %vm382 = vcmask 1046528
        %v383 = vrot.slane %v272, 1
        %v384 = vrot.slane %v273, 1
        %v385 = vsel %vm382, %v383, %v384
        %v386 = vrot.slane %v274, 1
        %v387 = vsel %vm382, %v384, %v386
        %v388 = vrot.slane %v275, 1
        %v389 = vrot.slane %v276, 1
        %v390 = vsel %vm382, %v388, %v389
        %v391 = vrot.slane %v277, 1
        %v392 = vsel %vm382, %v389, %v391
        %v393 = vrot.slane %v278, 1
        %v394 = vrot.slane %v279, 1
        %v395 = vsel %vm382, %v393, %v394
        %v396 = vrot.slane %v280, 1
        %v397 = vsel %vm382, %v394, %v396
        %v398 = vrot.slane %v281, 1
        %v399 = vrot.slane %v282, 1
        %v400 = vsel %vm382, %v398, %v399
        %v401 = vrot.slane %v283, 1
        %v402 = vsel %vm382, %v399, %v401
        %v403 = vrot.slane %v284, 1
        %v404 = vrot.slane %v285, 1
        %v405 = vsel %vm382, %v403, %v404
        %v406 = vrot.slane %v286, 1
        %v407 = vsel %vm382, %v404, %v406
        %v408 = vrot.slane %v287, 1
        %v409 = vrot.slane %v288, 1
        %v410 = vsel %vm382, %v408, %v409
        %v411 = vrot.slane %v289, 1
        %v412 = vsel %vm382, %v409, %v411
        %v413 = vrot.slane %v290, 1
        %v414 = vrot.slane %v291, 1
        %v415 = vsel %vm382, %v413, %v414
        %v416 = vrot.slane %v292, 1
        %v417 = vsel %vm382, %v414, %v416
        %v418 = vrot.slane %v293, 1
        %v419 = vrot.slane %v294, 1
        %v420 = vsel %vm382, %v418, %v419
        %v421 = vrot.slane %v295, 1
        %v422 = vsel %vm382, %v419, %v421
        %v423 = vrot.slane %v296, 1
        %v424 = vrot.slane %v297, 1
        %v425 = vsel %vm382, %v423, %v424
        %v426 = vrot.slane %v298, 1
        %v427 = vsel %vm382, %v424, %v426
        %v428 = vrot.slane %v299, 1
        %v429 = vrot.slane %v300, 1
        %v430 = vsel %vm382, %v428, %v429
        %v431 = vrot.slane %v301, 1
        %v432 = vsel %vm382, %v429, %v431
        %v433 = vrot.slane %v302, 1
        %v434 = vrot.slane %v303, 1
        %v435 = vsel %vm382, %v433, %v434
        %v436 = vrot.slane %v304, 1
        %v437 = vsel %vm382, %v434, %v436
        %v438 = vrot.slane %v305, 1
        %v439 = vrot.slane %v306, 1
        %v440 = vsel %vm382, %v438, %v439
        %v441 = vrot.slane %v307, 1
        %v442 = vsel %vm382, %v439, %v441
        %v443 = vrot.slane %v308, 1
        %v444 = vrot.slane %v309, 1
        %v445 = vsel %vm382, %v443, %v444
        %v446 = vrot.slane %v310, 1
        %v447 = vsel %vm382, %v444, %v446
        %v448 = vrot.slane %v311, 1
        %v449 = vrot.slane %v312, 1
        %v450 = vsel %vm382, %v448, %v449
        %v451 = vrot.slane %v313, 1
        %v452 = vsel %vm382, %v449, %v451
        %v453 = vrot.slane %v314, 1
        %v454 = vrot.slane %v315, 1
        %v455 = vsel %vm382, %v453, %v454
        %v456 = vrot.slane %v316, 1
        %v457 = vsel %vm382, %v454, %v456
        %v458 = vrot.slane %v317, 1
        %v459 = vrot.slane %v318, 1
        %v460 = vsel %vm382, %v458, %v459
        %v461 = vrot.slane %v319, 1
        %v462 = vsel %vm382, %v459, %v461
        %s463 = scalar_lea.vmem %s260, 64
        %v464 = vld [vmem:[%s463] sm:$0xff]
        %v465 = vld [vmem:[%s463 + $0x8] sm:$0xff]
        %v466 = vld [vmem:[%s463 + $0x10] sm:$0xff]
        %v467 = vld [vmem:[%s463 + $0x18] sm:$0xff]
        %v468 = vld [vmem:[%s463 + $0x20] sm:$0xff]
        %v469 = vld [vmem:[%s463 + $0x28] sm:$0xff]
        %v470 = vld [vmem:[%s463 + $0x30] sm:$0xff]
        %v471 = vld [vmem:[%s463 + $0x38] sm:$0xff]
        %vm472 = vcmask 523264
        %v473 = vsel %vm472, %v385, 0
        %v475 = vsel %vm472, %v387, 0
        %v477 = vsel %vm472, %v390, 0
        %v479 = vsel %vm472, %v392, 0
        %v481 = vsel %vm472, %v395, 0
        %v483 = vsel %vm472, %v397, 0
        %v485 = vsel %vm472, %v400, 0
        %v487 = vsel %vm472, %v402, 0
        %v489 = vsel %vm472, %v405, 0
        %v491 = vsel %vm472, %v407, 0
        %v493 = vsel %vm472, %v410, 0
        %v495 = vsel %vm472, %v412, 0
        %v497 = vsel %vm472, %v415, 0
        %v499 = vsel %vm472, %v417, 0
        %v501 = vsel %vm472, %v420, 0
        %v503 = vsel %vm472, %v422, 0
        %v505 = vsel %vm472, %v425, 0
        %v507 = vsel %vm472, %v427, 0
        %v509 = vsel %vm472, %v430, 0
        %v511 = vsel %vm472, %v432, 0
        %v513 = vsel %vm472, %v435, 0
        %v515 = vsel %vm472, %v437, 0
        %v517 = vsel %vm472, %v440, 0
        %v519 = vsel %vm472, %v442, 0
        %v521 = vsel %vm472, %v445, 0
        %v523 = vsel %vm472, %v447, 0
        %v525 = vsel %vm472, %v450, 0
        %v527 = vsel %vm472, %v452, 0
        %v529 = vsel %vm472, %v455, 0
        %v531 = vsel %vm472, %v457, 0
        %v533 = vsel %vm472, %v460, 0
        %v535 = vsel %vm472, %v462, 0
        %537 = vmatprep.subr.mxu0 0.0
        %538 = vmatpush1.msra.mxu0 0.0
        %539 = vmatprep.subr.mxu0 0.0
        %540 = vmatpush1.msra.mxu0 0.0
        %541 = vmatprep.subr.mxu0 0.0
        %542 = vmatpush1.msra.mxu0 0.0
        %543 = vmatprep.subr.mxu0 0.0
        %544 = vmatpush1.msra.mxu0 0.0
        %545 = vmatprep.subr.mxu0 0.0
        %546 = vmatpush1.msra.mxu0 0.0
        %547 = vmatprep.subr.mxu0 0.0
        %548 = vmatpush1.msra.mxu0 0.0
        %549 = vmatprep.subr.mxu0 0.0
        %550 = vmatpush1.msra.mxu0 0.0
        %551 = vmatprep.subr.mxu0 0.0
        %552 = vmatpush1.msra.mxu0 0.0
        %553 = vmatprep.subr.mxu0 0.0
        %554 = vmatpush1.msra.mxu0 %v471
        %555 = vmatprep.subr.mxu0 0.0
        %556 = vmatpush1.msra.mxu0 %v470
        %557 = vmatprep.subr.mxu0 0.0
        %558 = vmatpush1.msra.mxu0 %v469
        %559 = vmatprep.subr.mxu0 0.0
        %560 = vmatpush1.msra.mxu0 %v468
        %561 = vmatprep.subr.mxu0 0.0
        %562 = vmatpush1.msra.mxu0 %v467
        %563 = vmatprep.subr.mxu0 0.0
        %564 = vmatpush1.msra.mxu0 %v466
        %565 = vmatprep.subr.mxu0 0.0
        %566 = vmatpush1.msra.mxu0 %v465
        %567 = vmatprep.subr.mxu0 0.0
        %568 = vmatpush1.msra.mxu0 %v464
        %569 = vmatprep.subr.mxu0 0.0
        %570 = vmatpush2.msra.mxu0 0.0
        %571 = vmatprep.subr.mxu0 0.0
        %572 = vmatpush2.msra.mxu0 0.0
        %573 = vmatprep.subr.mxu0 0.0
        %574 = vmatpush2.msra.mxu0 0.0
        %575 = vmatprep.subr.mxu0 0.0
        %576 = vmatpush2.msra.mxu0 0.0
        %577 = vmatprep.subr.mxu0 0.0
        %578 = vmatpush2.msra.mxu0 0.0
        %579 = vmatprep.subr.mxu0 0.0
        %580 = vmatpush2.msra.mxu0 0.0
        %581 = vmatprep.subr.mxu0 0.0
        %582 = vmatpush2.msra.mxu0 0.0
        %583 = vmatprep.subr.mxu0 0.0
        %584 = vmatpush2.msra.mxu0 0.0
        %585 = vmatprep.subr.mxu0 0.0
        %586 = vmatpush2.msra.mxu0 0.0
        %587 = vmatprep.subr.mxu0 0.0
        %588 = vmatpush2.msra.mxu0 0.0
        %589 = vmatprep.subr.mxu0 0.0
        %590 = vmatpush2.msra.mxu0 0.0
        %591 = vmatprep.subr.mxu0 0.0
        %592 = vmatpush2.msra.mxu0 0.0
        %593 = vmatprep.subr.mxu0 0.0
        %594 = vmatpush2.msra.mxu0 0.0
        %595 = vmatprep.subr.mxu0 0.0
        %596 = vmatpush2.msra.mxu0 0.0
        %597 = vmatprep.subr.mxu0 0.0
        %598 = vmatpush2.msra.mxu0 0.0
        %599 = vmatprep.subr.mxu0 0.0
        %600 = vmatpush2.msra.mxu0 0.0
        %601 = vmatprep.mubr.f32.mxu0 0.0
        %602 = vmatmul.mubr.f32.gmra.mxu0 %v473
        %v603 = vpop.f32.mrf.mxu0
        %v604 = vadd.f32 0.0, %v603
        %v605 = vpop.f32.mrf.mxu0
        %606 = vmatprep.mubr.f32.mxu0 0.0
        %607 = vmatmul.mubr.f32.gmra.mxu0 %v475
        %v608 = vpop.f32.mrf.mxu0
        %v609 = vadd.f32 0.0, %v608
        %v610 = vpop.f32.mrf.mxu0
        %611 = vmatprep.mubr.f32.mxu0 0.0
        %612 = vmatmul.mubr.f32.gmra.mxu0 %v477
        %v613 = vpop.f32.mrf.mxu0
        %v614 = vadd.f32 0.0, %v613
        %v615 = vpop.f32.mrf.mxu0
        %616 = vmatprep.mubr.f32.mxu0 0.0
        %617 = vmatmul.mubr.f32.gmra.mxu0 %v479
        %v618 = vpop.f32.mrf.mxu0
        %v619 = vadd.f32 0.0, %v618
        %v620 = vpop.f32.mrf.mxu0
        %621 = vmatprep.mubr.f32.mxu0 0.0
        %622 = vmatmul.mubr.f32.gmra.mxu0 %v481
        %v623 = vpop.f32.mrf.mxu0
        %v624 = vadd.f32 0.0, %v623
        %v625 = vpop.f32.mrf.mxu0
        %626 = vmatprep.mubr.f32.mxu0 0.0
        %627 = vmatmul.mubr.f32.gmra.mxu0 %v483
        %v628 = vpop.f32.mrf.mxu0
        %v629 = vadd.f32 0.0, %v628
        %v630 = vpop.f32.mrf.mxu0
        %631 = vmatprep.mubr.f32.mxu0 0.0
        %632 = vmatmul.mubr.f32.gmra.mxu0 %v485
        %v633 = vpop.f32.mrf.mxu0
        %v634 = vadd.f32 0.0, %v633
        %v635 = vpop.f32.mrf.mxu0
        %636 = vmatprep.mubr.f32.mxu0 0.0
        %637 = vmatmul.mubr.f32.gmra.mxu0 %v487
        %v638 = vpop.f32.mrf.mxu0
        %v639 = vadd.f32 0.0, %v638
        %v640 = vpop.f32.mrf.mxu0
        %641 = vmatprep.mubr.f32.mxu0 0.0
        %642 = vmatmul.mubr.f32.gmra.mxu0 %v489
        %v643 = vpop.f32.mrf.mxu0
        %v644 = vadd.f32 0.0, %v643
        %v645 = vpop.f32.mrf.mxu0
        %646 = vmatprep.mubr.f32.mxu0 0.0
        %647 = vmatmul.mubr.f32.gmra.mxu0 %v491
        %v648 = vpop.f32.mrf.mxu0
        %v649 = vadd.f32 0.0, %v648
        %v650 = vpop.f32.mrf.mxu0
        %651 = vmatprep.mubr.f32.mxu0 0.0
        %652 = vmatmul.mubr.f32.gmra.mxu0 %v493
        %v653 = vpop.f32.mrf.mxu0
        %v654 = vadd.f32 0.0, %v653
        %v655 = vpop.f32.mrf.mxu0
        %656 = vmatprep.mubr.f32.mxu0 0.0
        %657 = vmatmul.mubr.f32.gmra.mxu0 %v495
        %v658 = vpop.f32.mrf.mxu0
        %v659 = vadd.f32 0.0, %v658
        %v660 = vpop.f32.mrf.mxu0
        %661 = vmatprep.mubr.f32.mxu0 0.0
        %662 = vmatmul.mubr.f32.gmra.mxu0 %v497
        %v663 = vpop.f32.mrf.mxu0
        %v664 = vadd.f32 0.0, %v663
        %v665 = vpop.f32.mrf.mxu0
        %666 = vmatprep.mubr.f32.mxu0 0.0
        %667 = vmatmul.mubr.f32.gmra.mxu0 %v499
        %v668 = vpop.f32.mrf.mxu0
        %v669 = vadd.f32 0.0, %v668
        %v670 = vpop.f32.mrf.mxu0
        %671 = vmatprep.mubr.f32.mxu0 0.0
        %672 = vmatmul.mubr.f32.gmra.mxu0 %v501
        %v673 = vpop.f32.mrf.mxu0
        %v674 = vadd.f32 0.0, %v673
        %v675 = vpop.f32.mrf.mxu0
        %676 = vmatprep.mubr.f32.mxu0 0.0
        %677 = vmatmul.mubr.f32.gmra.mxu0 %v503
        %v678 = vpop.f32.mrf.mxu0
        %v679 = vadd.f32 0.0, %v678
        %v680 = vpop.f32.mrf.mxu0
        %681 = vmatprep.mubr.f32.mxu0 0.0
        %682 = vmatmul.mubr.f32.gmra.mxu0 %v505
        %v683 = vpop.f32.mrf.mxu0
        %v684 = vadd.f32 0.0, %v683
        %v685 = vpop.f32.mrf.mxu0
        %686 = vmatprep.mubr.f32.mxu0 0.0
        %687 = vmatmul.mubr.f32.gmra.mxu0 %v507
        %v688 = vpop.f32.mrf.mxu0
        %v689 = vadd.f32 0.0, %v688
        %v690 = vpop.f32.mrf.mxu0
        %691 = vmatprep.mubr.f32.mxu0 0.0
        %692 = vmatmul.mubr.f32.gmra.mxu0 %v509
        %v693 = vpop.f32.mrf.mxu0
        %v694 = vadd.f32 0.0, %v693
        %v695 = vpop.f32.mrf.mxu0
        %696 = vmatprep.mubr.f32.mxu0 0.0
        %697 = vmatmul.mubr.f32.gmra.mxu0 %v511
        %v698 = vpop.f32.mrf.mxu0
        %v699 = vadd.f32 0.0, %v698
        %v700 = vpop.f32.mrf.mxu0
        %701 = vmatprep.mubr.f32.mxu0 0.0
        %702 = vmatmul.mubr.f32.gmra.mxu0 %v513
        %v703 = vpop.f32.mrf.mxu0
        %v704 = vadd.f32 0.0, %v703
        %v705 = vpop.f32.mrf.mxu0
        %706 = vmatprep.mubr.f32.mxu0 0.0
        %707 = vmatmul.mubr.f32.gmra.mxu0 %v515
        %v708 = vpop.f32.mrf.mxu0
        %v709 = vadd.f32 0.0, %v708
        %v710 = vpop.f32.mrf.mxu0
        %711 = vmatprep.mubr.f32.mxu0 0.0
        %712 = vmatmul.mubr.f32.gmra.mxu0 %v517
        %v713 = vpop.f32.mrf.mxu0
        %v714 = vadd.f32 0.0, %v713
        %v715 = vpop.f32.mrf.mxu0
        %716 = vmatprep.mubr.f32.mxu0 0.0
        %717 = vmatmul.mubr.f32.gmra.mxu0 %v519
        %v718 = vpop.f32.mrf.mxu0
        %v719 = vadd.f32 0.0, %v718
        %v720 = vpop.f32.mrf.mxu0
        %721 = vmatprep.mubr.f32.mxu0 0.0
        %722 = vmatmul.mubr.f32.gmra.mxu0 %v521
        %v723 = vpop.f32.mrf.mxu0
        %v724 = vadd.f32 0.0, %v723
        %v725 = vpop.f32.mrf.mxu0
        %726 = vmatprep.mubr.f32.mxu0 0.0
        %727 = vmatmul.mubr.f32.gmra.mxu0 %v523
        %v728 = vpop.f32.mrf.mxu0
        %v729 = vadd.f32 0.0, %v728
        %v730 = vpop.f32.mrf.mxu0
        %731 = vmatprep.mubr.f32.mxu0 0.0
        %732 = vmatmul.mubr.f32.gmra.mxu0 %v525
        %v733 = vpop.f32.mrf.mxu0
        %v734 = vadd.f32 0.0, %v733
        %v735 = vpop.f32.mrf.mxu0
        %736 = vmatprep.mubr.f32.mxu0 0.0
        %737 = vmatmul.mubr.f32.gmra.mxu0 %v527
        %v738 = vpop.f32.mrf.mxu0
        %v739 = vadd.f32 0.0, %v738
        %v740 = vpop.f32.mrf.mxu0
        %741 = vmatprep.mubr.f32.mxu0 0.0
        %742 = vmatmul.mubr.f32.gmra.mxu0 %v529
        %v743 = vpop.f32.mrf.mxu0
        %v744 = vadd.f32 0.0, %v743
        %v745 = vpop.f32.mrf.mxu0
        %746 = vmatprep.mubr.f32.mxu0 0.0
        %747 = vmatmul.mubr.f32.gmra.mxu0 %v531
        %v748 = vpop.f32.mrf.mxu0
        %v749 = vadd.f32 0.0, %v748
        %v750 = vpop.f32.mrf.mxu0
        %751 = vmatprep.mubr.f32.mxu0 0.0
        %752 = vmatmul.mubr.f32.gmra.mxu0 %v533
        %v753 = vpop.f32.mrf.mxu0
        %v754 = vadd.f32 0.0, %v753
        %v755 = vpop.f32.mrf.mxu0
        %756 = vmatprep.mubr.f32.mxu0 0.0
        %757 = vmatmul.mubr.f32.gmra.mxu0 %v535
        %v758 = vpop.f32.mrf.mxu0
        %v759 = vadd.f32 0.0, %v758
        %v760 = vpop.f32.mrf.mxu0
        %761 = vdwg.mxu0
        %v762 = vsel %vm472, %v272, 0
        %v764 = vsel %vm472, %v273, 0
        %v766 = vsel %vm472, %v275, 0
        %v768 = vsel %vm472, %v276, 0
        %v770 = vsel %vm472, %v278, 0
        %v772 = vsel %vm472, %v279, 0
        %v774 = vsel %vm472, %v281, 0
        %v776 = vsel %vm472, %v282, 0
        %v778 = vsel %vm472, %v284, 0
        %v780 = vsel %vm472, %v285, 0
        %v782 = vsel %vm472, %v287, 0
        %v784 = vsel %vm472, %v288, 0
        %v786 = vsel %vm472, %v290, 0
        %v788 = vsel %vm472, %v291, 0
        %v790 = vsel %vm472, %v293, 0
        %v792 = vsel %vm472, %v294, 0
        %v794 = vsel %vm472, %v296, 0
        %v796 = vsel %vm472, %v297, 0
        %v798 = vsel %vm472, %v299, 0
        %v800 = vsel %vm472, %v300, 0
        %v802 = vsel %vm472, %v302, 0
        %v804 = vsel %vm472, %v303, 0
        %v806 = vsel %vm472, %v305, 0
        %v808 = vsel %vm472, %v306, 0
        %v810 = vsel %vm472, %v308, 0
        %v812 = vsel %vm472, %v309, 0
        %v814 = vsel %vm472, %v311, 0
        %v816 = vsel %vm472, %v312, 0
        %v818 = vsel %vm472, %v314, 0
        %v820 = vsel %vm472, %v315, 0
        %v822 = vsel %vm472, %v317, 0
        %v824 = vsel %vm472, %v318, 0
        %826 = vmatprep.subr.mxu0 0.0
        %827 = vmatpush1.msra.mxu0 0.0
        %828 = vmatprep.subr.mxu0 0.0
        %829 = vmatpush1.msra.mxu0 0.0
        %830 = vmatprep.subr.mxu0 0.0
        %831 = vmatpush1.msra.mxu0 0.0
        %832 = vmatprep.subr.mxu0 0.0
        %833 = vmatpush1.msra.mxu0 0.0
        %834 = vmatprep.subr.mxu0 0.0
        %835 = vmatpush1.msra.mxu0 0.0
        %836 = vmatprep.subr.mxu0 0.0
        %837 = vmatpush1.msra.mxu0 0.0
        %838 = vmatprep.subr.mxu0 0.0
        %839 = vmatpush1.msra.mxu0 0.0
        %840 = vmatprep.subr.mxu0 0.0
        %841 = vmatpush1.msra.mxu0 0.0
        %842 = vmatprep.subr.mxu0 0.0
        %843 = vmatpush1.msra.mxu0 %v333
        %844 = vmatprep.subr.mxu0 0.0
        %845 = vmatpush1.msra.mxu0 %v332
        %846 = vmatprep.subr.mxu0 0.0
        %847 = vmatpush1.msra.mxu0 %v331
        %848 = vmatprep.subr.mxu0 0.0
        %849 = vmatpush1.msra.mxu0 %v330
        %850 = vmatprep.subr.mxu0 0.0
        %851 = vmatpush1.msra.mxu0 %v329
        %852 = vmatprep.subr.mxu0 0.0
        %853 = vmatpush1.msra.mxu0 %v328
        %854 = vmatprep.subr.mxu0 0.0
        %855 = vmatpush1.msra.mxu0 %v327
        %856 = vmatprep.subr.mxu0 0.0
        %857 = vmatpush1.msra.mxu0 %v326
        %858 = vmatprep.subr.mxu0 0.0
        %859 = vmatpush2.msra.mxu0 0.0
        %860 = vmatprep.subr.mxu0 0.0
        %861 = vmatpush2.msra.mxu0 0.0
        %862 = vmatprep.subr.mxu0 0.0
        %863 = vmatpush2.msra.mxu0 0.0
        %864 = vmatprep.subr.mxu0 0.0
        %865 = vmatpush2.msra.mxu0 0.0
        %866 = vmatprep.subr.mxu0 0.0
        %867 = vmatpush2.msra.mxu0 0.0
        %868 = vmatprep.subr.mxu0 0.0
        %869 = vmatpush2.msra.mxu0 0.0
        %870 = vmatprep.subr.mxu0 0.0
        %871 = vmatpush2.msra.mxu0 0.0
        %872 = vmatprep.subr.mxu0 0.0
        %873 = vmatpush2.msra.mxu0 0.0
        %874 = vmatprep.subr.mxu0 0.0
        %875 = vmatpush2.msra.mxu0 0.0
        %876 = vmatprep.subr.mxu0 0.0
        %877 = vmatpush2.msra.mxu0 0.0
        %878 = vmatprep.subr.mxu0 0.0
        %879 = vmatpush2.msra.mxu0 0.0
        %880 = vmatprep.subr.mxu0 0.0
        %881 = vmatpush2.msra.mxu0 0.0
        %882 = vmatprep.subr.mxu0 0.0
        %883 = vmatpush2.msra.mxu0 0.0
        %884 = vmatprep.subr.mxu0 0.0
        %885 = vmatpush2.msra.mxu0 0.0
        %886 = vmatprep.subr.mxu0 0.0
        %887 = vmatpush2.msra.mxu0 0.0
        %888 = vmatprep.subr.mxu0 0.0
        %889 = vmatpush2.msra.mxu0 0.0
        %890 = vmatprep.mubr.f32.mxu0 0.0
        %891 = vmatmul.mubr.f32.gmra.mxu0 %v762
        %v892 = vpop.f32.mrf.mxu0
        %v893 = vadd.f32 %v604, %v892
        %v894 = vpop.f32.mrf.mxu0
        %895 = vmatprep.mubr.f32.mxu0 0.0
        %896 = vmatmul.mubr.f32.gmra.mxu0 %v764
        %v897 = vpop.f32.mrf.mxu0
        %v898 = vadd.f32 %v609, %v897
        %v899 = vpop.f32.mrf.mxu0
        %900 = vmatprep.mubr.f32.mxu0 0.0
        %901 = vmatmul.mubr.f32.gmra.mxu0 %v766
        %v902 = vpop.f32.mrf.mxu0
        %v903 = vadd.f32 %v614, %v902
        %v904 = vpop.f32.mrf.mxu0
        %905 = vmatprep.mubr.f32.mxu0 0.0
        %906 = vmatmul.mubr.f32.gmra.mxu0 %v768
        %v907 = vpop.f32.mrf.mxu0
        %v908 = vadd.f32 %v619, %v907
        %v909 = vpop.f32.mrf.mxu0
        %910 = vmatprep.mubr.f32.mxu0 0.0
        %911 = vmatmul.mubr.f32.gmra.mxu0 %v770
        %v912 = vpop.f32.mrf.mxu0
        %v913 = vadd.f32 %v624, %v912
        %v914 = vpop.f32.mrf.mxu0
        %915 = vmatprep.mubr.f32.mxu0 0.0
        %916 = vmatmul.mubr.f32.gmra.mxu0 %v772
        %v917 = vpop.f32.mrf.mxu0
        %v918 = vadd.f32 %v629, %v917
        %v919 = vpop.f32.mrf.mxu0
        %920 = vmatprep.mubr.f32.mxu0 0.0
        %921 = vmatmul.mubr.f32.gmra.mxu0 %v774
        %v922 = vpop.f32.mrf.mxu0
        %v923 = vadd.f32 %v634, %v922
        %v924 = vpop.f32.mrf.mxu0
        %925 = vmatprep.mubr.f32.mxu0 0.0
        %926 = vmatmul.mubr.f32.gmra.mxu0 %v776
        %v927 = vpop.f32.mrf.mxu0
        %v928 = vadd.f32 %v639, %v927
        %v929 = vpop.f32.mrf.mxu0
        %930 = vmatprep.mubr.f32.mxu0 0.0
        %931 = vmatmul.mubr.f32.gmra.mxu0 %v778
        %v932 = vpop.f32.mrf.mxu0
        %v933 = vadd.f32 %v644, %v932
        %v934 = vpop.f32.mrf.mxu0
        %935 = vmatprep.mubr.f32.mxu0 0.0
        %936 = vmatmul.mubr.f32.gmra.mxu0 %v780
        %v937 = vpop.f32.mrf.mxu0
        %v938 = vadd.f32 %v649, %v937
        %v939 = vpop.f32.mrf.mxu0
        %940 = vmatprep.mubr.f32.mxu0 0.0
        %941 = vmatmul.mubr.f32.gmra.mxu0 %v782
        %v942 = vpop.f32.mrf.mxu0
        %v943 = vadd.f32 %v654, %v942
        %v944 = vpop.f32.mrf.mxu0
        %945 = vmatprep.mubr.f32.mxu0 0.0
        %946 = vmatmul.mubr.f32.gmra.mxu0 %v784
        %v947 = vpop.f32.mrf.mxu0
        %v948 = vadd.f32 %v659, %v947
        %v949 = vpop.f32.mrf.mxu0
        %950 = vmatprep.mubr.f32.mxu0 0.0
        %951 = vmatmul.mubr.f32.gmra.mxu0 %v786
        %v952 = vpop.f32.mrf.mxu0
        %v953 = vadd.f32 %v664, %v952
        %v954 = vpop.f32.mrf.mxu0
        %955 = vmatprep.mubr.f32.mxu0 0.0
        %956 = vmatmul.mubr.f32.gmra.mxu0 %v788
        %v957 = vpop.f32.mrf.mxu0
        %v958 = vadd.f32 %v669, %v957
        %v959 = vpop.f32.mrf.mxu0
        %960 = vmatprep.mubr.f32.mxu0 0.0
        %961 = vmatmul.mubr.f32.gmra.mxu0 %v790
        %v962 = vpop.f32.mrf.mxu0
        %v963 = vadd.f32 %v674, %v962
        %v964 = vpop.f32.mrf.mxu0
        %965 = vmatprep.mubr.f32.mxu0 0.0
        %966 = vmatmul.mubr.f32.gmra.mxu0 %v792
        %v967 = vpop.f32.mrf.mxu0
        %v968 = vadd.f32 %v679, %v967
        %v969 = vpop.f32.mrf.mxu0
        %970 = vmatprep.mubr.f32.mxu0 0.0
        %971 = vmatmul.mubr.f32.gmra.mxu0 %v794
        %v972 = vpop.f32.mrf.mxu0
        %v973 = vadd.f32 %v684, %v972
        %v974 = vpop.f32.mrf.mxu0
        %975 = vmatprep.mubr.f32.mxu0 0.0
        %976 = vmatmul.mubr.f32.gmra.mxu0 %v796
        %v977 = vpop.f32.mrf.mxu0
        %v978 = vadd.f32 %v689, %v977
        %v979 = vpop.f32.mrf.mxu0
        %980 = vmatprep.mubr.f32.mxu0 0.0
        %981 = vmatmul.mubr.f32.gmra.mxu0 %v798
        %v982 = vpop.f32.mrf.mxu0
        %v983 = vadd.f32 %v694, %v982
        %v984 = vpop.f32.mrf.mxu0
        %985 = vmatprep.mubr.f32.mxu0 0.0
        %986 = vmatmul.mubr.f32.gmra.mxu0 %v800
        %v987 = vpop.f32.mrf.mxu0
        %v988 = vadd.f32 %v699, %v987
        %v989 = vpop.f32.mrf.mxu0
        %990 = vmatprep.mubr.f32.mxu0 0.0
        %991 = vmatmul.mubr.f32.gmra.mxu0 %v802
        %v992 = vpop.f32.mrf.mxu0
        %v993 = vadd.f32 %v704, %v992
        %v994 = vpop.f32.mrf.mxu0
        %995 = vmatprep.mubr.f32.mxu0 0.0
        %996 = vmatmul.mubr.f32.gmra.mxu0 %v804
        %v997 = vpop.f32.mrf.mxu0
        %v998 = vadd.f32 %v709, %v997
        %v999 = vpop.f32.mrf.mxu0
        %1000 = vmatprep.mubr.f32.mxu0 0.0
        %1001 = vmatmul.mubr.f32.gmra.mxu0 %v806
        %v1002 = vpop.f32.mrf.mxu0
        %v1003 = vadd.f32 %v714, %v1002
        %v1004 = vpop.f32.mrf.mxu0
        %1005 = vmatprep.mubr.f32.mxu0 0.0
        %1006 = vmatmul.mubr.f32.gmra.mxu0 %v808
        %v1007 = vpop.f32.mrf.mxu0
        %v1008 = vadd.f32 %v719, %v1007
        %v1009 = vpop.f32.mrf.mxu0
        %1010 = vmatprep.mubr.f32.mxu0 0.0
        %1011 = vmatmul.mubr.f32.gmra.mxu0 %v810
        %v1012 = vpop.f32.mrf.mxu0
        %v1013 = vadd.f32 %v724, %v1012
        %v1014 = vpop.f32.mrf.mxu0
        %1015 = vmatprep.mubr.f32.mxu0 0.0
        %1016 = vmatmul.mubr.f32.gmra.mxu0 %v812
        %v1017 = vpop.f32.mrf.mxu0
        %v1018 = vadd.f32 %v729, %v1017
        %v1019 = vpop.f32.mrf.mxu0
        %1020 = vmatprep.mubr.f32.mxu0 0.0
        %1021 = vmatmul.mubr.f32.gmra.mxu0 %v814
        %v1022 = vpop.f32.mrf.mxu0
        %v1023 = vadd.f32 %v734, %v1022
        %v1024 = vpop.f32.mrf.mxu0
        %1025 = vmatprep.mubr.f32.mxu0 0.0
        %1026 = vmatmul.mubr.f32.gmra.mxu0 %v816
        %v1027 = vpop.f32.mrf.mxu0
        %v1028 = vadd.f32 %v739, %v1027
        %v1029 = vpop.f32.mrf.mxu0
        %1030 = vmatprep.mubr.f32.mxu0 0.0
        %1031 = vmatmul.mubr.f32.gmra.mxu0 %v818
        %v1032 = vpop.f32.mrf.mxu0
        %v1033 = vadd.f32 %v744, %v1032
        %v1034 = vpop.f32.mrf.mxu0
        %1035 = vmatprep.mubr.f32.mxu0 0.0
        %1036 = vmatmul.mubr.f32.gmra.mxu0 %v820
        %v1037 = vpop.f32.mrf.mxu0
        %v1038 = vadd.f32 %v749, %v1037
        %v1039 = vpop.f32.mrf.mxu0
        %1040 = vmatprep.mubr.f32.mxu0 0.0
        %1041 = vmatmul.mubr.f32.gmra.mxu0 %v822
        %v1042 = vpop.f32.mrf.mxu0
        %v1043 = vadd.f32 %v754, %v1042
        %v1044 = vpop.f32.mrf.mxu0
        %1045 = vmatprep.mubr.f32.mxu0 0.0
        %1046 = vmatmul.mubr.f32.gmra.mxu0 %v824
        %v1047 = vpop.f32.mrf.mxu0
        %v1048 = vadd.f32 %v759, %v1047
        %v1049 = vpop.f32.mrf.mxu0
        %1050 = vdwg.mxu0
        %vm1051 = vcmask 1045504
        %v1052 = vrot.slane %v272, 2
        %v1053 = vrot.slane %v273, 2
        %v1054 = vsel %vm1051, %v1052, %v1053
        %v1055 = vrot.slane %v274, 2
        %v1056 = vsel %vm1051, %v1053, %v1055
        %v1057 = vrot.slane %v275, 2
        %v1058 = vrot.slane %v276, 2
        %v1059 = vsel %vm1051, %v1057, %v1058
        %v1060 = vrot.slane %v277, 2
        %v1061 = vsel %vm1051, %v1058, %v1060
        %v1062 = vrot.slane %v278, 2
        %v1063 = vrot.slane %v279, 2
        %v1064 = vsel %vm1051, %v1062, %v1063
        %v1065 = vrot.slane %v280, 2
        %v1066 = vsel %vm1051, %v1063, %v1065
        %v1067 = vrot.slane %v281, 2
        %v1068 = vrot.slane %v282, 2
        %v1069 = vsel %vm1051, %v1067, %v1068
        %v1070 = vrot.slane %v283, 2
        %v1071 = vsel %vm1051, %v1068, %v1070
        %v1072 = vrot.slane %v284, 2
        %v1073 = vrot.slane %v285, 2
        %v1074 = vsel %vm1051, %v1072, %v1073
        %v1075 = vrot.slane %v286, 2
        %v1076 = vsel %vm1051, %v1073, %v1075
        %v1077 = vrot.slane %v287, 2
        %v1078 = vrot.slane %v288, 2
        %v1079 = vsel %vm1051, %v1077, %v1078
        %v1080 = vrot.slane %v289, 2
        %v1081 = vsel %vm1051, %v1078, %v1080
        %v1082 = vrot.slane %v290, 2
        %v1083 = vrot.slane %v291, 2
        %v1084 = vsel %vm1051, %v1082, %v1083
        %v1085 = vrot.slane %v292, 2
        %v1086 = vsel %vm1051, %v1083, %v1085
        %v1087 = vrot.slane %v293, 2
        %v1088 = vrot.slane %v294, 2
        %v1089 = vsel %vm1051, %v1087, %v1088
        %v1090 = vrot.slane %v295, 2
        %v1091 = vsel %vm1051, %v1088, %v1090
        %v1092 = vrot.slane %v296, 2
        %v1093 = vrot.slane %v297, 2
        %v1094 = vsel %vm1051, %v1092, %v1093
        %v1095 = vrot.slane %v298, 2
        %v1096 = vsel %vm1051, %v1093, %v1095
        %v1097 = vrot.slane %v299, 2
        %v1098 = vrot.slane %v300, 2
        %v1099 = vsel %vm1051, %v1097, %v1098
        %v1100 = vrot.slane %v301, 2
        %v1101 = vsel %vm1051, %v1098, %v1100
        %v1102 = vrot.slane %v302, 2
        %v1103 = vrot.slane %v303, 2
        %v1104 = vsel %vm1051, %v1102, %v1103
        %v1105 = vrot.slane %v304, 2
        %v1106 = vsel %vm1051, %v1103, %v1105
        %v1107 = vrot.slane %v305, 2
        %v1108 = vrot.slane %v306, 2
        %v1109 = vsel %vm1051, %v1107, %v1108
        %v1110 = vrot.slane %v307, 2
        %v1111 = vsel %vm1051, %v1108, %v1110
        %v1112 = vrot.slane %v308, 2
        %v1113 = vrot.slane %v309, 2
        %v1114 = vsel %vm1051, %v1112, %v1113
        %v1115 = vrot.slane %v310, 2
        %v1116 = vsel %vm1051, %v1113, %v1115
        %v1117 = vrot.slane %v311, 2
        %v1118 = vrot.slane %v312, 2
        %v1119 = vsel %vm1051, %v1117, %v1118
        %v1120 = vrot.slane %v313, 2
        %v1121 = vsel %vm1051, %v1118, %v1120
        %v1122 = vrot.slane %v314, 2
        %v1123 = vrot.slane %v315, 2
        %v1124 = vsel %vm1051, %v1122, %v1123
        %v1125 = vrot.slane %v316, 2
        %v1126 = vsel %vm1051, %v1123, %v1125
        %v1127 = vrot.slane %v317, 2
        %v1128 = vrot.slane %v318, 2
        %v1129 = vsel %vm1051, %v1127, %v1128
        %v1130 = vrot.slane %v319, 2
        %v1131 = vsel %vm1051, %v1128, %v1130
        %s1132 = scalar_lea.vmem %s260, 128
        %v1133 = vld [vmem:[%s1132] sm:$0xff]
        %v1134 = vld [vmem:[%s1132 + $0x8] sm:$0xff]
        %v1135 = vld [vmem:[%s1132 + $0x10] sm:$0xff]
        %v1136 = vld [vmem:[%s1132 + $0x18] sm:$0xff]
        %v1137 = vld [vmem:[%s1132 + $0x20] sm:$0xff]
        %v1138 = vld [vmem:[%s1132 + $0x28] sm:$0xff]
        %v1139 = vld [vmem:[%s1132 + $0x30] sm:$0xff]
        %v1140 = vld [vmem:[%s1132 + $0x38] sm:$0xff]
        %v1141 = vsel %vm472, %v1054, 0
        %v1143 = vsel %vm472, %v1056, 0
        %v1145 = vsel %vm472, %v1059, 0
        %v1147 = vsel %vm472, %v1061, 0
        %v1149 = vsel %vm472, %v1064, 0
        %v1151 = vsel %vm472, %v1066, 0
        %v1153 = vsel %vm472, %v1069, 0
        %v1155 = vsel %vm472, %v1071, 0
        %v1157 = vsel %vm472, %v1074, 0
        %v1159 = vsel %vm472, %v1076, 0
        %v1161 = vsel %vm472, %v1079, 0
        %v1163 = vsel %vm472, %v1081, 0
        %v1165 = vsel %vm472, %v1084, 0
        %v1167 = vsel %vm472, %v1086, 0
        %v1169 = vsel %vm472, %v1089, 0
        %v1171 = vsel %vm472, %v1091, 0
        %v1173 = vsel %vm472, %v1094, 0
        %v1175 = vsel %vm472, %v1096, 0
        %v1177 = vsel %vm472, %v1099, 0
        %v1179 = vsel %vm472, %v1101, 0
        %v1181 = vsel %vm472, %v1104, 0
        %v1183 = vsel %vm472, %v1106, 0
        %v1185 = vsel %vm472, %v1109, 0
        %v1187 = vsel %vm472, %v1111, 0
        %v1189 = vsel %vm472, %v1114, 0
        %v1191 = vsel %vm472, %v1116, 0
        %v1193 = vsel %vm472, %v1119, 0
        %v1195 = vsel %vm472, %v1121, 0
        %v1197 = vsel %vm472, %v1124, 0
        %v1199 = vsel %vm472, %v1126, 0
        %v1201 = vsel %vm472, %v1129, 0
        %v1203 = vsel %vm472, %v1131, 0
        %1205 = vmatprep.subr.mxu0 0.0
        %1206 = vmatpush1.msra.mxu0 0.0
        %1207 = vmatprep.subr.mxu0 0.0
        %1208 = vmatpush1.msra.mxu0 0.0
        %1209 = vmatprep.subr.mxu0 0.0
        %1210 = vmatpush1.msra.mxu0 0.0
        %1211 = vmatprep.subr.mxu0 0.0
        %1212 = vmatpush1.msra.mxu0 0.0
        %1213 = vmatprep.subr.mxu0 0.0
        %1214 = vmatpush1.msra.mxu0 0.0
        %1215 = vmatprep.subr.mxu0 0.0
        %1216 = vmatpush1.msra.mxu0 0.0
        %1217 = vmatprep.subr.mxu0 0.0
        %1218 = vmatpush1.msra.mxu0 0.0
        %1219 = vmatprep.subr.mxu0 0.0
        %1220 = vmatpush1.msra.mxu0 0.0
        %1221 = vmatprep.subr.mxu0 0.0
        %1222 = vmatpush1.msra.mxu0 %v1140
        %1223 = vmatprep.subr.mxu0 0.0
        %1224 = vmatpush1.msra.mxu0 %v1139
        %1225 = vmatprep.subr.mxu0 0.0
        %1226 = vmatpush1.msra.mxu0 %v1138
        %1227 = vmatprep.subr.mxu0 0.0
        %1228 = vmatpush1.msra.mxu0 %v1137
        %1229 = vmatprep.subr.mxu0 0.0
        %1230 = vmatpush1.msra.mxu0 %v1136
        %1231 = vmatprep.subr.mxu0 0.0
        %1232 = vmatpush1.msra.mxu0 %v1135
        %1233 = vmatprep.subr.mxu0 0.0
        %1234 = vmatpush1.msra.mxu0 %v1134
        %1235 = vmatprep.subr.mxu0 0.0
        %1236 = vmatpush1.msra.mxu0 %v1133
        %1237 = vmatprep.subr.mxu0 0.0
        %1238 = vmatpush2.msra.mxu0 0.0
        %1239 = vmatprep.subr.mxu0 0.0
        %1240 = vmatpush2.msra.mxu0 0.0
        %1241 = vmatprep.subr.mxu0 0.0
        %1242 = vmatpush2.msra.mxu0 0.0
        %1243 = vmatprep.subr.mxu0 0.0
        %1244 = vmatpush2.msra.mxu0 0.0
        %1245 = vmatprep.subr.mxu0 0.0
        %1246 = vmatpush2.msra.mxu0 0.0
        %1247 = vmatprep.subr.mxu0 0.0
        %1248 = vmatpush2.msra.mxu0 0.0
        %1249 = vmatprep.subr.mxu0 0.0
        %1250 = vmatpush2.msra.mxu0 0.0
        %1251 = vmatprep.subr.mxu0 0.0
        %1252 = vmatpush2.msra.mxu0 0.0
        %1253 = vmatprep.subr.mxu0 0.0
        %1254 = vmatpush2.msra.mxu0 0.0
        %1255 = vmatprep.subr.mxu0 0.0
        %1256 = vmatpush2.msra.mxu0 0.0
        %1257 = vmatprep.subr.mxu0 0.0
        %1258 = vmatpush2.msra.mxu0 0.0
        %1259 = vmatprep.subr.mxu0 0.0
        %1260 = vmatpush2.msra.mxu0 0.0
        %1261 = vmatprep.subr.mxu0 0.0
        %1262 = vmatpush2.msra.mxu0 0.0
        %1263 = vmatprep.subr.mxu0 0.0
        %1264 = vmatpush2.msra.mxu0 0.0
        %1265 = vmatprep.subr.mxu0 0.0
        %1266 = vmatpush2.msra.mxu0 0.0
        %1267 = vmatprep.subr.mxu0 0.0
        %1268 = vmatpush2.msra.mxu0 0.0
        %1269 = vmatprep.mubr.f32.mxu0 0.0
        %1270 = vmatmul.mubr.f32.gmra.mxu0 %v1141
        %v1271 = vpop.f32.mrf.mxu0
        %v1272 = vadd.f32 0.0, %v1271
        %v1273 = vpop.f32.mrf.mxu0
        %1274 = vmatprep.mubr.f32.mxu0 0.0
        %1275 = vmatmul.mubr.f32.gmra.mxu0 %v1143
        %v1276 = vpop.f32.mrf.mxu0
        %v1277 = vadd.f32 0.0, %v1276
        %v1278 = vpop.f32.mrf.mxu0
        %1279 = vmatprep.mubr.f32.mxu0 0.0
        %1280 = vmatmul.mubr.f32.gmra.mxu0 %v1145
        %v1281 = vpop.f32.mrf.mxu0
        %v1282 = vadd.f32 0.0, %v1281
        %v1283 = vpop.f32.mrf.mxu0
        %1284 = vmatprep.mubr.f32.mxu0 0.0
        %1285 = vmatmul.mubr.f32.gmra.mxu0 %v1147
        %v1286 = vpop.f32.mrf.mxu0
        %v1287 = vadd.f32 0.0, %v1286
        %v1288 = vpop.f32.mrf.mxu0
        %1289 = vmatprep.mubr.f32.mxu0 0.0
        %1290 = vmatmul.mubr.f32.gmra.mxu0 %v1149
        %v1291 = vpop.f32.mrf.mxu0
        %v1292 = vadd.f32 0.0, %v1291
        %v1293 = vpop.f32.mrf.mxu0
        %1294 = vmatprep.mubr.f32.mxu0 0.0
        %1295 = vmatmul.mubr.f32.gmra.mxu0 %v1151
        %v1296 = vpop.f32.mrf.mxu0
        %v1297 = vadd.f32 0.0, %v1296
        %v1298 = vpop.f32.mrf.mxu0
        %1299 = vmatprep.mubr.f32.mxu0 0.0
        %1300 = vmatmul.mubr.f32.gmra.mxu0 %v1153
        %v1301 = vpop.f32.mrf.mxu0
        %v1302 = vadd.f32 0.0, %v1301
        %v1303 = vpop.f32.mrf.mxu0
        %1304 = vmatprep.mubr.f32.mxu0 0.0
        %1305 = vmatmul.mubr.f32.gmra.mxu0 %v1155
        %v1306 = vpop.f32.mrf.mxu0
        %v1307 = vadd.f32 0.0, %v1306
        %v1308 = vpop.f32.mrf.mxu0
        %1309 = vmatprep.mubr.f32.mxu0 0.0
        %1310 = vmatmul.mubr.f32.gmra.mxu0 %v1157
        %v1311 = vpop.f32.mrf.mxu0
        %v1312 = vadd.f32 0.0, %v1311
        %v1313 = vpop.f32.mrf.mxu0
        %1314 = vmatprep.mubr.f32.mxu0 0.0
        %1315 = vmatmul.mubr.f32.gmra.mxu0 %v1159
        %v1316 = vpop.f32.mrf.mxu0
        %v1317 = vadd.f32 0.0, %v1316
        %v1318 = vpop.f32.mrf.mxu0
        %1319 = vmatprep.mubr.f32.mxu0 0.0
        %1320 = vmatmul.mubr.f32.gmra.mxu0 %v1161
        %v1321 = vpop.f32.mrf.mxu0
        %v1322 = vadd.f32 0.0, %v1321
        %v1323 = vpop.f32.mrf.mxu0
        %1324 = vmatprep.mubr.f32.mxu0 0.0
        %1325 = vmatmul.mubr.f32.gmra.mxu0 %v1163
        %v1326 = vpop.f32.mrf.mxu0
        %v1327 = vadd.f32 0.0, %v1326
        %v1328 = vpop.f32.mrf.mxu0
        %1329 = vmatprep.mubr.f32.mxu0 0.0
        %1330 = vmatmul.mubr.f32.gmra.mxu0 %v1165
        %v1331 = vpop.f32.mrf.mxu0
        %v1332 = vadd.f32 0.0, %v1331
        %v1333 = vpop.f32.mrf.mxu0
        %1334 = vmatprep.mubr.f32.mxu0 0.0
        %1335 = vmatmul.mubr.f32.gmra.mxu0 %v1167
        %v1336 = vpop.f32.mrf.mxu0
        %v1337 = vadd.f32 0.0, %v1336
        %v1338 = vpop.f32.mrf.mxu0
        %1339 = vmatprep.mubr.f32.mxu0 0.0
        %1340 = vmatmul.mubr.f32.gmra.mxu0 %v1169
        %v1341 = vpop.f32.mrf.mxu0
        %v1342 = vadd.f32 0.0, %v1341
        %v1343 = vpop.f32.mrf.mxu0
        %1344 = vmatprep.mubr.f32.mxu0 0.0
        %1345 = vmatmul.mubr.f32.gmra.mxu0 %v1171
        %v1346 = vpop.f32.mrf.mxu0
        %v1347 = vadd.f32 0.0, %v1346
        %v1348 = vpop.f32.mrf.mxu0
        %1349 = vmatprep.mubr.f32.mxu0 0.0
        %1350 = vmatmul.mubr.f32.gmra.mxu0 %v1173
        %v1351 = vpop.f32.mrf.mxu0
        %v1352 = vadd.f32 0.0, %v1351
        %v1353 = vpop.f32.mrf.mxu0
        %1354 = vmatprep.mubr.f32.mxu0 0.0
        %1355 = vmatmul.mubr.f32.gmra.mxu0 %v1175
        %v1356 = vpop.f32.mrf.mxu0
        %v1357 = vadd.f32 0.0, %v1356
        %v1358 = vpop.f32.mrf.mxu0
        %1359 = vmatprep.mubr.f32.mxu0 0.0
        %1360 = vmatmul.mubr.f32.gmra.mxu0 %v1177
        %v1361 = vpop.f32.mrf.mxu0
        %v1362 = vadd.f32 0.0, %v1361
        %v1363 = vpop.f32.mrf.mxu0
        %1364 = vmatprep.mubr.f32.mxu0 0.0
        %1365 = vmatmul.mubr.f32.gmra.mxu0 %v1179
        %v1366 = vpop.f32.mrf.mxu0
        %v1367 = vadd.f32 0.0, %v1366
        %v1368 = vpop.f32.mrf.mxu0
        %1369 = vmatprep.mubr.f32.mxu0 0.0
        %1370 = vmatmul.mubr.f32.gmra.mxu0 %v1181
        %v1371 = vpop.f32.mrf.mxu0
        %v1372 = vadd.f32 0.0, %v1371
        %v1373 = vpop.f32.mrf.mxu0
        %1374 = vmatprep.mubr.f32.mxu0 0.0
        %1375 = vmatmul.mubr.f32.gmra.mxu0 %v1183
        %v1376 = vpop.f32.mrf.mxu0
        %v1377 = vadd.f32 0.0, %v1376
        %v1378 = vpop.f32.mrf.mxu0
        %1379 = vmatprep.mubr.f32.mxu0 0.0
        %1380 = vmatmul.mubr.f32.gmra.mxu0 %v1185
        %v1381 = vpop.f32.mrf.mxu0
        %v1382 = vadd.f32 0.0, %v1381
        %v1383 = vpop.f32.mrf.mxu0
        %1384 = vmatprep.mubr.f32.mxu0 0.0
        %1385 = vmatmul.mubr.f32.gmra.mxu0 %v1187
        %v1386 = vpop.f32.mrf.mxu0
        %v1387 = vadd.f32 0.0, %v1386
        %v1388 = vpop.f32.mrf.mxu0
        %1389 = vmatprep.mubr.f32.mxu0 0.0
        %1390 = vmatmul.mubr.f32.gmra.mxu0 %v1189
        %v1391 = vpop.f32.mrf.mxu0
        %v1392 = vadd.f32 0.0, %v1391
        %v1393 = vpop.f32.mrf.mxu0
        %1394 = vmatprep.mubr.f32.mxu0 0.0
        %1395 = vmatmul.mubr.f32.gmra.mxu0 %v1191
        %v1396 = vpop.f32.mrf.mxu0
        %v1397 = vadd.f32 0.0, %v1396
        %v1398 = vpop.f32.mrf.mxu0
        %1399 = vmatprep.mubr.f32.mxu0 0.0
        %1400 = vmatmul.mubr.f32.gmra.mxu0 %v1193
        %v1401 = vpop.f32.mrf.mxu0
        %v1402 = vadd.f32 0.0, %v1401
        %v1403 = vpop.f32.mrf.mxu0
        %1404 = vmatprep.mubr.f32.mxu0 0.0
        %1405 = vmatmul.mubr.f32.gmra.mxu0 %v1195
        %v1406 = vpop.f32.mrf.mxu0
        %v1407 = vadd.f32 0.0, %v1406
        %v1408 = vpop.f32.mrf.mxu0
        %1409 = vmatprep.mubr.f32.mxu0 0.0
        %1410 = vmatmul.mubr.f32.gmra.mxu0 %v1197
        %v1411 = vpop.f32.mrf.mxu0
        %v1412 = vadd.f32 0.0, %v1411
        %v1413 = vpop.f32.mrf.mxu0
        %1414 = vmatprep.mubr.f32.mxu0 0.0
        %1415 = vmatmul.mubr.f32.gmra.mxu0 %v1199
        %v1416 = vpop.f32.mrf.mxu0
        %v1417 = vadd.f32 0.0, %v1416
        %v1418 = vpop.f32.mrf.mxu0
        %1419 = vmatprep.mubr.f32.mxu0 0.0
        %1420 = vmatmul.mubr.f32.gmra.mxu0 %v1201
        %v1421 = vpop.f32.mrf.mxu0
        %v1422 = vadd.f32 0.0, %v1421
        %v1423 = vpop.f32.mrf.mxu0
        %1424 = vmatprep.mubr.f32.mxu0 0.0
        %1425 = vmatmul.mubr.f32.gmra.mxu0 %v1203
        %v1426 = vpop.f32.mrf.mxu0
        %v1427 = vadd.f32 0.0, %v1426
        %v1428 = vpop.f32.mrf.mxu0
        %1429 = vdwg.mxu0
        %v1430 = vadd.f32 %v893, %v1272
        %v1431 = vadd.f32 %v898, %v1277
        %v1432 = vadd.f32 %v903, %v1282
        %v1433 = vadd.f32 %v908, %v1287
        %v1434 = vadd.f32 %v913, %v1292
        %v1435 = vadd.f32 %v918, %v1297
        %v1436 = vadd.f32 %v923, %v1302
        %v1437 = vadd.f32 %v928, %v1307
        %v1438 = vadd.f32 %v933, %v1312
        %v1439 = vadd.f32 %v938, %v1317
        %v1440 = vadd.f32 %v943, %v1322
        %v1441 = vadd.f32 %v948, %v1327
        %v1442 = vadd.f32 %v953, %v1332
        %v1443 = vadd.f32 %v958, %v1337
        %v1444 = vadd.f32 %v963, %v1342
        %v1445 = vadd.f32 %v968, %v1347
        %v1446 = vadd.f32 %v973, %v1352
        %v1447 = vadd.f32 %v978, %v1357
        %v1448 = vadd.f32 %v983, %v1362
        %v1449 = vadd.f32 %v988, %v1367
        %v1450 = vadd.f32 %v993, %v1372
        %v1451 = vadd.f32 %v998, %v1377
        %v1452 = vadd.f32 %v1003, %v1382
        %v1453 = vadd.f32 %v1008, %v1387
        %v1454 = vadd.f32 %v1013, %v1392
        %v1455 = vadd.f32 %v1018, %v1397
        %v1456 = vadd.f32 %v1023, %v1402
        %v1457 = vadd.f32 %v1028, %v1407
        %v1458 = vadd.f32 %v1033, %v1412
        %v1459 = vadd.f32 %v1038, %v1417
        %v1460 = vadd.f32 %v1043, %v1422
        %v1461 = vadd.f32 %v1048, %v1427
        %s1462 = scalar_lea.vmem %s260, 192
        %v1463 = vld [vmem:[%s1462] sm:$0xff]
        %v1464 = vld [vmem:[%s1462 + $0x8] sm:$0xff]
        %v1465 = vld [vmem:[%s1462 + $0x10] sm:$0xff]
        %v1466 = vld [vmem:[%s1462 + $0x18] sm:$0xff]
        %v1467 = vld [vmem:[%s1462 + $0x20] sm:$0xff]
        %v1468 = vld [vmem:[%s1462 + $0x28] sm:$0xff]
        %v1469 = vld [vmem:[%s1462 + $0x30] sm:$0xff]
        %v1470 = vld [vmem:[%s1462 + $0x38] sm:$0xff]
        %v1472 = vsel %vm472, %v320, 0
        %v1475 = vsel %vm472, %v321, 0
        %1477 = vmatprep.subr.mxu0 0.0
        %1478 = vmatpush1.msra.mxu0 0.0
        %1479 = vmatprep.subr.mxu0 0.0
        %1480 = vmatpush1.msra.mxu0 0.0
        %1481 = vmatprep.subr.mxu0 0.0
        %1482 = vmatpush1.msra.mxu0 0.0
        %1483 = vmatprep.subr.mxu0 0.0
        %1484 = vmatpush1.msra.mxu0 0.0
        %1485 = vmatprep.subr.mxu0 0.0
        %1486 = vmatpush1.msra.mxu0 0.0
        %1487 = vmatprep.subr.mxu0 0.0
        %1488 = vmatpush1.msra.mxu0 0.0
        %1489 = vmatprep.subr.mxu0 0.0
        %1490 = vmatpush1.msra.mxu0 0.0
        %1491 = vmatprep.subr.mxu0 0.0
        %1492 = vmatpush1.msra.mxu0 0.0
        %1493 = vmatprep.subr.mxu0 0.0
        %1494 = vmatpush1.msra.mxu0 %v1470
        %1495 = vmatprep.subr.mxu0 0.0
        %1496 = vmatpush1.msra.mxu0 %v1469
        %1497 = vmatprep.subr.mxu0 0.0
        %1498 = vmatpush1.msra.mxu0 %v1468
        %1499 = vmatprep.subr.mxu0 0.0
        %1500 = vmatpush1.msra.mxu0 %v1467
        %1501 = vmatprep.subr.mxu0 0.0
        %1502 = vmatpush1.msra.mxu0 %v1466
        %1503 = vmatprep.subr.mxu0 0.0
        %1504 = vmatpush1.msra.mxu0 %v1465
        %1505 = vmatprep.subr.mxu0 0.0
        %1506 = vmatpush1.msra.mxu0 %v1464
        %1507 = vmatprep.subr.mxu0 0.0
        %1508 = vmatpush1.msra.mxu0 %v1463
        %1509 = vmatprep.subr.mxu0 0.0
        %1510 = vmatpush2.msra.mxu0 0.0
        %1511 = vmatprep.subr.mxu0 0.0
        %1512 = vmatpush2.msra.mxu0 0.0
        %1513 = vmatprep.subr.mxu0 0.0
        %1514 = vmatpush2.msra.mxu0 0.0
        %1515 = vmatprep.subr.mxu0 0.0
        %1516 = vmatpush2.msra.mxu0 0.0
        %1517 = vmatprep.subr.mxu0 0.0
        %1518 = vmatpush2.msra.mxu0 0.0
        %1519 = vmatprep.subr.mxu0 0.0
        %1520 = vmatpush2.msra.mxu0 0.0
        %1521 = vmatprep.subr.mxu0 0.0
        %1522 = vmatpush2.msra.mxu0 0.0
        %1523 = vmatprep.subr.mxu0 0.0
        %1524 = vmatpush2.msra.mxu0 0.0
        %1525 = vmatprep.subr.mxu0 0.0
        %1526 = vmatpush2.msra.mxu0 0.0
        %1527 = vmatprep.subr.mxu0 0.0
        %1528 = vmatpush2.msra.mxu0 0.0
        %1529 = vmatprep.subr.mxu0 0.0
        %1530 = vmatpush2.msra.mxu0 0.0
        %1531 = vmatprep.subr.mxu0 0.0
        %1532 = vmatpush2.msra.mxu0 0.0
        %1533 = vmatprep.subr.mxu0 0.0
        %1534 = vmatpush2.msra.mxu0 0.0
        %1535 = vmatprep.subr.mxu0 0.0
        %1536 = vmatpush2.msra.mxu0 0.0
        %1537 = vmatprep.subr.mxu0 0.0
        %1538 = vmatpush2.msra.mxu0 0.0
        %1539 = vmatprep.subr.mxu0 0.0
        %1540 = vmatpush2.msra.mxu0 0.0
        %1541 = vmatprep.mubr.f32.mxu0 0.0
        %1542 = vmatmul.mubr.f32.gmra.mxu0 %v766
        %v1543 = vpop.f32.mrf.mxu0
        %v1544 = vadd.f32 0.0, %v1543
        %v1545 = vpop.f32.mrf.mxu0
        %1546 = vmatprep.mubr.f32.mxu0 0.0
        %1547 = vmatmul.mubr.f32.gmra.mxu0 %v768
        %v1548 = vpop.f32.mrf.mxu0
        %v1549 = vadd.f32 0.0, %v1548
        %v1550 = vpop.f32.mrf.mxu0
        %1551 = vmatprep.mubr.f32.mxu0 0.0
        %1552 = vmatmul.mubr.f32.gmra.mxu0 %v770
        %v1553 = vpop.f32.mrf.mxu0
        %v1554 = vadd.f32 0.0, %v1553
        %v1555 = vpop.f32.mrf.mxu0
        %1556 = vmatprep.mubr.f32.mxu0 0.0
        %1557 = vmatmul.mubr.f32.gmra.mxu0 %v772
        %v1558 = vpop.f32.mrf.mxu0
        %v1559 = vadd.f32 0.0, %v1558
        %v1560 = vpop.f32.mrf.mxu0
        %1561 = vmatprep.mubr.f32.mxu0 0.0
        %1562 = vmatmul.mubr.f32.gmra.mxu0 %v774
        %v1563 = vpop.f32.mrf.mxu0
        %v1564 = vadd.f32 0.0, %v1563
        %v1565 = vpop.f32.mrf.mxu0
        %1566 = vmatprep.mubr.f32.mxu0 0.0
        %1567 = vmatmul.mubr.f32.gmra.mxu0 %v776
        %v1568 = vpop.f32.mrf.mxu0
        %v1569 = vadd.f32 0.0, %v1568
        %v1570 = vpop.f32.mrf.mxu0
        %1571 = vmatprep.mubr.f32.mxu0 0.0
        %1572 = vmatmul.mubr.f32.gmra.mxu0 %v778
        %v1573 = vpop.f32.mrf.mxu0
        %v1574 = vadd.f32 0.0, %v1573
        %v1575 = vpop.f32.mrf.mxu0
        %1576 = vmatprep.mubr.f32.mxu0 0.0
        %1577 = vmatmul.mubr.f32.gmra.mxu0 %v780
        %v1578 = vpop.f32.mrf.mxu0
        %v1579 = vadd.f32 0.0, %v1578
        %v1580 = vpop.f32.mrf.mxu0
        %1581 = vmatprep.mubr.f32.mxu0 0.0
        %1582 = vmatmul.mubr.f32.gmra.mxu0 %v782
        %v1583 = vpop.f32.mrf.mxu0
        %v1584 = vadd.f32 0.0, %v1583
        %v1585 = vpop.f32.mrf.mxu0
        %1586 = vmatprep.mubr.f32.mxu0 0.0
        %1587 = vmatmul.mubr.f32.gmra.mxu0 %v784
        %v1588 = vpop.f32.mrf.mxu0
        %v1589 = vadd.f32 0.0, %v1588
        %v1590 = vpop.f32.mrf.mxu0
        %1591 = vmatprep.mubr.f32.mxu0 0.0
        %1592 = vmatmul.mubr.f32.gmra.mxu0 %v786
        %v1593 = vpop.f32.mrf.mxu0
        %v1594 = vadd.f32 0.0, %v1593
        %v1595 = vpop.f32.mrf.mxu0
        %1596 = vmatprep.mubr.f32.mxu0 0.0
        %1597 = vmatmul.mubr.f32.gmra.mxu0 %v788
        %v1598 = vpop.f32.mrf.mxu0
        %v1599 = vadd.f32 0.0, %v1598
        %v1600 = vpop.f32.mrf.mxu0
        %1601 = vmatprep.mubr.f32.mxu0 0.0
        %1602 = vmatmul.mubr.f32.gmra.mxu0 %v790
        %v1603 = vpop.f32.mrf.mxu0
        %v1604 = vadd.f32 0.0, %v1603
        %v1605 = vpop.f32.mrf.mxu0
        %1606 = vmatprep.mubr.f32.mxu0 0.0
        %1607 = vmatmul.mubr.f32.gmra.mxu0 %v792
        %v1608 = vpop.f32.mrf.mxu0
        %v1609 = vadd.f32 0.0, %v1608
        %v1610 = vpop.f32.mrf.mxu0
        %1611 = vmatprep.mubr.f32.mxu0 0.0
        %1612 = vmatmul.mubr.f32.gmra.mxu0 %v794
        %v1613 = vpop.f32.mrf.mxu0
        %v1614 = vadd.f32 0.0, %v1613
        %v1615 = vpop.f32.mrf.mxu0
        %1616 = vmatprep.mubr.f32.mxu0 0.0
        %1617 = vmatmul.mubr.f32.gmra.mxu0 %v796
        %v1618 = vpop.f32.mrf.mxu0
        %v1619 = vadd.f32 0.0, %v1618
        %v1620 = vpop.f32.mrf.mxu0
        %1621 = vmatprep.mubr.f32.mxu0 0.0
        %1622 = vmatmul.mubr.f32.gmra.mxu0 %v798
        %v1623 = vpop.f32.mrf.mxu0
        %v1624 = vadd.f32 0.0, %v1623
        %v1625 = vpop.f32.mrf.mxu0
        %1626 = vmatprep.mubr.f32.mxu0 0.0
        %1627 = vmatmul.mubr.f32.gmra.mxu0 %v800
        %v1628 = vpop.f32.mrf.mxu0
        %v1629 = vadd.f32 0.0, %v1628
        %v1630 = vpop.f32.mrf.mxu0
        %1631 = vmatprep.mubr.f32.mxu0 0.0
        %1632 = vmatmul.mubr.f32.gmra.mxu0 %v802
        %v1633 = vpop.f32.mrf.mxu0
        %v1634 = vadd.f32 0.0, %v1633
        %v1635 = vpop.f32.mrf.mxu0
        %1636 = vmatprep.mubr.f32.mxu0 0.0
        %1637 = vmatmul.mubr.f32.gmra.mxu0 %v804
        %v1638 = vpop.f32.mrf.mxu0
        %v1639 = vadd.f32 0.0, %v1638
        %v1640 = vpop.f32.mrf.mxu0
        %1641 = vmatprep.mubr.f32.mxu0 0.0
        %1642 = vmatmul.mubr.f32.gmra.mxu0 %v806
        %v1643 = vpop.f32.mrf.mxu0
        %v1644 = vadd.f32 0.0, %v1643
        %v1645 = vpop.f32.mrf.mxu0
        %1646 = vmatprep.mubr.f32.mxu0 0.0
        %1647 = vmatmul.mubr.f32.gmra.mxu0 %v808
        %v1648 = vpop.f32.mrf.mxu0
        %v1649 = vadd.f32 0.0, %v1648
        %v1650 = vpop.f32.mrf.mxu0
        %1651 = vmatprep.mubr.f32.mxu0 0.0
        %1652 = vmatmul.mubr.f32.gmra.mxu0 %v810
        %v1653 = vpop.f32.mrf.mxu0
        %v1654 = vadd.f32 0.0, %v1653
        %v1655 = vpop.f32.mrf.mxu0
        %1656 = vmatprep.mubr.f32.mxu0 0.0
        %1657 = vmatmul.mubr.f32.gmra.mxu0 %v812
        %v1658 = vpop.f32.mrf.mxu0
        %v1659 = vadd.f32 0.0, %v1658
        %v1660 = vpop.f32.mrf.mxu0
        %1661 = vmatprep.mubr.f32.mxu0 0.0
        %1662 = vmatmul.mubr.f32.gmra.mxu0 %v814
        %v1663 = vpop.f32.mrf.mxu0
        %v1664 = vadd.f32 0.0, %v1663
        %v1665 = vpop.f32.mrf.mxu0
        %1666 = vmatprep.mubr.f32.mxu0 0.0
        %1667 = vmatmul.mubr.f32.gmra.mxu0 %v816
        %v1668 = vpop.f32.mrf.mxu0
        %v1669 = vadd.f32 0.0, %v1668
        %v1670 = vpop.f32.mrf.mxu0
        %1671 = vmatprep.mubr.f32.mxu0 0.0
        %1672 = vmatmul.mubr.f32.gmra.mxu0 %v818
        %v1673 = vpop.f32.mrf.mxu0
        %v1674 = vadd.f32 0.0, %v1673
        %v1675 = vpop.f32.mrf.mxu0
        %1676 = vmatprep.mubr.f32.mxu0 0.0
        %1677 = vmatmul.mubr.f32.gmra.mxu0 %v820
        %v1678 = vpop.f32.mrf.mxu0
        %v1679 = vadd.f32 0.0, %v1678
        %v1680 = vpop.f32.mrf.mxu0
        %1681 = vmatprep.mubr.f32.mxu0 0.0
        %1682 = vmatmul.mubr.f32.gmra.mxu0 %v822
        %v1683 = vpop.f32.mrf.mxu0
        %v1684 = vadd.f32 0.0, %v1683
        %v1685 = vpop.f32.mrf.mxu0
        %1686 = vmatprep.mubr.f32.mxu0 0.0
        %1687 = vmatmul.mubr.f32.gmra.mxu0 %v824
        %v1688 = vpop.f32.mrf.mxu0
        %v1689 = vadd.f32 0.0, %v1688
        %v1690 = vpop.f32.mrf.mxu0
        %1691 = vmatprep.mubr.f32.mxu0 0.0
        %1692 = vmatmul.mubr.f32.gmra.mxu0 %v1472
        %v1693 = vpop.f32.mrf.mxu0
        %v1694 = vadd.f32 0.0, %v1693
        %v1695 = vpop.f32.mrf.mxu0
        %1696 = vmatprep.mubr.f32.mxu0 0.0
        %1697 = vmatmul.mubr.f32.gmra.mxu0 %v1475
        %v1698 = vpop.f32.mrf.mxu0
        %v1699 = vadd.f32 0.0, %v1698
        %v1700 = vpop.f32.mrf.mxu0
        %1701 = vdwg.mxu0
        %v1702 = vadd.f32 %v1430, %v1544
        %v1703 = vadd.f32 %v1431, %v1549
        %v1704 = vadd.f32 %v1432, %v1554
        %v1705 = vadd.f32 %v1433, %v1559
        %v1706 = vadd.f32 %v1434, %v1564
        %v1707 = vadd.f32 %v1435, %v1569
        %v1708 = vadd.f32 %v1436, %v1574
        %v1709 = vadd.f32 %v1437, %v1579
        %v1710 = vadd.f32 %v1438, %v1584
        %v1711 = vadd.f32 %v1439, %v1589
        %v1712 = vadd.f32 %v1440, %v1594
        %v1713 = vadd.f32 %v1441, %v1599
        %v1714 = vadd.f32 %v1442, %v1604
        %v1715 = vadd.f32 %v1443, %v1609
        %v1716 = vadd.f32 %v1444, %v1614
        %v1717 = vadd.f32 %v1445, %v1619
        %v1718 = vadd.f32 %v1446, %v1624
        %v1719 = vadd.f32 %v1447, %v1629
        %v1720 = vadd.f32 %v1448, %v1634
        %v1721 = vadd.f32 %v1449, %v1639
        %v1722 = vadd.f32 %v1450, %v1644
        %v1723 = vadd.f32 %v1451, %v1649
        %v1724 = vadd.f32 %v1452, %v1654
        %v1725 = vadd.f32 %v1453, %v1659
        %v1726 = vadd.f32 %v1454, %v1664
        %v1727 = vadd.f32 %v1455, %v1669
        %v1728 = vadd.f32 %v1456, %v1674
        %v1729 = vadd.f32 %v1457, %v1679
        %v1730 = vadd.f32 %v1458, %v1684
        %v1731 = vadd.f32 %v1459, %v1689
        %v1732 = vadd.f32 %v1460, %v1694
        %v1733 = vadd.f32 %v1461, %v1699
        %v1735 = vrot.slane %v320, 1
        %v1736 = vrot.slane %v321, 1
        %v1737 = vsel %vm382, %v1735, %v1736
        %v1738 = vrot.slane %v322, 1
        %v1739 = vsel %vm382, %v1736, %v1738
        %s1740 = scalar_lea.vmem %s260, 256
        %v1741 = vld [vmem:[%s1740] sm:$0xff]
        %v1742 = vld [vmem:[%s1740 + $0x8] sm:$0xff]
        %v1743 = vld [vmem:[%s1740 + $0x10] sm:$0xff]
        %v1744 = vld [vmem:[%s1740 + $0x18] sm:$0xff]
        %v1745 = vld [vmem:[%s1740 + $0x20] sm:$0xff]
        %v1746 = vld [vmem:[%s1740 + $0x28] sm:$0xff]
        %v1747 = vld [vmem:[%s1740 + $0x30] sm:$0xff]
        %v1748 = vld [vmem:[%s1740 + $0x38] sm:$0xff]
        %v1749 = vsel %vm472, %v1737, 0
        %v1751 = vsel %vm472, %v1739, 0
        %1753 = vmatprep.subr.mxu0 0.0
        %1754 = vmatpush1.msra.mxu0 0.0
        %1755 = vmatprep.subr.mxu0 0.0
        %1756 = vmatpush1.msra.mxu0 0.0
        %1757 = vmatprep.subr.mxu0 0.0
        %1758 = vmatpush1.msra.mxu0 0.0
        %1759 = vmatprep.subr.mxu0 0.0
        %1760 = vmatpush1.msra.mxu0 0.0
        %1761 = vmatprep.subr.mxu0 0.0
        %1762 = vmatpush1.msra.mxu0 0.0
        %1763 = vmatprep.subr.mxu0 0.0
        %1764 = vmatpush1.msra.mxu0 0.0
        %1765 = vmatprep.subr.mxu0 0.0
        %1766 = vmatpush1.msra.mxu0 0.0
        %1767 = vmatprep.subr.mxu0 0.0
        %1768 = vmatpush1.msra.mxu0 0.0
        %1769 = vmatprep.subr.mxu0 0.0
        %1770 = vmatpush1.msra.mxu0 %v1748
        %1771 = vmatprep.subr.mxu0 0.0
        %1772 = vmatpush1.msra.mxu0 %v1747
        %1773 = vmatprep.subr.mxu0 0.0
        %1774 = vmatpush1.msra.mxu0 %v1746
        %1775 = vmatprep.subr.mxu0 0.0
        %1776 = vmatpush1.msra.mxu0 %v1745
        %1777 = vmatprep.subr.mxu0 0.0
        %1778 = vmatpush1.msra.mxu0 %v1744
        %1779 = vmatprep.subr.mxu0 0.0
        %1780 = vmatpush1.msra.mxu0 %v1743
        %1781 = vmatprep.subr.mxu0 0.0
        %1782 = vmatpush1.msra.mxu0 %v1742
        %1783 = vmatprep.subr.mxu0 0.0
        %1784 = vmatpush1.msra.mxu0 %v1741
        %1785 = vmatprep.subr.mxu0 0.0
        %1786 = vmatpush2.msra.mxu0 0.0
        %1787 = vmatprep.subr.mxu0 0.0
        %1788 = vmatpush2.msra.mxu0 0.0
        %1789 = vmatprep.subr.mxu0 0.0
        %1790 = vmatpush2.msra.mxu0 0.0
        %1791 = vmatprep.subr.mxu0 0.0
        %1792 = vmatpush2.msra.mxu0 0.0
        %1793 = vmatprep.subr.mxu0 0.0
        %1794 = vmatpush2.msra.mxu0 0.0
        %1795 = vmatprep.subr.mxu0 0.0
        %1796 = vmatpush2.msra.mxu0 0.0
        %1797 = vmatprep.subr.mxu0 0.0
        %1798 = vmatpush2.msra.mxu0 0.0
        %1799 = vmatprep.subr.mxu0 0.0
        %1800 = vmatpush2.msra.mxu0 0.0
        %1801 = vmatprep.subr.mxu0 0.0
        %1802 = vmatpush2.msra.mxu0 0.0
        %1803 = vmatprep.subr.mxu0 0.0
        %1804 = vmatpush2.msra.mxu0 0.0
        %1805 = vmatprep.subr.mxu0 0.0
        %1806 = vmatpush2.msra.mxu0 0.0
        %1807 = vmatprep.subr.mxu0 0.0
        %1808 = vmatpush2.msra.mxu0 0.0
        %1809 = vmatprep.subr.mxu0 0.0
        %1810 = vmatpush2.msra.mxu0 0.0
        %1811 = vmatprep.subr.mxu0 0.0
        %1812 = vmatpush2.msra.mxu0 0.0
        %1813 = vmatprep.subr.mxu0 0.0
        %1814 = vmatpush2.msra.mxu0 0.0
        %1815 = vmatprep.subr.mxu0 0.0
        %1816 = vmatpush2.msra.mxu0 0.0
        %1817 = vmatprep.mubr.f32.mxu0 0.0
        %1818 = vmatmul.mubr.f32.gmra.mxu0 %v477
        %v1819 = vpop.f32.mrf.mxu0
        %v1820 = vadd.f32 0.0, %v1819
        %v1821 = vpop.f32.mrf.mxu0
        %1822 = vmatprep.mubr.f32.mxu0 0.0
        %1823 = vmatmul.mubr.f32.gmra.mxu0 %v479
        %v1824 = vpop.f32.mrf.mxu0
        %v1825 = vadd.f32 0.0, %v1824
        %v1826 = vpop.f32.mrf.mxu0
        %1827 = vmatprep.mubr.f32.mxu0 0.0
        %1828 = vmatmul.mubr.f32.gmra.mxu0 %v481
        %v1829 = vpop.f32.mrf.mxu0
        %v1830 = vadd.f32 0.0, %v1829
        %v1831 = vpop.f32.mrf.mxu0
        %1832 = vmatprep.mubr.f32.mxu0 0.0
        %1833 = vmatmul.mubr.f32.gmra.mxu0 %v483
        %v1834 = vpop.f32.mrf.mxu0
        %v1835 = vadd.f32 0.0, %v1834
        %v1836 = vpop.f32.mrf.mxu0
        %1837 = vmatprep.mubr.f32.mxu0 0.0
        %1838 = vmatmul.mubr.f32.gmra.mxu0 %v485
        %v1839 = vpop.f32.mrf.mxu0
        %v1840 = vadd.f32 0.0, %v1839
        %v1841 = vpop.f32.mrf.mxu0
        %1842 = vmatprep.mubr.f32.mxu0 0.0
        %1843 = vmatmul.mubr.f32.gmra.mxu0 %v487
        %v1844 = vpop.f32.mrf.mxu0
        %v1845 = vadd.f32 0.0, %v1844
        %v1846 = vpop.f32.mrf.mxu0
        %1847 = vmatprep.mubr.f32.mxu0 0.0
        %1848 = vmatmul.mubr.f32.gmra.mxu0 %v489
        %v1849 = vpop.f32.mrf.mxu0
        %v1850 = vadd.f32 0.0, %v1849
        %v1851 = vpop.f32.mrf.mxu0
        %1852 = vmatprep.mubr.f32.mxu0 0.0
        %1853 = vmatmul.mubr.f32.gmra.mxu0 %v491
        %v1854 = vpop.f32.mrf.mxu0
        %v1855 = vadd.f32 0.0, %v1854
        %v1856 = vpop.f32.mrf.mxu0
        %1857 = vmatprep.mubr.f32.mxu0 0.0
        %1858 = vmatmul.mubr.f32.gmra.mxu0 %v493
        %v1859 = vpop.f32.mrf.mxu0
        %v1860 = vadd.f32 0.0, %v1859
        %v1861 = vpop.f32.mrf.mxu0
        %1862 = vmatprep.mubr.f32.mxu0 0.0
        %1863 = vmatmul.mubr.f32.gmra.mxu0 %v495
        %v1864 = vpop.f32.mrf.mxu0
        %v1865 = vadd.f32 0.0, %v1864
        %v1866 = vpop.f32.mrf.mxu0
        %1867 = vmatprep.mubr.f32.mxu0 0.0
        %1868 = vmatmul.mubr.f32.gmra.mxu0 %v497
        %v1869 = vpop.f32.mrf.mxu0
        %v1870 = vadd.f32 0.0, %v1869
        %v1871 = vpop.f32.mrf.mxu0
        %1872 = vmatprep.mubr.f32.mxu0 0.0
        %1873 = vmatmul.mubr.f32.gmra.mxu0 %v499
        %v1874 = vpop.f32.mrf.mxu0
        %v1875 = vadd.f32 0.0, %v1874
        %v1876 = vpop.f32.mrf.mxu0
        %1877 = vmatprep.mubr.f32.mxu0 0.0
        %1878 = vmatmul.mubr.f32.gmra.mxu0 %v501
        %v1879 = vpop.f32.mrf.mxu0
        %v1880 = vadd.f32 0.0, %v1879
        %v1881 = vpop.f32.mrf.mxu0
        %1882 = vmatprep.mubr.f32.mxu0 0.0
        %1883 = vmatmul.mubr.f32.gmra.mxu0 %v503
        %v1884 = vpop.f32.mrf.mxu0
        %v1885 = vadd.f32 0.0, %v1884
        %v1886 = vpop.f32.mrf.mxu0
        %1887 = vmatprep.mubr.f32.mxu0 0.0
        %1888 = vmatmul.mubr.f32.gmra.mxu0 %v505
        %v1889 = vpop.f32.mrf.mxu0
        %v1890 = vadd.f32 0.0, %v1889
        %v1891 = vpop.f32.mrf.mxu0
        %1892 = vmatprep.mubr.f32.mxu0 0.0
        %1893 = vmatmul.mubr.f32.gmra.mxu0 %v507
        %v1894 = vpop.f32.mrf.mxu0
        %v1895 = vadd.f32 0.0, %v1894
        %v1896 = vpop.f32.mrf.mxu0
        %1897 = vmatprep.mubr.f32.mxu0 0.0
        %1898 = vmatmul.mubr.f32.gmra.mxu0 %v509
        %v1899 = vpop.f32.mrf.mxu0
        %v1900 = vadd.f32 0.0, %v1899
        %v1901 = vpop.f32.mrf.mxu0
        %1902 = vmatprep.mubr.f32.mxu0 0.0
        %1903 = vmatmul.mubr.f32.gmra.mxu0 %v511
        %v1904 = vpop.f32.mrf.mxu0
        %v1905 = vadd.f32 0.0, %v1904
        %v1906 = vpop.f32.mrf.mxu0
        %1907 = vmatprep.mubr.f32.mxu0 0.0
        %1908 = vmatmul.mubr.f32.gmra.mxu0 %v513
        %v1909 = vpop.f32.mrf.mxu0
        %v1910 = vadd.f32 0.0, %v1909
        %v1911 = vpop.f32.mrf.mxu0
        %1912 = vmatprep.mubr.f32.mxu0 0.0
        %1913 = vmatmul.mubr.f32.gmra.mxu0 %v515
        %v1914 = vpop.f32.mrf.mxu0
        %v1915 = vadd.f32 0.0, %v1914
        %v1916 = vpop.f32.mrf.mxu0
        %1917 = vmatprep.mubr.f32.mxu0 0.0
        %1918 = vmatmul.mubr.f32.gmra.mxu0 %v517
        %v1919 = vpop.f32.mrf.mxu0
        %v1920 = vadd.f32 0.0, %v1919
        %v1921 = vpop.f32.mrf.mxu0
        %1922 = vmatprep.mubr.f32.mxu0 0.0
        %1923 = vmatmul.mubr.f32.gmra.mxu0 %v519
        %v1924 = vpop.f32.mrf.mxu0
        %v1925 = vadd.f32 0.0, %v1924
        %v1926 = vpop.f32.mrf.mxu0
        %1927 = vmatprep.mubr.f32.mxu0 0.0
        %1928 = vmatmul.mubr.f32.gmra.mxu0 %v521
        %v1929 = vpop.f32.mrf.mxu0
        %v1930 = vadd.f32 0.0, %v1929
        %v1931 = vpop.f32.mrf.mxu0
        %1932 = vmatprep.mubr.f32.mxu0 0.0
        %1933 = vmatmul.mubr.f32.gmra.mxu0 %v523
        %v1934 = vpop.f32.mrf.mxu0
        %v1935 = vadd.f32 0.0, %v1934
        %v1936 = vpop.f32.mrf.mxu0
        %1937 = vmatprep.mubr.f32.mxu0 0.0
        %1938 = vmatmul.mubr.f32.gmra.mxu0 %v525
        %v1939 = vpop.f32.mrf.mxu0
        %v1940 = vadd.f32 0.0, %v1939
        %v1941 = vpop.f32.mrf.mxu0
        %1942 = vmatprep.mubr.f32.mxu0 0.0
        %1943 = vmatmul.mubr.f32.gmra.mxu0 %v527
        %v1944 = vpop.f32.mrf.mxu0
        %v1945 = vadd.f32 0.0, %v1944
        %v1946 = vpop.f32.mrf.mxu0
        %1947 = vmatprep.mubr.f32.mxu0 0.0
        %1948 = vmatmul.mubr.f32.gmra.mxu0 %v529
        %v1949 = vpop.f32.mrf.mxu0
        %v1950 = vadd.f32 0.0, %v1949
        %v1951 = vpop.f32.mrf.mxu0
        %1952 = vmatprep.mubr.f32.mxu0 0.0
        %1953 = vmatmul.mubr.f32.gmra.mxu0 %v531
        %v1954 = vpop.f32.mrf.mxu0
        %v1955 = vadd.f32 0.0, %v1954
        %v1956 = vpop.f32.mrf.mxu0
        %1957 = vmatprep.mubr.f32.mxu0 0.0
        %1958 = vmatmul.mubr.f32.gmra.mxu0 %v533
        %v1959 = vpop.f32.mrf.mxu0
        %v1960 = vadd.f32 0.0, %v1959
        %v1961 = vpop.f32.mrf.mxu0
        %1962 = vmatprep.mubr.f32.mxu0 0.0
        %1963 = vmatmul.mubr.f32.gmra.mxu0 %v535
        %v1964 = vpop.f32.mrf.mxu0
        %v1965 = vadd.f32 0.0, %v1964
        %v1966 = vpop.f32.mrf.mxu0
        %1967 = vmatprep.mubr.f32.mxu0 0.0
        %1968 = vmatmul.mubr.f32.gmra.mxu0 %v1749
        %v1969 = vpop.f32.mrf.mxu0
        %v1970 = vadd.f32 0.0, %v1969
        %v1971 = vpop.f32.mrf.mxu0
        %1972 = vmatprep.mubr.f32.mxu0 0.0
        %1973 = vmatmul.mubr.f32.gmra.mxu0 %v1751
        %v1974 = vpop.f32.mrf.mxu0
        %v1975 = vadd.f32 0.0, %v1974
        %v1976 = vpop.f32.mrf.mxu0
        %1977 = vdwg.mxu0
        %v1978 = vadd.f32 %v1702, %v1820
        %v1979 = vadd.f32 %v1703, %v1825
        %v1980 = vadd.f32 %v1704, %v1830
        %v1981 = vadd.f32 %v1705, %v1835
        %v1982 = vadd.f32 %v1706, %v1840
        %v1983 = vadd.f32 %v1707, %v1845
        %v1984 = vadd.f32 %v1708, %v1850
        %v1985 = vadd.f32 %v1709, %v1855
        %v1986 = vadd.f32 %v1710, %v1860
        %v1987 = vadd.f32 %v1711, %v1865
        %v1988 = vadd.f32 %v1712, %v1870
        %v1989 = vadd.f32 %v1713, %v1875
        %v1990 = vadd.f32 %v1714, %v1880
        %v1991 = vadd.f32 %v1715, %v1885
        %v1992 = vadd.f32 %v1716, %v1890
        %v1993 = vadd.f32 %v1717, %v1895
        %v1994 = vadd.f32 %v1718, %v1900
        %v1995 = vadd.f32 %v1719, %v1905
        %v1996 = vadd.f32 %v1720, %v1910
        %v1997 = vadd.f32 %v1721, %v1915
        %v1998 = vadd.f32 %v1722, %v1920
        %v1999 = vadd.f32 %v1723, %v1925
        %v2000 = vadd.f32 %v1724, %v1930
        %v2001 = vadd.f32 %v1725, %v1935
        %v2002 = vadd.f32 %v1726, %v1940
        %v2003 = vadd.f32 %v1727, %v1945
        %v2004 = vadd.f32 %v1728, %v1950
        %v2005 = vadd.f32 %v1729, %v1955
        %v2006 = vadd.f32 %v1730, %v1960
        %v2007 = vadd.f32 %v1731, %v1965
        %v2008 = vadd.f32 %v1732, %v1970
        %v2009 = vadd.f32 %v1733, %v1975
        %v2010 = vrot.slane %v320, 2
        %v2011 = vrot.slane %v321, 2
        %v2012 = vsel %vm1051, %v2010, %v2011
        %v2013 = vrot.slane %v322, 2
        %v2014 = vsel %vm1051, %v2011, %v2013
        %s2015 = scalar_lea.vmem %s260, 320
        %v2016 = vld [vmem:[%s2015] sm:$0xff]
        %v2017 = vld [vmem:[%s2015 + $0x8] sm:$0xff]
        %v2018 = vld [vmem:[%s2015 + $0x10] sm:$0xff]
        %v2019 = vld [vmem:[%s2015 + $0x18] sm:$0xff]
        %v2020 = vld [vmem:[%s2015 + $0x20] sm:$0xff]
        %v2021 = vld [vmem:[%s2015 + $0x28] sm:$0xff]
        %v2022 = vld [vmem:[%s2015 + $0x30] sm:$0xff]
        %v2023 = vld [vmem:[%s2015 + $0x38] sm:$0xff]
        %v2024 = vsel %vm472, %v2012, 0
        %v2026 = vsel %vm472, %v2014, 0
        %2028 = vmatprep.subr.mxu0 0.0
        %2029 = vmatpush1.msra.mxu0 0.0
        %2030 = vmatprep.subr.mxu0 0.0
        %2031 = vmatpush1.msra.mxu0 0.0
        %2032 = vmatprep.subr.mxu0 0.0
        %2033 = vmatpush1.msra.mxu0 0.0
        %2034 = vmatprep.subr.mxu0 0.0
        %2035 = vmatpush1.msra.mxu0 0.0
        %2036 = vmatprep.subr.mxu0 0.0
        %2037 = vmatpush1.msra.mxu0 0.0
        %2038 = vmatprep.subr.mxu0 0.0
        %2039 = vmatpush1.msra.mxu0 0.0
        %2040 = vmatprep.subr.mxu0 0.0
        %2041 = vmatpush1.msra.mxu0 0.0
        %2042 = vmatprep.subr.mxu0 0.0
        %2043 = vmatpush1.msra.mxu0 0.0
        %2044 = vmatprep.subr.mxu0 0.0
        %2045 = vmatpush1.msra.mxu0 %v2023
        %2046 = vmatprep.subr.mxu0 0.0
        %2047 = vmatpush1.msra.mxu0 %v2022
        %2048 = vmatprep.subr.mxu0 0.0
        %2049 = vmatpush1.msra.mxu0 %v2021
        %2050 = vmatprep.subr.mxu0 0.0
        %2051 = vmatpush1.msra.mxu0 %v2020
        %2052 = vmatprep.subr.mxu0 0.0
        %2053 = vmatpush1.msra.mxu0 %v2019
        %2054 = vmatprep.subr.mxu0 0.0
        %2055 = vmatpush1.msra.mxu0 %v2018
        %2056 = vmatprep.subr.mxu0 0.0
        %2057 = vmatpush1.msra.mxu0 %v2017
        %2058 = vmatprep.subr.mxu0 0.0
        %2059 = vmatpush1.msra.mxu0 %v2016
        %2060 = vmatprep.subr.mxu0 0.0
        %2061 = vmatpush2.msra.mxu0 0.0
        %2062 = vmatprep.subr.mxu0 0.0
        %2063 = vmatpush2.msra.mxu0 0.0
        %2064 = vmatprep.subr.mxu0 0.0
        %2065 = vmatpush2.msra.mxu0 0.0
        %2066 = vmatprep.subr.mxu0 0.0
        %2067 = vmatpush2.msra.mxu0 0.0
        %2068 = vmatprep.subr.mxu0 0.0
        %2069 = vmatpush2.msra.mxu0 0.0
        %2070 = vmatprep.subr.mxu0 0.0
        %2071 = vmatpush2.msra.mxu0 0.0
        %2072 = vmatprep.subr.mxu0 0.0
        %2073 = vmatpush2.msra.mxu0 0.0
        %2074 = vmatprep.subr.mxu0 0.0
        %2075 = vmatpush2.msra.mxu0 0.0
        %2076 = vmatprep.subr.mxu0 0.0
        %2077 = vmatpush2.msra.mxu0 0.0
        %2078 = vmatprep.subr.mxu0 0.0
        %2079 = vmatpush2.msra.mxu0 0.0
        %2080 = vmatprep.subr.mxu0 0.0
        %2081 = vmatpush2.msra.mxu0 0.0
        %2082 = vmatprep.subr.mxu0 0.0
        %2083 = vmatpush2.msra.mxu0 0.0
        %2084 = vmatprep.subr.mxu0 0.0
        %2085 = vmatpush2.msra.mxu0 0.0
        %2086 = vmatprep.subr.mxu0 0.0
        %2087 = vmatpush2.msra.mxu0 0.0
        %2088 = vmatprep.subr.mxu0 0.0
        %2089 = vmatpush2.msra.mxu0 0.0
        %2090 = vmatprep.subr.mxu0 0.0
        %2091 = vmatpush2.msra.mxu0 0.0
        %2092 = vmatprep.mubr.f32.mxu0 0.0
        %2093 = vmatmul.mubr.f32.gmra.mxu0 %v1145
        %v2094 = vpop.f32.mrf.mxu0
        %v2095 = vadd.f32 0.0, %v2094
        %v2096 = vpop.f32.mrf.mxu0
        %2097 = vmatprep.mubr.f32.mxu0 0.0
        %2098 = vmatmul.mubr.f32.gmra.mxu0 %v1147
        %v2099 = vpop.f32.mrf.mxu0
        %v2100 = vadd.f32 0.0, %v2099
        %v2101 = vpop.f32.mrf.mxu0
        %2102 = vmatprep.mubr.f32.mxu0 0.0
        %2103 = vmatmul.mubr.f32.gmra.mxu0 %v1149
        %v2104 = vpop.f32.mrf.mxu0
        %v2105 = vadd.f32 0.0, %v2104
        %v2106 = vpop.f32.mrf.mxu0
        %2107 = vmatprep.mubr.f32.mxu0 0.0
        %2108 = vmatmul.mubr.f32.gmra.mxu0 %v1151
        %v2109 = vpop.f32.mrf.mxu0
        %v2110 = vadd.f32 0.0, %v2109
        %v2111 = vpop.f32.mrf.mxu0
        %2112 = vmatprep.mubr.f32.mxu0 0.0
        %2113 = vmatmul.mubr.f32.gmra.mxu0 %v1153
        %v2114 = vpop.f32.mrf.mxu0
        %v2115 = vadd.f32 0.0, %v2114
        %v2116 = vpop.f32.mrf.mxu0
        %2117 = vmatprep.mubr.f32.mxu0 0.0
        %2118 = vmatmul.mubr.f32.gmra.mxu0 %v1155
        %v2119 = vpop.f32.mrf.mxu0
        %v2120 = vadd.f32 0.0, %v2119
        %v2121 = vpop.f32.mrf.mxu0
        %2122 = vmatprep.mubr.f32.mxu0 0.0
        %2123 = vmatmul.mubr.f32.gmra.mxu0 %v1157
        %v2124 = vpop.f32.mrf.mxu0
        %v2125 = vadd.f32 0.0, %v2124
        %v2126 = vpop.f32.mrf.mxu0
        %2127 = vmatprep.mubr.f32.mxu0 0.0
        %2128 = vmatmul.mubr.f32.gmra.mxu0 %v1159
        %v2129 = vpop.f32.mrf.mxu0
        %v2130 = vadd.f32 0.0, %v2129
        %v2131 = vpop.f32.mrf.mxu0
        %2132 = vmatprep.mubr.f32.mxu0 0.0
        %2133 = vmatmul.mubr.f32.gmra.mxu0 %v1161
        %v2134 = vpop.f32.mrf.mxu0
        %v2135 = vadd.f32 0.0, %v2134
        %v2136 = vpop.f32.mrf.mxu0
        %2137 = vmatprep.mubr.f32.mxu0 0.0
        %2138 = vmatmul.mubr.f32.gmra.mxu0 %v1163
        %v2139 = vpop.f32.mrf.mxu0
        %v2140 = vadd.f32 0.0, %v2139
        %v2141 = vpop.f32.mrf.mxu0
        %2142 = vmatprep.mubr.f32.mxu0 0.0
        %2143 = vmatmul.mubr.f32.gmra.mxu0 %v1165
        %v2144 = vpop.f32.mrf.mxu0
        %v2145 = vadd.f32 0.0, %v2144
        %v2146 = vpop.f32.mrf.mxu0
        %2147 = vmatprep.mubr.f32.mxu0 0.0
        %2148 = vmatmul.mubr.f32.gmra.mxu0 %v1167
        %v2149 = vpop.f32.mrf.mxu0
        %v2150 = vadd.f32 0.0, %v2149
        %v2151 = vpop.f32.mrf.mxu0
        %2152 = vmatprep.mubr.f32.mxu0 0.0
        %2153 = vmatmul.mubr.f32.gmra.mxu0 %v1169
        %v2154 = vpop.f32.mrf.mxu0
        %v2155 = vadd.f32 0.0, %v2154
        %v2156 = vpop.f32.mrf.mxu0
        %2157 = vmatprep.mubr.f32.mxu0 0.0
        %2158 = vmatmul.mubr.f32.gmra.mxu0 %v1171
        %v2159 = vpop.f32.mrf.mxu0
        %v2160 = vadd.f32 0.0, %v2159
        %v2161 = vpop.f32.mrf.mxu0
        %2162 = vmatprep.mubr.f32.mxu0 0.0
        %2163 = vmatmul.mubr.f32.gmra.mxu0 %v1173
        %v2164 = vpop.f32.mrf.mxu0
        %v2165 = vadd.f32 0.0, %v2164
        %v2166 = vpop.f32.mrf.mxu0
        %2167 = vmatprep.mubr.f32.mxu0 0.0
        %2168 = vmatmul.mubr.f32.gmra.mxu0 %v1175
        %v2169 = vpop.f32.mrf.mxu0
        %v2170 = vadd.f32 0.0, %v2169
        %v2171 = vpop.f32.mrf.mxu0
        %2172 = vmatprep.mubr.f32.mxu0 0.0
        %2173 = vmatmul.mubr.f32.gmra.mxu0 %v1177
        %v2174 = vpop.f32.mrf.mxu0
        %v2175 = vadd.f32 0.0, %v2174
        %v2176 = vpop.f32.mrf.mxu0
        %2177 = vmatprep.mubr.f32.mxu0 0.0
        %2178 = vmatmul.mubr.f32.gmra.mxu0 %v1179
        %v2179 = vpop.f32.mrf.mxu0
        %v2180 = vadd.f32 0.0, %v2179
        %v2181 = vpop.f32.mrf.mxu0
        %2182 = vmatprep.mubr.f32.mxu0 0.0
        %2183 = vmatmul.mubr.f32.gmra.mxu0 %v1181
        %v2184 = vpop.f32.mrf.mxu0
        %v2185 = vadd.f32 0.0, %v2184
        %v2186 = vpop.f32.mrf.mxu0
        %2187 = vmatprep.mubr.f32.mxu0 0.0
        %2188 = vmatmul.mubr.f32.gmra.mxu0 %v1183
        %v2189 = vpop.f32.mrf.mxu0
        %v2190 = vadd.f32 0.0, %v2189
        %v2191 = vpop.f32.mrf.mxu0
        %2192 = vmatprep.mubr.f32.mxu0 0.0
        %2193 = vmatmul.mubr.f32.gmra.mxu0 %v1185
        %v2194 = vpop.f32.mrf.mxu0
        %v2195 = vadd.f32 0.0, %v2194
        %v2196 = vpop.f32.mrf.mxu0
        %2197 = vmatprep.mubr.f32.mxu0 0.0
        %2198 = vmatmul.mubr.f32.gmra.mxu0 %v1187
        %v2199 = vpop.f32.mrf.mxu0
        %v2200 = vadd.f32 0.0, %v2199
        %v2201 = vpop.f32.mrf.mxu0
        %2202 = vmatprep.mubr.f32.mxu0 0.0
        %2203 = vmatmul.mubr.f32.gmra.mxu0 %v1189
        %v2204 = vpop.f32.mrf.mxu0
        %v2205 = vadd.f32 0.0, %v2204
        %v2206 = vpop.f32.mrf.mxu0
        %2207 = vmatprep.mubr.f32.mxu0 0.0
        %2208 = vmatmul.mubr.f32.gmra.mxu0 %v1191
        %v2209 = vpop.f32.mrf.mxu0
        %v2210 = vadd.f32 0.0, %v2209
        %v2211 = vpop.f32.mrf.mxu0
        %2212 = vmatprep.mubr.f32.mxu0 0.0
        %2213 = vmatmul.mubr.f32.gmra.mxu0 %v1193
        %v2214 = vpop.f32.mrf.mxu0
        %v2215 = vadd.f32 0.0, %v2214
        %v2216 = vpop.f32.mrf.mxu0
        %2217 = vmatprep.mubr.f32.mxu0 0.0
        %2218 = vmatmul.mubr.f32.gmra.mxu0 %v1195
        %v2219 = vpop.f32.mrf.mxu0
        %v2220 = vadd.f32 0.0, %v2219
        %v2221 = vpop.f32.mrf.mxu0
        %2222 = vmatprep.mubr.f32.mxu0 0.0
        %2223 = vmatmul.mubr.f32.gmra.mxu0 %v1197
        %v2224 = vpop.f32.mrf.mxu0
        %v2225 = vadd.f32 0.0, %v2224
        %v2226 = vpop.f32.mrf.mxu0
        %2227 = vmatprep.mubr.f32.mxu0 0.0
        %2228 = vmatmul.mubr.f32.gmra.mxu0 %v1199
        %v2229 = vpop.f32.mrf.mxu0
        %v2230 = vadd.f32 0.0, %v2229
        %v2231 = vpop.f32.mrf.mxu0
        %2232 = vmatprep.mubr.f32.mxu0 0.0
        %2233 = vmatmul.mubr.f32.gmra.mxu0 %v1201
        %v2234 = vpop.f32.mrf.mxu0
        %v2235 = vadd.f32 0.0, %v2234
        %v2236 = vpop.f32.mrf.mxu0
        %2237 = vmatprep.mubr.f32.mxu0 0.0
        %2238 = vmatmul.mubr.f32.gmra.mxu0 %v1203
        %v2239 = vpop.f32.mrf.mxu0
        %v2240 = vadd.f32 0.0, %v2239
        %v2241 = vpop.f32.mrf.mxu0
        %2242 = vmatprep.mubr.f32.mxu0 0.0
        %2243 = vmatmul.mubr.f32.gmra.mxu0 %v2024
        %v2244 = vpop.f32.mrf.mxu0
        %v2245 = vadd.f32 0.0, %v2244
        %v2246 = vpop.f32.mrf.mxu0
        %2247 = vmatprep.mubr.f32.mxu0 0.0
        %2248 = vmatmul.mubr.f32.gmra.mxu0 %v2026
        %v2249 = vpop.f32.mrf.mxu0
        %v2250 = vadd.f32 0.0, %v2249
        %v2251 = vpop.f32.mrf.mxu0
        %2252 = vdwg.mxu0
        %v2253 = vadd.f32 %v1978, %v2095
        %v2254 = vadd.f32 %v1979, %v2100
        %v2255 = vadd.f32 %v1980, %v2105
        %v2256 = vadd.f32 %v1981, %v2110
        %v2257 = vadd.f32 %v1982, %v2115
        %v2258 = vadd.f32 %v1983, %v2120
        %v2259 = vadd.f32 %v1984, %v2125
        %v2260 = vadd.f32 %v1985, %v2130
        %v2261 = vadd.f32 %v1986, %v2135
        %v2262 = vadd.f32 %v1987, %v2140
        %v2263 = vadd.f32 %v1988, %v2145
        %v2264 = vadd.f32 %v1989, %v2150
        %v2265 = vadd.f32 %v1990, %v2155
        %v2266 = vadd.f32 %v1991, %v2160
        %v2267 = vadd.f32 %v1992, %v2165
        %v2268 = vadd.f32 %v1993, %v2170
        %v2269 = vadd.f32 %v1994, %v2175
        %v2270 = vadd.f32 %v1995, %v2180
        %v2271 = vadd.f32 %v1996, %v2185
        %v2272 = vadd.f32 %v1997, %v2190
        %v2273 = vadd.f32 %v1998, %v2195
        %v2274 = vadd.f32 %v1999, %v2200
        %v2275 = vadd.f32 %v2000, %v2205
        %v2276 = vadd.f32 %v2001, %v2210
        %v2277 = vadd.f32 %v2002, %v2215
        %v2278 = vadd.f32 %v2003, %v2220
        %v2279 = vadd.f32 %v2004, %v2225
        %v2280 = vadd.f32 %v2005, %v2230
        %v2281 = vadd.f32 %v2006, %v2235
        %v2282 = vadd.f32 %v2007, %v2240
        %v2283 = vadd.f32 %v2008, %v2245
        %v2284 = vadd.f32 %v2009, %v2250
        %s2285 = scalar_lea.vmem %s260, 384
        %v2286 = vld [vmem:[%s2285] sm:$0xff]
        %v2287 = vld [vmem:[%s2285 + $0x8] sm:$0xff]
        %v2288 = vld [vmem:[%s2285 + $0x10] sm:$0xff]
        %v2289 = vld [vmem:[%s2285 + $0x18] sm:$0xff]
        %v2290 = vld [vmem:[%s2285 + $0x20] sm:$0xff]
        %v2291 = vld [vmem:[%s2285 + $0x28] sm:$0xff]
        %v2292 = vld [vmem:[%s2285 + $0x30] sm:$0xff]
        %v2293 = vld [vmem:[%s2285 + $0x38] sm:$0xff]
        %v2295 = vsel %vm472, %v323, 0
        %v2298 = vsel %vm472, %v324, 0
        %2300 = vmatprep.subr.mxu0 0.0
        %2301 = vmatpush1.msra.mxu0 0.0
        %2302 = vmatprep.subr.mxu0 0.0
        %2303 = vmatpush1.msra.mxu0 0.0
        %2304 = vmatprep.subr.mxu0 0.0
        %2305 = vmatpush1.msra.mxu0 0.0
        %2306 = vmatprep.subr.mxu0 0.0
        %2307 = vmatpush1.msra.mxu0 0.0
        %2308 = vmatprep.subr.mxu0 0.0
        %2309 = vmatpush1.msra.mxu0 0.0
        %2310 = vmatprep.subr.mxu0 0.0
        %2311 = vmatpush1.msra.mxu0 0.0
        %2312 = vmatprep.subr.mxu0 0.0
        %2313 = vmatpush1.msra.mxu0 0.0
        %2314 = vmatprep.subr.mxu0 0.0
        %2315 = vmatpush1.msra.mxu0 0.0
        %2316 = vmatprep.subr.mxu0 0.0
        %2317 = vmatpush1.msra.mxu0 %v2293
        %2318 = vmatprep.subr.mxu0 0.0
        %2319 = vmatpush1.msra.mxu0 %v2292
        %2320 = vmatprep.subr.mxu0 0.0
        %2321 = vmatpush1.msra.mxu0 %v2291
        %2322 = vmatprep.subr.mxu0 0.0
        %2323 = vmatpush1.msra.mxu0 %v2290
        %2324 = vmatprep.subr.mxu0 0.0
        %2325 = vmatpush1.msra.mxu0 %v2289
        %2326 = vmatprep.subr.mxu0 0.0
        %2327 = vmatpush1.msra.mxu0 %v2288
        %2328 = vmatprep.subr.mxu0 0.0
        %2329 = vmatpush1.msra.mxu0 %v2287
        %2330 = vmatprep.subr.mxu0 0.0
        %2331 = vmatpush1.msra.mxu0 %v2286
        %2332 = vmatprep.subr.mxu0 0.0
        %2333 = vmatpush2.msra.mxu0 0.0
        %2334 = vmatprep.subr.mxu0 0.0
        %2335 = vmatpush2.msra.mxu0 0.0
        %2336 = vmatprep.subr.mxu0 0.0
        %2337 = vmatpush2.msra.mxu0 0.0
        %2338 = vmatprep.subr.mxu0 0.0
        %2339 = vmatpush2.msra.mxu0 0.0
        %2340 = vmatprep.subr.mxu0 0.0
        %2341 = vmatpush2.msra.mxu0 0.0
        %2342 = vmatprep.subr.mxu0 0.0
        %2343 = vmatpush2.msra.mxu0 0.0
        %2344 = vmatprep.subr.mxu0 0.0
        %2345 = vmatpush2.msra.mxu0 0.0
        %2346 = vmatprep.subr.mxu0 0.0
        %2347 = vmatpush2.msra.mxu0 0.0
        %2348 = vmatprep.subr.mxu0 0.0
        %2349 = vmatpush2.msra.mxu0 0.0
        %2350 = vmatprep.subr.mxu0 0.0
        %2351 = vmatpush2.msra.mxu0 0.0
        %2352 = vmatprep.subr.mxu0 0.0
        %2353 = vmatpush2.msra.mxu0 0.0
        %2354 = vmatprep.subr.mxu0 0.0
        %2355 = vmatpush2.msra.mxu0 0.0
        %2356 = vmatprep.subr.mxu0 0.0
        %2357 = vmatpush2.msra.mxu0 0.0
        %2358 = vmatprep.subr.mxu0 0.0
        %2359 = vmatpush2.msra.mxu0 0.0
        %2360 = vmatprep.subr.mxu0 0.0
        %2361 = vmatpush2.msra.mxu0 0.0
        %2362 = vmatprep.subr.mxu0 0.0
        %2363 = vmatpush2.msra.mxu0 0.0
        %2364 = vmatprep.mubr.f32.mxu0 0.0
        %2365 = vmatmul.mubr.f32.gmra.mxu0 %v770
        %v2366 = vpop.f32.mrf.mxu0
        %v2367 = vadd.f32 0.0, %v2366
        %v2368 = vpop.f32.mrf.mxu0
        %2369 = vmatprep.mubr.f32.mxu0 0.0
        %2370 = vmatmul.mubr.f32.gmra.mxu0 %v772
        %v2371 = vpop.f32.mrf.mxu0
        %v2372 = vadd.f32 0.0, %v2371
        %v2373 = vpop.f32.mrf.mxu0
        %2374 = vmatprep.mubr.f32.mxu0 0.0
        %2375 = vmatmul.mubr.f32.gmra.mxu0 %v774
        %v2376 = vpop.f32.mrf.mxu0
        %v2377 = vadd.f32 0.0, %v2376
        %v2378 = vpop.f32.mrf.mxu0
        %2379 = vmatprep.mubr.f32.mxu0 0.0
        %2380 = vmatmul.mubr.f32.gmra.mxu0 %v776
        %v2381 = vpop.f32.mrf.mxu0
        %v2382 = vadd.f32 0.0, %v2381
        %v2383 = vpop.f32.mrf.mxu0
        %2384 = vmatprep.mubr.f32.mxu0 0.0
        %2385 = vmatmul.mubr.f32.gmra.mxu0 %v778
        %v2386 = vpop.f32.mrf.mxu0
        %v2387 = vadd.f32 0.0, %v2386
        %v2388 = vpop.f32.mrf.mxu0
        %2389 = vmatprep.mubr.f32.mxu0 0.0
        %2390 = vmatmul.mubr.f32.gmra.mxu0 %v780
        %v2391 = vpop.f32.mrf.mxu0
        %v2392 = vadd.f32 0.0, %v2391
        %v2393 = vpop.f32.mrf.mxu0
        %2394 = vmatprep.mubr.f32.mxu0 0.0
        %2395 = vmatmul.mubr.f32.gmra.mxu0 %v782
        %v2396 = vpop.f32.mrf.mxu0
        %v2397 = vadd.f32 0.0, %v2396
        %v2398 = vpop.f32.mrf.mxu0
        %2399 = vmatprep.mubr.f32.mxu0 0.0
        %2400 = vmatmul.mubr.f32.gmra.mxu0 %v784
        %v2401 = vpop.f32.mrf.mxu0
        %v2402 = vadd.f32 0.0, %v2401
        %v2403 = vpop.f32.mrf.mxu0
        %2404 = vmatprep.mubr.f32.mxu0 0.0
        %2405 = vmatmul.mubr.f32.gmra.mxu0 %v786
        %v2406 = vpop.f32.mrf.mxu0
        %v2407 = vadd.f32 0.0, %v2406
        %v2408 = vpop.f32.mrf.mxu0
        %2409 = vmatprep.mubr.f32.mxu0 0.0
        %2410 = vmatmul.mubr.f32.gmra.mxu0 %v788
        %v2411 = vpop.f32.mrf.mxu0
        %v2412 = vadd.f32 0.0, %v2411
        %v2413 = vpop.f32.mrf.mxu0
        %2414 = vmatprep.mubr.f32.mxu0 0.0
        %2415 = vmatmul.mubr.f32.gmra.mxu0 %v790
        %v2416 = vpop.f32.mrf.mxu0
        %v2417 = vadd.f32 0.0, %v2416
        %v2418 = vpop.f32.mrf.mxu0
        %2419 = vmatprep.mubr.f32.mxu0 0.0
        %2420 = vmatmul.mubr.f32.gmra.mxu0 %v792
        %v2421 = vpop.f32.mrf.mxu0
        %v2422 = vadd.f32 0.0, %v2421
        %v2423 = vpop.f32.mrf.mxu0
        %2424 = vmatprep.mubr.f32.mxu0 0.0
        %2425 = vmatmul.mubr.f32.gmra.mxu0 %v794
        %v2426 = vpop.f32.mrf.mxu0
        %v2427 = vadd.f32 0.0, %v2426
        %v2428 = vpop.f32.mrf.mxu0
        %2429 = vmatprep.mubr.f32.mxu0 0.0
        %2430 = vmatmul.mubr.f32.gmra.mxu0 %v796
        %v2431 = vpop.f32.mrf.mxu0
        %v2432 = vadd.f32 0.0, %v2431
        %v2433 = vpop.f32.mrf.mxu0
        %2434 = vmatprep.mubr.f32.mxu0 0.0
        %2435 = vmatmul.mubr.f32.gmra.mxu0 %v798
        %v2436 = vpop.f32.mrf.mxu0
        %v2437 = vadd.f32 0.0, %v2436
        %v2438 = vpop.f32.mrf.mxu0
        %2439 = vmatprep.mubr.f32.mxu0 0.0
        %2440 = vmatmul.mubr.f32.gmra.mxu0 %v800
        %v2441 = vpop.f32.mrf.mxu0
        %v2442 = vadd.f32 0.0, %v2441
        %v2443 = vpop.f32.mrf.mxu0
        %2444 = vmatprep.mubr.f32.mxu0 0.0
        %2445 = vmatmul.mubr.f32.gmra.mxu0 %v802
        %v2446 = vpop.f32.mrf.mxu0
        %v2447 = vadd.f32 0.0, %v2446
        %v2448 = vpop.f32.mrf.mxu0
        %2449 = vmatprep.mubr.f32.mxu0 0.0
        %2450 = vmatmul.mubr.f32.gmra.mxu0 %v804
        %v2451 = vpop.f32.mrf.mxu0
        %v2452 = vadd.f32 0.0, %v2451
        %v2453 = vpop.f32.mrf.mxu0
        %2454 = vmatprep.mubr.f32.mxu0 0.0
        %2455 = vmatmul.mubr.f32.gmra.mxu0 %v806
        %v2456 = vpop.f32.mrf.mxu0
        %v2457 = vadd.f32 0.0, %v2456
        %v2458 = vpop.f32.mrf.mxu0
        %2459 = vmatprep.mubr.f32.mxu0 0.0
        %2460 = vmatmul.mubr.f32.gmra.mxu0 %v808
        %v2461 = vpop.f32.mrf.mxu0
        %v2462 = vadd.f32 0.0, %v2461
        %v2463 = vpop.f32.mrf.mxu0
        %2464 = vmatprep.mubr.f32.mxu0 0.0
        %2465 = vmatmul.mubr.f32.gmra.mxu0 %v810
        %v2466 = vpop.f32.mrf.mxu0
        %v2467 = vadd.f32 0.0, %v2466
        %v2468 = vpop.f32.mrf.mxu0
        %2469 = vmatprep.mubr.f32.mxu0 0.0
        %2470 = vmatmul.mubr.f32.gmra.mxu0 %v812
        %v2471 = vpop.f32.mrf.mxu0
        %v2472 = vadd.f32 0.0, %v2471
        %v2473 = vpop.f32.mrf.mxu0
        %2474 = vmatprep.mubr.f32.mxu0 0.0
        %2475 = vmatmul.mubr.f32.gmra.mxu0 %v814
        %v2476 = vpop.f32.mrf.mxu0
        %v2477 = vadd.f32 0.0, %v2476
        %v2478 = vpop.f32.mrf.mxu0
        %2479 = vmatprep.mubr.f32.mxu0 0.0
        %2480 = vmatmul.mubr.f32.gmra.mxu0 %v816
        %v2481 = vpop.f32.mrf.mxu0
        %v2482 = vadd.f32 0.0, %v2481
        %v2483 = vpop.f32.mrf.mxu0
        %2484 = vmatprep.mubr.f32.mxu0 0.0
        %2485 = vmatmul.mubr.f32.gmra.mxu0 %v818
        %v2486 = vpop.f32.mrf.mxu0
        %v2487 = vadd.f32 0.0, %v2486
        %v2488 = vpop.f32.mrf.mxu0
        %2489 = vmatprep.mubr.f32.mxu0 0.0
        %2490 = vmatmul.mubr.f32.gmra.mxu0 %v820
        %v2491 = vpop.f32.mrf.mxu0
        %v2492 = vadd.f32 0.0, %v2491
        %v2493 = vpop.f32.mrf.mxu0
        %2494 = vmatprep.mubr.f32.mxu0 0.0
        %2495 = vmatmul.mubr.f32.gmra.mxu0 %v822
        %v2496 = vpop.f32.mrf.mxu0
        %v2497 = vadd.f32 0.0, %v2496
        %v2498 = vpop.f32.mrf.mxu0
        %2499 = vmatprep.mubr.f32.mxu0 0.0
        %2500 = vmatmul.mubr.f32.gmra.mxu0 %v824
        %v2501 = vpop.f32.mrf.mxu0
        %v2502 = vadd.f32 0.0, %v2501
        %v2503 = vpop.f32.mrf.mxu0
        %2504 = vmatprep.mubr.f32.mxu0 0.0
        %2505 = vmatmul.mubr.f32.gmra.mxu0 %v1472
        %v2506 = vpop.f32.mrf.mxu0
        %v2507 = vadd.f32 0.0, %v2506
        %v2508 = vpop.f32.mrf.mxu0
        %2509 = vmatprep.mubr.f32.mxu0 0.0
        %2510 = vmatmul.mubr.f32.gmra.mxu0 %v1475
        %v2511 = vpop.f32.mrf.mxu0
        %v2512 = vadd.f32 0.0, %v2511
        %v2513 = vpop.f32.mrf.mxu0
        %2514 = vmatprep.mubr.f32.mxu0 0.0
        %2515 = vmatmul.mubr.f32.gmra.mxu0 %v2295
        %v2516 = vpop.f32.mrf.mxu0
        %v2517 = vadd.f32 0.0, %v2516
        %v2518 = vpop.f32.mrf.mxu0
        %2519 = vmatprep.mubr.f32.mxu0 0.0
        %2520 = vmatmul.mubr.f32.gmra.mxu0 %v2298
        %v2521 = vpop.f32.mrf.mxu0
        %v2522 = vadd.f32 0.0, %v2521
        %v2523 = vpop.f32.mrf.mxu0
        %2524 = vdwg.mxu0
        %v2525 = vadd.f32 %v2253, %v2367
        %v2526 = vadd.f32 %v2254, %v2372
        %v2527 = vadd.f32 %v2255, %v2377
        %v2528 = vadd.f32 %v2256, %v2382
        %v2529 = vadd.f32 %v2257, %v2387
        %v2530 = vadd.f32 %v2258, %v2392
        %v2531 = vadd.f32 %v2259, %v2397
        %v2532 = vadd.f32 %v2260, %v2402
        %v2533 = vadd.f32 %v2261, %v2407
        %v2534 = vadd.f32 %v2262, %v2412
        %v2535 = vadd.f32 %v2263, %v2417
        %v2536 = vadd.f32 %v2264, %v2422
        %v2537 = vadd.f32 %v2265, %v2427
        %v2538 = vadd.f32 %v2266, %v2432
        %v2539 = vadd.f32 %v2267, %v2437
        %v2540 = vadd.f32 %v2268, %v2442
        %v2541 = vadd.f32 %v2269, %v2447
        %v2542 = vadd.f32 %v2270, %v2452
        %v2543 = vadd.f32 %v2271, %v2457
        %v2544 = vadd.f32 %v2272, %v2462
        %v2545 = vadd.f32 %v2273, %v2467
        %v2546 = vadd.f32 %v2274, %v2472
        %v2547 = vadd.f32 %v2275, %v2477
        %v2548 = vadd.f32 %v2276, %v2482
        %v2549 = vadd.f32 %v2277, %v2487
        %v2550 = vadd.f32 %v2278, %v2492
        %v2551 = vadd.f32 %v2279, %v2497
        %v2552 = vadd.f32 %v2280, %v2502
        %v2553 = vadd.f32 %v2281, %v2507
        %v2554 = vadd.f32 %v2282, %v2512
        %v2555 = vadd.f32 %v2283, %v2517
        %v2556 = vadd.f32 %v2284, %v2522
        %v2558 = vrot.slane %v323, 1
        %v2559 = vrot.slane %v324, 1
        %v2560 = vsel %vm382, %v2558, %v2559
        %v2561 = vrot.slane %v325, 1
        %v2562 = vsel %vm382, %v2559, %v2561
        %s2563 = scalar_lea.vmem %s260, 448
        %v2564 = vld [vmem:[%s2563] sm:$0xff]
        %v2565 = vld [vmem:[%s2563 + $0x8] sm:$0xff]
        %v2566 = vld [vmem:[%s2563 + $0x10] sm:$0xff]
        %v2567 = vld [vmem:[%s2563 + $0x18] sm:$0xff]
        %v2568 = vld [vmem:[%s2563 + $0x20] sm:$0xff]
        %v2569 = vld [vmem:[%s2563 + $0x28] sm:$0xff]
        %v2570 = vld [vmem:[%s2563 + $0x30] sm:$0xff]
        %v2571 = vld [vmem:[%s2563 + $0x38] sm:$0xff]
        %v2572 = vsel %vm472, %v2560, 0
        %v2574 = vsel %vm472, %v2562, 0
        %2576 = vmatprep.subr.mxu0 0.0
        %2577 = vmatpush1.msra.mxu0 0.0
        %2578 = vmatprep.subr.mxu0 0.0
        %2579 = vmatpush1.msra.mxu0 0.0
        %2580 = vmatprep.subr.mxu0 0.0
        %2581 = vmatpush1.msra.mxu0 0.0
        %2582 = vmatprep.subr.mxu0 0.0
        %2583 = vmatpush1.msra.mxu0 0.0
        %2584 = vmatprep.subr.mxu0 0.0
        %2585 = vmatpush1.msra.mxu0 0.0
        %2586 = vmatprep.subr.mxu0 0.0
        %2587 = vmatpush1.msra.mxu0 0.0
        %2588 = vmatprep.subr.mxu0 0.0
        %2589 = vmatpush1.msra.mxu0 0.0
        %2590 = vmatprep.subr.mxu0 0.0
        %2591 = vmatpush1.msra.mxu0 0.0
        %2592 = vmatprep.subr.mxu0 0.0
        %2593 = vmatpush1.msra.mxu0 %v2571
        %2594 = vmatprep.subr.mxu0 0.0
        %2595 = vmatpush1.msra.mxu0 %v2570
        %2596 = vmatprep.subr.mxu0 0.0
        %2597 = vmatpush1.msra.mxu0 %v2569
        %2598 = vmatprep.subr.mxu0 0.0
        %2599 = vmatpush1.msra.mxu0 %v2568
        %2600 = vmatprep.subr.mxu0 0.0
        %2601 = vmatpush1.msra.mxu0 %v2567
        %2602 = vmatprep.subr.mxu0 0.0
        %2603 = vmatpush1.msra.mxu0 %v2566
        %2604 = vmatprep.subr.mxu0 0.0
        %2605 = vmatpush1.msra.mxu0 %v2565
        %2606 = vmatprep.subr.mxu0 0.0
        %2607 = vmatpush1.msra.mxu0 %v2564
        %2608 = vmatprep.subr.mxu0 0.0
        %2609 = vmatpush2.msra.mxu0 0.0
        %2610 = vmatprep.subr.mxu0 0.0
        %2611 = vmatpush2.msra.mxu0 0.0
        %2612 = vmatprep.subr.mxu0 0.0
        %2613 = vmatpush2.msra.mxu0 0.0
        %2614 = vmatprep.subr.mxu0 0.0
        %2615 = vmatpush2.msra.mxu0 0.0
        %2616 = vmatprep.subr.mxu0 0.0
        %2617 = vmatpush2.msra.mxu0 0.0
        %2618 = vmatprep.subr.mxu0 0.0
        %2619 = vmatpush2.msra.mxu0 0.0
        %2620 = vmatprep.subr.mxu0 0.0
        %2621 = vmatpush2.msra.mxu0 0.0
        %2622 = vmatprep.subr.mxu0 0.0
        %2623 = vmatpush2.msra.mxu0 0.0
        %2624 = vmatprep.subr.mxu0 0.0
        %2625 = vmatpush2.msra.mxu0 0.0
        %2626 = vmatprep.subr.mxu0 0.0
        %2627 = vmatpush2.msra.mxu0 0.0
        %2628 = vmatprep.subr.mxu0 0.0
        %2629 = vmatpush2.msra.mxu0 0.0
        %2630 = vmatprep.subr.mxu0 0.0
        %2631 = vmatpush2.msra.mxu0 0.0
        %2632 = vmatprep.subr.mxu0 0.0
        %2633 = vmatpush2.msra.mxu0 0.0
        %2634 = vmatprep.subr.mxu0 0.0
        %2635 = vmatpush2.msra.mxu0 0.0
        %2636 = vmatprep.subr.mxu0 0.0
        %2637 = vmatpush2.msra.mxu0 0.0
        %2638 = vmatprep.subr.mxu0 0.0
        %2639 = vmatpush2.msra.mxu0 0.0
        %2640 = vmatprep.mubr.f32.mxu0 0.0
        %2641 = vmatmul.mubr.f32.gmra.mxu0 %v481
        %v2642 = vpop.f32.mrf.mxu0
        %v2643 = vadd.f32 0.0, %v2642
        %v2644 = vpop.f32.mrf.mxu0
        %2645 = vmatprep.mubr.f32.mxu0 0.0
        %2646 = vmatmul.mubr.f32.gmra.mxu0 %v483
        %v2647 = vpop.f32.mrf.mxu0
        %v2648 = vadd.f32 0.0, %v2647
        %v2649 = vpop.f32.mrf.mxu0
        %2650 = vmatprep.mubr.f32.mxu0 0.0
        %2651 = vmatmul.mubr.f32.gmra.mxu0 %v485
        %v2652 = vpop.f32.mrf.mxu0
        %v2653 = vadd.f32 0.0, %v2652
        %v2654 = vpop.f32.mrf.mxu0
        %2655 = vmatprep.mubr.f32.mxu0 0.0
        %2656 = vmatmul.mubr.f32.gmra.mxu0 %v487
        %v2657 = vpop.f32.mrf.mxu0
        %v2658 = vadd.f32 0.0, %v2657
        %v2659 = vpop.f32.mrf.mxu0
        %2660 = vmatprep.mubr.f32.mxu0 0.0
        %2661 = vmatmul.mubr.f32.gmra.mxu0 %v489
        %v2662 = vpop.f32.mrf.mxu0
        %v2663 = vadd.f32 0.0, %v2662
        %v2664 = vpop.f32.mrf.mxu0
        %2665 = vmatprep.mubr.f32.mxu0 0.0
        %2666 = vmatmul.mubr.f32.gmra.mxu0 %v491
        %v2667 = vpop.f32.mrf.mxu0
        %v2668 = vadd.f32 0.0, %v2667
        %v2669 = vpop.f32.mrf.mxu0
        %2670 = vmatprep.mubr.f32.mxu0 0.0
        %2671 = vmatmul.mubr.f32.gmra.mxu0 %v493
        %v2672 = vpop.f32.mrf.mxu0
        %v2673 = vadd.f32 0.0, %v2672
        %v2674 = vpop.f32.mrf.mxu0
        %2675 = vmatprep.mubr.f32.mxu0 0.0
        %2676 = vmatmul.mubr.f32.gmra.mxu0 %v495
        %v2677 = vpop.f32.mrf.mxu0
        %v2678 = vadd.f32 0.0, %v2677
        %v2679 = vpop.f32.mrf.mxu0
        %2680 = vmatprep.mubr.f32.mxu0 0.0
        %2681 = vmatmul.mubr.f32.gmra.mxu0 %v497
        %v2682 = vpop.f32.mrf.mxu0
        %v2683 = vadd.f32 0.0, %v2682
        %v2684 = vpop.f32.mrf.mxu0
        %2685 = vmatprep.mubr.f32.mxu0 0.0
        %2686 = vmatmul.mubr.f32.gmra.mxu0 %v499
        %v2687 = vpop.f32.mrf.mxu0
        %v2688 = vadd.f32 0.0, %v2687
        %v2689 = vpop.f32.mrf.mxu0
        %2690 = vmatprep.mubr.f32.mxu0 0.0
        %2691 = vmatmul.mubr.f32.gmra.mxu0 %v501
        %v2692 = vpop.f32.mrf.mxu0
        %v2693 = vadd.f32 0.0, %v2692
        %v2694 = vpop.f32.mrf.mxu0
        %2695 = vmatprep.mubr.f32.mxu0 0.0
        %2696 = vmatmul.mubr.f32.gmra.mxu0 %v503
        %v2697 = vpop.f32.mrf.mxu0
        %v2698 = vadd.f32 0.0, %v2697
        %v2699 = vpop.f32.mrf.mxu0
        %2700 = vmatprep.mubr.f32.mxu0 0.0
        %2701 = vmatmul.mubr.f32.gmra.mxu0 %v505
        %v2702 = vpop.f32.mrf.mxu0
        %v2703 = vadd.f32 0.0, %v2702
        %v2704 = vpop.f32.mrf.mxu0
        %2705 = vmatprep.mubr.f32.mxu0 0.0
        %2706 = vmatmul.mubr.f32.gmra.mxu0 %v507
        %v2707 = vpop.f32.mrf.mxu0
        %v2708 = vadd.f32 0.0, %v2707
        %v2709 = vpop.f32.mrf.mxu0
        %2710 = vmatprep.mubr.f32.mxu0 0.0
        %2711 = vmatmul.mubr.f32.gmra.mxu0 %v509
        %v2712 = vpop.f32.mrf.mxu0
        %v2713 = vadd.f32 0.0, %v2712
        %v2714 = vpop.f32.mrf.mxu0
        %2715 = vmatprep.mubr.f32.mxu0 0.0
        %2716 = vmatmul.mubr.f32.gmra.mxu0 %v511
        %v2717 = vpop.f32.mrf.mxu0
        %v2718 = vadd.f32 0.0, %v2717
        %v2719 = vpop.f32.mrf.mxu0
        %2720 = vmatprep.mubr.f32.mxu0 0.0
        %2721 = vmatmul.mubr.f32.gmra.mxu0 %v513
        %v2722 = vpop.f32.mrf.mxu0
        %v2723 = vadd.f32 0.0, %v2722
        %v2724 = vpop.f32.mrf.mxu0
        %2725 = vmatprep.mubr.f32.mxu0 0.0
        %2726 = vmatmul.mubr.f32.gmra.mxu0 %v515
        %v2727 = vpop.f32.mrf.mxu0
        %v2728 = vadd.f32 0.0, %v2727
        %v2729 = vpop.f32.mrf.mxu0
        %2730 = vmatprep.mubr.f32.mxu0 0.0
        %2731 = vmatmul.mubr.f32.gmra.mxu0 %v517
        %v2732 = vpop.f32.mrf.mxu0
        %v2733 = vadd.f32 0.0, %v2732
        %v2734 = vpop.f32.mrf.mxu0
        %2735 = vmatprep.mubr.f32.mxu0 0.0
        %2736 = vmatmul.mubr.f32.gmra.mxu0 %v519
        %v2737 = vpop.f32.mrf.mxu0
        %v2738 = vadd.f32 0.0, %v2737
        %v2739 = vpop.f32.mrf.mxu0
        %2740 = vmatprep.mubr.f32.mxu0 0.0
        %2741 = vmatmul.mubr.f32.gmra.mxu0 %v521
        %v2742 = vpop.f32.mrf.mxu0
        %v2743 = vadd.f32 0.0, %v2742
        %v2744 = vpop.f32.mrf.mxu0
        %2745 = vmatprep.mubr.f32.mxu0 0.0
        %2746 = vmatmul.mubr.f32.gmra.mxu0 %v523
        %v2747 = vpop.f32.mrf.mxu0
        %v2748 = vadd.f32 0.0, %v2747
        %v2749 = vpop.f32.mrf.mxu0
        %2750 = vmatprep.mubr.f32.mxu0 0.0
        %2751 = vmatmul.mubr.f32.gmra.mxu0 %v525
        %v2752 = vpop.f32.mrf.mxu0
        %v2753 = vadd.f32 0.0, %v2752
        %v2754 = vpop.f32.mrf.mxu0
        %2755 = vmatprep.mubr.f32.mxu0 0.0
        %2756 = vmatmul.mubr.f32.gmra.mxu0 %v527
        %v2757 = vpop.f32.mrf.mxu0
        %v2758 = vadd.f32 0.0, %v2757
        %v2759 = vpop.f32.mrf.mxu0
        %2760 = vmatprep.mubr.f32.mxu0 0.0
        %2761 = vmatmul.mubr.f32.gmra.mxu0 %v529
        %v2762 = vpop.f32.mrf.mxu0
        %v2763 = vadd.f32 0.0, %v2762
        %v2764 = vpop.f32.mrf.mxu0
        %2765 = vmatprep.mubr.f32.mxu0 0.0
        %2766 = vmatmul.mubr.f32.gmra.mxu0 %v531
        %v2767 = vpop.f32.mrf.mxu0
        %v2768 = vadd.f32 0.0, %v2767
        %v2769 = vpop.f32.mrf.mxu0
        %2770 = vmatprep.mubr.f32.mxu0 0.0
        %2771 = vmatmul.mubr.f32.gmra.mxu0 %v533
        %v2772 = vpop.f32.mrf.mxu0
        %v2773 = vadd.f32 0.0, %v2772
        %v2774 = vpop.f32.mrf.mxu0
        %2775 = vmatprep.mubr.f32.mxu0 0.0
        %2776 = vmatmul.mubr.f32.gmra.mxu0 %v535
        %v2777 = vpop.f32.mrf.mxu0
        %v2778 = vadd.f32 0.0, %v2777
        %v2779 = vpop.f32.mrf.mxu0
        %2780 = vmatprep.mubr.f32.mxu0 0.0
        %2781 = vmatmul.mubr.f32.gmra.mxu0 %v1749
        %v2782 = vpop.f32.mrf.mxu0
        %v2783 = vadd.f32 0.0, %v2782
        %v2784 = vpop.f32.mrf.mxu0
        %2785 = vmatprep.mubr.f32.mxu0 0.0
        %2786 = vmatmul.mubr.f32.gmra.mxu0 %v1751
        %v2787 = vpop.f32.mrf.mxu0
        %v2788 = vadd.f32 0.0, %v2787
        %v2789 = vpop.f32.mrf.mxu0
        %2790 = vmatprep.mubr.f32.mxu0 0.0
        %2791 = vmatmul.mubr.f32.gmra.mxu0 %v2572
        %v2792 = vpop.f32.mrf.mxu0
        %v2793 = vadd.f32 0.0, %v2792
        %v2794 = vpop.f32.mrf.mxu0
        %2795 = vmatprep.mubr.f32.mxu0 0.0
        %2796 = vmatmul.mubr.f32.gmra.mxu0 %v2574
        %v2797 = vpop.f32.mrf.mxu0
        %v2798 = vadd.f32 0.0, %v2797
        %v2799 = vpop.f32.mrf.mxu0
        %2800 = vdwg.mxu0
        %v2801 = vadd.f32 %v2525, %v2643
        %v2802 = vadd.f32 %v2526, %v2648
        %v2803 = vadd.f32 %v2527, %v2653
        %v2804 = vadd.f32 %v2528, %v2658
        %v2805 = vadd.f32 %v2529, %v2663
        %v2806 = vadd.f32 %v2530, %v2668
        %v2807 = vadd.f32 %v2531, %v2673
        %v2808 = vadd.f32 %v2532, %v2678
        %v2809 = vadd.f32 %v2533, %v2683
        %v2810 = vadd.f32 %v2534, %v2688
        %v2811 = vadd.f32 %v2535, %v2693
        %v2812 = vadd.f32 %v2536, %v2698
        %v2813 = vadd.f32 %v2537, %v2703
        %v2814 = vadd.f32 %v2538, %v2708
        %v2815 = vadd.f32 %v2539, %v2713
        %v2816 = vadd.f32 %v2540, %v2718
        %v2817 = vadd.f32 %v2541, %v2723
        %v2818 = vadd.f32 %v2542, %v2728
        %v2819 = vadd.f32 %v2543, %v2733
        %v2820 = vadd.f32 %v2544, %v2738
        %v2821 = vadd.f32 %v2545, %v2743
        %v2822 = vadd.f32 %v2546, %v2748
        %v2823 = vadd.f32 %v2547, %v2753
        %v2824 = vadd.f32 %v2548, %v2758
        %v2825 = vadd.f32 %v2549, %v2763
        %v2826 = vadd.f32 %v2550, %v2768
        %v2827 = vadd.f32 %v2551, %v2773
        %v2828 = vadd.f32 %v2552, %v2778
        %v2829 = vadd.f32 %v2553, %v2783
        %v2830 = vadd.f32 %v2554, %v2788
        %v2831 = vadd.f32 %v2555, %v2793
        %v2832 = vadd.f32 %v2556, %v2798
        %v2833 = vrot.slane %v323, 2
        %v2834 = vrot.slane %v324, 2
        %v2835 = vsel %vm1051, %v2833, %v2834
        %v2836 = vrot.slane %v325, 2
        %v2837 = vsel %vm1051, %v2834, %v2836
        %s2838 = scalar_lea.vmem %s260, 512
        %v2839 = vld [vmem:[%s2838] sm:$0xff]
        %v2840 = vld [vmem:[%s2838 + $0x8] sm:$0xff]
        %v2841 = vld [vmem:[%s2838 + $0x10] sm:$0xff]
        %v2842 = vld [vmem:[%s2838 + $0x18] sm:$0xff]
        %v2843 = vld [vmem:[%s2838 + $0x20] sm:$0xff]
        %v2844 = vld [vmem:[%s2838 + $0x28] sm:$0xff]
        %v2845 = vld [vmem:[%s2838 + $0x30] sm:$0xff]
        %v2846 = vld [vmem:[%s2838 + $0x38] sm:$0xff]
        %v2847 = vsel %vm472, %v2835, 0
        %v2849 = vsel %vm472, %v2837, 0
        %2851 = vmatprep.subr.mxu0 0.0
        %2852 = vmatpush1.msra.mxu0 0.0
        %2853 = vmatprep.subr.mxu0 0.0
        %2854 = vmatpush1.msra.mxu0 0.0
        %2855 = vmatprep.subr.mxu0 0.0
        %2856 = vmatpush1.msra.mxu0 0.0
        %2857 = vmatprep.subr.mxu0 0.0
        %2858 = vmatpush1.msra.mxu0 0.0
        %2859 = vmatprep.subr.mxu0 0.0
        %2860 = vmatpush1.msra.mxu0 0.0
        %2861 = vmatprep.subr.mxu0 0.0
        %2862 = vmatpush1.msra.mxu0 0.0
        %2863 = vmatprep.subr.mxu0 0.0
        %2864 = vmatpush1.msra.mxu0 0.0
        %2865 = vmatprep.subr.mxu0 0.0
        %2866 = vmatpush1.msra.mxu0 0.0
        %2867 = vmatprep.subr.mxu0 0.0
        %2868 = vmatpush1.msra.mxu0 %v2846
        %2869 = vmatprep.subr.mxu0 0.0
        %2870 = vmatpush1.msra.mxu0 %v2845
        %2871 = vmatprep.subr.mxu0 0.0
        %2872 = vmatpush1.msra.mxu0 %v2844
        %2873 = vmatprep.subr.mxu0 0.0
        %2874 = vmatpush1.msra.mxu0 %v2843
        %2875 = vmatprep.subr.mxu0 0.0
        %2876 = vmatpush1.msra.mxu0 %v2842
        %2877 = vmatprep.subr.mxu0 0.0
        %2878 = vmatpush1.msra.mxu0 %v2841
        %2879 = vmatprep.subr.mxu0 0.0
        %2880 = vmatpush1.msra.mxu0 %v2840
        %2881 = vmatprep.subr.mxu0 0.0
        %2882 = vmatpush1.msra.mxu0 %v2839
        %2883 = vmatprep.subr.mxu0 0.0
        %2884 = vmatpush2.msra.mxu0 0.0
        %2885 = vmatprep.subr.mxu0 0.0
        %2886 = vmatpush2.msra.mxu0 0.0
        %2887 = vmatprep.subr.mxu0 0.0
        %2888 = vmatpush2.msra.mxu0 0.0
        %2889 = vmatprep.subr.mxu0 0.0
        %2890 = vmatpush2.msra.mxu0 0.0
        %2891 = vmatprep.subr.mxu0 0.0
        %2892 = vmatpush2.msra.mxu0 0.0
        %2893 = vmatprep.subr.mxu0 0.0
        %2894 = vmatpush2.msra.mxu0 0.0
        %2895 = vmatprep.subr.mxu0 0.0
        %2896 = vmatpush2.msra.mxu0 0.0
        %2897 = vmatprep.subr.mxu0 0.0
        %2898 = vmatpush2.msra.mxu0 0.0
        %2899 = vmatprep.subr.mxu0 0.0
        %2900 = vmatpush2.msra.mxu0 0.0
        %2901 = vmatprep.subr.mxu0 0.0
        %2902 = vmatpush2.msra.mxu0 0.0
        %2903 = vmatprep.subr.mxu0 0.0
        %2904 = vmatpush2.msra.mxu0 0.0
        %2905 = vmatprep.subr.mxu0 0.0
        %2906 = vmatpush2.msra.mxu0 0.0
        %2907 = vmatprep.subr.mxu0 0.0
        %2908 = vmatpush2.msra.mxu0 0.0
        %2909 = vmatprep.subr.mxu0 0.0
        %2910 = vmatpush2.msra.mxu0 0.0
        %2911 = vmatprep.subr.mxu0 0.0
        %2912 = vmatpush2.msra.mxu0 0.0
        %2913 = vmatprep.subr.mxu0 0.0
        %2914 = vmatpush2.msra.mxu0 0.0
        %2915 = vmatprep.mubr.f32.mxu0 0.0
        %2916 = vmatmul.mubr.f32.gmra.mxu0 %v1149
        %v2917 = vpop.f32.mrf.mxu0
        %v2918 = vadd.f32 0.0, %v2917
        %v2919 = vpop.f32.mrf.mxu0
        %2920 = vmatprep.mubr.f32.mxu0 0.0
        %2921 = vmatmul.mubr.f32.gmra.mxu0 %v1151
        %v2922 = vpop.f32.mrf.mxu0
        %v2923 = vadd.f32 0.0, %v2922
        %v2924 = vpop.f32.mrf.mxu0
        %2925 = vmatprep.mubr.f32.mxu0 0.0
        %2926 = vmatmul.mubr.f32.gmra.mxu0 %v1153
        %v2927 = vpop.f32.mrf.mxu0
        %v2928 = vadd.f32 0.0, %v2927
        %v2929 = vpop.f32.mrf.mxu0
        %2930 = vmatprep.mubr.f32.mxu0 0.0
        %2931 = vmatmul.mubr.f32.gmra.mxu0 %v1155
        %v2932 = vpop.f32.mrf.mxu0
        %v2933 = vadd.f32 0.0, %v2932
        %v2934 = vpop.f32.mrf.mxu0
        %2935 = vmatprep.mubr.f32.mxu0 0.0
        %2936 = vmatmul.mubr.f32.gmra.mxu0 %v1157
        %v2937 = vpop.f32.mrf.mxu0
        %v2938 = vadd.f32 0.0, %v2937
        %v2939 = vpop.f32.mrf.mxu0
        %2940 = vmatprep.mubr.f32.mxu0 0.0
        %2941 = vmatmul.mubr.f32.gmra.mxu0 %v1159
        %v2942 = vpop.f32.mrf.mxu0
        %v2943 = vadd.f32 0.0, %v2942
        %v2944 = vpop.f32.mrf.mxu0
        %2945 = vmatprep.mubr.f32.mxu0 0.0
        %2946 = vmatmul.mubr.f32.gmra.mxu0 %v1161
        %v2947 = vpop.f32.mrf.mxu0
        %v2948 = vadd.f32 0.0, %v2947
        %v2949 = vpop.f32.mrf.mxu0
        %2950 = vmatprep.mubr.f32.mxu0 0.0
        %2951 = vmatmul.mubr.f32.gmra.mxu0 %v1163
        %v2952 = vpop.f32.mrf.mxu0
        %v2953 = vadd.f32 0.0, %v2952
        %v2954 = vpop.f32.mrf.mxu0
        %2955 = vmatprep.mubr.f32.mxu0 0.0
        %2956 = vmatmul.mubr.f32.gmra.mxu0 %v1165
        %v2957 = vpop.f32.mrf.mxu0
        %v2958 = vadd.f32 0.0, %v2957
        %v2959 = vpop.f32.mrf.mxu0
        %2960 = vmatprep.mubr.f32.mxu0 0.0
        %2961 = vmatmul.mubr.f32.gmra.mxu0 %v1167
        %v2962 = vpop.f32.mrf.mxu0
        %v2963 = vadd.f32 0.0, %v2962
        %v2964 = vpop.f32.mrf.mxu0
        %2965 = vmatprep.mubr.f32.mxu0 0.0
        %2966 = vmatmul.mubr.f32.gmra.mxu0 %v1169
        %v2967 = vpop.f32.mrf.mxu0
        %v2968 = vadd.f32 0.0, %v2967
        %v2969 = vpop.f32.mrf.mxu0
        %2970 = vmatprep.mubr.f32.mxu0 0.0
        %2971 = vmatmul.mubr.f32.gmra.mxu0 %v1171
        %v2972 = vpop.f32.mrf.mxu0
        %v2973 = vadd.f32 0.0, %v2972
        %v2974 = vpop.f32.mrf.mxu0
        %2975 = vmatprep.mubr.f32.mxu0 0.0
        %2976 = vmatmul.mubr.f32.gmra.mxu0 %v1173
        %v2977 = vpop.f32.mrf.mxu0
        %v2978 = vadd.f32 0.0, %v2977
        %v2979 = vpop.f32.mrf.mxu0
        %2980 = vmatprep.mubr.f32.mxu0 0.0
        %2981 = vmatmul.mubr.f32.gmra.mxu0 %v1175
        %v2982 = vpop.f32.mrf.mxu0
        %v2983 = vadd.f32 0.0, %v2982
        %v2984 = vpop.f32.mrf.mxu0
        %2985 = vmatprep.mubr.f32.mxu0 0.0
        %2986 = vmatmul.mubr.f32.gmra.mxu0 %v1177
        %v2987 = vpop.f32.mrf.mxu0
        %v2988 = vadd.f32 0.0, %v2987
        %v2989 = vpop.f32.mrf.mxu0
        %2990 = vmatprep.mubr.f32.mxu0 0.0
        %2991 = vmatmul.mubr.f32.gmra.mxu0 %v1179
        %v2992 = vpop.f32.mrf.mxu0
        %v2993 = vadd.f32 0.0, %v2992
        %v2994 = vpop.f32.mrf.mxu0
        %2995 = vmatprep.mubr.f32.mxu0 0.0
        %2996 = vmatmul.mubr.f32.gmra.mxu0 %v1181
        %v2997 = vpop.f32.mrf.mxu0
        %v2998 = vadd.f32 0.0, %v2997
        %v2999 = vpop.f32.mrf.mxu0
        %3000 = vmatprep.mubr.f32.mxu0 0.0
        %3001 = vmatmul.mubr.f32.gmra.mxu0 %v1183
        %v3002 = vpop.f32.mrf.mxu0
        %v3003 = vadd.f32 0.0, %v3002
        %v3004 = vpop.f32.mrf.mxu0
        %3005 = vmatprep.mubr.f32.mxu0 0.0
        %3006 = vmatmul.mubr.f32.gmra.mxu0 %v1185
        %v3007 = vpop.f32.mrf.mxu0
        %v3008 = vadd.f32 0.0, %v3007
        %v3009 = vpop.f32.mrf.mxu0
        %3010 = vmatprep.mubr.f32.mxu0 0.0
        %3011 = vmatmul.mubr.f32.gmra.mxu0 %v1187
        %v3012 = vpop.f32.mrf.mxu0
        %v3013 = vadd.f32 0.0, %v3012
        %v3014 = vpop.f32.mrf.mxu0
        %3015 = vmatprep.mubr.f32.mxu0 0.0
        %3016 = vmatmul.mubr.f32.gmra.mxu0 %v1189
        %v3017 = vpop.f32.mrf.mxu0
        %v3018 = vadd.f32 0.0, %v3017
        %v3019 = vpop.f32.mrf.mxu0
        %3020 = vmatprep.mubr.f32.mxu0 0.0
        %3021 = vmatmul.mubr.f32.gmra.mxu0 %v1191
        %v3022 = vpop.f32.mrf.mxu0
        %v3023 = vadd.f32 0.0, %v3022
        %v3024 = vpop.f32.mrf.mxu0
        %3025 = vmatprep.mubr.f32.mxu0 0.0
        %3026 = vmatmul.mubr.f32.gmra.mxu0 %v1193
        %v3027 = vpop.f32.mrf.mxu0
        %v3028 = vadd.f32 0.0, %v3027
        %v3029 = vpop.f32.mrf.mxu0
        %3030 = vmatprep.mubr.f32.mxu0 0.0
        %3031 = vmatmul.mubr.f32.gmra.mxu0 %v1195
        %v3032 = vpop.f32.mrf.mxu0
        %v3033 = vadd.f32 0.0, %v3032
        %v3034 = vpop.f32.mrf.mxu0
        %3035 = vmatprep.mubr.f32.mxu0 0.0
        %3036 = vmatmul.mubr.f32.gmra.mxu0 %v1197
        %v3037 = vpop.f32.mrf.mxu0
        %v3038 = vadd.f32 0.0, %v3037
        %v3039 = vpop.f32.mrf.mxu0
        %3040 = vmatprep.mubr.f32.mxu0 0.0
        %3041 = vmatmul.mubr.f32.gmra.mxu0 %v1199
        %v3042 = vpop.f32.mrf.mxu0
        %v3043 = vadd.f32 0.0, %v3042
        %v3044 = vpop.f32.mrf.mxu0
        %3045 = vmatprep.mubr.f32.mxu0 0.0
        %3046 = vmatmul.mubr.f32.gmra.mxu0 %v1201
        %v3047 = vpop.f32.mrf.mxu0
        %v3048 = vadd.f32 0.0, %v3047
        %v3049 = vpop.f32.mrf.mxu0
        %3050 = vmatprep.mubr.f32.mxu0 0.0
        %3051 = vmatmul.mubr.f32.gmra.mxu0 %v1203
        %v3052 = vpop.f32.mrf.mxu0
        %v3053 = vadd.f32 0.0, %v3052
        %v3054 = vpop.f32.mrf.mxu0
        %3055 = vmatprep.mubr.f32.mxu0 0.0
        %3056 = vmatmul.mubr.f32.gmra.mxu0 %v2024
        %v3057 = vpop.f32.mrf.mxu0
        %v3058 = vadd.f32 0.0, %v3057
        %v3059 = vpop.f32.mrf.mxu0
        %3060 = vmatprep.mubr.f32.mxu0 0.0
        %3061 = vmatmul.mubr.f32.gmra.mxu0 %v2026
        %v3062 = vpop.f32.mrf.mxu0
        %v3063 = vadd.f32 0.0, %v3062
        %v3064 = vpop.f32.mrf.mxu0
        %3065 = vmatprep.mubr.f32.mxu0 0.0
        %3066 = vmatmul.mubr.f32.gmra.mxu0 %v2847
        %v3067 = vpop.f32.mrf.mxu0
        %v3068 = vadd.f32 0.0, %v3067
        %v3069 = vpop.f32.mrf.mxu0
        %3070 = vmatprep.mubr.f32.mxu0 0.0
        %3071 = vmatmul.mubr.f32.gmra.mxu0 %v2849
        %v3072 = vpop.f32.mrf.mxu0
        %v3073 = vadd.f32 0.0, %v3072
        %v3074 = vpop.f32.mrf.mxu0
        %3075 = vdwg.mxu0
        %v3076 = vadd.f32 %v2801, %v2918
        %v3077 = vadd.f32 %v2802, %v2923
        %v3078 = vadd.f32 %v2803, %v2928
        %v3079 = vadd.f32 %v2804, %v2933
        %v3080 = vadd.f32 %v2805, %v2938
        %v3081 = vadd.f32 %v2806, %v2943
        %v3082 = vadd.f32 %v2807, %v2948
        %v3083 = vadd.f32 %v2808, %v2953
        %v3084 = vadd.f32 %v2809, %v2958
        %v3085 = vadd.f32 %v2810, %v2963
        %v3086 = vadd.f32 %v2811, %v2968
        %v3087 = vadd.f32 %v2812, %v2973
        %v3088 = vadd.f32 %v2813, %v2978
        %v3089 = vadd.f32 %v2814, %v2983
        %v3090 = vadd.f32 %v2815, %v2988
        %v3091 = vadd.f32 %v2816, %v2993
        %v3092 = vadd.f32 %v2817, %v2998
        %v3093 = vadd.f32 %v2818, %v3003
        %v3094 = vadd.f32 %v2819, %v3008
        %v3095 = vadd.f32 %v2820, %v3013
        %v3096 = vadd.f32 %v2821, %v3018
        %v3097 = vadd.f32 %v2822, %v3023
        %v3098 = vadd.f32 %v2823, %v3028
        %v3099 = vadd.f32 %v2824, %v3033
        %v3100 = vadd.f32 %v2825, %v3038
        %v3101 = vadd.f32 %v2826, %v3043
        %v3102 = vadd.f32 %v2827, %v3048
        %v3103 = vadd.f32 %v2828, %v3053
        %v3104 = vadd.f32 %v2829, %v3058
        %v3105 = vadd.f32 %v2830, %v3063
        %v3106 = vadd.f32 %v2831, %v3068
        %v3107 = vadd.f32 %v2832, %v3073
        %v3108 = vld [vmem:[%s263] sm:$0x1]
        %v3110 = vlaneseq
        %v3111 = vshrl.u32 %v3110, 7
        %v3112 = vsub.s32 0, %v3111
        %v3113 = vrot.slane %v3108, %v3112
        %v3115 = vadd.f32 %v3076, %v3113
        %v3116 = vadd.f32 %v3077, %v3113
        %v3117 = vadd.f32 %v3078, %v3113
        %v3118 = vadd.f32 %v3079, %v3113
        %v3119 = vadd.f32 %v3080, %v3113
        %v3120 = vadd.f32 %v3081, %v3113
        %v3121 = vadd.f32 %v3082, %v3113
        %v3122 = vadd.f32 %v3083, %v3113
        %v3123 = vadd.f32 %v3084, %v3113
        %v3124 = vadd.f32 %v3085, %v3113
        %v3125 = vadd.f32 %v3086, %v3113
        %v3126 = vadd.f32 %v3087, %v3113
        %v3127 = vadd.f32 %v3088, %v3113
        %v3128 = vadd.f32 %v3089, %v3113
        %v3129 = vadd.f32 %v3090, %v3113
        %v3130 = vadd.f32 %v3091, %v3113
        %v3131 = vadd.f32 %v3092, %v3113
        %v3132 = vadd.f32 %v3093, %v3113
        %v3133 = vadd.f32 %v3094, %v3113
        %v3134 = vadd.f32 %v3095, %v3113
        %v3135 = vadd.f32 %v3096, %v3113
        %v3136 = vadd.f32 %v3097, %v3113
        %v3137 = vadd.f32 %v3098, %v3113
        %v3138 = vadd.f32 %v3099, %v3113
        %v3139 = vadd.f32 %v3100, %v3113
        %v3140 = vadd.f32 %v3101, %v3113
        %v3141 = vadd.f32 %v3102, %v3113
        %v3142 = vadd.f32 %v3103, %v3113
        %v3143 = vadd.f32 %v3104, %v3113
        %v3144 = vadd.f32 %v3105, %v3113
        %v3145 = vadd.f32 %v3106, %v3113
        %v3146 = vadd.f32 %v3107, %v3113
        %v3147 = vld [vmem:[%s271] sm:$0xff]
        %v3148 = vld [vmem:[%s271 + $0x8] sm:$0xff]
        %v3149 = vld [vmem:[%s271 + $0x10] sm:$0xff]
        %v3150 = vld [vmem:[%s271 + $0x18] sm:$0xff]
        %v3151 = vld [vmem:[%s271 + $0x20] sm:$0xff]
        %v3152 = vld [vmem:[%s271 + $0x28] sm:$0xff]
        %v3153 = vld [vmem:[%s271 + $0x30] sm:$0xff]
        %v3154 = vld [vmem:[%s271 + $0x38] sm:$0xff]
        %v3155 = vld [vmem:[%s271 + $0x40] sm:$0xff]
        %v3156 = vld [vmem:[%s271 + $0x48] sm:$0xff]
        %v3157 = vld [vmem:[%s271 + $0x50] sm:$0xff]
        %v3158 = vld [vmem:[%s271 + $0x58] sm:$0xff]
        %v3159 = vld [vmem:[%s271 + $0x60] sm:$0xff]
        %v3160 = vld [vmem:[%s271 + $0x68] sm:$0xff]
        %v3161 = vld [vmem:[%s271 + $0x70] sm:$0xff]
        %v3162 = vld [vmem:[%s271 + $0x78] sm:$0xff]
        %v3163 = vld [vmem:[%s271 + $0x80] sm:$0xff]
        %v3164 = vld [vmem:[%s271 + $0x88] sm:$0xff]
        %v3165 = vld [vmem:[%s271 + $0x90] sm:$0xff]
        %v3166 = vld [vmem:[%s271 + $0x98] sm:$0xff]
        %v3167 = vld [vmem:[%s271 + $0xa0] sm:$0xff]
        %v3168 = vld [vmem:[%s271 + $0xa8] sm:$0xff]
        %v3169 = vld [vmem:[%s271 + $0xb0] sm:$0xff]
        %v3170 = vld [vmem:[%s271 + $0xb8] sm:$0xff]
        %v3171 = vld [vmem:[%s271 + $0xc0] sm:$0xff]
        %v3172 = vld [vmem:[%s271 + $0xc8] sm:$0xff]
        %v3173 = vld [vmem:[%s271 + $0xd0] sm:$0xff]
        %v3174 = vld [vmem:[%s271 + $0xd8] sm:$0xff]
        %v3175 = vld [vmem:[%s271 + $0xe0] sm:$0xff]
        %v3176 = vld [vmem:[%s271 + $0xe8] sm:$0xff]
        %v3177 = vld [vmem:[%s271 + $0xf0] sm:$0xff]
        %v3178 = vld [vmem:[%s271 + $0xf8] sm:$0xff]
        %v3179 = vadd.f32 %v3115, %v3147
        %v3180 = vadd.f32 %v3116, %v3148
        %v3181 = vadd.f32 %v3117, %v3149
        %v3182 = vadd.f32 %v3118, %v3150
        %v3183 = vadd.f32 %v3119, %v3151
        %v3184 = vadd.f32 %v3120, %v3152
        %v3185 = vadd.f32 %v3121, %v3153
        %v3186 = vadd.f32 %v3122, %v3154
        %v3187 = vadd.f32 %v3123, %v3155
        %v3188 = vadd.f32 %v3124, %v3156
        %v3189 = vadd.f32 %v3125, %v3157
        %v3190 = vadd.f32 %v3126, %v3158
        %v3191 = vadd.f32 %v3127, %v3159
        %v3192 = vadd.f32 %v3128, %v3160
        %v3193 = vadd.f32 %v3129, %v3161
        %v3194 = vadd.f32 %v3130, %v3162
        %v3195 = vadd.f32 %v3131, %v3163
        %v3196 = vadd.f32 %v3132, %v3164
        %v3197 = vadd.f32 %v3133, %v3165
        %v3198 = vadd.f32 %v3134, %v3166
        %v3199 = vadd.f32 %v3135, %v3167
        %v3200 = vadd.f32 %v3136, %v3168
        %v3201 = vadd.f32 %v3137, %v3169
        %v3202 = vadd.f32 %v3138, %v3170
        %v3203 = vadd.f32 %v3139, %v3171
        %v3204 = vadd.f32 %v3140, %v3172
        %v3205 = vadd.f32 %v3141, %v3173
        %v3206 = vadd.f32 %v3142, %v3174
        %v3207 = vadd.f32 %v3143, %v3175
        %v3208 = vadd.f32 %v3144, %v3176
        %v3209 = vadd.f32 %v3145, %v3177
        %v3210 = vadd.f32 %v3146, %v3178
        %v3211 = vmax.f32 %v3179, 0.0
        %v3212 = vmax.f32 %v3180, 0.0
        %v3213 = vmax.f32 %v3181, 0.0
        %v3214 = vmax.f32 %v3182, 0.0
        %v3215 = vmax.f32 %v3183, 0.0
        %v3216 = vmax.f32 %v3184, 0.0
        %v3217 = vmax.f32 %v3185, 0.0
        %v3218 = vmax.f32 %v3186, 0.0
        %v3219 = vmax.f32 %v3187, 0.0
        %v3220 = vmax.f32 %v3188, 0.0
        %v3221 = vmax.f32 %v3189, 0.0
        %v3222 = vmax.f32 %v3190, 0.0
        %v3223 = vmax.f32 %v3191, 0.0
        %v3224 = vmax.f32 %v3192, 0.0
        %v3225 = vmax.f32 %v3193, 0.0
        %v3226 = vmax.f32 %v3194, 0.0
        %v3227 = vmax.f32 %v3195, 0.0
        %v3228 = vmax.f32 %v3196, 0.0
        %v3229 = vmax.f32 %v3197, 0.0
        %v3230 = vmax.f32 %v3198, 0.0
        %v3231 = vmax.f32 %v3199, 0.0
        %v3232 = vmax.f32 %v3200, 0.0
        %v3233 = vmax.f32 %v3201, 0.0
        %v3234 = vmax.f32 %v3202, 0.0
        %v3235 = vmax.f32 %v3203, 0.0
        %v3236 = vmax.f32 %v3204, 0.0
        %v3237 = vmax.f32 %v3205, 0.0
        %v3238 = vmax.f32 %v3206, 0.0
        %v3239 = vmax.f32 %v3207, 0.0
        %v3240 = vmax.f32 %v3208, 0.0
        %v3241 = vmax.f32 %v3209, 0.0
        %v3242 = vmax.f32 %v3210, 0.0
        %3243 = vst.msk [vmem:[%s251] sm:$0xff] %vm472, %v3211
        %3244 = vst.msk [vmem:[%s251 + $0x8] sm:$0xff] %vm472, %v3212
        %3245 = vst.msk [vmem:[%s251 + $0x10] sm:$0xff] %vm472, %v3213
        %3246 = vst.msk [vmem:[%s251 + $0x18] sm:$0xff] %vm472, %v3214
        %3247 = vst.msk [vmem:[%s251 + $0x20] sm:$0xff] %vm472, %v3215
        %3248 = vst.msk [vmem:[%s251 + $0x28] sm:$0xff] %vm472, %v3216
        %3249 = vst.msk [vmem:[%s251 + $0x30] sm:$0xff] %vm472, %v3217
        %3250 = vst.msk [vmem:[%s251 + $0x38] sm:$0xff] %vm472, %v3218
        %3251 = vst.msk [vmem:[%s251 + $0x40] sm:$0xff] %vm472, %v3219
        %3252 = vst.msk [vmem:[%s251 + $0x48] sm:$0xff] %vm472, %v3220
        %3253 = vst.msk [vmem:[%s251 + $0x50] sm:$0xff] %vm472, %v3221
        %3254 = vst.msk [vmem:[%s251 + $0x58] sm:$0xff] %vm472, %v3222
        %3255 = vst.msk [vmem:[%s251 + $0x60] sm:$0xff] %vm472, %v3223
        %3256 = vst.msk [vmem:[%s251 + $0x68] sm:$0xff] %vm472, %v3224
        %3257 = vst.msk [vmem:[%s251 + $0x70] sm:$0xff] %vm472, %v3225
        %3258 = vst.msk [vmem:[%s251 + $0x78] sm:$0xff] %vm472, %v3226
        %3259 = vst.msk [vmem:[%s251 + $0x80] sm:$0xff] %vm472, %v3227
        %3260 = vst.msk [vmem:[%s251 + $0x88] sm:$0xff] %vm472, %v3228
        %3261 = vst.msk [vmem:[%s251 + $0x90] sm:$0xff] %vm472, %v3229
        %3262 = vst.msk [vmem:[%s251 + $0x98] sm:$0xff] %vm472, %v3230
        %3263 = vst.msk [vmem:[%s251 + $0xa0] sm:$0xff] %vm472, %v3231
        %3264 = vst.msk [vmem:[%s251 + $0xa8] sm:$0xff] %vm472, %v3232
        %3265 = vst.msk [vmem:[%s251 + $0xb0] sm:$0xff] %vm472, %v3233
        %3266 = vst.msk [vmem:[%s251 + $0xb8] sm:$0xff] %vm472, %v3234
        %3267 = vst.msk [vmem:[%s251 + $0xc0] sm:$0xff] %vm472, %v3235
        %3268 = vst.msk [vmem:[%s251 + $0xc8] sm:$0xff] %vm472, %v3236
        %3269 = vst.msk [vmem:[%s251 + $0xd0] sm:$0xff] %vm472, %v3237
        %3270 = vst.msk [vmem:[%s251 + $0xd8] sm:$0xff] %vm472, %v3238
        %3271 = vst.msk [vmem:[%s251 + $0xe0] sm:$0xff] %vm472, %v3239
        %3272 = vst.msk [vmem:[%s251 + $0xe8] sm:$0xff] %vm472, %v3240
        %3273 = vst.msk [vmem:[%s251 + $0xf0] sm:$0xff] %vm472, %v3241
        %3274 = vst.msk [vmem:[%s251 + $0xf8] sm:$0xff] %vm472, %v3242
        %s3275 = sand.u32 %s146, 1
        %s3276 = scalar_lea.sflag [#allocation3], %s3275
        %s3277 = sand.u32 %s146, 1
        %s3278 = smul.addr %s3277, 256
        %s3279 = scalar_lea.vmem [#allocation2], %s3278
        // Predicated region
        $region37: #{basic_block_forward.3} parent=35 // pred_check
          %p3280 = pneg %p156
        $region38: #{basic_block_forward.3} parent=35 // pred_check_branch
          %3282 = sbr.rel (%p3280) target = $region40
        $region39: #{basic_block_forward.3} parent=35 // pred_region
          %s3284 = ssub.s32 4096, 4096
          %3285 = vsyncadd %s3276, %s3284
          %s3286 = smul.addr %s22, 32
          %s3287 = sadd.s32 %s23, %s3286
          %s3288 = smul.addr %s3287, 128
          %s3289 = scalar_lea.hbm %s4, %s3288
          %s3290 = sshll.u32 %s3279, 4
          %s3291 = int_to_ptr.vmem [resolvable:$true] %s3290
          %3296 = dma.vmem_to_hbm [thread:$0]  %s3291, 4096, %s3289, %s3276, 128, 128, 8
        $region40: #{basic_block_forward.3} parent=35 // pred_fallthru
          _
      $region36: #{basic_block_forward.3} parent=5 // pred_fallthru
        _
      %p3297 = scmp.le.s32.totalorder 2, %s13
      // Predicated region
      $region41: #{basic_block_forward.3} parent=5 // pred_check
        %p3298 = pneg %p3297
      $region42: #{basic_block_forward.3} parent=5 // pred_check_branch
        %3300 = sbr.rel (%p3298) target = $region44
      $region43: #{basic_block_forward.3} parent=5 // pred_region
        %s3301 = ssub.s32 %s13, 2
        // Predicated region
        $region45: #{basic_block_forward.3} parent=43 // pred_check
          %p3302 = pneg %p162
        $region46: #{basic_block_forward.3} parent=43 // pred_check_branch
          %3304 = sbr.rel (%p3302) target = $region48
        $region47: #{basic_block_forward.3} parent=43 // pred_region
          %s3305 = sand.u32 %s147, 1
          %s3306 = scalar_lea.sflag [#allocation3], %s3305
          %s3307 = sand.u32 %s147, 1
          %s3308 = smul.addr %s3307, 256
          %s3309 = scalar_lea.vmem [#allocation2], %s3308
          %3310 = dma.done %s3306, 4096
        $region48: #{basic_block_forward.3} parent=43 // pred_fallthru
          _
      $region44: #{basic_block_forward.3} parent=5 // pred_fallthru
        _
    $region6: #{basic_block_forward.3} parent=1 // loop_footer
      %s17 = sadd.s32 1, %s13
    $region7: #{basic_block_forward.3} parent=1 // loop_footer_branch
      %12 = sbr.rel target = $region3
    $region8: #{basic_block_forward.3} parent=1 // loop_exit
      _
    %3311 = vsyncpa [#allocation3], 1
    %s3312 = scalar_lea.sflag [#allocation3], 1
    %3313 = vsyncpa %s3312, 1

</llo_original>
